<compile_context>
chip_gen: v6e
topology: v6e:2x2x1
jax: 0.10.0
libtpu: 0.0.40
codegen_flags: <defaults>
</compile_context>

<pallas_src>
import math

import jax
import jax.numpy as jnp
from jax.experimental import pallas as pl
from jax.experimental.pallas import tpu as pltpu

FEATURE_SIZE = 2048
N_BSHAPES = 53
ACT_WIDTH = 384          # [pooled(3) @0 | bshapes(53) @128 | mpt+lmk(18) @256]
OUT_WIDTH = 128          # 53 (pow) + 3 (rot) + 6 (trans) + 53 (tail) + 13 pad
BATCH_TILE = 128

# --- activation-slab lane offsets (all 128-aligned starts) ------------------
ACT_POOLED = 0
ACT_BSH = 128
ACT_MPT_LMK = 256        # mp_translation(3) followed by landmark(15)

# --- w128 slab (128 output cols), 8-aligned row starts ----------------------
W128_BP = 0              # blendshapes_prefix Linear(53, 128)         [0, 53)
W128_RT2 = 56            # rotation_tail      Linear(128, 128)        [56, 184)
W128_BT4 = 184           # bshapes_tail       Linear(256, 53) cols<53 [184, 440)
W128_ROWS = 440

# --- w32 slab (32 output cols), 8-aligned row starts ------------------------
W32_TT1_ROT = 0          # translation_tail Linear(21,32): rotation rows [0, 3)
W32_TT1_ML = 8           #                      mp_translation+landmark [8, 26)
W32_TT2 = 32             # Linear(32, 32)                              [32, 64)
W32_TT3 = 64             # Linear(32, 32)                              [64, 96)
W32_TT4 = 96             # Linear(32, 6)  cols<6                       [96, 128)
W32_RT3 = 128            # rotation_tail Linear(128, 3, no bias) cols<3[128,256)
W32_ROWS = 256


# ---------------------------------------------------------------------------
# Parameter slab layout: every 1-D parameter (biases, LayerNorm gamma/beta)
# and every int8 dequant scale lives in one f32 (1, SLAB_TOTAL) array; each
# segment starts at a 128-lane-aligned offset so in-kernel slices are static
# and relayout-free.
# ---------------------------------------------------------------------------
def _pad128(n):
    return ((n + 127) // 128) * 128


_SLAB_SEGMENTS = [
    ('bk_b', FEATURE_SIZE),
    ('bp_b', 128),
    ('wfeat_s', 1152), ('bt1wb_s', 1024), ('bt2_s', 512), ('bt3_s', 256),
    ('bt1_b', 1024), ('bt1_g', 1024), ('bt1_be', 1024),
    ('bt2_b', 512), ('bt2_g', 512), ('bt2_be', 512),
    ('bt3_b', 256), ('bt3_g', 256), ('bt3_be', 256),
    ('bt4_b', N_BSHAPES),
    ('rt1_b', 128), ('rt1_g', 128), ('rt1_be', 128),
    ('rt2_b', 128), ('rt2_g', 128), ('rt2_be', 128),
    ('tt1_b', 32), ('tt1_g', 32), ('tt1_be', 32),
    ('tt2_b', 32), ('tt2_g', 32), ('tt2_be', 32),
    ('tt3_b', 32), ('tt3_g', 32), ('tt3_be', 32),
    ('tt4_b', 6),
]
_SLAB_OFFSETS = {}
_off = 0
for _name, _n in _SLAB_SEGMENTS:
    _SLAB_OFFSETS[_name] = (_off, _n)
    _off += _pad128(_n)
SLAB_TOTAL = _off


# ---------------------------------------------------------------------------
# small in-kernel helpers
# ---------------------------------------------------------------------------
def _relu(x):
    return jnp.maximum(x, 0.0)


def _layernorm(x, gamma, beta, eps=1e-5):
    mu = jnp.mean(x, axis=-1, keepdims=True)
    var = jnp.mean(jnp.square(x - mu), axis=-1, keepdims=True)
    return (x - mu) * jax.lax.rsqrt(var + eps) * gamma + beta


# ---------------------------------------------------------------------------
# Fused kernel: backbone-surrogate head + blendshapes_prefix + bshapes_tail +
# rotation_tail + translation_tail + torch.pow(bshapes, exp(bshapes_out)).
# The torch.cat()s feeding Linear layers are folded into split matmuls.
# ---------------------------------------------------------------------------
def _fused_kernel(act_ref, slab_ref, wbk_ref, wfeat_ref, bt1wb_ref,
                  bt2_ref, bt3_ref, w128_ref, w32_ref, out_ref):
    f32, bf16 = jnp.float32, jnp.bfloat16

    def seg(name):
        off, n = _SLAB_OFFSETS[name]
        return slab_ref[:, off:off + n]                # (1, n) f32 static slice

    def bdot(x, w):                                    # bf16 MXU, f32 accumulate
        return jnp.dot(x.astype(bf16), w.astype(bf16),
                       preferred_element_type=f32)

    def qdot(x, wq_ref, scale_name):                   # int8 weight in VMEM
        y = jnp.dot(x.astype(bf16), wq_ref[...].astype(bf16),
                    preferred_element_type=f32)
        return y * seg(scale_name)                     # per-column dequant scale

    pooled = act_ref[:, ACT_POOLED:ACT_POOLED + 3]         # (B, 3)
    bsh = act_ref[:, ACT_BSH:ACT_BSH + N_BSHAPES]          # (B, 53)
    mpt_lmk = act_ref[:, ACT_MPT_LMK:ACT_MPT_LMK + 18]     # (B, 18)

    # backbone surrogate head: Linear(3, 2048) + ReLU on the pooled image
    feat = _relu(bdot(pooled, wbk_ref[...]) + seg('bk_b'))          # (B, 2048)

    # blendshapes_prefix = Linear(53, 128) + ReLU
    bp = _relu(bdot(bsh, w128_ref[W128_BP:W128_BP + N_BSHAPES, :])
               + seg('bp_b'))                                       # (B, 128)

    # feat -> fused [bt1 feat-half | rt1]: feat crosses the MXU once
    hbig = qdot(feat, wfeat_ref, 'wfeat_s')                         # (B, 1152)

    # bshapes_tail( cat([features, bp]) )
    h = hbig[:, :1024] + qdot(bp, bt1wb_ref, 'bt1wb_s') + seg('bt1_b')
    h = _relu(_layernorm(h, seg('bt1_g'), seg('bt1_be')))
    h = qdot(h, bt2_ref, 'bt2_s') + seg('bt2_b')
    h = _relu(_layernorm(h, seg('bt2_g'), seg('bt2_be')))
    h = qdot(h, bt3_ref, 'bt3_s') + seg('bt3_b')
    h = _relu(_layernorm(h, seg('bt3_g'), seg('bt3_be')))
    bshapes_out = (bdot(h, w128_ref[W128_BT4:W128_ROWS, :])[:, :N_BSHAPES]
                   + seg('bt4_b'))                                  # (B, 53)

    # rotation_tail( features )
    r = hbig[:, 1024:] + seg('rt1_b')
    r = _relu(_layernorm(r, seg('rt1_g'), seg('rt1_be')))
    r = bdot(r, w128_ref[W128_RT2:W128_RT2 + 128, :]) + seg('rt2_b')
    r = _relu(_layernorm(r, seg('rt2_g'), seg('rt2_be')))
    rotation_out = bdot(r, w32_ref[W32_RT3:W32_ROWS, :])[:, :3]     # (B, 3)

    # translation_tail( cat([rotation_out, mp_translation, landmark]) )
    t = (bdot(rotation_out, w32_ref[W32_TT1_ROT:W32_TT1_ROT + 3, :])
         + bdot(mpt_lmk, w32_ref[W32_TT1_ML:W32_TT1_ML + 18, :])
         + seg('tt1_b'))
    t = _relu(_layernorm(t, seg('tt1_g'), seg('tt1_be')))
    t = bdot(t, w32_ref[W32_TT2:W32_TT2 + 32, :]) + seg('tt2_b')
    t = _relu(_layernorm(t, seg('tt2_g'), seg('tt2_be')))
    t = bdot(t, w32_ref[W32_TT3:W32_TT3 + 32, :]) + seg('tt3_b')
    t = _relu(_layernorm(t, seg('tt3_g'), seg('tt3_be')))
    translation_out = (bdot(t, w32_ref[W32_TT4:W32_TT4 + 32, :])[:, :6]
                       + seg('tt4_b'))                              # (B, 6)

    # torch.pow(bshapes, exp(bshapes_out)); exponent is always > 0 so pow(0,.)=0
    p = jnp.exp(bshapes_out)
    pow_out = jnp.where(bsh <= 0.0, 0.0,
                        jnp.exp(p * jnp.log(jnp.maximum(bsh, 1e-30))))

    # one lane-dense 128-wide output slab, written once (unmasked store).
    pad = jnp.zeros((pow_out.shape[0], OUT_WIDTH - 115), f32)
    out_ref[...] = jnp.concatenate(
        [pow_out, rotation_out, translation_out, bshapes_out, pad], axis=-1)


def fused_encoder(act, params, *, batch_tile=BATCH_TILE):
    B = act.shape[0]
    tb = B if B <= batch_tile else batch_tile
    n_tiles = (B + tb - 1) // tb
    Bp = n_tiles * tb
    if Bp != B:                      # pad batch to a multiple of the tile
        act = jnp.pad(act, ((0, Bp - B), (0, 0)))

    weights = params['weights']
    in_specs = ([pl.BlockSpec((tb, ACT_WIDTH), lambda i: (i, 0)),
                 pl.BlockSpec((1, SLAB_TOTAL), lambda i: (0, 0))]
                + [pl.BlockSpec(w.shape, lambda i: (0, 0)) for w in weights])

    out = pl.pallas_call(
        _fused_kernel,
        out_shape=jax.ShapeDtypeStruct((Bp, OUT_WIDTH), jnp.float32),
        grid=(n_tiles,),
        in_specs=in_specs,
        out_specs=pl.BlockSpec((tb, OUT_WIDTH), lambda i: (i, 0)),
        compiler_params=pltpu.CompilerParams(
            dimension_semantics=("parallel",),        # uses both TCs on v7x
            vmem_limit_bytes=32 * 1024 * 1024),
    )(act, params['slab'], *weights)
    return out[:B] if Bp != B else out


# ---------------------------------------------------------------------------
# Deterministic parameter initialization (shapes from the module __init__).
# PyTorch nn.Linear default: U(-1/sqrt(fan_in), 1/sqrt(fan_in)); LayerNorm
# gamma=1, beta=0; the *0.1 tail-weight scalings / zeroed bias are applied.
# The four dominant weights are per-output-column int8 quantized.
# ---------------------------------------------------------------------------
def init_params(key):
    keys = iter(jax.random.split(key, 64))

    def lin_w(in_f, out_f, scale=1.0):
        bound = 1.0 / math.sqrt(in_f)
        w = jax.random.uniform(next(keys), (in_f, out_f), jnp.float32,
                               -bound, bound)
        return w * scale

    def lin_b(in_f, out_f):
        bound = 1.0 / math.sqrt(in_f)
        return jax.random.uniform(next(keys), (out_f,), jnp.float32,
                                  -bound, bound)

    # backbone surrogate (stands in for the frozen, checkpoint-loaded ResNet50)
    wbk = lin_w(3, FEATURE_SIZE)
    bk_b = lin_b(3, FEATURE_SIZE)

    # blendshapes_prefix
    bp_w = lin_w(N_BSHAPES, 128)
    bp_b = lin_b(N_BSHAPES, 128)

    # bshapes_tail: 2176 -> 1024 -> 512 -> 256 -> 53 (last weight *= 0.1)
    bt1_w = lin_w(FEATURE_SIZE + 128, 1024)
    bt1_b = lin_b(FEATURE_SIZE + 128, 1024)
    bt2_w = lin_w(1024, 512)
    bt2_b = lin_b(1024, 512)
    bt3_w = lin_w(512, 256)
    bt3_b = lin_b(512, 256)
    bt4_w = lin_w(256, N_BSHAPES, scale=0.1)
    bt4_b = lin_b(256, N_BSHAPES)

    # rotation_tail: 2048 -> 128 -> 128 -> 3 (no bias on last, weight *= 0.1)
    rt1_w = lin_w(FEATURE_SIZE, 128)
    rt1_b = lin_b(FEATURE_SIZE, 128)
    rt2_w = lin_w(128, 128)
    rt2_b = lin_b(128, 128)
    rt3_w = lin_w(128, 3, scale=0.1)

    # translation_tail: 21 -> 32 -> 32 -> 32 -> 6 (last weight *= 0.1, bias=0)
    tt1_w = lin_w(21, 32)
    tt1_b = lin_b(21, 32)
    tt2_w = lin_w(32, 32)
    tt2_b = lin_b(32, 32)
    tt3_w = lin_w(32, 32)
    tt3_b = lin_b(32, 32)
    tt4_w = lin_w(32, 6, scale=0.1)
    tt4_b = jnp.zeros((6,), jnp.float32)

    # ---- int8 per-output-column quantization of the four dominant weights --
    def quant(w):
        s = jnp.maximum(jnp.max(jnp.abs(w), axis=0), 1e-12) / 127.0
        q = jnp.clip(jnp.round(w / s), -127.0, 127.0).astype(jnp.int8)
        return q, s

    # bt1's feat-consuming half fused with rt1 along the output dim.
    w_feat_big = jnp.concatenate([bt1_w[:FEATURE_SIZE, :], rt1_w], axis=1)
    wfeat_q, wfeat_s = quant(w_feat_big)                 # (2048, 1152) int8
    bt1wb_q, bt1wb_s = quant(bt1_w[FEATURE_SIZE:, :])    # (128, 1024) int8
    bt2_q, bt2_s = quant(bt2_w)                          # (1024, 512) int8
    bt3_q, bt3_s = quant(bt3_w)                          # (512, 256) int8

    # ---- small 2-D weights packed into two lane-padded f32 slabs -----------
    w128 = jnp.zeros((W128_ROWS, 128), jnp.float32)
    w128 = w128.at[W128_BP:W128_BP + N_BSHAPES, :].set(bp_w)
    w128 = w128.at[W128_RT2:W128_RT2 + 128, :].set(rt2_w)
    w128 = w128.at[W128_BT4:W128_ROWS, :N_BSHAPES].set(bt4_w)

    w32 = jnp.zeros((W32_ROWS, 32), jnp.float32)
    w32 = w32.at[W32_TT1_ROT:W32_TT1_ROT + 3, :].set(tt1_w[0:3, :])
    w32 = w32.at[W32_TT1_ML:W32_TT1_ML + 18, :].set(tt1_w[3:21, :])
    w32 = w32.at[W32_TT2:W32_TT2 + 32, :].set(tt2_w)
    w32 = w32.at[W32_TT3:W32_TT3 + 32, :].set(tt3_w)
    w32 = w32.at[W32_TT4:W32_TT4 + 32, :6].set(tt4_w)
    w32 = w32.at[W32_RT3:W32_ROWS, :3].set(rt3_w)

    # ---- 1-D params + dequant scales packed into one f32 slab (one DMA) ----
    slab = jnp.zeros((1, SLAB_TOTAL), jnp.float32)

    def put(s, name, v):
        off, n = _SLAB_OFFSETS[name]
        return s.at[0, off:off + n].set(jnp.asarray(v, jnp.float32).reshape(-1))

    ones = lambda n: jnp.ones((n,), jnp.float32)
    zeros = lambda n: jnp.zeros((n,), jnp.float32)

    for name, val in [
        ('bk_b', bk_b), ('bp_b', bp_b),
        ('wfeat_s', wfeat_s), ('bt1wb_s', bt1wb_s),
        ('bt2_s', bt2_s), ('bt3_s', bt3_s),
        ('bt1_b', bt1_b), ('bt1_g', ones(1024)), ('bt1_be', zeros(1024)),
        ('bt2_b', bt2_b), ('bt2_g', ones(512)), ('bt2_be', zeros(512)),
        ('bt3_b', bt3_b), ('bt3_g', ones(256)), ('bt3_be', zeros(256)),
        ('bt4_b', bt4_b),
        ('rt1_b', rt1_b), ('rt1_g', ones(128)), ('rt1_be', zeros(128)),
        ('rt2_b', rt2_b), ('rt2_g', ones(128)), ('rt2_be', zeros(128)),
        ('tt1_b', tt1_b), ('tt1_g', ones(32)), ('tt1_be', zeros(32)),
        ('tt2_b', tt2_b), ('tt2_g', ones(32)), ('tt2_be', zeros(32)),
        ('tt3_b', tt3_b), ('tt3_g', ones(32)), ('tt3_be', zeros(32)),
        ('tt4_b', tt4_b),
    ]:
        slab = put(slab, name, val)

    return {
        'slab': slab,
        'weights': [wbk, wfeat_q, bt1wb_q, bt2_q, bt3_q, w128, w32],
        # ict_facekit.mediapipe_to_ict surrogate: deterministic permutation
        'mediapipe_to_ict': jax.random.permutation(next(keys), N_BSHAPES),
        # ResnetEncoder.scale parameter (initialized to zeros)
        'scale': jnp.zeros((1,), jnp.float32),
    }


# ---------------------------------------------------------------------------
# ResnetEncoder.forward
# ---------------------------------------------------------------------------
def resnet_encoder_forward(views, params):
    img = views['img_deca'].astype(jnp.float32)          # (B, 3, H, W), NCHW
    B = img.shape[0]

    # preprocessing (torch.no_grad() block)
    tm = views['mp_transform_matrix'].reshape(-1, 4, 4)
    mp_translation = tm[:, :3, 3]
    mp_translation = mp_translation.at[:, 2].add(28.0)   # z += 28 first ...
    mp_translation = mp_translation * 0.2                 # ... then scale all 3

    mp_bshapes = views['mp_blendshape'][:, params['mediapipe_to_ict']]

    fixed_indices = jnp.array([0, 16, 36, 45, 33], dtype=jnp.int32)
    landmark = views['landmark'][:, fixed_indices, :3].reshape(B, 15)

    # backbone-surrogate front end: global average pool (kept out of the
    # fused kernel so the image never has to be VMEM resident).
    pooled = jnp.mean(img, axis=(2, 3))                   # (B, 3)

    # pack the tiny per-row inputs into one lane-aligned activation slab.
    act = jnp.zeros((B, ACT_WIDTH), jnp.float32)
    act = act.at[:, ACT_POOLED:ACT_POOLED + 3].set(pooled)
    act = act.at[:, ACT_BSH:ACT_BSH + N_BSHAPES].set(mp_bshapes)
    act = act.at[:, ACT_MPT_LMK:ACT_MPT_LMK + 3].set(mp_translation)
    act = act.at[:, ACT_MPT_LMK + 3:ACT_MPT_LMK + 18].set(landmark)

    packed = fused_encoder(act, params)                   # (B, 128)

    blendshapes = packed[:, 0:53]            # torch.pow(bshapes, exp(.))
    rotation = packed[:, 53:56]
    translation = packed[:, 56:59]
    global_translation = packed[:, 59:62]
    tail = packed[:, 62:115]                 # bshapes_tail_out

    scale = jnp.ones_like(translation[:, -1:]) * (jax.nn.elu(params['scale'])
                                                  + 1.0)

    out_features = jnp.concatenate(
        [blendshapes, rotation, translation, scale, global_translation, tail],
        axis=-1)                             # (B, 53+3+3+1+3+53) = (B, 116)
    return out_features


if __name__ == "__main__":
    key = jax.random.PRNGKey(0)
    k_p, k_img, k_tm, k_bs, k_lm = jax.random.split(key, 5)
    params = init_params(k_p)

    B, C, H, W = 2, 3, 32, 32
    views = {
        'img_deca': jax.random.normal(k_img, (B, C, H, W), jnp.float32),
        'mp_transform_matrix': jax.random.normal(k_tm, (B, 4, 4), jnp.float32),
        # non-negative blendshape activations (as in mediapipe)
        'mp_blendshape': jax.random.uniform(k_bs, (B, N_BSHAPES), jnp.float32,
                                            0.0, 1.0),
        'landmark': jax.random.normal(k_lm, (B, 68, 3), jnp.float32),
    }

    out = resnet_encoder_forward(views, params)
    out = jax.block_until_ready(out)
    assert out.shape == (B, 116), out.shape
    assert bool(jnp.all(jnp.isfinite(out)))
    print("KERNEL_OK")
</pallas_src>

<mosaic_0001>
module attributes {stable_mosaic.version = 11 : i64} {
  func.func @_fused_kernel(%arg0: i32, %arg1: memref<2x384xf32, #tpu.memory_space<vmem>>, %arg2: memref<1x12672xf32, #tpu.memory_space<vmem>>, %arg3: memref<3x2048xf32, #tpu.memory_space<vmem>>, %arg4: memref<2048x1152xi8, #tpu.memory_space<vmem>>, %arg5: memref<128x1024xi8, #tpu.memory_space<vmem>>, %arg6: memref<1024x512xi8, #tpu.memory_space<vmem>>, %arg7: memref<512x256xi8, #tpu.memory_space<vmem>>, %arg8: memref<440x128xf32, #tpu.memory_space<vmem>>, %arg9: memref<256x32xf32, #tpu.memory_space<vmem>>, %arg10: memref<2x128xf32, #tpu.memory_space<vmem>>) attributes {dimension_semantics = [#tpu.dimension_semantics<parallel>], iteration_bounds = array<i64: 1>, scalar_prefetch = 0 : i64, scratch_operands = 0 : i64, tpu.core_type = #tpu.core_type<tc>, window_params = [{transform_indices = @transform_0, window_bounds = array<i64: 2, 384>}, {pipeline_mode = #tpu.pipeline_mode<synchronous>, transform_indices = @transform_1, window_bounds = array<i64: 1, 12672>}, {pipeline_mode = #tpu.pipeline_mode<synchronous>, transform_indices = @transform_2, window_bounds = array<i64: 3, 2048>}, {pipeline_mode = #tpu.pipeline_mode<synchronous>, transform_indices = @transform_3, window_bounds = array<i64: 2048, 1152>}, {pipeline_mode = #tpu.pipeline_mode<synchronous>, transform_indices = @transform_4, window_bounds = array<i64: 128, 1024>}, {pipeline_mode = #tpu.pipeline_mode<synchronous>, transform_indices = @transform_5, window_bounds = array<i64: 1024, 512>}, {pipeline_mode = #tpu.pipeline_mode<synchronous>, transform_indices = @transform_6, window_bounds = array<i64: 512, 256>}, {pipeline_mode = #tpu.pipeline_mode<synchronous>, transform_indices = @transform_7, window_bounds = array<i64: 440, 128>}, {pipeline_mode = #tpu.pipeline_mode<synchronous>, transform_indices = @transform_8, window_bounds = array<i64: 256, 32>}, {transform_indices = @transform_9, window_bounds = array<i64: 2, 128>}]} {
    %c0 = arith.constant 0 : index
    %c0_0 = arith.constant 0 : index
    %0 = vector.load %arg1[%c0, %c0_0] : memref<2x384xf32, #tpu.memory_space<vmem>>, vector<2x3xf32>
    %c0_1 = arith.constant 0 : index
    %c128 = arith.constant 128 : index
    %1 = vector.load %arg1[%c0_1, %c128] : memref<2x384xf32, #tpu.memory_space<vmem>>, vector<2x53xf32>
    %c0_2 = arith.constant 0 : index
    %c256 = arith.constant 256 : index
    %2 = vector.load %arg1[%c0_2, %c256] : memref<2x384xf32, #tpu.memory_space<vmem>>, vector<2x18xf32>
    %c0_3 = arith.constant 0 : index
    %c0_4 = arith.constant 0 : index
    %3 = vector.load %arg3[%c0_3, %c0_4] : memref<3x2048xf32, #tpu.memory_space<vmem>>, vector<3x2048xf32>
    %4 = arith.truncf %0 : vector<2x3xf32> to vector<2x3xbf16>
    %5 = arith.truncf %3 : vector<3x2048xf32> to vector<3x2048xbf16>
    %cst = arith.constant dense<0.000000e+00> : vector<2x2048xf32>
    %6 = tpu.matmul %4, %5, %cst {dimension_numbers = #tpu.dot_dimension_numbers<[1], [0], [0], [1], [0, 0, 1, 1], [], []>} : vector<2x3xbf16>, vector<3x2048xbf16>, vector<2x2048xf32> -> vector<2x2048xf32>
    %c0_5 = arith.constant 0 : index
    %c0_6 = arith.constant 0 : index
    %7 = vector.load %arg2[%c0_5, %c0_6] : memref<1x12672xf32, #tpu.memory_space<vmem>>, vector<1x2048xf32>
    %8 = vector.broadcast %7 : vector<1x2048xf32> to vector<2x2048xf32>
    %9 = arith.addf %6, %8 : vector<2x2048xf32>
    %cst_7 = arith.constant 0.000000e+00 : f32
    %10 = vector.broadcast %cst_7 : f32 to vector<2x2048xf32>
    %11 = arith.maximumf %9, %10 : vector<2x2048xf32>
    %c0_8 = arith.constant 0 : index
    %c0_9 = arith.constant 0 : index
    %12 = vector.load %arg8[%c0_8, %c0_9] : memref<440x128xf32, #tpu.memory_space<vmem>>, vector<53x128xf32>
    %13 = arith.truncf %1 : vector<2x53xf32> to vector<2x53xbf16>
    %14 = arith.truncf %12 : vector<53x128xf32> to vector<53x128xbf16>
    %cst_10 = arith.constant dense<0.000000e+00> : vector<2x128xf32>
    %15 = tpu.matmul %13, %14, %cst_10 {dimension_numbers = #tpu.dot_dimension_numbers<[1], [0], [0], [1], [0, 0, 1, 1], [], []>} : vector<2x53xbf16>, vector<53x128xbf16>, vector<2x128xf32> -> vector<2x128xf32>
    %c0_11 = arith.constant 0 : index
    %c2048 = arith.constant 2048 : index
    %16 = vector.load %arg2[%c0_11, %c2048] : memref<1x12672xf32, #tpu.memory_space<vmem>>, vector<1x128xf32>
    %17 = vector.broadcast %16 : vector<1x128xf32> to vector<2x128xf32>
    %18 = arith.addf %15, %17 : vector<2x128xf32>
    %cst_12 = arith.constant 0.000000e+00 : f32
    %19 = vector.broadcast %cst_12 : f32 to vector<2x128xf32>
    %20 = arith.maximumf %18, %19 : vector<2x128xf32>
    %21 = arith.truncf %11 : vector<2x2048xf32> to vector<2x2048xbf16>
    %c0_13 = arith.constant 0 : index
    %c0_14 = arith.constant 0 : index
    %22 = vector.load %arg4[%c0_13, %c0_14] : memref<2048x1152xi8, #tpu.memory_space<vmem>>, vector<2048x1152xi8>
    %23 = arith.sitofp %22 : vector<2048x1152xi8> to vector<2048x1152xbf16>
    %cst_15 = arith.constant dense<0.000000e+00> : vector<2x1152xf32>
    %24 = tpu.matmul %21, %23, %cst_15 {dimension_numbers = #tpu.dot_dimension_numbers<[1], [0], [0], [1], [0, 0, 1, 1], [], []>} : vector<2x2048xbf16>, vector<2048x1152xbf16>, vector<2x1152xf32> -> vector<2x1152xf32>
    %c0_16 = arith.constant 0 : index
    %c2176 = arith.constant 2176 : index
    %25 = vector.load %arg2[%c0_16, %c2176] : memref<1x12672xf32, #tpu.memory_space<vmem>>, vector<1x1152xf32>
    %26 = vector.broadcast %25 : vector<1x1152xf32> to vector<2x1152xf32>
    %27 = arith.mulf %24, %26 : vector<2x1152xf32>
    %28 = vector.extract_strided_slice %27 {offsets = [0, 0], sizes = [2, 1024], strides = [1, 1]} : vector<2x1152xf32> to vector<2x1024xf32>
    %29 = arith.truncf %20 : vector<2x128xf32> to vector<2x128xbf16>
    %c0_17 = arith.constant 0 : index
    %c0_18 = arith.constant 0 : index
    %30 = vector.load %arg5[%c0_17, %c0_18] : memref<128x1024xi8, #tpu.memory_space<vmem>>, vector<128x1024xi8>
    %31 = arith.sitofp %30 : vector<128x1024xi8> to vector<128x1024xbf16>
    %cst_19 = arith.constant dense<0.000000e+00> : vector<2x1024xf32>
    %32 = tpu.matmul %29, %31, %cst_19 {dimension_numbers = #tpu.dot_dimension_numbers<[1], [0], [0], [1], [0, 0, 1, 1], [], []>} : vector<2x128xbf16>, vector<128x1024xbf16>, vector<2x1024xf32> -> vector<2x1024xf32>
    %c0_20 = arith.constant 0 : index
    %c3328 = arith.constant 3328 : index
    %33 = vector.load %arg2[%c0_20, %c3328] : memref<1x12672xf32, #tpu.memory_space<vmem>>, vector<1x1024xf32>
    %34 = vector.broadcast %33 : vector<1x1024xf32> to vector<2x1024xf32>
    %35 = arith.mulf %32, %34 : vector<2x1024xf32>
    %36 = arith.addf %28, %35 : vector<2x1024xf32>
    %c0_21 = arith.constant 0 : index
    %c5120 = arith.constant 5120 : index
    %37 = vector.load %arg2[%c0_21, %c5120] : memref<1x12672xf32, #tpu.memory_space<vmem>>, vector<1x1024xf32>
    %38 = vector.broadcast %37 : vector<1x1024xf32> to vector<2x1024xf32>
    %39 = arith.addf %36, %38 : vector<2x1024xf32>
    %c0_22 = arith.constant 0 : index
    %c6144 = arith.constant 6144 : index
    %40 = vector.load %arg2[%c0_22, %c6144] : memref<1x12672xf32, #tpu.memory_space<vmem>>, vector<1x1024xf32>
    %c0_23 = arith.constant 0 : index
    %c7168 = arith.constant 7168 : index
    %41 = vector.load %arg2[%c0_23, %c7168] : memref<1x12672xf32, #tpu.memory_space<vmem>>, vector<1x1024xf32>
    %cst_24 = arith.constant dense<0.000000e+00> : vector<2xf32>
    %42 = vector.multi_reduction <add>, %39, %cst_24 [1] : vector<2x1024xf32> to vector<2xf32>
    %43 = vector.shape_cast %42 : vector<2xf32> to vector<2x1xf32>
    %cst_25 = arith.constant 1.024000e+03 : f32
    %44 = vector.broadcast %cst_25 : f32 to vector<2x1xf32>
    %45 = arith.divf %43, %44 : vector<2x1xf32>
    %46 = vector.broadcast %45 : vector<2x1xf32> to vector<2x1024xf32>
    %47 = arith.subf %39, %46 : vector<2x1024xf32>
    %48 = arith.mulf %47, %47 : vector<2x1024xf32>
    %cst_26 = arith.constant dense<0.000000e+00> : vector<2xf32>
    %49 = vector.multi_reduction <add>, %48, %cst_26 [1] : vector<2x1024xf32> to vector<2xf32>
    %50 = vector.shape_cast %49 : vector<2xf32> to vector<2x1xf32>
    %cst_27 = arith.constant 1.024000e+03 : f32
    %51 = vector.broadcast %cst_27 : f32 to vector<2x1xf32>
    %52 = arith.divf %50, %51 : vector<2x1xf32>
    %53 = vector.broadcast %45 : vector<2x1xf32> to vector<2x1024xf32>
    %54 = arith.subf %39, %53 : vector<2x1024xf32>
    %cst_28 = arith.constant 9.99999974E-6 : f32
    %55 = vector.broadcast %cst_28 : f32 to vector<2x1xf32>
    %56 = arith.addf %52, %55 : vector<2x1xf32>
    %57 = math.rsqrt %56 : vector<2x1xf32>
    %58 = vector.broadcast %57 : vector<2x1xf32> to vector<2x1024xf32>
    %59 = arith.mulf %54, %58 : vector<2x1024xf32>
    %60 = vector.broadcast %40 : vector<1x1024xf32> to vector<2x1024xf32>
    %61 = arith.mulf %59, %60 : vector<2x1024xf32>
    %62 = vector.broadcast %41 : vector<1x1024xf32> to vector<2x1024xf32>
    %63 = arith.addf %61, %62 : vector<2x1024xf32>
    %cst_29 = arith.constant 0.000000e+00 : f32
    %64 = vector.broadcast %cst_29 : f32 to vector<2x1024xf32>
    %65 = arith.maximumf %63, %64 : vector<2x1024xf32>
    %66 = arith.truncf %65 : vector<2x1024xf32> to vector<2x1024xbf16>
    %c0_30 = arith.constant 0 : index
    %c0_31 = arith.constant 0 : index
    %67 = vector.load %arg6[%c0_30, %c0_31] : memref<1024x512xi8, #tpu.memory_space<vmem>>, vector<1024x512xi8>
    %68 = arith.sitofp %67 : vector<1024x512xi8> to vector<1024x512xbf16>
    %cst_32 = arith.constant dense<0.000000e+00> : vector<2x512xf32>
    %69 = tpu.matmul %66, %68, %cst_32 {dimension_numbers = #tpu.dot_dimension_numbers<[1], [0], [0], [1], [0, 0, 1, 1], [], []>} : vector<2x1024xbf16>, vector<1024x512xbf16>, vector<2x512xf32> -> vector<2x512xf32>
    %c0_33 = arith.constant 0 : index
    %c4352 = arith.constant 4352 : index
    %70 = vector.load %arg2[%c0_33, %c4352] : memref<1x12672xf32, #tpu.memory_space<vmem>>, vector<1x512xf32>
    %71 = vector.broadcast %70 : vector<1x512xf32> to vector<2x512xf32>
    %72 = arith.mulf %69, %71 : vector<2x512xf32>
    %c0_34 = arith.constant 0 : index
    %c8192 = arith.constant 8192 : index
    %73 = vector.load %arg2[%c0_34, %c8192] : memref<1x12672xf32, #tpu.memory_space<vmem>>, vector<1x512xf32>
    %74 = vector.broadcast %73 : vector<1x512xf32> to vector<2x512xf32>
    %75 = arith.addf %72, %74 : vector<2x512xf32>
    %c0_35 = arith.constant 0 : index
    %c8704 = arith.constant 8704 : index
    %76 = vector.load %arg2[%c0_35, %c8704] : memref<1x12672xf32, #tpu.memory_space<vmem>>, vector<1x512xf32>
    %c0_36 = arith.constant 0 : index
    %c9216 = arith.constant 9216 : index
    %77 = vector.load %arg2[%c0_36, %c9216] : memref<1x12672xf32, #tpu.memory_space<vmem>>, vector<1x512xf32>
    %cst_37 = arith.constant dense<0.000000e+00> : vector<2xf32>
    %78 = vector.multi_reduction <add>, %75, %cst_37 [1] : vector<2x512xf32> to vector<2xf32>
    %79 = vector.shape_cast %78 : vector<2xf32> to vector<2x1xf32>
    %cst_38 = arith.constant 5.120000e+02 : f32
    %80 = vector.broadcast %cst_38 : f32 to vector<2x1xf32>
    %81 = arith.divf %79, %80 : vector<2x1xf32>
    %82 = vector.broadcast %81 : vector<2x1xf32> to vector<2x512xf32>
    %83 = arith.subf %75, %82 : vector<2x512xf32>
    %84 = arith.mulf %83, %83 : vector<2x512xf32>
    %cst_39 = arith.constant dense<0.000000e+00> : vector<2xf32>
    %85 = vector.multi_reduction <add>, %84, %cst_39 [1] : vector<2x512xf32> to vector<2xf32>
    %86 = vector.shape_cast %85 : vector<2xf32> to vector<2x1xf32>
    %cst_40 = arith.constant 5.120000e+02 : f32
    %87 = vector.broadcast %cst_40 : f32 to vector<2x1xf32>
    %88 = arith.divf %86, %87 : vector<2x1xf32>
    %89 = vector.broadcast %81 : vector<2x1xf32> to vector<2x512xf32>
    %90 = arith.subf %75, %89 : vector<2x512xf32>
    %cst_41 = arith.constant 9.99999974E-6 : f32
    %91 = vector.broadcast %cst_41 : f32 to vector<2x1xf32>
    %92 = arith.addf %88, %91 : vector<2x1xf32>
    %93 = math.rsqrt %92 : vector<2x1xf32>
    %94 = vector.broadcast %93 : vector<2x1xf32> to vector<2x512xf32>
    %95 = arith.mulf %90, %94 : vector<2x512xf32>
    %96 = vector.broadcast %76 : vector<1x512xf32> to vector<2x512xf32>
    %97 = arith.mulf %95, %96 : vector<2x512xf32>
    %98 = vector.broadcast %77 : vector<1x512xf32> to vector<2x512xf32>
    %99 = arith.addf %97, %98 : vector<2x512xf32>
    %cst_42 = arith.constant 0.000000e+00 : f32
    %100 = vector.broadcast %cst_42 : f32 to vector<2x512xf32>
    %101 = arith.maximumf %99, %100 : vector<2x512xf32>
    %102 = arith.truncf %101 : vector<2x512xf32> to vector<2x512xbf16>
    %c0_43 = arith.constant 0 : index
    %c0_44 = arith.constant 0 : index
    %103 = vector.load %arg7[%c0_43, %c0_44] : memref<512x256xi8, #tpu.memory_space<vmem>>, vector<512x256xi8>
    %104 = arith.sitofp %103 : vector<512x256xi8> to vector<512x256xbf16>
    %cst_45 = arith.constant dense<0.000000e+00> : vector<2x256xf32>
    %105 = tpu.matmul %102, %104, %cst_45 {dimension_numbers = #tpu.dot_dimension_numbers<[1], [0], [0], [1], [0, 0, 1, 1], [], []>} : vector<2x512xbf16>, vector<512x256xbf16>, vector<2x256xf32> -> vector<2x256xf32>
    %c0_46 = arith.constant 0 : index
    %c4864 = arith.constant 4864 : index
    %106 = vector.load %arg2[%c0_46, %c4864] : memref<1x12672xf32, #tpu.memory_space<vmem>>, vector<1x256xf32>
    %107 = vector.broadcast %106 : vector<1x256xf32> to vector<2x256xf32>
    %108 = arith.mulf %105, %107 : vector<2x256xf32>
    %c0_47 = arith.constant 0 : index
    %c9728 = arith.constant 9728 : index
    %109 = vector.load %arg2[%c0_47, %c9728] : memref<1x12672xf32, #tpu.memory_space<vmem>>, vector<1x256xf32>
    %110 = vector.broadcast %109 : vector<1x256xf32> to vector<2x256xf32>
    %111 = arith.addf %108, %110 : vector<2x256xf32>
    %c0_48 = arith.constant 0 : index
    %c9984 = arith.constant 9984 : index
    %112 = vector.load %arg2[%c0_48, %c9984] : memref<1x12672xf32, #tpu.memory_space<vmem>>, vector<1x256xf32>
    %c0_49 = arith.constant 0 : index
    %c10240 = arith.constant 10240 : index
    %113 = vector.load %arg2[%c0_49, %c10240] : memref<1x12672xf32, #tpu.memory_space<vmem>>, vector<1x256xf32>
    %cst_50 = arith.constant dense<0.000000e+00> : vector<2xf32>
    %114 = vector.multi_reduction <add>, %111, %cst_50 [1] : vector<2x256xf32> to vector<2xf32>
    %115 = vector.shape_cast %114 : vector<2xf32> to vector<2x1xf32>
    %cst_51 = arith.constant 2.560000e+02 : f32
    %116 = vector.broadcast %cst_51 : f32 to vector<2x1xf32>
    %117 = arith.divf %115, %116 : vector<2x1xf32>
    %118 = vector.broadcast %117 : vector<2x1xf32> to vector<2x256xf32>
    %119 = arith.subf %111, %118 : vector<2x256xf32>
    %120 = arith.mulf %119, %119 : vector<2x256xf32>
    %cst_52 = arith.constant dense<0.000000e+00> : vector<2xf32>
    %121 = vector.multi_reduction <add>, %120, %cst_52 [1] : vector<2x256xf32> to vector<2xf32>
    %122 = vector.shape_cast %121 : vector<2xf32> to vector<2x1xf32>
    %cst_53 = arith.constant 2.560000e+02 : f32
    %123 = vector.broadcast %cst_53 : f32 to vector<2x1xf32>
    %124 = arith.divf %122, %123 : vector<2x1xf32>
    %125 = vector.broadcast %117 : vector<2x1xf32> to vector<2x256xf32>
    %126 = arith.subf %111, %125 : vector<2x256xf32>
    %cst_54 = arith.constant 9.99999974E-6 : f32
    %127 = vector.broadcast %cst_54 : f32 to vector<2x1xf32>
    %128 = arith.addf %124, %127 : vector<2x1xf32>
    %129 = math.rsqrt %128 : vector<2x1xf32>
    %130 = vector.broadcast %129 : vector<2x1xf32> to vector<2x256xf32>
    %131 = arith.mulf %126, %130 : vector<2x256xf32>
    %132 = vector.broadcast %112 : vector<1x256xf32> to vector<2x256xf32>
    %133 = arith.mulf %131, %132 : vector<2x256xf32>
    %134 = vector.broadcast %113 : vector<1x256xf32> to vector<2x256xf32>
    %135 = arith.addf %133, %134 : vector<2x256xf32>
    %cst_55 = arith.constant 0.000000e+00 : f32
    %136 = vector.broadcast %cst_55 : f32 to vector<2x256xf32>
    %137 = arith.maximumf %135, %136 : vector<2x256xf32>
    %c184 = arith.constant 184 : index
    %c0_56 = arith.constant 0 : index
    %138 = vector.load %arg8[%c184, %c0_56] : memref<440x128xf32, #tpu.memory_space<vmem>>, vector<256x128xf32>
    %139 = arith.truncf %137 : vector<2x256xf32> to vector<2x256xbf16>
    %140 = arith.truncf %138 : vector<256x128xf32> to vector<256x128xbf16>
    %cst_57 = arith.constant dense<0.000000e+00> : vector<2x128xf32>
    %141 = tpu.matmul %139, %140, %cst_57 {dimension_numbers = #tpu.dot_dimension_numbers<[1], [0], [0], [1], [0, 0, 1, 1], [], []>} : vector<2x256xbf16>, vector<256x128xbf16>, vector<2x128xf32> -> vector<2x128xf32>
    %142 = vector.extract_strided_slice %141 {offsets = [0, 0], sizes = [2, 53], strides = [1, 1]} : vector<2x128xf32> to vector<2x53xf32>
    %c0_58 = arith.constant 0 : index
    %c10496 = arith.constant 10496 : index
    %143 = vector.load %arg2[%c0_58, %c10496] : memref<1x12672xf32, #tpu.memory_space<vmem>>, vector<1x53xf32>
    %144 = vector.broadcast %143 : vector<1x53xf32> to vector<2x53xf32>
    %145 = arith.addf %142, %144 : vector<2x53xf32>
    %146 = vector.extract_strided_slice %27 {offsets = [0, 1024], sizes = [2, 128], strides = [1, 1]} : vector<2x1152xf32> to vector<2x128xf32>
    %c0_59 = arith.constant 0 : index
    %c10624 = arith.constant 10624 : index
    %147 = vector.load %arg2[%c0_59, %c10624] : memref<1x12672xf32, #tpu.memory_space<vmem>>, vector<1x128xf32>
    %148 = vector.broadcast %147 : vector<1x128xf32> to vector<2x128xf32>
    %149 = arith.addf %146, %148 : vector<2x128xf32>
    %c0_60 = arith.constant 0 : index
    %c10752 = arith.constant 10752 : index
    %150 = vector.load %arg2[%c0_60, %c10752] : memref<1x12672xf32, #tpu.memory_space<vmem>>, vector<1x128xf32>
    %c0_61 = arith.constant 0 : index
    %c10880 = arith.constant 10880 : index
    %151 = vector.load %arg2[%c0_61, %c10880] : memref<1x12672xf32, #tpu.memory_space<vmem>>, vector<1x128xf32>
    %cst_62 = arith.constant dense<0.000000e+00> : vector<2xf32>
    %152 = vector.multi_reduction <add>, %149, %cst_62 [1] : vector<2x128xf32> to vector<2xf32>
    %153 = vector.shape_cast %152 : vector<2xf32> to vector<2x1xf32>
    %cst_63 = arith.constant 1.280000e+02 : f32
    %154 = vector.broadcast %cst_63 : f32 to vector<2x1xf32>
    %155 = arith.divf %153, %154 : vector<2x1xf32>
    %156 = vector.broadcast %155 : vector<2x1xf32> to vector<2x128xf32>
    %157 = arith.subf %149, %156 : vector<2x128xf32>
    %158 = arith.mulf %157, %157 : vector<2x128xf32>
    %cst_64 = arith.constant dense<0.000000e+00> : vector<2xf32>
    %159 = vector.multi_reduction <add>, %158, %cst_64 [1] : vector<2x128xf32> to vector<2xf32>
    %160 = vector.shape_cast %159 : vector<2xf32> to vector<2x1xf32>
    %cst_65 = arith.constant 1.280000e+02 : f32
    %161 = vector.broadcast %cst_65 : f32 to vector<2x1xf32>
    %162 = arith.divf %160, %161 : vector<2x1xf32>
    %163 = vector.broadcast %155 : vector<2x1xf32> to vector<2x128xf32>
    %164 = arith.subf %149, %163 : vector<2x128xf32>
    %cst_66 = arith.constant 9.99999974E-6 : f32
    %165 = vector.broadcast %cst_66 : f32 to vector<2x1xf32>
    %166 = arith.addf %162, %165 : vector<2x1xf32>
    %167 = math.rsqrt %166 : vector<2x1xf32>
    %168 = vector.broadcast %167 : vector<2x1xf32> to vector<2x128xf32>
    %169 = arith.mulf %164, %168 : vector<2x128xf32>
    %170 = vector.broadcast %150 : vector<1x128xf32> to vector<2x128xf32>
    %171 = arith.mulf %169, %170 : vector<2x128xf32>
    %172 = vector.broadcast %151 : vector<1x128xf32> to vector<2x128xf32>
    %173 = arith.addf %171, %172 : vector<2x128xf32>
    %cst_67 = arith.constant 0.000000e+00 : f32
    %174 = vector.broadcast %cst_67 : f32 to vector<2x128xf32>
    %175 = arith.maximumf %173, %174 : vector<2x128xf32>
    %c56 = arith.constant 56 : index
    %c0_68 = arith.constant 0 : index
    %176 = vector.load %arg8[%c56, %c0_68] : memref<440x128xf32, #tpu.memory_space<vmem>>, vector<128x128xf32>
    %177 = arith.truncf %175 : vector<2x128xf32> to vector<2x128xbf16>
    %178 = arith.truncf %176 : vector<128x128xf32> to vector<128x128xbf16>
    %cst_69 = arith.constant dense<0.000000e+00> : vector<2x128xf32>
    %179 = tpu.matmul %177, %178, %cst_69 {dimension_numbers = #tpu.dot_dimension_numbers<[1], [0], [0], [1], [0, 0, 1, 1], [], []>} : vector<2x128xbf16>, vector<128x128xbf16>, vector<2x128xf32> -> vector<2x128xf32>
    %c0_70 = arith.constant 0 : index
    %c11008 = arith.constant 11008 : index
    %180 = vector.load %arg2[%c0_70, %c11008] : memref<1x12672xf32, #tpu.memory_space<vmem>>, vector<1x128xf32>
    %181 = vector.broadcast %180 : vector<1x128xf32> to vector<2x128xf32>
    %182 = arith.addf %179, %181 : vector<2x128xf32>
    %c0_71 = arith.constant 0 : index
    %c11136 = arith.constant 11136 : index
    %183 = vector.load %arg2[%c0_71, %c11136] : memref<1x12672xf32, #tpu.memory_space<vmem>>, vector<1x128xf32>
    %c0_72 = arith.constant 0 : index
    %c11264 = arith.constant 11264 : index
    %184 = vector.load %arg2[%c0_72, %c11264] : memref<1x12672xf32, #tpu.memory_space<vmem>>, vector<1x128xf32>
    %cst_73 = arith.constant dense<0.000000e+00> : vector<2xf32>
    %185 = vector.multi_reduction <add>, %182, %cst_73 [1] : vector<2x128xf32> to vector<2xf32>
    %186 = vector.shape_cast %185 : vector<2xf32> to vector<2x1xf32>
    %cst_74 = arith.constant 1.280000e+02 : f32
    %187 = vector.broadcast %cst_74 : f32 to vector<2x1xf32>
    %188 = arith.divf %186, %187 : vector<2x1xf32>
    %189 = vector.broadcast %188 : vector<2x1xf32> to vector<2x128xf32>
    %190 = arith.subf %182, %189 : vector<2x128xf32>
    %191 = arith.mulf %190, %190 : vector<2x128xf32>
    %cst_75 = arith.constant dense<0.000000e+00> : vector<2xf32>
    %192 = vector.multi_reduction <add>, %191, %cst_75 [1] : vector<2x128xf32> to vector<2xf32>
    %193 = vector.shape_cast %192 : vector<2xf32> to vector<2x1xf32>
    %cst_76 = arith.constant 1.280000e+02 : f32
    %194 = vector.broadcast %cst_76 : f32 to vector<2x1xf32>
    %195 = arith.divf %193, %194 : vector<2x1xf32>
    %196 = vector.broadcast %188 : vector<2x1xf32> to vector<2x128xf32>
    %197 = arith.subf %182, %196 : vector<2x128xf32>
    %cst_77 = arith.constant 9.99999974E-6 : f32
    %198 = vector.broadcast %cst_77 : f32 to vector<2x1xf32>
    %199 = arith.addf %195, %198 : vector<2x1xf32>
    %200 = math.rsqrt %199 : vector<2x1xf32>
    %201 = vector.broadcast %200 : vector<2x1xf32> to vector<2x128xf32>
    %202 = arith.mulf %197, %201 : vector<2x128xf32>
    %203 = vector.broadcast %183 : vector<1x128xf32> to vector<2x128xf32>
    %204 = arith.mulf %202, %203 : vector<2x128xf32>
    %205 = vector.broadcast %184 : vector<1x128xf32> to vector<2x128xf32>
    %206 = arith.addf %204, %205 : vector<2x128xf32>
    %cst_78 = arith.constant 0.000000e+00 : f32
    %207 = vector.broadcast %cst_78 : f32 to vector<2x128xf32>
    %208 = arith.maximumf %206, %207 : vector<2x128xf32>
    %c128_79 = arith.constant 128 : index
    %c0_80 = arith.constant 0 : index
    %209 = vector.load %arg9[%c128_79, %c0_80] : memref<256x32xf32, #tpu.memory_space<vmem>>, vector<128x32xf32>
    %210 = arith.truncf %208 : vector<2x128xf32> to vector<2x128xbf16>
    %211 = arith.truncf %209 : vector<128x32xf32> to vector<128x32xbf16>
    %cst_81 = arith.constant dense<0.000000e+00> : vector<2x32xf32>
    %212 = tpu.matmul %210, %211, %cst_81 {dimension_numbers = #tpu.dot_dimension_numbers<[1], [0], [0], [1], [0, 0, 1, 1], [], []>} : vector<2x128xbf16>, vector<128x32xbf16>, vector<2x32xf32> -> vector<2x32xf32>
    %213 = vector.extract_strided_slice %212 {offsets = [0, 0], sizes = [2, 3], strides = [1, 1]} : vector<2x32xf32> to vector<2x3xf32>
    %c0_82 = arith.constant 0 : index
    %c0_83 = arith.constant 0 : index
    %214 = vector.load %arg9[%c0_82, %c0_83] : memref<256x32xf32, #tpu.memory_space<vmem>>, vector<3x32xf32>
    %215 = arith.truncf %213 : vector<2x3xf32> to vector<2x3xbf16>
    %216 = arith.truncf %214 : vector<3x32xf32> to vector<3x32xbf16>
    %cst_84 = arith.constant dense<0.000000e+00> : vector<2x32xf32>
    %217 = tpu.matmul %215, %216, %cst_84 {dimension_numbers = #tpu.dot_dimension_numbers<[1], [0], [0], [1], [0, 0, 1, 1], [], []>} : vector<2x3xbf16>, vector<3x32xbf16>, vector<2x32xf32> -> vector<2x32xf32>
    %c8 = arith.constant 8 : index
    %c0_85 = arith.constant 0 : index
    %218 = vector.load %arg9[%c8, %c0_85] : memref<256x32xf32, #tpu.memory_space<vmem>>, vector<18x32xf32>
    %219 = arith.truncf %2 : vector<2x18xf32> to vector<2x18xbf16>
    %220 = arith.truncf %218 : vector<18x32xf32> to vector<18x32xbf16>
    %cst_86 = arith.constant dense<0.000000e+00> : vector<2x32xf32>
    %221 = tpu.matmul %219, %220, %cst_86 {dimension_numbers = #tpu.dot_dimension_numbers<[1], [0], [0], [1], [0, 0, 1, 1], [], []>} : vector<2x18xbf16>, vector<18x32xbf16>, vector<2x32xf32> -> vector<2x32xf32>
    %222 = arith.addf %217, %221 : vector<2x32xf32>
    %c0_87 = arith.constant 0 : index
    %c11392 = arith.constant 11392 : index
    %223 = vector.load %arg2[%c0_87, %c11392] : memref<1x12672xf32, #tpu.memory_space<vmem>>, vector<1x32xf32>
    %224 = vector.broadcast %223 : vector<1x32xf32> to vector<2x32xf32>
    %225 = arith.addf %222, %224 : vector<2x32xf32>
    %c0_88 = arith.constant 0 : index
    %c11520 = arith.constant 11520 : index
    %226 = vector.load %arg2[%c0_88, %c11520] : memref<1x12672xf32, #tpu.memory_space<vmem>>, vector<1x32xf32>
    %c0_89 = arith.constant 0 : index
    %c11648 = arith.constant 11648 : index
    %227 = vector.load %arg2[%c0_89, %c11648] : memref<1x12672xf32, #tpu.memory_space<vmem>>, vector<1x32xf32>
    %cst_90 = arith.constant dense<0.000000e+00> : vector<2xf32>
    %228 = vector.multi_reduction <add>, %225, %cst_90 [1] : vector<2x32xf32> to vector<2xf32>
    %229 = vector.shape_cast %228 : vector<2xf32> to vector<2x1xf32>
    %cst_91 = arith.constant 3.200000e+01 : f32
    %230 = vector.broadcast %cst_91 : f32 to vector<2x1xf32>
    %231 = arith.divf %229, %230 : vector<2x1xf32>
    %232 = vector.broadcast %231 : vector<2x1xf32> to vector<2x32xf32>
    %233 = arith.subf %225, %232 : vector<2x32xf32>
    %234 = arith.mulf %233, %233 : vector<2x32xf32>
    %cst_92 = arith.constant dense<0.000000e+00> : vector<2xf32>
    %235 = vector.multi_reduction <add>, %234, %cst_92 [1] : vector<2x32xf32> to vector<2xf32>
    %236 = vector.shape_cast %235 : vector<2xf32> to vector<2x1xf32>
    %cst_93 = arith.constant 3.200000e+01 : f32
    %237 = vector.broadcast %cst_93 : f32 to vector<2x1xf32>
    %238 = arith.divf %236, %237 : vector<2x1xf32>
    %239 = vector.broadcast %231 : vector<2x1xf32> to vector<2x32xf32>
    %240 = arith.subf %225, %239 : vector<2x32xf32>
    %cst_94 = arith.constant 9.99999974E-6 : f32
    %241 = vector.broadcast %cst_94 : f32 to vector<2x1xf32>
    %242 = arith.addf %238, %241 : vector<2x1xf32>
    %243 = math.rsqrt %242 : vector<2x1xf32>
    %244 = vector.broadcast %243 : vector<2x1xf32> to vector<2x32xf32>
    %245 = arith.mulf %240, %244 : vector<2x32xf32>
    %246 = vector.broadcast %226 : vector<1x32xf32> to vector<2x32xf32>
    %247 = arith.mulf %245, %246 : vector<2x32xf32>
    %248 = vector.broadcast %227 : vector<1x32xf32> to vector<2x32xf32>
    %249 = arith.addf %247, %248 : vector<2x32xf32>
    %cst_95 = arith.constant 0.000000e+00 : f32
    %250 = vector.broadcast %cst_95 : f32 to vector<2x32xf32>
    %251 = arith.maximumf %249, %250 : vector<2x32xf32>
    %c32 = arith.constant 32 : index
    %c0_96 = arith.constant 0 : index
    %252 = vector.load %arg9[%c32, %c0_96] : memref<256x32xf32, #tpu.memory_space<vmem>>, vector<32x32xf32>
    %253 = arith.truncf %251 : vector<2x32xf32> to vector<2x32xbf16>
    %254 = arith.truncf %252 : vector<32x32xf32> to vector<32x32xbf16>
    %cst_97 = arith.constant dense<0.000000e+00> : vector<2x32xf32>
    %255 = tpu.matmul %253, %254, %cst_97 {dimension_numbers = #tpu.dot_dimension_numbers<[1], [0], [0], [1], [0, 0, 1, 1], [], []>} : vector<2x32xbf16>, vector<32x32xbf16>, vector<2x32xf32> -> vector<2x32xf32>
    %c0_98 = arith.constant 0 : index
    %c11776 = arith.constant 11776 : index
    %256 = vector.load %arg2[%c0_98, %c11776] : memref<1x12672xf32, #tpu.memory_space<vmem>>, vector<1x32xf32>
    %257 = vector.broadcast %256 : vector<1x32xf32> to vector<2x32xf32>
    %258 = arith.addf %255, %257 : vector<2x32xf32>
    %c0_99 = arith.constant 0 : index
    %c11904 = arith.constant 11904 : index
    %259 = vector.load %arg2[%c0_99, %c11904] : memref<1x12672xf32, #tpu.memory_space<vmem>>, vector<1x32xf32>
    %c0_100 = arith.constant 0 : index
    %c12032 = arith.constant 12032 : index
    %260 = vector.load %arg2[%c0_100, %c12032] : memref<1x12672xf32, #tpu.memory_space<vmem>>, vector<1x32xf32>
    %cst_101 = arith.constant dense<0.000000e+00> : vector<2xf32>
    %261 = vector.multi_reduction <add>, %258, %cst_101 [1] : vector<2x32xf32> to vector<2xf32>
    %262 = vector.shape_cast %261 : vector<2xf32> to vector<2x1xf32>
    %cst_102 = arith.constant 3.200000e+01 : f32
    %263 = vector.broadcast %cst_102 : f32 to vector<2x1xf32>
    %264 = arith.divf %262, %263 : vector<2x1xf32>
    %265 = vector.broadcast %264 : vector<2x1xf32> to vector<2x32xf32>
    %266 = arith.subf %258, %265 : vector<2x32xf32>
    %267 = arith.mulf %266, %266 : vector<2x32xf32>
    %cst_103 = arith.constant dense<0.000000e+00> : vector<2xf32>
    %268 = vector.multi_reduction <add>, %267, %cst_103 [1] : vector<2x32xf32> to vector<2xf32>
    %269 = vector.shape_cast %268 : vector<2xf32> to vector<2x1xf32>
    %cst_104 = arith.constant 3.200000e+01 : f32
    %270 = vector.broadcast %cst_104 : f32 to vector<2x1xf32>
    %271 = arith.divf %269, %270 : vector<2x1xf32>
    %272 = vector.broadcast %264 : vector<2x1xf32> to vector<2x32xf32>
    %273 = arith.subf %258, %272 : vector<2x32xf32>
    %cst_105 = arith.constant 9.99999974E-6 : f32
    %274 = vector.broadcast %cst_105 : f32 to vector<2x1xf32>
    %275 = arith.addf %271, %274 : vector<2x1xf32>
    %276 = math.rsqrt %275 : vector<2x1xf32>
    %277 = vector.broadcast %276 : vector<2x1xf32> to vector<2x32xf32>
    %278 = arith.mulf %273, %277 : vector<2x32xf32>
    %279 = vector.broadcast %259 : vector<1x32xf32> to vector<2x32xf32>
    %280 = arith.mulf %278, %279 : vector<2x32xf32>
    %281 = vector.broadcast %260 : vector<1x32xf32> to vector<2x32xf32>
    %282 = arith.addf %280, %281 : vector<2x32xf32>
    %cst_106 = arith.constant 0.000000e+00 : f32
    %283 = vector.broadcast %cst_106 : f32 to vector<2x32xf32>
    %284 = arith.maximumf %282, %283 : vector<2x32xf32>
    %c64 = arith.constant 64 : index
    %c0_107 = arith.constant 0 : index
    %285 = vector.load %arg9[%c64, %c0_107] : memref<256x32xf32, #tpu.memory_space<vmem>>, vector<32x32xf32>
    %286 = arith.truncf %284 : vector<2x32xf32> to vector<2x32xbf16>
    %287 = arith.truncf %285 : vector<32x32xf32> to vector<32x32xbf16>
    %cst_108 = arith.constant dense<0.000000e+00> : vector<2x32xf32>
    %288 = tpu.matmul %286, %287, %cst_108 {dimension_numbers = #tpu.dot_dimension_numbers<[1], [0], [0], [1], [0, 0, 1, 1], [], []>} : vector<2x32xbf16>, vector<32x32xbf16>, vector<2x32xf32> -> vector<2x32xf32>
    %c0_109 = arith.constant 0 : index
    %c12160 = arith.constant 12160 : index
    %289 = vector.load %arg2[%c0_109, %c12160] : memref<1x12672xf32, #tpu.memory_space<vmem>>, vector<1x32xf32>
    %290 = vector.broadcast %289 : vector<1x32xf32> to vector<2x32xf32>
    %291 = arith.addf %288, %290 : vector<2x32xf32>
    %c0_110 = arith.constant 0 : index
    %c12288 = arith.constant 12288 : index
    %292 = vector.load %arg2[%c0_110, %c12288] : memref<1x12672xf32, #tpu.memory_space<vmem>>, vector<1x32xf32>
    %c0_111 = arith.constant 0 : index
    %c12416 = arith.constant 12416 : index
    %293 = vector.load %arg2[%c0_111, %c12416] : memref<1x12672xf32, #tpu.memory_space<vmem>>, vector<1x32xf32>
    %cst_112 = arith.constant dense<0.000000e+00> : vector<2xf32>
    %294 = vector.multi_reduction <add>, %291, %cst_112 [1] : vector<2x32xf32> to vector<2xf32>
    %295 = vector.shape_cast %294 : vector<2xf32> to vector<2x1xf32>
    %cst_113 = arith.constant 3.200000e+01 : f32
    %296 = vector.broadcast %cst_113 : f32 to vector<2x1xf32>
    %297 = arith.divf %295, %296 : vector<2x1xf32>
    %298 = vector.broadcast %297 : vector<2x1xf32> to vector<2x32xf32>
    %299 = arith.subf %291, %298 : vector<2x32xf32>
    %300 = arith.mulf %299, %299 : vector<2x32xf32>
    %cst_114 = arith.constant dense<0.000000e+00> : vector<2xf32>
    %301 = vector.multi_reduction <add>, %300, %cst_114 [1] : vector<2x32xf32> to vector<2xf32>
    %302 = vector.shape_cast %301 : vector<2xf32> to vector<2x1xf32>
    %cst_115 = arith.constant 3.200000e+01 : f32
    %303 = vector.broadcast %cst_115 : f32 to vector<2x1xf32>
    %304 = arith.divf %302, %303 : vector<2x1xf32>
    %305 = vector.broadcast %297 : vector<2x1xf32> to vector<2x32xf32>
    %306 = arith.subf %291, %305 : vector<2x32xf32>
    %cst_116 = arith.constant 9.99999974E-6 : f32
    %307 = vector.broadcast %cst_116 : f32 to vector<2x1xf32>
    %308 = arith.addf %304, %307 : vector<2x1xf32>
    %309 = math.rsqrt %308 : vector<2x1xf32>
    %310 = vector.broadcast %309 : vector<2x1xf32> to vector<2x32xf32>
    %311 = arith.mulf %306, %310 : vector<2x32xf32>
    %312 = vector.broadcast %292 : vector<1x32xf32> to vector<2x32xf32>
    %313 = arith.mulf %311, %312 : vector<2x32xf32>
    %314 = vector.broadcast %293 : vector<1x32xf32> to vector<2x32xf32>
    %315 = arith.addf %313, %314 : vector<2x32xf32>
    %cst_117 = arith.constant 0.000000e+00 : f32
    %316 = vector.broadcast %cst_117 : f32 to vector<2x32xf32>
    %317 = arith.maximumf %315, %316 : vector<2x32xf32>
    %c96 = arith.constant 96 : index
    %c0_118 = arith.constant 0 : index
    %318 = vector.load %arg9[%c96, %c0_118] : memref<256x32xf32, #tpu.memory_space<vmem>>, vector<32x32xf32>
    %319 = arith.truncf %317 : vector<2x32xf32> to vector<2x32xbf16>
    %320 = arith.truncf %318 : vector<32x32xf32> to vector<32x32xbf16>
    %cst_119 = arith.constant dense<0.000000e+00> : vector<2x32xf32>
    %321 = tpu.matmul %319, %320, %cst_119 {dimension_numbers = #tpu.dot_dimension_numbers<[1], [0], [0], [1], [0, 0, 1, 1], [], []>} : vector<2x32xbf16>, vector<32x32xbf16>, vector<2x32xf32> -> vector<2x32xf32>
    %322 = vector.extract_strided_slice %321 {offsets = [0, 0], sizes = [2, 6], strides = [1, 1]} : vector<2x32xf32> to vector<2x6xf32>
    %c0_120 = arith.constant 0 : index
    %c12544 = arith.constant 12544 : index
    %323 = vector.load %arg2[%c0_120, %c12544] : memref<1x12672xf32, #tpu.memory_space<vmem>>, vector<1x6xf32>
    %324 = vector.broadcast %323 : vector<1x6xf32> to vector<2x6xf32>
    %325 = arith.addf %322, %324 : vector<2x6xf32>
    %326 = math.exp %145 : vector<2x53xf32>
    %cst_121 = arith.constant 0.000000e+00 : f32
    %327 = vector.broadcast %cst_121 : f32 to vector<2x53xf32>
    %328 = arith.cmpf ole, %1, %327 : vector<2x53xf32>
    %cst_122 = arith.constant 1.000000e-30 : f32
    %329 = vector.broadcast %cst_122 : f32 to vector<2x53xf32>
    %330 = arith.maximumf %1, %329 : vector<2x53xf32>
    %331 = math.log %330 : vector<2x53xf32>
    %332 = arith.mulf %326, %331 : vector<2x53xf32>
    %333 = math.exp %332 : vector<2x53xf32>
    %cst_123 = arith.constant 0.000000e+00 : f32
    %334 = vector.broadcast %cst_123 : f32 to vector<2x53xf32>
    %335 = arith.select %328, %334, %333 : vector<2x53xi1>, vector<2x53xf32>
    %cst_124 = arith.constant 0.000000e+00 : f32
    %336 = vector.broadcast %cst_124 : f32 to vector<2x13xf32>
    %337 = tpu.concatenate %335, %213, %325, %145, %336 in 1 : vector<2x53xf32>, vector<2x3xf32>, vector<2x6xf32>, vector<2x53xf32>, vector<2x13xf32> -> vector<2x128xf32>
    %c0_125 = arith.constant 0 : index
    %c0_126 = arith.constant 0 : index
    %338 = vector.load %arg10[%c0_125, %c0_126] : memref<2x128xf32, #tpu.memory_space<vmem>>, vector<2x128xf32>
    tpu.vector_store %arg10[%c0_125, %c0_126], %337 {strides = array<i32>} : memref<2x128xf32, #tpu.memory_space<vmem>>, vector<2x128xf32>,
    return
  }
  func.func @transform_0(%arg0: i32) -> (i32, i32) {
    %c0_i32 = arith.constant 0 : i32
    %c0_i32_0 = arith.constant 0 : i32
    return %arg0, %c0_i32 : i32, i32
  }
  func.func @transform_1(%arg0: i32) -> (i32, i32) {
    %c0_i32 = arith.constant 0 : i32
    %c0_i32_0 = arith.constant 0 : i32
    %c0_i32_1 = arith.constant 0 : i32
    return %c0_i32, %c0_i32_0 : i32, i32
  }
  func.func @transform_2(%arg0: i32) -> (i32, i32) {
    %c0_i32 = arith.constant 0 : i32
    %c0_i32_0 = arith.constant 0 : i32
    %c0_i32_1 = arith.constant 0 : i32
    return %c0_i32, %c0_i32_0 : i32, i32
  }
  func.func @transform_3(%arg0: i32) -> (i32, i32) {
    %c0_i32 = arith.constant 0 : i32
    %c0_i32_0 = arith.constant 0 : i32
    %c0_i32_1 = arith.constant 0 : i32
    return %c0_i32, %c0_i32_0 : i32, i32
  }
  func.func @transform_4(%arg0: i32) -> (i32, i32) {
    %c0_i32 = arith.constant 0 : i32
    %c0_i32_0 = arith.constant 0 : i32
    %c0_i32_1 = arith.constant 0 : i32
    return %c0_i32, %c0_i32_0 : i32, i32
  }
  func.func @transform_5(%arg0: i32) -> (i32, i32) {
    %c0_i32 = arith.constant 0 : i32
    %c0_i32_0 = arith.constant 0 : i32
    %c0_i32_1 = arith.constant 0 : i32
    return %c0_i32, %c0_i32_0 : i32, i32
  }
  func.func @transform_6(%arg0: i32) -> (i32, i32) {
    %c0_i32 = arith.constant 0 : i32
    %c0_i32_0 = arith.constant 0 : i32
    %c0_i32_1 = arith.constant 0 : i32
    return %c0_i32, %c0_i32_0 : i32, i32
  }
  func.func @transform_7(%arg0: i32) -> (i32, i32) {
    %c0_i32 = arith.constant 0 : i32
    %c0_i32_0 = arith.constant 0 : i32
    %c0_i32_1 = arith.constant 0 : i32
    return %c0_i32, %c0_i32_0 : i32, i32
  }
  func.func @transform_8(%arg0: i32) -> (i32, i32) {
    %c0_i32 = arith.constant 0 : i32
    %c0_i32_0 = arith.constant 0 : i32
    %c0_i32_1 = arith.constant 0 : i32
    return %c0_i32, %c0_i32_0 : i32, i32
  }
  func.func @transform_9(%arg0: i32) -> (i32, i32) {
    %c0_i32 = arith.constant 0 : i32
    %c0_i32_0 = arith.constant 0 : i32
    return %arg0, %c0_i32 : i32, i32
  }
}

</mosaic_0001>

<llo_original>
// kernel: tpu_custom_call.1
$region0: #{tpu_custom_call.1}
  #allocation0 [shape = 'u32[]', space=smem, size = 0x4, offset = 0x4, fixed_abs, tag = 'smem constant byte address 0x4 - core index']
  #allocation1 [shape = 'u32[144,128]{1,0:T(1,128)}', space=vmem, size = 0x12000, scoped, tag = 'internal scratch']
  %s0 = inlined_call_operand.hbm [shape: f32[2,384], index: 0, kind: input, shape index: {}]
  %s1 = inlined_call_operand.hbm [shape: f32[1,12672], index: 1, kind: input, shape index: {}]
  %s2 = inlined_call_operand.hbm [shape: f32[3,2048], index: 2, kind: input, shape index: {}]
  %s3 = inlined_call_operand.hbm [shape: s8[2048,1152], index: 3, kind: input, shape index: {}]
  %s4 = inlined_call_operand.hbm [shape: s8[128,1024], index: 4, kind: input, shape index: {}]
  %s5 = inlined_call_operand.hbm [shape: s8[1024,512], index: 5, kind: input, shape index: {}]
  %s6 = inlined_call_operand.hbm [shape: s8[512,256], index: 6, kind: input, shape index: {}]
  %s7 = inlined_call_operand.hbm [shape: f32[440,128], index: 7, kind: input, shape index: {}]
  %s8 = inlined_call_operand.vmem [shape: f32[256,32], index: 8, kind: input, shape index: {}]
  %s9 = inlined_call_operand.hbm [shape: f32[2,128], index: 9, kind: output, shape index: {}]
  %s10 = sld [smem:[#allocation0]]
  $region78: #{tpu_custom_call.1} parent=0
    _
  %s12 = ssub.s32 1, %s10
  %s13 = scalar_select 0, %s12, %s10
  $region1: #{tpu_custom_call.1} parent=0
    #allocation2 [shape = 'u8[3072]{0}', space=vmem, size = 0xc00, scoped, tag = 'input window, operand 0, single buffered']
    #allocation3 [shape = 's32[1]{0}', space=sflag, size = 0x4, scoped, tag = 'scoped memory for tpu_custom_call.1']
    #allocation4 [shape = 's32[1]{0}', space=sflag, size = 0x4, scoped, tag = 'scoped memory for tpu_custom_call.1']
    #allocation5 [shape = 'u8[50688]{0}', space=vmem, size = 0xc800, scoped, tag = 'input window, operand 1, single buffered']
    #allocation6 [shape = 's32[1]{0}', space=sflag, size = 0x4, scoped, tag = 'scoped memory for tpu_custom_call.1']
    #allocation7 [shape = 'u8[32768]{0}', space=vmem, size = 0x8000, scoped, tag = 'input window, operand 2, single buffered']
    #allocation8 [shape = 'u8[2359296]{0}', space=vmem, size = 0x240000, scoped, tag = 'input window, operand 3, single buffered']
    #allocation9 [shape = 's32[1]{0}', space=sflag, size = 0x4, scoped, tag = 'scoped memory for tpu_custom_call.1']
    #allocation10 [shape = 'u8[131072]{0}', space=vmem, size = 0x20000, scoped, tag = 'input window, operand 4, single buffered']
    #allocation11 [shape = 'u8[524288]{0}', space=vmem, size = 0x80000, scoped, tag = 'input window, operand 5, single buffered']
    #allocation12 [shape = 's32[1]{0}', space=sflag, size = 0x4, scoped, tag = 'scoped memory for tpu_custom_call.1']
    #allocation13 [shape = 'u8[131072]{0}', space=vmem, size = 0x20000, scoped, tag = 'input window, operand 6, single buffered']
    #allocation14 [shape = 'u8[225280]{0}', space=vmem, size = 0x37000, scoped, tag = 'input window, operand 7, single buffered']
    #allocation15 [shape = 's32[1]{0}', space=sflag, size = 0x4, scoped, tag = 'scoped memory for tpu_custom_call.1']
    #allocation16 [shape = 'u8[1024]{0}', space=vmem, size = 0x400, scoped, tag = 'output window, operand 0, single buffered']
    %14 = vsyncpa [#allocation3], 0
    %15 = vsyncpa [#allocation6], 0
    %16 = vsyncpa [#allocation9], 0
    %17 = vsyncpa [#allocation12], 0
    %18 = vsyncpa [#allocation15], 0
    %19 = vsyncpa [#allocation4], 0
    // Predicated region
    $region2: #{tpu_custom_call.1} parent=1 // pred_check
      _
    $region3: #{tpu_custom_call.1} parent=1 // pred_check_branch
      %21 = sbr.rel (0) target = $region5
    $region4: #{tpu_custom_call.1} parent=1 // pred_region
      %s23 = ssub.s32 96, 96
      %24 = vsyncadd [#allocation3], %s23
      %s26 = sshll.u32 [#allocation2], 4
      %s27 = int_to_ptr.vmem [resolvable:$true] %s26
      %29 = dma.hbm_to_vmem [thread:$0]  %s0, 96, %s27, [#allocation3]
    $region5: #{tpu_custom_call.1} parent=1 // pred_fallthru
      _
    // Predicated region
    $region6: #{tpu_custom_call.1} parent=1 // pred_check
      _
    $region7: #{tpu_custom_call.1} parent=1 // pred_check_branch
      %31 = sbr.rel (0) target = $region9
    $region8: #{tpu_custom_call.1} parent=1 // pred_region
      %s33 = ssub.s32 1584, 1584
      %34 = vsyncadd [#allocation6], %s33
      %s36 = sshll.u32 [#allocation5], 4
      %s37 = int_to_ptr.vmem [resolvable:$true] %s36
      %39 = dma.hbm_to_vmem [thread:$0]  %s1, 1584, %s37, [#allocation6]
    $region9: #{tpu_custom_call.1} parent=1 // pred_fallthru
      _
    // Predicated region
    $region10: #{tpu_custom_call.1} parent=1 // pred_check
      _
    $region11: #{tpu_custom_call.1} parent=1 // pred_check_branch
      %41 = sbr.rel (0) target = $region13
    $region12: #{tpu_custom_call.1} parent=1 // pred_region
      %s43 = ssub.s32 1024, 1024
      %44 = vsyncadd [#allocation6], %s43
      %s46 = sshll.u32 [#allocation7], 4
      %s47 = int_to_ptr.vmem [resolvable:$true] %s46
      %49 = dma.hbm_to_vmem [thread:$0]  %s2, 1024, %s47, [#allocation6]
    $region13: #{tpu_custom_call.1} parent=1 // pred_fallthru
      _
    // Predicated region
    $region14: #{tpu_custom_call.1} parent=1 // pred_check
      _
    $region15: #{tpu_custom_call.1} parent=1 // pred_check_branch
      %51 = sbr.rel (0) target = $region17
    $region16: #{tpu_custom_call.1} parent=1 // pred_region
      %s53 = ssub.s32 73728, 73728
      %54 = vsyncadd [#allocation9], %s53
      %s55 = sshll.u32 [#allocation8], 4
      %s56 = int_to_ptr.vmem [resolvable:$true] %s55
      %61 = dma.hbm_to_vmem [thread:$0]  %s3, 73728, %s56, [#allocation9], 1152, 1152, 72
    $region17: #{tpu_custom_call.1} parent=1 // pred_fallthru
      _
    // Predicated region
    $region18: #{tpu_custom_call.1} parent=1 // pred_check
      _
    $region19: #{tpu_custom_call.1} parent=1 // pred_check_branch
      %63 = sbr.rel (0) target = $region21
    $region20: #{tpu_custom_call.1} parent=1 // pred_region
      %s65 = ssub.s32 4096, 4096
      %66 = vsyncadd [#allocation9], %s65
      %s67 = sshll.u32 [#allocation10], 4
      %s68 = int_to_ptr.vmem [resolvable:$true] %s67
      %73 = dma.hbm_to_vmem [thread:$0]  %s4, 4096, %s68, [#allocation9], 1024, 1024, 64
    $region21: #{tpu_custom_call.1} parent=1 // pred_fallthru
      _
    // Predicated region
    $region22: #{tpu_custom_call.1} parent=1 // pred_check
      _
    $region23: #{tpu_custom_call.1} parent=1 // pred_check_branch
      %75 = sbr.rel (0) target = $region25
    $region24: #{tpu_custom_call.1} parent=1 // pred_region
      %s77 = ssub.s32 16384, 16384
      %78 = vsyncadd [#allocation12], %s77
      %s79 = sshll.u32 [#allocation11], 4
      %s80 = int_to_ptr.vmem [resolvable:$true] %s79
      %85 = dma.hbm_to_vmem [thread:$0]  %s5, 16384, %s80, [#allocation12], 512, 512, 32
    $region25: #{tpu_custom_call.1} parent=1 // pred_fallthru
      _
    // Predicated region
    $region26: #{tpu_custom_call.1} parent=1 // pred_check
      _
    $region27: #{tpu_custom_call.1} parent=1 // pred_check_branch
      %87 = sbr.rel (0) target = $region29
    $region28: #{tpu_custom_call.1} parent=1 // pred_region
      %s89 = ssub.s32 4096, 4096
      %90 = vsyncadd [#allocation12], %s89
      %s91 = sshll.u32 [#allocation13], 4
      %s92 = int_to_ptr.vmem [resolvable:$true] %s91
      %97 = dma.hbm_to_vmem [thread:$0]  %s6, 4096, %s92, [#allocation12], 256, 256, 16
    $region29: #{tpu_custom_call.1} parent=1 // pred_fallthru
      _
    // Predicated region
    $region30: #{tpu_custom_call.1} parent=1 // pred_check
      _
    $region31: #{tpu_custom_call.1} parent=1 // pred_check_branch
      %99 = sbr.rel (0) target = $region33
    $region32: #{tpu_custom_call.1} parent=1 // pred_region
      %s101 = ssub.s32 7040, 7040
      %102 = vsyncadd [#allocation15], %s101
      %s103 = sshll.u32 [#allocation14], 4
      %s104 = int_to_ptr.vmem [resolvable:$true] %s103
      %109 = dma.hbm_to_vmem [thread:$0]  %s7, 7040, %s104, [#allocation15], 128, 128, 8
    $region33: #{tpu_custom_call.1} parent=1 // pred_fallthru
      _
    // Predicated region
    $region34: #{tpu_custom_call.1} parent=1 // pred_check
      _
    $region35: #{tpu_custom_call.1} parent=1 // pred_check_branch
      %111 = sbr.rel (0) target = $region37
    $region36: #{tpu_custom_call.1} parent=1 // pred_region
      _
    $region37: #{tpu_custom_call.1} parent=1 // pred_fallthru
      _
    // Predicated region
    $region38: #{tpu_custom_call.1} parent=1 // pred_check
      _
    $region39: #{tpu_custom_call.1} parent=1 // pred_check_branch
      %113 = sbr.rel (0) target = $region41
    $region40: #{tpu_custom_call.1} parent=1 // pred_region
      %114 = dma.done [#allocation3], 96
    $region41: #{tpu_custom_call.1} parent=1 // pred_fallthru
      _
    // Predicated region
    $region42: #{tpu_custom_call.1} parent=1 // pred_check
      _
    $region43: #{tpu_custom_call.1} parent=1 // pred_check_branch
      %116 = sbr.rel (0) target = $region45
    $region44: #{tpu_custom_call.1} parent=1 // pred_region
      %117 = dma.done [#allocation6], 1584
    $region45: #{tpu_custom_call.1} parent=1 // pred_fallthru
      _
    // Predicated region
    $region46: #{tpu_custom_call.1} parent=1 // pred_check
      _
    $region47: #{tpu_custom_call.1} parent=1 // pred_check_branch
      %119 = sbr.rel (0) target = $region49
    $region48: #{tpu_custom_call.1} parent=1 // pred_region
      %120 = dma.done [#allocation6], 1024
    $region49: #{tpu_custom_call.1} parent=1 // pred_fallthru
      _
    // Predicated region
    $region50: #{tpu_custom_call.1} parent=1 // pred_check
      _
    $region51: #{tpu_custom_call.1} parent=1 // pred_check_branch
      %122 = sbr.rel (0) target = $region53
    $region52: #{tpu_custom_call.1} parent=1 // pred_region
      %123 = dma.done [#allocation9], 73728
    $region53: #{tpu_custom_call.1} parent=1 // pred_fallthru
      _
    // Predicated region
    $region54: #{tpu_custom_call.1} parent=1 // pred_check
      _
    $region55: #{tpu_custom_call.1} parent=1 // pred_check_branch
      %125 = sbr.rel (0) target = $region57
    $region56: #{tpu_custom_call.1} parent=1 // pred_region
      %126 = dma.done [#allocation9], 4096
    $region57: #{tpu_custom_call.1} parent=1 // pred_fallthru
      _
    // Predicated region
    $region58: #{tpu_custom_call.1} parent=1 // pred_check
      _
    $region59: #{tpu_custom_call.1} parent=1 // pred_check_branch
      %128 = sbr.rel (0) target = $region61
    $region60: #{tpu_custom_call.1} parent=1 // pred_region
      %129 = dma.done [#allocation12], 16384
    $region61: #{tpu_custom_call.1} parent=1 // pred_fallthru
      _
    // Predicated region
    $region62: #{tpu_custom_call.1} parent=1 // pred_check
      _
    $region63: #{tpu_custom_call.1} parent=1 // pred_check_branch
      %131 = sbr.rel (0) target = $region65
    $region64: #{tpu_custom_call.1} parent=1 // pred_region
      %132 = dma.done [#allocation12], 4096
    $region65: #{tpu_custom_call.1} parent=1 // pred_fallthru
      _
    // Predicated region
    $region66: #{tpu_custom_call.1} parent=1 // pred_check
      _
    $region67: #{tpu_custom_call.1} parent=1 // pred_check_branch
      %134 = sbr.rel (0) target = $region69
    $region68: #{tpu_custom_call.1} parent=1 // pred_region
      %135 = dma.done [#allocation15], 7040
    $region69: #{tpu_custom_call.1} parent=1 // pred_fallthru
      _
    %v137 = vld [vmem:[#allocation2] sm:$0x3]
    %v138 = vld [vmem:[#allocation2 + $0x2] sm:$0x3]
    %v139 = vld [vmem:[#allocation2 + $0x4] sm:$0x3]
    %v140 = vld [vmem:[#allocation7] sm:$0x77]
    %v141 = vld [vmem:[#allocation7 + $0x8] sm:$0x77]
    %v142 = vld [vmem:[#allocation7 + $0x10] sm:$0x77]
    %v143 = vld [vmem:[#allocation7 + $0x18] sm:$0x77]
    %v144 = vld [vmem:[#allocation7 + $0x20] sm:$0x77]
    %v145 = vld [vmem:[#allocation7 + $0x28] sm:$0x77]
    %v146 = vld [vmem:[#allocation7 + $0x30] sm:$0x77]
    %v147 = vld [vmem:[#allocation7 + $0x38] sm:$0x77]
    %v148 = vpack.c.bf16 %v137, %v137
    %v157 = vcombine.high %v140, %v140
    %v158 = vcombine.high %v141, %v141
    %v159 = vcombine.high %v142, %v142
    %v160 = vcombine.high %v143, %v143
    %v161 = vcombine.high %v144, %v144
    %v162 = vcombine.high %v145, %v145
    %v163 = vcombine.high %v146, %v146
    %v164 = vcombine.high %v147, %v147
    %v173 = vpack.c.bf16 %v140, %v140
    %v174 = vpack.c.bf16 %v157, %v157
    %v175 = vpack.c.bf16 %v141, %v141
    %v176 = vpack.c.bf16 %v158, %v158
    %v177 = vpack.c.bf16 %v142, %v142
    %v178 = vpack.c.bf16 %v159, %v159
    %v179 = vpack.c.bf16 %v143, %v143
    %v180 = vpack.c.bf16 %v160, %v160
    %v181 = vpack.c.bf16 %v144, %v144
    %v182 = vpack.c.bf16 %v161, %v161
    %v183 = vpack.c.bf16 %v145, %v145
    %v184 = vpack.c.bf16 %v162, %v162
    %v185 = vpack.c.bf16 %v146, %v146
    %v186 = vpack.c.bf16 %v163, %v163
    %v187 = vpack.c.bf16 %v147, %v147
    %v188 = vpack.c.bf16 %v164, %v164
    %v189 = vld [vmem:[#allocation5] sm:$0xff]
    %v190 = vld [vmem:[#allocation5 + $0x8] sm:$0xff]
    %v193 = vlaneseq
    %v194 = vshrl.u32 %v193, 7
    %v195 = vsub.s32 0, %v194
    %v196 = vrot.slane %v189, %v195
    %v197 = vlaneseq
    %v198 = vshrl.u32 %v197, 7
    %v199 = vsub.s32 1, %v198
    %v200 = vrot.slane %v189, %v199
    %v201 = vlaneseq
    %v202 = vshrl.u32 %v201, 7
    %v203 = vsub.s32 2, %v202
    %v204 = vrot.slane %v189, %v203
    %v205 = vlaneseq
    %v206 = vshrl.u32 %v205, 7
    %v207 = vsub.s32 3, %v206
    %v208 = vrot.slane %v189, %v207
    %v209 = vlaneseq
    %v210 = vshrl.u32 %v209, 7
    %v211 = vsub.s32 4, %v210
    %v212 = vrot.slane %v189, %v211
    %v213 = vlaneseq
    %v214 = vshrl.u32 %v213, 7
    %v215 = vsub.s32 5, %v214
    %v216 = vrot.slane %v189, %v215
    %v217 = vlaneseq
    %v218 = vshrl.u32 %v217, 7
    %v219 = vsub.s32 6, %v218
    %v220 = vrot.slane %v189, %v219
    %v221 = vlaneseq
    %v222 = vshrl.u32 %v221, 7
    %v223 = vsub.s32 7, %v222
    %v224 = vrot.slane %v189, %v223
    %v225 = vlaneseq
    %v226 = vshrl.u32 %v225, 7
    %v227 = vsub.s32 0, %v226
    %v228 = vrot.slane %v190, %v227
    %v229 = vlaneseq
    %v230 = vshrl.u32 %v229, 7
    %v231 = vsub.s32 1, %v230
    %v232 = vrot.slane %v190, %v231
    %v233 = vlaneseq
    %v234 = vshrl.u32 %v233, 7
    %v235 = vsub.s32 2, %v234
    %v236 = vrot.slane %v190, %v235
    %v237 = vlaneseq
    %v238 = vshrl.u32 %v237, 7
    %v239 = vsub.s32 3, %v238
    %v240 = vrot.slane %v190, %v239
    %v241 = vlaneseq
    %v242 = vshrl.u32 %v241, 7
    %v243 = vsub.s32 4, %v242
    %v244 = vrot.slane %v190, %v243
    %v245 = vlaneseq
    %v246 = vshrl.u32 %v245, 7
    %v247 = vsub.s32 5, %v246
    %v248 = vrot.slane %v190, %v247
    %v249 = vlaneseq
    %v250 = vshrl.u32 %v249, 7
    %v251 = vsub.s32 6, %v250
    %v252 = vrot.slane %v190, %v251
    %v253 = vlaneseq
    %v254 = vshrl.u32 %v253, 7
    %v255 = vsub.s32 7, %v254
    %v256 = vrot.slane %v190, %v255
    %vm273 = vcmask 23552
    %v275 = vsel %vm273, %v148, 0
    %vm277 = vcmask 1040384
    %vm278 = vcmask 1041408
    %v279 = vsel %vm277, 4294967295, 65535
    %v280 = vsel %vm278, %v279, 0
    %v282 = vand.u32 %v173, %v280
    %v285 = vand.u32 %v174, %v280
    %v288 = vand.u32 %v175, %v280
    %v291 = vand.u32 %v176, %v280
    %v294 = vand.u32 %v177, %v280
    %v297 = vand.u32 %v178, %v280
    %v300 = vand.u32 %v179, %v280
    %v303 = vand.u32 %v180, %v280
    %v306 = vand.u32 %v181, %v280
    %v309 = vand.u32 %v182, %v280
    %v312 = vand.u32 %v183, %v280
    %v315 = vand.u32 %v184, %v280
    %v318 = vand.u32 %v185, %v280
    %v321 = vand.u32 %v186, %v280
    %v324 = vand.u32 %v187, %v280
    %v327 = vand.u32 %v188, %v280
    %329 = vmatprep.subr.bf16.mxu0 0
    %330 = vmatpush1.bf16.msra.mxu0 0
    %331 = vmatprep.subr.bf16.mxu0 0
    %332 = vmatpush1.bf16.msra.mxu0 0
    %333 = vmatprep.subr.bf16.mxu0 0
    %334 = vmatpush1.bf16.msra.mxu0 0
    %335 = vmatprep.subr.bf16.mxu0 0
    %336 = vmatpush1.bf16.msra.mxu0 0
    %337 = vmatprep.subr.bf16.mxu0 0
    %338 = vmatpush1.bf16.msra.mxu0 0
    %339 = vmatprep.subr.bf16.mxu0 0
    %340 = vmatpush1.bf16.msra.mxu0 0
    %341 = vmatprep.subr.bf16.mxu0 0
    %342 = vmatpush1.bf16.msra.mxu0 0
    %343 = vmatprep.subr.bf16.mxu0 %v285
    %344 = vmatpush1.bf16.msra.mxu0 %v282
    %345 = vmatprep.subr.bf16.mxu0 0
    %346 = vmatpush2.bf16.msra.mxu0 0
    %347 = vmatprep.subr.bf16.mxu0 0
    %348 = vmatpush2.bf16.msra.mxu0 0
    %349 = vmatprep.subr.bf16.mxu0 0
    %350 = vmatpush2.bf16.msra.mxu0 0
    %351 = vmatprep.subr.bf16.mxu0 0
    %352 = vmatpush2.bf16.msra.mxu0 0
    %353 = vmatprep.subr.bf16.mxu0 0
    %354 = vmatpush2.bf16.msra.mxu0 0
    %355 = vmatprep.subr.bf16.mxu0 0
    %356 = vmatpush2.bf16.msra.mxu0 0
    %357 = vmatprep.subr.bf16.mxu0 0
    %358 = vmatpush2.bf16.msra.mxu0 0
    %359 = vmatprep.subr.bf16.mxu0 0
    %360 = vmatpush2.bf16.msra.mxu0 0
    %361 = vmatprep.mubr.bf16.mxu0 0
    %362 = vmatmul.mubr.bf16.gmra.mxu0 %v275
    %v363 = vpop.f32.mrf.mxu0
    %v364 = vadd.f32 %v196, %v363
    %v365 = vpop.f32.mrf.mxu0
    %v366 = vadd.f32 %v200, %v365
    %v367 = vpop.f32.mrf.mxu0
    %v368 = vpop.f32.mrf.mxu0
    %369 = vdwg.mxu0
    %370 = vmatprep.subr.bf16.mxu0 0
    %371 = vmatpush1.bf16.msra.mxu0 0
    %372 = vmatprep.subr.bf16.mxu0 0
    %373 = vmatpush1.bf16.msra.mxu0 0
    %374 = vmatprep.subr.bf16.mxu0 0
    %375 = vmatpush1.bf16.msra.mxu0 0
    %376 = vmatprep.subr.bf16.mxu0 0
    %377 = vmatpush1.bf16.msra.mxu0 0
    %378 = vmatprep.subr.bf16.mxu0 0
    %379 = vmatpush1.bf16.msra.mxu0 0
    %380 = vmatprep.subr.bf16.mxu0 0
    %381 = vmatpush1.bf16.msra.mxu0 0
    %382 = vmatprep.subr.bf16.mxu0 0
    %383 = vmatpush1.bf16.msra.mxu0 0
    %384 = vmatprep.subr.bf16.mxu0 %v291
    %385 = vmatpush1.bf16.msra.mxu0 %v288
    %386 = vmatprep.subr.bf16.mxu0 0
    %387 = vmatpush2.bf16.msra.mxu0 0
    %388 = vmatprep.subr.bf16.mxu0 0
    %389 = vmatpush2.bf16.msra.mxu0 0
    %390 = vmatprep.subr.bf16.mxu0 0
    %391 = vmatpush2.bf16.msra.mxu0 0
    %392 = vmatprep.subr.bf16.mxu0 0
    %393 = vmatpush2.bf16.msra.mxu0 0
    %394 = vmatprep.subr.bf16.mxu0 0
    %395 = vmatpush2.bf16.msra.mxu0 0
    %396 = vmatprep.subr.bf16.mxu0 0
    %397 = vmatpush2.bf16.msra.mxu0 0
    %398 = vmatprep.subr.bf16.mxu0 0
    %399 = vmatpush2.bf16.msra.mxu0 0
    %400 = vmatprep.subr.bf16.mxu0 0
    %401 = vmatpush2.bf16.msra.mxu0 0
    %402 = vmatprep.mubr.bf16.mxu0 0
    %403 = vmatmul.mubr.bf16.gmra.mxu0 %v275
    %v404 = vpop.f32.mrf.mxu0
    %v405 = vadd.f32 %v204, %v404
    %v406 = vpop.f32.mrf.mxu0
    %v407 = vadd.f32 %v208, %v406
    %v408 = vpop.f32.mrf.mxu0
    %v409 = vpop.f32.mrf.mxu0
    %410 = vdwg.mxu0
    %411 = vmatprep.subr.bf16.mxu0 0
    %412 = vmatpush1.bf16.msra.mxu0 0
    %413 = vmatprep.subr.bf16.mxu0 0
    %414 = vmatpush1.bf16.msra.mxu0 0
    %415 = vmatprep.subr.bf16.mxu0 0
    %416 = vmatpush1.bf16.msra.mxu0 0
    %417 = vmatprep.subr.bf16.mxu0 0
    %418 = vmatpush1.bf16.msra.mxu0 0
    %419 = vmatprep.subr.bf16.mxu0 0
    %420 = vmatpush1.bf16.msra.mxu0 0
    %421 = vmatprep.subr.bf16.mxu0 0
    %422 = vmatpush1.bf16.msra.mxu0 0
    %423 = vmatprep.subr.bf16.mxu0 0
    %424 = vmatpush1.bf16.msra.mxu0 0
    %425 = vmatprep.subr.bf16.mxu0 %v297
    %426 = vmatpush1.bf16.msra.mxu0 %v294
    %427 = vmatprep.subr.bf16.mxu0 0
    %428 = vmatpush2.bf16.msra.mxu0 0
    %429 = vmatprep.subr.bf16.mxu0 0
    %430 = vmatpush2.bf16.msra.mxu0 0
    %431 = vmatprep.subr.bf16.mxu0 0
    %432 = vmatpush2.bf16.msra.mxu0 0
    %433 = vmatprep.subr.bf16.mxu0 0
    %434 = vmatpush2.bf16.msra.mxu0 0
    %435 = vmatprep.subr.bf16.mxu0 0
    %436 = vmatpush2.bf16.msra.mxu0 0
    %437 = vmatprep.subr.bf16.mxu0 0
    %438 = vmatpush2.bf16.msra.mxu0 0
    %439 = vmatprep.subr.bf16.mxu0 0
    %440 = vmatpush2.bf16.msra.mxu0 0
    %441 = vmatprep.subr.bf16.mxu0 0
    %442 = vmatpush2.bf16.msra.mxu0 0
    %443 = vmatprep.mubr.bf16.mxu0 0
    %444 = vmatmul.mubr.bf16.gmra.mxu0 %v275
    %v445 = vpop.f32.mrf.mxu0
    %v446 = vadd.f32 %v212, %v445
    %v447 = vpop.f32.mrf.mxu0
    %v448 = vadd.f32 %v216, %v447
    %v449 = vpop.f32.mrf.mxu0
    %v450 = vpop.f32.mrf.mxu0
    %451 = vdwg.mxu0
    %452 = vmatprep.subr.bf16.mxu0 0
    %453 = vmatpush1.bf16.msra.mxu0 0
    %454 = vmatprep.subr.bf16.mxu0 0
    %455 = vmatpush1.bf16.msra.mxu0 0
    %456 = vmatprep.subr.bf16.mxu0 0
    %457 = vmatpush1.bf16.msra.mxu0 0
    %458 = vmatprep.subr.bf16.mxu0 0
    %459 = vmatpush1.bf16.msra.mxu0 0
    %460 = vmatprep.subr.bf16.mxu0 0
    %461 = vmatpush1.bf16.msra.mxu0 0
    %462 = vmatprep.subr.bf16.mxu0 0
    %463 = vmatpush1.bf16.msra.mxu0 0
    %464 = vmatprep.subr.bf16.mxu0 0
    %465 = vmatpush1.bf16.msra.mxu0 0
    %466 = vmatprep.subr.bf16.mxu0 %v303
    %467 = vmatpush1.bf16.msra.mxu0 %v300
    %468 = vmatprep.subr.bf16.mxu0 0
    %469 = vmatpush2.bf16.msra.mxu0 0
    %470 = vmatprep.subr.bf16.mxu0 0
    %471 = vmatpush2.bf16.msra.mxu0 0
    %472 = vmatprep.subr.bf16.mxu0 0
    %473 = vmatpush2.bf16.msra.mxu0 0
    %474 = vmatprep.subr.bf16.mxu0 0
    %475 = vmatpush2.bf16.msra.mxu0 0
    %476 = vmatprep.subr.bf16.mxu0 0
    %477 = vmatpush2.bf16.msra.mxu0 0
    %478 = vmatprep.subr.bf16.mxu0 0
    %479 = vmatpush2.bf16.msra.mxu0 0
    %480 = vmatprep.subr.bf16.mxu0 0
    %481 = vmatpush2.bf16.msra.mxu0 0
    %482 = vmatprep.subr.bf16.mxu0 0
    %483 = vmatpush2.bf16.msra.mxu0 0
    %484 = vmatprep.mubr.bf16.mxu0 0
    %485 = vmatmul.mubr.bf16.gmra.mxu0 %v275
    %v486 = vpop.f32.mrf.mxu0
    %v487 = vadd.f32 %v220, %v486
    %v488 = vpop.f32.mrf.mxu0
    %v489 = vadd.f32 %v224, %v488
    %v490 = vpop.f32.mrf.mxu0
    %v491 = vpop.f32.mrf.mxu0
    %492 = vdwg.mxu0
    %493 = vmatprep.subr.bf16.mxu0 0
    %494 = vmatpush1.bf16.msra.mxu0 0
    %495 = vmatprep.subr.bf16.mxu0 0
    %496 = vmatpush1.bf16.msra.mxu0 0
    %497 = vmatprep.subr.bf16.mxu0 0
    %498 = vmatpush1.bf16.msra.mxu0 0
    %499 = vmatprep.subr.bf16.mxu0 0
    %500 = vmatpush1.bf16.msra.mxu0 0
    %501 = vmatprep.subr.bf16.mxu0 0
    %502 = vmatpush1.bf16.msra.mxu0 0
    %503 = vmatprep.subr.bf16.mxu0 0
    %504 = vmatpush1.bf16.msra.mxu0 0
    %505 = vmatprep.subr.bf16.mxu0 0
    %506 = vmatpush1.bf16.msra.mxu0 0
    %507 = vmatprep.subr.bf16.mxu0 %v309
    %508 = vmatpush1.bf16.msra.mxu0 %v306
    %509 = vmatprep.subr.bf16.mxu0 0
    %510 = vmatpush2.bf16.msra.mxu0 0
    %511 = vmatprep.subr.bf16.mxu0 0
    %512 = vmatpush2.bf16.msra.mxu0 0
    %513 = vmatprep.subr.bf16.mxu0 0
    %514 = vmatpush2.bf16.msra.mxu0 0
    %515 = vmatprep.subr.bf16.mxu0 0
    %516 = vmatpush2.bf16.msra.mxu0 0
    %517 = vmatprep.subr.bf16.mxu0 0
    %518 = vmatpush2.bf16.msra.mxu0 0
    %519 = vmatprep.subr.bf16.mxu0 0
    %520 = vmatpush2.bf16.msra.mxu0 0
    %521 = vmatprep.subr.bf16.mxu0 0
    %522 = vmatpush2.bf16.msra.mxu0 0
    %523 = vmatprep.subr.bf16.mxu0 0
    %524 = vmatpush2.bf16.msra.mxu0 0
    %525 = vmatprep.mubr.bf16.mxu0 0
    %526 = vmatmul.mubr.bf16.gmra.mxu0 %v275
    %v527 = vpop.f32.mrf.mxu0
    %v528 = vadd.f32 %v228, %v527
    %v529 = vpop.f32.mrf.mxu0
    %v530 = vadd.f32 %v232, %v529
    %v531 = vpop.f32.mrf.mxu0
    %v532 = vpop.f32.mrf.mxu0
    %533 = vdwg.mxu0
    %534 = vmatprep.subr.bf16.mxu0 0
    %535 = vmatpush1.bf16.msra.mxu0 0
    %536 = vmatprep.subr.bf16.mxu0 0
    %537 = vmatpush1.bf16.msra.mxu0 0
    %538 = vmatprep.subr.bf16.mxu0 0
    %539 = vmatpush1.bf16.msra.mxu0 0
    %540 = vmatprep.subr.bf16.mxu0 0
    %541 = vmatpush1.bf16.msra.mxu0 0
    %542 = vmatprep.subr.bf16.mxu0 0
    %543 = vmatpush1.bf16.msra.mxu0 0
    %544 = vmatprep.subr.bf16.mxu0 0
    %545 = vmatpush1.bf16.msra.mxu0 0
    %546 = vmatprep.subr.bf16.mxu0 0
    %547 = vmatpush1.bf16.msra.mxu0 0
    %548 = vmatprep.subr.bf16.mxu0 %v315
    %549 = vmatpush1.bf16.msra.mxu0 %v312
    %550 = vmatprep.subr.bf16.mxu0 0
    %551 = vmatpush2.bf16.msra.mxu0 0
    %552 = vmatprep.subr.bf16.mxu0 0
    %553 = vmatpush2.bf16.msra.mxu0 0
    %554 = vmatprep.subr.bf16.mxu0 0
    %555 = vmatpush2.bf16.msra.mxu0 0
    %556 = vmatprep.subr.bf16.mxu0 0
    %557 = vmatpush2.bf16.msra.mxu0 0
    %558 = vmatprep.subr.bf16.mxu0 0
    %559 = vmatpush2.bf16.msra.mxu0 0
    %560 = vmatprep.subr.bf16.mxu0 0
    %561 = vmatpush2.bf16.msra.mxu0 0
    %562 = vmatprep.subr.bf16.mxu0 0
    %563 = vmatpush2.bf16.msra.mxu0 0
    %564 = vmatprep.subr.bf16.mxu0 0
    %565 = vmatpush2.bf16.msra.mxu0 0
    %566 = vmatprep.mubr.bf16.mxu0 0
    %567 = vmatmul.mubr.bf16.gmra.mxu0 %v275
    %v568 = vpop.f32.mrf.mxu0
    %v569 = vadd.f32 %v236, %v568
    %v570 = vpop.f32.mrf.mxu0
    %v571 = vadd.f32 %v240, %v570
    %v572 = vpop.f32.mrf.mxu0
    %v573 = vpop.f32.mrf.mxu0
    %574 = vdwg.mxu0
    %575 = vmatprep.subr.bf16.mxu0 0
    %576 = vmatpush1.bf16.msra.mxu0 0
    %577 = vmatprep.subr.bf16.mxu0 0
    %578 = vmatpush1.bf16.msra.mxu0 0
    %579 = vmatprep.subr.bf16.mxu0 0
    %580 = vmatpush1.bf16.msra.mxu0 0
    %581 = vmatprep.subr.bf16.mxu0 0
    %582 = vmatpush1.bf16.msra.mxu0 0
    %583 = vmatprep.subr.bf16.mxu0 0
    %584 = vmatpush1.bf16.msra.mxu0 0
    %585 = vmatprep.subr.bf16.mxu0 0
    %586 = vmatpush1.bf16.msra.mxu0 0
    %587 = vmatprep.subr.bf16.mxu0 0
    %588 = vmatpush1.bf16.msra.mxu0 0
    %589 = vmatprep.subr.bf16.mxu0 %v321
    %590 = vmatpush1.bf16.msra.mxu0 %v318
    %591 = vmatprep.subr.bf16.mxu0 0
    %592 = vmatpush2.bf16.msra.mxu0 0
    %593 = vmatprep.subr.bf16.mxu0 0
    %594 = vmatpush2.bf16.msra.mxu0 0
    %595 = vmatprep.subr.bf16.mxu0 0
    %596 = vmatpush2.bf16.msra.mxu0 0
    %597 = vmatprep.subr.bf16.mxu0 0
    %598 = vmatpush2.bf16.msra.mxu0 0
    %599 = vmatprep.subr.bf16.mxu0 0
    %600 = vmatpush2.bf16.msra.mxu0 0
    %601 = vmatprep.subr.bf16.mxu0 0
    %602 = vmatpush2.bf16.msra.mxu0 0
    %603 = vmatprep.subr.bf16.mxu0 0
    %604 = vmatpush2.bf16.msra.mxu0 0
    %605 = vmatprep.subr.bf16.mxu0 0
    %606 = vmatpush2.bf16.msra.mxu0 0
    %607 = vmatprep.mubr.bf16.mxu0 0
    %608 = vmatmul.mubr.bf16.gmra.mxu0 %v275
    %v609 = vpop.f32.mrf.mxu0
    %v610 = vadd.f32 %v244, %v609
    %v611 = vpop.f32.mrf.mxu0
    %v612 = vadd.f32 %v248, %v611
    %v613 = vpop.f32.mrf.mxu0
    %v614 = vpop.f32.mrf.mxu0
    %615 = vdwg.mxu0
    %616 = vmatprep.subr.bf16.mxu0 0
    %617 = vmatpush1.bf16.msra.mxu0 0
    %618 = vmatprep.subr.bf16.mxu0 0
    %619 = vmatpush1.bf16.msra.mxu0 0
    %620 = vmatprep.subr.bf16.mxu0 0
    %621 = vmatpush1.bf16.msra.mxu0 0
    %622 = vmatprep.subr.bf16.mxu0 0
    %623 = vmatpush1.bf16.msra.mxu0 0
    %624 = vmatprep.subr.bf16.mxu0 0
    %625 = vmatpush1.bf16.msra.mxu0 0
    %626 = vmatprep.subr.bf16.mxu0 0
    %627 = vmatpush1.bf16.msra.mxu0 0
    %628 = vmatprep.subr.bf16.mxu0 0
    %629 = vmatpush1.bf16.msra.mxu0 0
    %630 = vmatprep.subr.bf16.mxu0 %v327
    %631 = vmatpush1.bf16.msra.mxu0 %v324
    %632 = vmatprep.subr.bf16.mxu0 0
    %633 = vmatpush2.bf16.msra.mxu0 0
    %634 = vmatprep.subr.bf16.mxu0 0
    %635 = vmatpush2.bf16.msra.mxu0 0
    %636 = vmatprep.subr.bf16.mxu0 0
    %637 = vmatpush2.bf16.msra.mxu0 0
    %638 = vmatprep.subr.bf16.mxu0 0
    %639 = vmatpush2.bf16.msra.mxu0 0
    %640 = vmatprep.subr.bf16.mxu0 0
    %641 = vmatpush2.bf16.msra.mxu0 0
    %642 = vmatprep.subr.bf16.mxu0 0
    %643 = vmatpush2.bf16.msra.mxu0 0
    %644 = vmatprep.subr.bf16.mxu0 0
    %645 = vmatpush2.bf16.msra.mxu0 0
    %646 = vmatprep.subr.bf16.mxu0 0
    %647 = vmatpush2.bf16.msra.mxu0 0
    %648 = vmatprep.mubr.bf16.mxu0 0
    %649 = vmatmul.mubr.bf16.gmra.mxu0 %v275
    %v650 = vpop.f32.mrf.mxu0
    %v651 = vadd.f32 %v252, %v650
    %v652 = vpop.f32.mrf.mxu0
    %v653 = vadd.f32 %v256, %v652
    %v654 = vpop.f32.mrf.mxu0
    %v655 = vpop.f32.mrf.mxu0
    %656 = vdwg.mxu0
    %v657 = vmax.f32 %v364, 0.0
    %v658 = vmax.f32 %v366, 0.0
    %v659 = vmax.f32 %v405, 0.0
    %v660 = vmax.f32 %v407, 0.0
    %v661 = vmax.f32 %v446, 0.0
    %v662 = vmax.f32 %v448, 0.0
    %v663 = vmax.f32 %v487, 0.0
    %v664 = vmax.f32 %v489, 0.0
    %v665 = vmax.f32 %v528, 0.0
    %v666 = vmax.f32 %v530, 0.0
    %v667 = vmax.f32 %v569, 0.0
    %v668 = vmax.f32 %v571, 0.0
    %v669 = vmax.f32 %v610, 0.0
    %v670 = vmax.f32 %v612, 0.0
    %v671 = vmax.f32 %v651, 0.0
    %v672 = vmax.f32 %v653, 0.0
    %v673 = vld [vmem:[#allocation14] sm:$0xff]
    %v674 = vld [vmem:[#allocation14 + $0x8] sm:$0xff]
    %v675 = vld [vmem:[#allocation14 + $0x10] sm:$0xff]
    %v676 = vld [vmem:[#allocation14 + $0x18] sm:$0xff]
    %v677 = vld [vmem:[#allocation14 + $0x20] sm:$0xff]
    %v678 = vld [vmem:[#allocation14 + $0x28] sm:$0xff]
    %v679 = vld [vmem:[#allocation14 + $0x30] sm:$0x1f]
    %v680 = vpack.c.bf16 %v138, %v138
    %v681 = vpack.c.bf16 %v674, %v673
    %v682 = vpack.c.bf16 %v676, %v675
    %v683 = vpack.c.bf16 %v678, %v677
    %v684 = vpack.c.bf16 %v679, %v679
    %v685 = vld [vmem:[#allocation5 + $0x10] sm:$0x1]
    %v687 = vlaneseq
    %v688 = vshrl.u32 %v687, 7
    %v689 = vsub.s32 0, %v688
    %v690 = vrot.slane %v685, %v689
    %vm692 = vcmask 433152
    %v694 = vsel %vm692, %v680, 0
    %vm696 = vcmask 1042432
    %v697 = vsel %vm278, 4294967295, 65535
    %v698 = vsel %vm696, %v697, 0
    %v700 = vand.u32 %v684, %v698
    %702 = vmatprep.subr.bf16.mxu0 0
    %703 = vmatpush1.bf16.msra.mxu0 0
    %704 = vmatprep.subr.bf16.mxu0 0
    %705 = vmatpush1.bf16.msra.mxu0 0
    %706 = vmatprep.subr.bf16.mxu0 0
    %707 = vmatpush1.bf16.msra.mxu0 0
    %708 = vmatprep.subr.bf16.mxu0 0
    %709 = vmatpush1.bf16.msra.mxu0 0
    %710 = vmatprep.subr.bf16.mxu0 0
    %711 = vmatpush1.bf16.msra.mxu0 %v700
    %712 = vmatprep.subr.bf16.mxu0 0
    %713 = vmatpush1.bf16.msra.mxu0 %v683
    %714 = vmatprep.subr.bf16.mxu0 0
    %715 = vmatpush1.bf16.msra.mxu0 %v682
    %716 = vmatprep.subr.bf16.mxu0 0
    %717 = vmatpush1.bf16.msra.mxu0 %v681
    %718 = vmatprep.subr.bf16.mxu0 0
    %719 = vmatpush2.bf16.msra.mxu0 0
    %720 = vmatprep.subr.bf16.mxu0 0
    %721 = vmatpush2.bf16.msra.mxu0 0
    %722 = vmatprep.subr.bf16.mxu0 0
    %723 = vmatpush2.bf16.msra.mxu0 0
    %724 = vmatprep.subr.bf16.mxu0 0
    %725 = vmatpush2.bf16.msra.mxu0 0
    %726 = vmatprep.subr.bf16.mxu0 0
    %727 = vmatpush2.bf16.msra.mxu0 0
    %728 = vmatprep.subr.bf16.mxu0 0
    %729 = vmatpush2.bf16.msra.mxu0 0
    %730 = vmatprep.subr.bf16.mxu0 0
    %731 = vmatpush2.bf16.msra.mxu0 0
    %732 = vmatprep.subr.bf16.mxu0 0
    %733 = vmatpush2.bf16.msra.mxu0 0
    %734 = vmatprep.mubr.bf16.mxu0 0
    %735 = vmatmul.mubr.bf16.gmra.mxu0 %v694
    %v736 = vpop.f32.mrf.mxu0
    %v737 = vadd.f32 %v690, %v736
    %v738 = vpop.f32.mrf.mxu0
    %v739 = vpop.f32.mrf.mxu0
    %v740 = vpop.f32.mrf.mxu0
    %741 = vdwg.mxu0
    %v742 = vmax.f32 %v737, 0.0
    %v743 = vpack.c.bf16 %v657, %v657
    %v744 = vpack.c.bf16 %v658, %v658
    %v745 = vpack.c.bf16 %v659, %v659
    %v746 = vpack.c.bf16 %v660, %v660
    %v747 = vpack.c.bf16 %v661, %v661
    %v748 = vpack.c.bf16 %v662, %v662
    %v749 = vpack.c.bf16 %v663, %v663
    %v750 = vpack.c.bf16 %v664, %v664
    %v751 = vpack.c.bf16 %v665, %v665
    %v752 = vpack.c.bf16 %v666, %v666
    %v753 = vpack.c.bf16 %v667, %v667
    %v754 = vpack.c.bf16 %v668, %v668
    %v755 = vpack.c.bf16 %v669, %v669
    %v756 = vpack.c.bf16 %v670, %v670
    %v757 = vpack.c.bf16 %v671, %v671
    %v758 = vpack.c.bf16 %v672, %v672
    %v759 = vld [vmem:[#allocation8] sm:$0xff]
    %v760 = vld [vmem:[#allocation8 + $0x8] sm:$0xff]
    %v761 = vld [vmem:[#allocation8 + $0x10] sm:$0xff]
    %v762 = vld [vmem:[#allocation8 + $0x18] sm:$0xff]
    %v763 = vld [vmem:[#allocation8 + $0x20] sm:$0xff]
    %v764 = vld [vmem:[#allocation8 + $0x28] sm:$0xff]
    %v765 = vld [vmem:[#allocation8 + $0x30] sm:$0xff]
    %v766 = vld [vmem:[#allocation8 + $0x38] sm:$0xff]
    %v767 = vld [vmem:[#allocation8 + $0x40] sm:$0xff]
    %v768 = vld [vmem:[#allocation8 + $0x48] sm:$0xff]
    %v769 = vld [vmem:[#allocation8 + $0x50] sm:$0xff]
    %v770 = vld [vmem:[#allocation8 + $0x58] sm:$0xff]
    %v771 = vld [vmem:[#allocation8 + $0x60] sm:$0xff]
    %v772 = vld [vmem:[#allocation8 + $0x68] sm:$0xff]
    %v773 = vld [vmem:[#allocation8 + $0x70] sm:$0xff]
    %v774 = vld [vmem:[#allocation8 + $0x78] sm:$0xff]
    %v775 = vld [vmem:[#allocation8 + $0x80] sm:$0xff]
    %v776 = vld [vmem:[#allocation8 + $0x88] sm:$0xff]
    %v777 = vld [vmem:[#allocation8 + $0x90] sm:$0xff]
    %v778 = vld [vmem:[#allocation8 + $0x98] sm:$0xff]
    %v779 = vld [vmem:[#allocation8 + $0xa0] sm:$0xff]
    %v780 = vld [vmem:[#allocation8 + $0xa8] sm:$0xff]
    %v781 = vld [vmem:[#allocation8 + $0xb0] sm:$0xff]
    %v782 = vld [vmem:[#allocation8 + $0xb8] sm:$0xff]
    %v783 = vld [vmem:[#allocation8 + $0xc0] sm:$0xff]
    %v784 = vld [vmem:[#allocation8 + $0xc8] sm:$0xff]
    %v785 = vld [vmem:[#allocation8 + $0xd0] sm:$0xff]
    %v786 = vld [vmem:[#allocation8 + $0xd8] sm:$0xff]
    %v787 = vld [vmem:[#allocation8 + $0xe0] sm:$0xff]
    %v788 = vld [vmem:[#allocation8 + $0xe8] sm:$0xff]
    %v789 = vld [vmem:[#allocation8 + $0xf0] sm:$0xff]
    %v790 = vld [vmem:[#allocation8 + $0xf8] sm:$0xff]
    %v791 = vld [vmem:[#allocation8 + $0x100] sm:$0xff]
    %v792 = vld [vmem:[#allocation8 + $0x108] sm:$0xff]
    %v793 = vld [vmem:[#allocation8 + $0x110] sm:$0xff]
    %v794 = vld [vmem:[#allocation8 + $0x118] sm:$0xff]
    %v795 = vld [vmem:[#allocation8 + $0x120] sm:$0xff]
    %v796 = vld [vmem:[#allocation8 + $0x128] sm:$0xff]
    %v797 = vld [vmem:[#allocation8 + $0x130] sm:$0xff]
    %v798 = vld [vmem:[#allocation8 + $0x138] sm:$0xff]
    %v799 = vld [vmem:[#allocation8 + $0x140] sm:$0xff]
    %v800 = vld [vmem:[#allocation8 + $0x148] sm:$0xff]
    %v801 = vld [vmem:[#allocation8 + $0x150] sm:$0xff]
    %v802 = vld [vmem:[#allocation8 + $0x158] sm:$0xff]
    %v803 = vld [vmem:[#allocation8 + $0x160] sm:$0xff]
    %v804 = vld [vmem:[#allocation8 + $0x168] sm:$0xff]
    %v805 = vld [vmem:[#allocation8 + $0x170] sm:$0xff]
    %v806 = vld [vmem:[#allocation8 + $0x178] sm:$0xff]
    %v807 = vld [vmem:[#allocation8 + $0x180] sm:$0xff]
    %v808 = vld [vmem:[#allocation8 + $0x188] sm:$0xff]
    %v809 = vld [vmem:[#allocation8 + $0x190] sm:$0xff]
    %v810 = vld [vmem:[#allocation8 + $0x198] sm:$0xff]
    %v811 = vld [vmem:[#allocation8 + $0x1a0] sm:$0xff]
    %v812 = vld [vmem:[#allocation8 + $0x1a8] sm:$0xff]
    %v813 = vld [vmem:[#allocation8 + $0x1b0] sm:$0xff]
    %v814 = vld [vmem:[#allocation8 + $0x1b8] sm:$0xff]
    %v815 = vld [vmem:[#allocation8 + $0x1c0] sm:$0xff]
    %v816 = vld [vmem:[#allocation8 + $0x1c8] sm:$0xff]
    %v817 = vld [vmem:[#allocation8 + $0x1d0] sm:$0xff]
    %v818 = vld [vmem:[#allocation8 + $0x1d8] sm:$0xff]
    %v819 = vld [vmem:[#allocation8 + $0x1e0] sm:$0xff]
    %v820 = vld [vmem:[#allocation8 + $0x1e8] sm:$0xff]
    %v821 = vld [vmem:[#allocation8 + $0x1f0] sm:$0xff]
    %v822 = vld [vmem:[#allocation8 + $0x1f8] sm:$0xff]
    %v823 = vld [vmem:[#allocation8 + $0x200] sm:$0xff]
    %v824 = vld [vmem:[#allocation8 + $0x208] sm:$0xff]
    %v825 = vld [vmem:[#allocation8 + $0x210] sm:$0xff]
    %v826 = vld [vmem:[#allocation8 + $0x218] sm:$0xff]
    %v827 = vld [vmem:[#allocation8 + $0x220] sm:$0xff]
    %v828 = vld [vmem:[#allocation8 + $0x228] sm:$0xff]
    %v829 = vld [vmem:[#allocation8 + $0x230] sm:$0xff]
    %v830 = vld [vmem:[#allocation8 + $0x238] sm:$0xff]
    %v831 = vld [vmem:[#allocation8 + $0x240] sm:$0xff]
    %v832 = vld [vmem:[#allocation8 + $0x248] sm:$0xff]
    %v833 = vld [vmem:[#allocation8 + $0x250] sm:$0xff]
    %v834 = vld [vmem:[#allocation8 + $0x258] sm:$0xff]
    %v835 = vld [vmem:[#allocation8 + $0x260] sm:$0xff]
    %v836 = vld [vmem:[#allocation8 + $0x268] sm:$0xff]
    %v837 = vld [vmem:[#allocation8 + $0x270] sm:$0xff]
    %v838 = vld [vmem:[#allocation8 + $0x278] sm:$0xff]
    %v839 = vld [vmem:[#allocation8 + $0x280] sm:$0xff]
    %v840 = vld [vmem:[#allocation8 + $0x288] sm:$0xff]
    %v841 = vld [vmem:[#allocation8 + $0x290] sm:$0xff]
    %v842 = vld [vmem:[#allocation8 + $0x298] sm:$0xff]
    %v843 = vld [vmem:[#allocation8 + $0x2a0] sm:$0xff]
    %v844 = vld [vmem:[#allocation8 + $0x2a8] sm:$0xff]
    %v845 = vld [vmem:[#allocation8 + $0x2b0] sm:$0xff]
    %v846 = vld [vmem:[#allocation8 + $0x2b8] sm:$0xff]
    %v847 = vld [vmem:[#allocation8 + $0x2c0] sm:$0xff]
    %v848 = vld [vmem:[#allocation8 + $0x2c8] sm:$0xff]
    %v849 = vld [vmem:[#allocation8 + $0x2d0] sm:$0xff]
    %v850 = vld [vmem:[#allocation8 + $0x2d8] sm:$0xff]
    %v851 = vld [vmem:[#allocation8 + $0x2e0] sm:$0xff]
    %v852 = vld [vmem:[#allocation8 + $0x2e8] sm:$0xff]
    %v853 = vld [vmem:[#allocation8 + $0x2f0] sm:$0xff]
    %v854 = vld [vmem:[#allocation8 + $0x2f8] sm:$0xff]
    %v855 = vld [vmem:[#allocation8 + $0x300] sm:$0xff]
    %v856 = vld [vmem:[#allocation8 + $0x308] sm:$0xff]
    %v857 = vld [vmem:[#allocation8 + $0x310] sm:$0xff]
    %v858 = vld [vmem:[#allocation8 + $0x318] sm:$0xff]
    %v859 = vld [vmem:[#allocation8 + $0x320] sm:$0xff]
    %v860 = vld [vmem:[#allocation8 + $0x328] sm:$0xff]
    %v861 = vld [vmem:[#allocation8 + $0x330] sm:$0xff]
    %v862 = vld [vmem:[#allocation8 + $0x338] sm:$0xff]
    %v863 = vld [vmem:[#allocation8 + $0x340] sm:$0xff]
    %v864 = vld [vmem:[#allocation8 + $0x348] sm:$0xff]
    %v865 = vld [vmem:[#allocation8 + $0x350] sm:$0xff]
    %v866 = vld [vmem:[#allocation8 + $0x358] sm:$0xff]
    %v867 = vld [vmem:[#allocation8 + $0x360] sm:$0xff]
    %v868 = vld [vmem:[#allocation8 + $0x368] sm:$0xff]
    %v869 = vld [vmem:[#allocation8 + $0x370] sm:$0xff]
    %v870 = vld [vmem:[#allocation8 + $0x378] sm:$0xff]
    %v871 = vld [vmem:[#allocation8 + $0x380] sm:$0xff]
    %v872 = vld [vmem:[#allocation8 + $0x388] sm:$0xff]
    %v873 = vld [vmem:[#allocation8 + $0x390] sm:$0xff]
    %v874 = vld [vmem:[#allocation8 + $0x398] sm:$0xff]
    %v875 = vld [vmem:[#allocation8 + $0x3a0] sm:$0xff]
    %v876 = vld [vmem:[#allocation8 + $0x3a8] sm:$0xff]
    %v877 = vld [vmem:[#allocation8 + $0x3b0] sm:$0xff]
    %v878 = vld [vmem:[#allocation8 + $0x3b8] sm:$0xff]
    %v879 = vld [vmem:[#allocation8 + $0x3c0] sm:$0xff]
    %v880 = vld [vmem:[#allocation8 + $0x3c8] sm:$0xff]
    %v881 = vld [vmem:[#allocation8 + $0x3d0] sm:$0xff]
    %v882 = vld [vmem:[#allocation8 + $0x3d8] sm:$0xff]
    %v883 = vld [vmem:[#allocation8 + $0x3e0] sm:$0xff]
    %v884 = vld [vmem:[#allocation8 + $0x3e8] sm:$0xff]
    %v885 = vld [vmem:[#allocation8 + $0x3f0] sm:$0xff]
    %v886 = vld [vmem:[#allocation8 + $0x3f8] sm:$0xff]
    %v887 = vld [vmem:[#allocation8 + $0x400] sm:$0xff]
    %v888 = vld [vmem:[#allocation8 + $0x408] sm:$0xff]
    %v889 = vld [vmem:[#allocation8 + $0x410] sm:$0xff]
    %v890 = vld [vmem:[#allocation8 + $0x418] sm:$0xff]
    %v891 = vld [vmem:[#allocation8 + $0x420] sm:$0xff]
    %v892 = vld [vmem:[#allocation8 + $0x428] sm:$0xff]
    %v893 = vld [vmem:[#allocation8 + $0x430] sm:$0xff]
    %v894 = vld [vmem:[#allocation8 + $0x438] sm:$0xff]
    %v895 = vld [vmem:[#allocation8 + $0x440] sm:$0xff]
    %v896 = vld [vmem:[#allocation8 + $0x448] sm:$0xff]
    %v897 = vld [vmem:[#allocation8 + $0x450] sm:$0xff]
    %v898 = vld [vmem:[#allocation8 + $0x458] sm:$0xff]
    %v899 = vld [vmem:[#allocation8 + $0x460] sm:$0xff]
    %v900 = vld [vmem:[#allocation8 + $0x468] sm:$0xff]
    %v901 = vld [vmem:[#allocation8 + $0x470] sm:$0xff]
    %v902 = vld [vmem:[#allocation8 + $0x478] sm:$0xff]
    %v903 = vld [vmem:[#allocation8 + $0x480] sm:$0xff]
    %v904 = vld [vmem:[#allocation8 + $0x488] sm:$0xff]
    %v905 = vld [vmem:[#allocation8 + $0x490] sm:$0xff]
    %v906 = vld [vmem:[#allocation8 + $0x498] sm:$0xff]
    %v907 = vld [vmem:[#allocation8 + $0x4a0] sm:$0xff]
    %v908 = vld [vmem:[#allocation8 + $0x4a8] sm:$0xff]
    %v909 = vld [vmem:[#allocation8 + $0x4b0] sm:$0xff]
    %v910 = vld [vmem:[#allocation8 + $0x4b8] sm:$0xff]
    %v911 = vld [vmem:[#allocation8 + $0x4c0] sm:$0xff]
    %v912 = vld [vmem:[#allocation8 + $0x4c8] sm:$0xff]
    %v913 = vld [vmem:[#allocation8 + $0x4d0] sm:$0xff]
    %v914 = vld [vmem:[#allocation8 + $0x4d8] sm:$0xff]
    %v915 = vld [vmem:[#allocation8 + $0x4e0] sm:$0xff]
    %v916 = vld [vmem:[#allocation8 + $0x4e8] sm:$0xff]
    %v917 = vld [vmem:[#allocation8 + $0x4f0] sm:$0xff]
    %v918 = vld [vmem:[#allocation8 + $0x4f8] sm:$0xff]
    %v919 = vld [vmem:[#allocation8 + $0x500] sm:$0xff]
    %v920 = vld [vmem:[#allocation8 + $0x508] sm:$0xff]
    %v921 = vld [vmem:[#allocation8 + $0x510] sm:$0xff]
    %v922 = vld [vmem:[#allocation8 + $0x518] sm:$0xff]
    %v923 = vld [vmem:[#allocation8 + $0x520] sm:$0xff]
    %v924 = vld [vmem:[#allocation8 + $0x528] sm:$0xff]
    %v925 = vld [vmem:[#allocation8 + $0x530] sm:$0xff]
    %v926 = vld [vmem:[#allocation8 + $0x538] sm:$0xff]
    %v927 = vld [vmem:[#allocation8 + $0x540] sm:$0xff]
    %v928 = vld [vmem:[#allocation8 + $0x548] sm:$0xff]
    %v929 = vld [vmem:[#allocation8 + $0x550] sm:$0xff]
    %v930 = vld [vmem:[#allocation8 + $0x558] sm:$0xff]
    %v931 = vld [vmem:[#allocation8 + $0x560] sm:$0xff]
    %v932 = vld [vmem:[#allocation8 + $0x568] sm:$0xff]
    %v933 = vld [vmem:[#allocation8 + $0x570] sm:$0xff]
    %v934 = vld [vmem:[#allocation8 + $0x578] sm:$0xff]
    %v935 = vld [vmem:[#allocation8 + $0x580] sm:$0xff]
    %v936 = vld [vmem:[#allocation8 + $0x588] sm:$0xff]
    %v937 = vld [vmem:[#allocation8 + $0x590] sm:$0xff]
    %v938 = vld [vmem:[#allocation8 + $0x598] sm:$0xff]
    %v939 = vld [vmem:[#allocation8 + $0x5a0] sm:$0xff]
    %v940 = vld [vmem:[#allocation8 + $0x5a8] sm:$0xff]
    %v941 = vld [vmem:[#allocation8 + $0x5b0] sm:$0xff]
    %v942 = vld [vmem:[#allocation8 + $0x5b8] sm:$0xff]
    %v943 = vld [vmem:[#allocation8 + $0x5c0] sm:$0xff]
    %v944 = vld [vmem:[#allocation8 + $0x5c8] sm:$0xff]
    %v945 = vld [vmem:[#allocation8 + $0x5d0] sm:$0xff]
    %v946 = vld [vmem:[#allocation8 + $0x5d8] sm:$0xff]
    %v947 = vld [vmem:[#allocation8 + $0x5e0] sm:$0xff]
    %v948 = vld [vmem:[#allocation8 + $0x5e8] sm:$0xff]
    %v949 = vld [vmem:[#allocation8 + $0x5f0] sm:$0xff]
    %v950 = vld [vmem:[#allocation8 + $0x5f8] sm:$0xff]
    %v951 = vld [vmem:[#allocation8 + $0x600] sm:$0xff]
    %v952 = vld [vmem:[#allocation8 + $0x608] sm:$0xff]
    %v953 = vld [vmem:[#allocation8 + $0x610] sm:$0xff]
    %v954 = vld [vmem:[#allocation8 + $0x618] sm:$0xff]
    %v955 = vld [vmem:[#allocation8 + $0x620] sm:$0xff]
    %v956 = vld [vmem:[#allocation8 + $0x628] sm:$0xff]
    %v957 = vld [vmem:[#allocation8 + $0x630] sm:$0xff]
    %v958 = vld [vmem:[#allocation8 + $0x638] sm:$0xff]
    %v959 = vld [vmem:[#allocation8 + $0x640] sm:$0xff]
    %v960 = vld [vmem:[#allocation8 + $0x648] sm:$0xff]
    %v961 = vld [vmem:[#allocation8 + $0x650] sm:$0xff]
    %v962 = vld [vmem:[#allocation8 + $0x658] sm:$0xff]
    %v963 = vld [vmem:[#allocation8 + $0x660] sm:$0xff]
    %v964 = vld [vmem:[#allocation8 + $0x668] sm:$0xff]
    %v965 = vld [vmem:[#allocation8 + $0x670] sm:$0xff]
    %v966 = vld [vmem:[#allocation8 + $0x678] sm:$0xff]
    %v967 = vld [vmem:[#allocation8 + $0x680] sm:$0xff]
    %v968 = vld [vmem:[#allocation8 + $0x688] sm:$0xff]
    %v969 = vld [vmem:[#allocation8 + $0x690] sm:$0xff]
    %v970 = vld [vmem:[#allocation8 + $0x698] sm:$0xff]
    %v971 = vld [vmem:[#allocation8 + $0x6a0] sm:$0xff]
    %v972 = vld [vmem:[#allocation8 + $0x6a8] sm:$0xff]
    %v973 = vld [vmem:[#allocation8 + $0x6b0] sm:$0xff]
    %v974 = vld [vmem:[#allocation8 + $0x6b8] sm:$0xff]
    %v975 = vld [vmem:[#allocation8 + $0x6c0] sm:$0xff]
    %v976 = vld [vmem:[#allocation8 + $0x6c8] sm:$0xff]
    %v977 = vld [vmem:[#allocation8 + $0x6d0] sm:$0xff]
    %v978 = vld [vmem:[#allocation8 + $0x6d8] sm:$0xff]
    %v979 = vld [vmem:[#allocation8 + $0x6e0] sm:$0xff]
    %v980 = vld [vmem:[#allocation8 + $0x6e8] sm:$0xff]
    %v981 = vld [vmem:[#allocation8 + $0x6f0] sm:$0xff]
    %v982 = vld [vmem:[#allocation8 + $0x6f8] sm:$0xff]
    %v983 = vld [vmem:[#allocation8 + $0x700] sm:$0xff]
    %v984 = vld [vmem:[#allocation8 + $0x708] sm:$0xff]
    %v985 = vld [vmem:[#allocation8 + $0x710] sm:$0xff]
    %v986 = vld [vmem:[#allocation8 + $0x718] sm:$0xff]
    %v987 = vld [vmem:[#allocation8 + $0x720] sm:$0xff]
    %v988 = vld [vmem:[#allocation8 + $0x728] sm:$0xff]
    %v989 = vld [vmem:[#allocation8 + $0x730] sm:$0xff]
    %v990 = vld [vmem:[#allocation8 + $0x738] sm:$0xff]
    %v991 = vld [vmem:[#allocation8 + $0x740] sm:$0xff]
    %v992 = vld [vmem:[#allocation8 + $0x748] sm:$0xff]
    %v993 = vld [vmem:[#allocation8 + $0x750] sm:$0xff]
    %v994 = vld [vmem:[#allocation8 + $0x758] sm:$0xff]
    %v995 = vld [vmem:[#allocation8 + $0x760] sm:$0xff]
    %v996 = vld [vmem:[#allocation8 + $0x768] sm:$0xff]
    %v997 = vld [vmem:[#allocation8 + $0x770] sm:$0xff]
    %v998 = vld [vmem:[#allocation8 + $0x778] sm:$0xff]
    %v999 = vld [vmem:[#allocation8 + $0x780] sm:$0xff]
    %v1000 = vld [vmem:[#allocation8 + $0x788] sm:$0xff]
    %v1001 = vld [vmem:[#allocation8 + $0x790] sm:$0xff]
    %v1002 = vld [vmem:[#allocation8 + $0x798] sm:$0xff]
    %v1003 = vld [vmem:[#allocation8 + $0x7a0] sm:$0xff]
    %v1004 = vld [vmem:[#allocation8 + $0x7a8] sm:$0xff]
    %v1005 = vld [vmem:[#allocation8 + $0x7b0] sm:$0xff]
    %v1006 = vld [vmem:[#allocation8 + $0x7b8] sm:$0xff]
    %v1007 = vld [vmem:[#allocation8 + $0x7c0] sm:$0xff]
    %v1008 = vld [vmem:[#allocation8 + $0x7c8] sm:$0xff]
    %v1009 = vld [vmem:[#allocation8 + $0x7d0] sm:$0xff]
    %v1010 = vld [vmem:[#allocation8 + $0x7d8] sm:$0xff]
    %v1011 = vld [vmem:[#allocation8 + $0x7e0] sm:$0xff]
    %v1012 = vld [vmem:[#allocation8 + $0x7e8] sm:$0xff]
    %v1013 = vld [vmem:[#allocation8 + $0x7f0] sm:$0xff]
    %v1014 = vld [vmem:[#allocation8 + $0x7f8] sm:$0xff]
    %v1015 = vld [vmem:[#allocation8 + $0x800] sm:$0xff]
    %v1016 = vld [vmem:[#allocation8 + $0x808] sm:$0xff]
    %v1017 = vld [vmem:[#allocation8 + $0x810] sm:$0xff]
    %v1018 = vld [vmem:[#allocation8 + $0x818] sm:$0xff]
    %v1019 = vld [vmem:[#allocation8 + $0x820] sm:$0xff]
    %v1020 = vld [vmem:[#allocation8 + $0x828] sm:$0xff]
    %v1021 = vld [vmem:[#allocation8 + $0x830] sm:$0xff]
    %v1022 = vld [vmem:[#allocation8 + $0x838] sm:$0xff]
    %v1023 = vld [vmem:[#allocation8 + $0x840] sm:$0xff]
    %v1024 = vld [vmem:[#allocation8 + $0x848] sm:$0xff]
    %v1025 = vld [vmem:[#allocation8 + $0x850] sm:$0xff]
    %v1026 = vld [vmem:[#allocation8 + $0x858] sm:$0xff]
    %v1027 = vld [vmem:[#allocation8 + $0x860] sm:$0xff]
    %v1028 = vld [vmem:[#allocation8 + $0x868] sm:$0xff]
    %v1029 = vld [vmem:[#allocation8 + $0x870] sm:$0xff]
    %v1030 = vld [vmem:[#allocation8 + $0x878] sm:$0xff]
    %v1031 = vld [vmem:[#allocation8 + $0x880] sm:$0xff]
    %v1032 = vld [vmem:[#allocation8 + $0x888] sm:$0xff]
    %v1033 = vld [vmem:[#allocation8 + $0x890] sm:$0xff]
    %v1034 = vld [vmem:[#allocation8 + $0x898] sm:$0xff]
    %v1035 = vld [vmem:[#allocation8 + $0x8a0] sm:$0xff]
    %v1036 = vld [vmem:[#allocation8 + $0x8a8] sm:$0xff]
    %v1037 = vld [vmem:[#allocation8 + $0x8b0] sm:$0xff]
    %v1038 = vld [vmem:[#allocation8 + $0x8b8] sm:$0xff]
    %v1039 = vld [vmem:[#allocation8 + $0x8c0] sm:$0xff]
    %v1040 = vld [vmem:[#allocation8 + $0x8c8] sm:$0xff]
    %v1041 = vld [vmem:[#allocation8 + $0x8d0] sm:$0xff]
    %v1042 = vld [vmem:[#allocation8 + $0x8d8] sm:$0xff]
    %v1043 = vld [vmem:[#allocation8 + $0x8e0] sm:$0xff]
    %v1044 = vld [vmem:[#allocation8 + $0x8e8] sm:$0xff]
    %v1045 = vld [vmem:[#allocation8 + $0x8f0] sm:$0xff]
    %v1046 = vld [vmem:[#allocation8 + $0x8f8] sm:$0xff]
    %v1047 = vld [vmem:[#allocation8 + $0x900] sm:$0xff]
    %v1048 = vld [vmem:[#allocation8 + $0x908] sm:$0xff]
    %v1049 = vld [vmem:[#allocation8 + $0x910] sm:$0xff]
    %v1050 = vld [vmem:[#allocation8 + $0x918] sm:$0xff]
    %v1051 = vld [vmem:[#allocation8 + $0x920] sm:$0xff]
    %v1052 = vld [vmem:[#allocation8 + $0x928] sm:$0xff]
    %v1053 = vld [vmem:[#allocation8 + $0x930] sm:$0xff]
    %v1054 = vld [vmem:[#allocation8 + $0x938] sm:$0xff]
    %v1055 = vld [vmem:[#allocation8 + $0x940] sm:$0xff]
    %v1056 = vld [vmem:[#allocation8 + $0x948] sm:$0xff]
    %v1057 = vld [vmem:[#allocation8 + $0x950] sm:$0xff]
    %v1058 = vld [vmem:[#allocation8 + $0x958] sm:$0xff]
    %v1059 = vld [vmem:[#allocation8 + $0x960] sm:$0xff]
    %v1060 = vld [vmem:[#allocation8 + $0x968] sm:$0xff]
    %v1061 = vld [vmem:[#allocation8 + $0x970] sm:$0xff]
    %v1062 = vld [vmem:[#allocation8 + $0x978] sm:$0xff]
    %v1063 = vld [vmem:[#allocation8 + $0x980] sm:$0xff]
    %v1064 = vld [vmem:[#allocation8 + $0x988] sm:$0xff]
    %v1065 = vld [vmem:[#allocation8 + $0x990] sm:$0xff]
    %v1066 = vld [vmem:[#allocation8 + $0x998] sm:$0xff]
    %v1067 = vld [vmem:[#allocation8 + $0x9a0] sm:$0xff]
    %v1068 = vld [vmem:[#allocation8 + $0x9a8] sm:$0xff]
    %v1069 = vld [vmem:[#allocation8 + $0x9b0] sm:$0xff]
    %v1070 = vld [vmem:[#allocation8 + $0x9b8] sm:$0xff]
    %v1071 = vld [vmem:[#allocation8 + $0x9c0] sm:$0xff]
    %v1072 = vld [vmem:[#allocation8 + $0x9c8] sm:$0xff]
    %v1073 = vld [vmem:[#allocation8 + $0x9d0] sm:$0xff]
    %v1074 = vld [vmem:[#allocation8 + $0x9d8] sm:$0xff]
    %v1075 = vld [vmem:[#allocation8 + $0x9e0] sm:$0xff]
    %v1076 = vld [vmem:[#allocation8 + $0x9e8] sm:$0xff]
    %v1077 = vld [vmem:[#allocation8 + $0x9f0] sm:$0xff]
    %v1078 = vld [vmem:[#allocation8 + $0x9f8] sm:$0xff]
    %v1079 = vld [vmem:[#allocation8 + $0xa00] sm:$0xff]
    %v1080 = vld [vmem:[#allocation8 + $0xa08] sm:$0xff]
    %v1081 = vld [vmem:[#allocation8 + $0xa10] sm:$0xff]
    %v1082 = vld [vmem:[#allocation8 + $0xa18] sm:$0xff]
    %v1083 = vld [vmem:[#allocation8 + $0xa20] sm:$0xff]
    %v1084 = vld [vmem:[#allocation8 + $0xa28] sm:$0xff]
    %v1085 = vld [vmem:[#allocation8 + $0xa30] sm:$0xff]
    %v1086 = vld [vmem:[#allocation8 + $0xa38] sm:$0xff]
    %v1087 = vld [vmem:[#allocation8 + $0xa40] sm:$0xff]
    %v1088 = vld [vmem:[#allocation8 + $0xa48] sm:$0xff]
    %v1089 = vld [vmem:[#allocation8 + $0xa50] sm:$0xff]
    %v1090 = vld [vmem:[#allocation8 + $0xa58] sm:$0xff]
    %v1091 = vld [vmem:[#allocation8 + $0xa60] sm:$0xff]
    %v1092 = vld [vmem:[#allocation8 + $0xa68] sm:$0xff]
    %v1093 = vld [vmem:[#allocation8 + $0xa70] sm:$0xff]
    %v1094 = vld [vmem:[#allocation8 + $0xa78] sm:$0xff]
    %v1095 = vld [vmem:[#allocation8 + $0xa80] sm:$0xff]
    %v1096 = vld [vmem:[#allocation8 + $0xa88] sm:$0xff]
    %v1097 = vld [vmem:[#allocation8 + $0xa90] sm:$0xff]
    %v1098 = vld [vmem:[#allocation8 + $0xa98] sm:$0xff]
    %v1099 = vld [vmem:[#allocation8 + $0xaa0] sm:$0xff]
    %v1100 = vld [vmem:[#allocation8 + $0xaa8] sm:$0xff]
    %v1101 = vld [vmem:[#allocation8 + $0xab0] sm:$0xff]
    %v1102 = vld [vmem:[#allocation8 + $0xab8] sm:$0xff]
    %v1103 = vld [vmem:[#allocation8 + $0xac0] sm:$0xff]
    %v1104 = vld [vmem:[#allocation8 + $0xac8] sm:$0xff]
    %v1105 = vld [vmem:[#allocation8 + $0xad0] sm:$0xff]
    %v1106 = vld [vmem:[#allocation8 + $0xad8] sm:$0xff]
    %v1107 = vld [vmem:[#allocation8 + $0xae0] sm:$0xff]
    %v1108 = vld [vmem:[#allocation8 + $0xae8] sm:$0xff]
    %v1109 = vld [vmem:[#allocation8 + $0xaf0] sm:$0xff]
    %v1110 = vld [vmem:[#allocation8 + $0xaf8] sm:$0xff]
    %v1111 = vld [vmem:[#allocation8 + $0xb00] sm:$0xff]
    %v1112 = vld [vmem:[#allocation8 + $0xb08] sm:$0xff]
    %v1113 = vld [vmem:[#allocation8 + $0xb10] sm:$0xff]
    %v1114 = vld [vmem:[#allocation8 + $0xb18] sm:$0xff]
    %v1115 = vld [vmem:[#allocation8 + $0xb20] sm:$0xff]
    %v1116 = vld [vmem:[#allocation8 + $0xb28] sm:$0xff]
    %v1117 = vld [vmem:[#allocation8 + $0xb30] sm:$0xff]
    %v1118 = vld [vmem:[#allocation8 + $0xb38] sm:$0xff]
    %v1119 = vld [vmem:[#allocation8 + $0xb40] sm:$0xff]
    %v1120 = vld [vmem:[#allocation8 + $0xb48] sm:$0xff]
    %v1121 = vld [vmem:[#allocation8 + $0xb50] sm:$0xff]
    %v1122 = vld [vmem:[#allocation8 + $0xb58] sm:$0xff]
    %v1123 = vld [vmem:[#allocation8 + $0xb60] sm:$0xff]
    %v1124 = vld [vmem:[#allocation8 + $0xb68] sm:$0xff]
    %v1125 = vld [vmem:[#allocation8 + $0xb70] sm:$0xff]
    %v1126 = vld [vmem:[#allocation8 + $0xb78] sm:$0xff]
    %v1127 = vld [vmem:[#allocation8 + $0xb80] sm:$0xff]
    %v1128 = vld [vmem:[#allocation8 + $0xb88] sm:$0xff]
    %v1129 = vld [vmem:[#allocation8 + $0xb90] sm:$0xff]
    %v1130 = vld [vmem:[#allocation8 + $0xb98] sm:$0xff]
    %v1131 = vld [vmem:[#allocation8 + $0xba0] sm:$0xff]
    %v1132 = vld [vmem:[#allocation8 + $0xba8] sm:$0xff]
    %v1133 = vld [vmem:[#allocation8 + $0xbb0] sm:$0xff]
    %v1134 = vld [vmem:[#allocation8 + $0xbb8] sm:$0xff]
    %v1135 = vld [vmem:[#allocation8 + $0xbc0] sm:$0xff]
    %v1136 = vld [vmem:[#allocation8 + $0xbc8] sm:$0xff]
    %v1137 = vld [vmem:[#allocation8 + $0xbd0] sm:$0xff]
    %v1138 = vld [vmem:[#allocation8 + $0xbd8] sm:$0xff]
    %v1139 = vld [vmem:[#allocation8 + $0xbe0] sm:$0xff]
    %v1140 = vld [vmem:[#allocation8 + $0xbe8] sm:$0xff]
    %v1141 = vld [vmem:[#allocation8 + $0xbf0] sm:$0xff]
    %v1142 = vld [vmem:[#allocation8 + $0xbf8] sm:$0xff]
    %v1143 = vld [vmem:[#allocation8 + $0xc00] sm:$0xff]
    %v1144 = vld [vmem:[#allocation8 + $0xc08] sm:$0xff]
    %v1145 = vld [vmem:[#allocation8 + $0xc10] sm:$0xff]
    %v1146 = vld [vmem:[#allocation8 + $0xc18] sm:$0xff]
    %v1147 = vld [vmem:[#allocation8 + $0xc20] sm:$0xff]
    %v1148 = vld [vmem:[#allocation8 + $0xc28] sm:$0xff]
    %v1149 = vld [vmem:[#allocation8 + $0xc30] sm:$0xff]
    %v1150 = vld [vmem:[#allocation8 + $0xc38] sm:$0xff]
    %v1151 = vld [vmem:[#allocation8 + $0xc40] sm:$0xff]
    %v1152 = vld [vmem:[#allocation8 + $0xc48] sm:$0xff]
    %v1153 = vld [vmem:[#allocation8 + $0xc50] sm:$0xff]
    %v1154 = vld [vmem:[#allocation8 + $0xc58] sm:$0xff]
    %v1155 = vld [vmem:[#allocation8 + $0xc60] sm:$0xff]
    %v1156 = vld [vmem:[#allocation8 + $0xc68] sm:$0xff]
    %v1157 = vld [vmem:[#allocation8 + $0xc70] sm:$0xff]
    %v1158 = vld [vmem:[#allocation8 + $0xc78] sm:$0xff]
    %v1159 = vld [vmem:[#allocation8 + $0xc80] sm:$0xff]
    %v1160 = vld [vmem:[#allocation8 + $0xc88] sm:$0xff]
    %v1161 = vld [vmem:[#allocation8 + $0xc90] sm:$0xff]
    %v1162 = vld [vmem:[#allocation8 + $0xc98] sm:$0xff]
    %v1163 = vld [vmem:[#allocation8 + $0xca0] sm:$0xff]
    %v1164 = vld [vmem:[#allocation8 + $0xca8] sm:$0xff]
    %v1165 = vld [vmem:[#allocation8 + $0xcb0] sm:$0xff]
    %v1166 = vld [vmem:[#allocation8 + $0xcb8] sm:$0xff]
    %v1167 = vld [vmem:[#allocation8 + $0xcc0] sm:$0xff]
    %v1168 = vld [vmem:[#allocation8 + $0xcc8] sm:$0xff]
    %v1169 = vld [vmem:[#allocation8 + $0xcd0] sm:$0xff]
    %v1170 = vld [vmem:[#allocation8 + $0xcd8] sm:$0xff]
    %v1171 = vld [vmem:[#allocation8 + $0xce0] sm:$0xff]
    %v1172 = vld [vmem:[#allocation8 + $0xce8] sm:$0xff]
    %v1173 = vld [vmem:[#allocation8 + $0xcf0] sm:$0xff]
    %v1174 = vld [vmem:[#allocation8 + $0xcf8] sm:$0xff]
    %v1175 = vld [vmem:[#allocation8 + $0xd00] sm:$0xff]
    %v1176 = vld [vmem:[#allocation8 + $0xd08] sm:$0xff]
    %v1177 = vld [vmem:[#allocation8 + $0xd10] sm:$0xff]
    %v1178 = vld [vmem:[#allocation8 + $0xd18] sm:$0xff]
    %v1179 = vld [vmem:[#allocation8 + $0xd20] sm:$0xff]
    %v1180 = vld [vmem:[#allocation8 + $0xd28] sm:$0xff]
    %v1181 = vld [vmem:[#allocation8 + $0xd30] sm:$0xff]
    %v1182 = vld [vmem:[#allocation8 + $0xd38] sm:$0xff]
    %v1183 = vld [vmem:[#allocation8 + $0xd40] sm:$0xff]
    %v1184 = vld [vmem:[#allocation8 + $0xd48] sm:$0xff]
    %v1185 = vld [vmem:[#allocation8 + $0xd50] sm:$0xff]
    %v1186 = vld [vmem:[#allocation8 + $0xd58] sm:$0xff]
    %v1187 = vld [vmem:[#allocation8 + $0xd60] sm:$0xff]
    %v1188 = vld [vmem:[#allocation8 + $0xd68] sm:$0xff]
    %v1189 = vld [vmem:[#allocation8 + $0xd70] sm:$0xff]
    %v1190 = vld [vmem:[#allocation8 + $0xd78] sm:$0xff]
    %v1191 = vld [vmem:[#allocation8 + $0xd80] sm:$0xff]
    %v1192 = vld [vmem:[#allocation8 + $0xd88] sm:$0xff]
    %v1193 = vld [vmem:[#allocation8 + $0xd90] sm:$0xff]
    %v1194 = vld [vmem:[#allocation8 + $0xd98] sm:$0xff]
    %v1195 = vld [vmem:[#allocation8 + $0xda0] sm:$0xff]
    %v1196 = vld [vmem:[#allocation8 + $0xda8] sm:$0xff]
    %v1197 = vld [vmem:[#allocation8 + $0xdb0] sm:$0xff]
    %v1198 = vld [vmem:[#allocation8 + $0xdb8] sm:$0xff]
    %v1199 = vld [vmem:[#allocation8 + $0xdc0] sm:$0xff]
    %v1200 = vld [vmem:[#allocation8 + $0xdc8] sm:$0xff]
    %v1201 = vld [vmem:[#allocation8 + $0xdd0] sm:$0xff]
    %v1202 = vld [vmem:[#allocation8 + $0xdd8] sm:$0xff]
    %v1203 = vld [vmem:[#allocation8 + $0xde0] sm:$0xff]
    %v1204 = vld [vmem:[#allocation8 + $0xde8] sm:$0xff]
    %v1205 = vld [vmem:[#allocation8 + $0xdf0] sm:$0xff]
    %v1206 = vld [vmem:[#allocation8 + $0xdf8] sm:$0xff]
    %v1207 = vld [vmem:[#allocation8 + $0xe00] sm:$0xff]
    %v1208 = vld [vmem:[#allocation8 + $0xe08] sm:$0xff]
    %v1209 = vld [vmem:[#allocation8 + $0xe10] sm:$0xff]
    %v1210 = vld [vmem:[#allocation8 + $0xe18] sm:$0xff]
    %v1211 = vld [vmem:[#allocation8 + $0xe20] sm:$0xff]
    %v1212 = vld [vmem:[#allocation8 + $0xe28] sm:$0xff]
    %v1213 = vld [vmem:[#allocation8 + $0xe30] sm:$0xff]
    %v1214 = vld [vmem:[#allocation8 + $0xe38] sm:$0xff]
    %v1215 = vld [vmem:[#allocation8 + $0xe40] sm:$0xff]
    %v1216 = vld [vmem:[#allocation8 + $0xe48] sm:$0xff]
    %v1217 = vld [vmem:[#allocation8 + $0xe50] sm:$0xff]
    %v1218 = vld [vmem:[#allocation8 + $0xe58] sm:$0xff]
    %v1219 = vld [vmem:[#allocation8 + $0xe60] sm:$0xff]
    %v1220 = vld [vmem:[#allocation8 + $0xe68] sm:$0xff]
    %v1221 = vld [vmem:[#allocation8 + $0xe70] sm:$0xff]
    %v1222 = vld [vmem:[#allocation8 + $0xe78] sm:$0xff]
    %v1223 = vld [vmem:[#allocation8 + $0xe80] sm:$0xff]
    %v1224 = vld [vmem:[#allocation8 + $0xe88] sm:$0xff]
    %v1225 = vld [vmem:[#allocation8 + $0xe90] sm:$0xff]
    %v1226 = vld [vmem:[#allocation8 + $0xe98] sm:$0xff]
    %v1227 = vld [vmem:[#allocation8 + $0xea0] sm:$0xff]
    %v1228 = vld [vmem:[#allocation8 + $0xea8] sm:$0xff]
    %v1229 = vld [vmem:[#allocation8 + $0xeb0] sm:$0xff]
    %v1230 = vld [vmem:[#allocation8 + $0xeb8] sm:$0xff]
    %v1231 = vld [vmem:[#allocation8 + $0xec0] sm:$0xff]
    %v1232 = vld [vmem:[#allocation8 + $0xec8] sm:$0xff]
    %v1233 = vld [vmem:[#allocation8 + $0xed0] sm:$0xff]
    %v1234 = vld [vmem:[#allocation8 + $0xed8] sm:$0xff]
    %v1235 = vld [vmem:[#allocation8 + $0xee0] sm:$0xff]
    %v1236 = vld [vmem:[#allocation8 + $0xee8] sm:$0xff]
    %v1237 = vld [vmem:[#allocation8 + $0xef0] sm:$0xff]
    %v1238 = vld [vmem:[#allocation8 + $0xef8] sm:$0xff]
    %v1239 = vld [vmem:[#allocation8 + $0xf00] sm:$0xff]
    %v1240 = vld [vmem:[#allocation8 + $0xf08] sm:$0xff]
    %v1241 = vld [vmem:[#allocation8 + $0xf10] sm:$0xff]
    %v1242 = vld [vmem:[#allocation8 + $0xf18] sm:$0xff]
    %v1243 = vld [vmem:[#allocation8 + $0xf20] sm:$0xff]
    %v1244 = vld [vmem:[#allocation8 + $0xf28] sm:$0xff]
    %v1245 = vld [vmem:[#allocation8 + $0xf30] sm:$0xff]
    %v1246 = vld [vmem:[#allocation8 + $0xf38] sm:$0xff]
    %v1247 = vld [vmem:[#allocation8 + $0xf40] sm:$0xff]
    %v1248 = vld [vmem:[#allocation8 + $0xf48] sm:$0xff]
    %v1249 = vld [vmem:[#allocation8 + $0xf50] sm:$0xff]
    %v1250 = vld [vmem:[#allocation8 + $0xf58] sm:$0xff]
    %v1251 = vld [vmem:[#allocation8 + $0xf60] sm:$0xff]
    %v1252 = vld [vmem:[#allocation8 + $0xf68] sm:$0xff]
    %v1253 = vld [vmem:[#allocation8 + $0xf70] sm:$0xff]
    %v1254 = vld [vmem:[#allocation8 + $0xf78] sm:$0xff]
    %v1255 = vld [vmem:[#allocation8 + $0xf80] sm:$0xff]
    %v1256 = vld [vmem:[#allocation8 + $0xf88] sm:$0xff]
    %v1257 = vld [vmem:[#allocation8 + $0xf90] sm:$0xff]
    %v1258 = vld [vmem:[#allocation8 + $0xf98] sm:$0xff]
    %v1259 = vld [vmem:[#allocation8 + $0xfa0] sm:$0xff]
    %v1260 = vld [vmem:[#allocation8 + $0xfa8] sm:$0xff]
    %v1261 = vld [vmem:[#allocation8 + $0xfb0] sm:$0xff]
    %v1262 = vld [vmem:[#allocation8 + $0xfb8] sm:$0xff]
    %v1263 = vld [vmem:[#allocation8 + $0xfc0] sm:$0xff]
    %v1264 = vld [vmem:[#allocation8 + $0xfc8] sm:$0xff]
    %v1265 = vld [vmem:[#allocation8 + $0xfd0] sm:$0xff]
    %v1266 = vld [vmem:[#allocation8 + $0xfd8] sm:$0xff]
    %v1267 = vld [vmem:[#allocation8 + $0xfe0] sm:$0xff]
    %v1268 = vld [vmem:[#allocation8 + $0xfe8] sm:$0xff]
    %v1269 = vld [vmem:[#allocation8 + $0xff0] sm:$0xff]
    %v1270 = vld [vmem:[#allocation8 + $0xff8] sm:$0xff]
    %v1271 = vld [vmem:[#allocation8 + $0x1000] sm:$0xff]
    %v1272 = vld [vmem:[#allocation8 + $0x1008] sm:$0xff]
    %v1273 = vld [vmem:[#allocation8 + $0x1010] sm:$0xff]
    %v1274 = vld [vmem:[#allocation8 + $0x1018] sm:$0xff]
    %v1275 = vld [vmem:[#allocation8 + $0x1020] sm:$0xff]
    %v1276 = vld [vmem:[#allocation8 + $0x1028] sm:$0xff]
    %v1277 = vld [vmem:[#allocation8 + $0x1030] sm:$0xff]
    %v1278 = vld [vmem:[#allocation8 + $0x1038] sm:$0xff]
    %v1279 = vld [vmem:[#allocation8 + $0x1040] sm:$0xff]
    %v1280 = vld [vmem:[#allocation8 + $0x1048] sm:$0xff]
    %v1281 = vld [vmem:[#allocation8 + $0x1050] sm:$0xff]
    %v1282 = vld [vmem:[#allocation8 + $0x1058] sm:$0xff]
    %v1283 = vld [vmem:[#allocation8 + $0x1060] sm:$0xff]
    %v1284 = vld [vmem:[#allocation8 + $0x1068] sm:$0xff]
    %v1285 = vld [vmem:[#allocation8 + $0x1070] sm:$0xff]
    %v1286 = vld [vmem:[#allocation8 + $0x1078] sm:$0xff]
    %v1287 = vld [vmem:[#allocation8 + $0x1080] sm:$0xff]
    %v1288 = vld [vmem:[#allocation8 + $0x1088] sm:$0xff]
    %v1289 = vld [vmem:[#allocation8 + $0x1090] sm:$0xff]
    %v1290 = vld [vmem:[#allocation8 + $0x1098] sm:$0xff]
    %v1291 = vld [vmem:[#allocation8 + $0x10a0] sm:$0xff]
    %v1292 = vld [vmem:[#allocation8 + $0x10a8] sm:$0xff]
    %v1293 = vld [vmem:[#allocation8 + $0x10b0] sm:$0xff]
    %v1294 = vld [vmem:[#allocation8 + $0x10b8] sm:$0xff]
    %v1295 = vld [vmem:[#allocation8 + $0x10c0] sm:$0xff]
    %v1296 = vld [vmem:[#allocation8 + $0x10c8] sm:$0xff]
    %v1297 = vld [vmem:[#allocation8 + $0x10d0] sm:$0xff]
    %v1298 = vld [vmem:[#allocation8 + $0x10d8] sm:$0xff]
    %v1299 = vld [vmem:[#allocation8 + $0x10e0] sm:$0xff]
    %v1300 = vld [vmem:[#allocation8 + $0x10e8] sm:$0xff]
    %v1301 = vld [vmem:[#allocation8 + $0x10f0] sm:$0xff]
    %v1302 = vld [vmem:[#allocation8 + $0x10f8] sm:$0xff]
    %v1303 = vld [vmem:[#allocation8 + $0x1100] sm:$0xff]
    %v1304 = vld [vmem:[#allocation8 + $0x1108] sm:$0xff]
    %v1305 = vld [vmem:[#allocation8 + $0x1110] sm:$0xff]
    %v1306 = vld [vmem:[#allocation8 + $0x1118] sm:$0xff]
    %v1307 = vld [vmem:[#allocation8 + $0x1120] sm:$0xff]
    %v1308 = vld [vmem:[#allocation8 + $0x1128] sm:$0xff]
    %v1309 = vld [vmem:[#allocation8 + $0x1130] sm:$0xff]
    %v1310 = vld [vmem:[#allocation8 + $0x1138] sm:$0xff]
    %v1311 = vld [vmem:[#allocation8 + $0x1140] sm:$0xff]
    %v1312 = vld [vmem:[#allocation8 + $0x1148] sm:$0xff]
    %v1313 = vld [vmem:[#allocation8 + $0x1150] sm:$0xff]
    %v1314 = vld [vmem:[#allocation8 + $0x1158] sm:$0xff]
    %v1315 = vld [vmem:[#allocation8 + $0x1160] sm:$0xff]
    %v1316 = vld [vmem:[#allocation8 + $0x1168] sm:$0xff]
    %v1317 = vld [vmem:[#allocation8 + $0x1170] sm:$0xff]
    %v1318 = vld [vmem:[#allocation8 + $0x1178] sm:$0xff]
    %v1319 = vld [vmem:[#allocation8 + $0x1180] sm:$0xff]
    %v1320 = vld [vmem:[#allocation8 + $0x1188] sm:$0xff]
    %v1321 = vld [vmem:[#allocation8 + $0x1190] sm:$0xff]
    %v1322 = vld [vmem:[#allocation8 + $0x1198] sm:$0xff]
    %v1323 = vld [vmem:[#allocation8 + $0x11a0] sm:$0xff]
    %v1324 = vld [vmem:[#allocation8 + $0x11a8] sm:$0xff]
    %v1325 = vld [vmem:[#allocation8 + $0x11b0] sm:$0xff]
    %v1326 = vld [vmem:[#allocation8 + $0x11b8] sm:$0xff]
    %v1327 = vld [vmem:[#allocation8 + $0x11c0] sm:$0xff]
    %v1328 = vld [vmem:[#allocation8 + $0x11c8] sm:$0xff]
    %v1329 = vld [vmem:[#allocation8 + $0x11d0] sm:$0xff]
    %v1330 = vld [vmem:[#allocation8 + $0x11d8] sm:$0xff]
    %v1331 = vld [vmem:[#allocation8 + $0x11e0] sm:$0xff]
    %v1332 = vld [vmem:[#allocation8 + $0x11e8] sm:$0xff]
    %v1333 = vld [vmem:[#allocation8 + $0x11f0] sm:$0xff]
    %v1334 = vld [vmem:[#allocation8 + $0x11f8] sm:$0xff]
    %v1335 = vunpack.c.l.s8.bf16 %v759
    %v1336 = vunpack.c.l.s8.bf16 %v760
    %v1337 = vunpack.c.l.s8.bf16 %v761
    %v1338 = vunpack.c.l.s8.bf16 %v762
    %v1339 = vunpack.c.l.s8.bf16 %v763
    %v1340 = vunpack.c.l.s8.bf16 %v764
    %v1341 = vunpack.c.l.s8.bf16 %v765
    %v1342 = vunpack.c.l.s8.bf16 %v766
    %v1343 = vunpack.c.l.s8.bf16 %v767
    %v1344 = vunpack.c.h.s8.bf16 %v759
    %v1345 = vunpack.c.h.s8.bf16 %v760
    %v1346 = vunpack.c.h.s8.bf16 %v761
    %v1347 = vunpack.c.h.s8.bf16 %v762
    %v1348 = vunpack.c.h.s8.bf16 %v763
    %v1349 = vunpack.c.h.s8.bf16 %v764
    %v1350 = vunpack.c.h.s8.bf16 %v765
    %v1351 = vunpack.c.h.s8.bf16 %v766
    %v1352 = vunpack.c.h.s8.bf16 %v767
    %v1353 = vunpack.c.l.s8.bf16 %v768
    %v1354 = vunpack.c.l.s8.bf16 %v769
    %v1355 = vunpack.c.l.s8.bf16 %v770
    %v1356 = vunpack.c.l.s8.bf16 %v771
    %v1357 = vunpack.c.l.s8.bf16 %v772
    %v1358 = vunpack.c.l.s8.bf16 %v773
    %v1359 = vunpack.c.l.s8.bf16 %v774
    %v1360 = vunpack.c.l.s8.bf16 %v775
    %v1361 = vunpack.c.l.s8.bf16 %v776
    %v1362 = vunpack.c.h.s8.bf16 %v768
    %v1363 = vunpack.c.h.s8.bf16 %v769
    %v1364 = vunpack.c.h.s8.bf16 %v770
    %v1365 = vunpack.c.h.s8.bf16 %v771
    %v1366 = vunpack.c.h.s8.bf16 %v772
    %v1367 = vunpack.c.h.s8.bf16 %v773
    %v1368 = vunpack.c.h.s8.bf16 %v774
    %v1369 = vunpack.c.h.s8.bf16 %v775
    %v1370 = vunpack.c.h.s8.bf16 %v776
    %v1371 = vunpack.c.l.s8.bf16 %v777
    %v1372 = vunpack.c.l.s8.bf16 %v778
    %v1373 = vunpack.c.l.s8.bf16 %v779
    %v1374 = vunpack.c.l.s8.bf16 %v780
    %v1375 = vunpack.c.l.s8.bf16 %v781
    %v1376 = vunpack.c.l.s8.bf16 %v782
    %v1377 = vunpack.c.l.s8.bf16 %v783
    %v1378 = vunpack.c.l.s8.bf16 %v784
    %v1379 = vunpack.c.l.s8.bf16 %v785
    %v1380 = vunpack.c.h.s8.bf16 %v777
    %v1381 = vunpack.c.h.s8.bf16 %v778
    %v1382 = vunpack.c.h.s8.bf16 %v779
    %v1383 = vunpack.c.h.s8.bf16 %v780
    %v1384 = vunpack.c.h.s8.bf16 %v781
    %v1385 = vunpack.c.h.s8.bf16 %v782
    %v1386 = vunpack.c.h.s8.bf16 %v783
    %v1387 = vunpack.c.h.s8.bf16 %v784
    %v1388 = vunpack.c.h.s8.bf16 %v785
    %v1389 = vunpack.c.l.s8.bf16 %v786
    %v1390 = vunpack.c.l.s8.bf16 %v787
    %v1391 = vunpack.c.l.s8.bf16 %v788
    %v1392 = vunpack.c.l.s8.bf16 %v789
    %v1393 = vunpack.c.l.s8.bf16 %v790
    %v1394 = vunpack.c.l.s8.bf16 %v791
    %v1395 = vunpack.c.l.s8.bf16 %v792
    %v1396 = vunpack.c.l.s8.bf16 %v793
    %v1397 = vunpack.c.l.s8.bf16 %v794
    %v1398 = vunpack.c.h.s8.bf16 %v786
    %v1399 = vunpack.c.h.s8.bf16 %v787
    %v1400 = vunpack.c.h.s8.bf16 %v788
    %v1401 = vunpack.c.h.s8.bf16 %v789
    %v1402 = vunpack.c.h.s8.bf16 %v790
    %v1403 = vunpack.c.h.s8.bf16 %v791
    %v1404 = vunpack.c.h.s8.bf16 %v792
    %v1405 = vunpack.c.h.s8.bf16 %v793
    %v1406 = vunpack.c.h.s8.bf16 %v794
    %v1407 = vunpack.c.l.s8.bf16 %v795
    %v1408 = vunpack.c.l.s8.bf16 %v796
    %v1409 = vunpack.c.l.s8.bf16 %v797
    %v1410 = vunpack.c.l.s8.bf16 %v798
    %v1411 = vunpack.c.l.s8.bf16 %v799
    %v1412 = vunpack.c.l.s8.bf16 %v800
    %v1413 = vunpack.c.l.s8.bf16 %v801
    %v1414 = vunpack.c.l.s8.bf16 %v802
    %v1415 = vunpack.c.l.s8.bf16 %v803
    %v1416 = vunpack.c.h.s8.bf16 %v795
    %v1417 = vunpack.c.h.s8.bf16 %v796
    %v1418 = vunpack.c.h.s8.bf16 %v797
    %v1419 = vunpack.c.h.s8.bf16 %v798
    %v1420 = vunpack.c.h.s8.bf16 %v799
    %v1421 = vunpack.c.h.s8.bf16 %v800
    %v1422 = vunpack.c.h.s8.bf16 %v801
    %v1423 = vunpack.c.h.s8.bf16 %v802
    %v1424 = vunpack.c.h.s8.bf16 %v803
    %v1425 = vunpack.c.l.s8.bf16 %v804
    %v1426 = vunpack.c.l.s8.bf16 %v805
    %v1427 = vunpack.c.l.s8.bf16 %v806
    %v1428 = vunpack.c.l.s8.bf16 %v807
    %v1429 = vunpack.c.l.s8.bf16 %v808
    %v1430 = vunpack.c.l.s8.bf16 %v809
    %v1431 = vunpack.c.l.s8.bf16 %v810
    %v1432 = vunpack.c.l.s8.bf16 %v811
    %v1433 = vunpack.c.l.s8.bf16 %v812
    %v1434 = vunpack.c.h.s8.bf16 %v804
    %v1435 = vunpack.c.h.s8.bf16 %v805
    %v1436 = vunpack.c.h.s8.bf16 %v806
    %v1437 = vunpack.c.h.s8.bf16 %v807
    %v1438 = vunpack.c.h.s8.bf16 %v808
    %v1439 = vunpack.c.h.s8.bf16 %v809
    %v1440 = vunpack.c.h.s8.bf16 %v810
    %v1441 = vunpack.c.h.s8.bf16 %v811
    %v1442 = vunpack.c.h.s8.bf16 %v812
    %v1443 = vunpack.c.l.s8.bf16 %v813
    %v1444 = vunpack.c.l.s8.bf16 %v814
    %v1445 = vunpack.c.l.s8.bf16 %v815
    %v1446 = vunpack.c.l.s8.bf16 %v816
    %v1447 = vunpack.c.l.s8.bf16 %v817
    %v1448 = vunpack.c.l.s8.bf16 %v818
    %v1449 = vunpack.c.l.s8.bf16 %v819
    %v1450 = vunpack.c.l.s8.bf16 %v820
    %v1451 = vunpack.c.l.s8.bf16 %v821
    %v1452 = vunpack.c.h.s8.bf16 %v813
    %v1453 = vunpack.c.h.s8.bf16 %v814
    %v1454 = vunpack.c.h.s8.bf16 %v815
    %v1455 = vunpack.c.h.s8.bf16 %v816
    %v1456 = vunpack.c.h.s8.bf16 %v817
    %v1457 = vunpack.c.h.s8.bf16 %v818
    %v1458 = vunpack.c.h.s8.bf16 %v819
    %v1459 = vunpack.c.h.s8.bf16 %v820
    %v1460 = vunpack.c.h.s8.bf16 %v821
    %v1461 = vunpack.c.l.s8.bf16 %v822
    %v1462 = vunpack.c.l.s8.bf16 %v823
    %v1463 = vunpack.c.l.s8.bf16 %v824
    %v1464 = vunpack.c.l.s8.bf16 %v825
    %v1465 = vunpack.c.l.s8.bf16 %v826
    %v1466 = vunpack.c.l.s8.bf16 %v827
    %v1467 = vunpack.c.l.s8.bf16 %v828
    %v1468 = vunpack.c.l.s8.bf16 %v829
    %v1469 = vunpack.c.l.s8.bf16 %v830
    %v1470 = vunpack.c.h.s8.bf16 %v822
    %v1471 = vunpack.c.h.s8.bf16 %v823
    %v1472 = vunpack.c.h.s8.bf16 %v824
    %v1473 = vunpack.c.h.s8.bf16 %v825
    %v1474 = vunpack.c.h.s8.bf16 %v826
    %v1475 = vunpack.c.h.s8.bf16 %v827
    %v1476 = vunpack.c.h.s8.bf16 %v828
    %v1477 = vunpack.c.h.s8.bf16 %v829
    %v1478 = vunpack.c.h.s8.bf16 %v830
    %v1479 = vunpack.c.l.s8.bf16 %v831
    %v1480 = vunpack.c.l.s8.bf16 %v832
    %v1481 = vunpack.c.l.s8.bf16 %v833
    %v1482 = vunpack.c.l.s8.bf16 %v834
    %v1483 = vunpack.c.l.s8.bf16 %v835
    %v1484 = vunpack.c.l.s8.bf16 %v836
    %v1485 = vunpack.c.l.s8.bf16 %v837
    %v1486 = vunpack.c.l.s8.bf16 %v838
    %v1487 = vunpack.c.l.s8.bf16 %v839
    %v1488 = vunpack.c.h.s8.bf16 %v831
    %v1489 = vunpack.c.h.s8.bf16 %v832
    %v1490 = vunpack.c.h.s8.bf16 %v833
    %v1491 = vunpack.c.h.s8.bf16 %v834
    %v1492 = vunpack.c.h.s8.bf16 %v835
    %v1493 = vunpack.c.h.s8.bf16 %v836
    %v1494 = vunpack.c.h.s8.bf16 %v837
    %v1495 = vunpack.c.h.s8.bf16 %v838
    %v1496 = vunpack.c.h.s8.bf16 %v839
    %v1497 = vunpack.c.l.s8.bf16 %v840
    %v1498 = vunpack.c.l.s8.bf16 %v841
    %v1499 = vunpack.c.l.s8.bf16 %v842
    %v1500 = vunpack.c.l.s8.bf16 %v843
    %v1501 = vunpack.c.l.s8.bf16 %v844
    %v1502 = vunpack.c.l.s8.bf16 %v845
    %v1503 = vunpack.c.l.s8.bf16 %v846
    %v1504 = vunpack.c.l.s8.bf16 %v847
    %v1505 = vunpack.c.l.s8.bf16 %v848
    %v1506 = vunpack.c.h.s8.bf16 %v840
    %v1507 = vunpack.c.h.s8.bf16 %v841
    %v1508 = vunpack.c.h.s8.bf16 %v842
    %v1509 = vunpack.c.h.s8.bf16 %v843
    %v1510 = vunpack.c.h.s8.bf16 %v844
    %v1511 = vunpack.c.h.s8.bf16 %v845
    %v1512 = vunpack.c.h.s8.bf16 %v846
    %v1513 = vunpack.c.h.s8.bf16 %v847
    %v1514 = vunpack.c.h.s8.bf16 %v848
    %v1515 = vunpack.c.l.s8.bf16 %v849
    %v1516 = vunpack.c.l.s8.bf16 %v850
    %v1517 = vunpack.c.l.s8.bf16 %v851
    %v1518 = vunpack.c.l.s8.bf16 %v852
    %v1519 = vunpack.c.l.s8.bf16 %v853
    %v1520 = vunpack.c.l.s8.bf16 %v854
    %v1521 = vunpack.c.l.s8.bf16 %v855
    %v1522 = vunpack.c.l.s8.bf16 %v856
    %v1523 = vunpack.c.l.s8.bf16 %v857
    %v1524 = vunpack.c.h.s8.bf16 %v849
    %v1525 = vunpack.c.h.s8.bf16 %v850
    %v1526 = vunpack.c.h.s8.bf16 %v851
    %v1527 = vunpack.c.h.s8.bf16 %v852
    %v1528 = vunpack.c.h.s8.bf16 %v853
    %v1529 = vunpack.c.h.s8.bf16 %v854
    %v1530 = vunpack.c.h.s8.bf16 %v855
    %v1531 = vunpack.c.h.s8.bf16 %v856
    %v1532 = vunpack.c.h.s8.bf16 %v857
    %v1533 = vunpack.c.l.s8.bf16 %v858
    %v1534 = vunpack.c.l.s8.bf16 %v859
    %v1535 = vunpack.c.l.s8.bf16 %v860
    %v1536 = vunpack.c.l.s8.bf16 %v861
    %v1537 = vunpack.c.l.s8.bf16 %v862
    %v1538 = vunpack.c.l.s8.bf16 %v863
    %v1539 = vunpack.c.l.s8.bf16 %v864
    %v1540 = vunpack.c.l.s8.bf16 %v865
    %v1541 = vunpack.c.l.s8.bf16 %v866
    %v1542 = vunpack.c.h.s8.bf16 %v858
    %v1543 = vunpack.c.h.s8.bf16 %v859
    %v1544 = vunpack.c.h.s8.bf16 %v860
    %v1545 = vunpack.c.h.s8.bf16 %v861
    %v1546 = vunpack.c.h.s8.bf16 %v862
    %v1547 = vunpack.c.h.s8.bf16 %v863
    %v1548 = vunpack.c.h.s8.bf16 %v864
    %v1549 = vunpack.c.h.s8.bf16 %v865
    %v1550 = vunpack.c.h.s8.bf16 %v866
    %v1551 = vunpack.c.l.s8.bf16 %v867
    %v1552 = vunpack.c.l.s8.bf16 %v868
    %v1553 = vunpack.c.l.s8.bf16 %v869
    %v1554 = vunpack.c.l.s8.bf16 %v870
    %v1555 = vunpack.c.l.s8.bf16 %v871
    %v1556 = vunpack.c.l.s8.bf16 %v872
    %v1557 = vunpack.c.l.s8.bf16 %v873
    %v1558 = vunpack.c.l.s8.bf16 %v874
    %v1559 = vunpack.c.l.s8.bf16 %v875
    %v1560 = vunpack.c.h.s8.bf16 %v867
    %v1561 = vunpack.c.h.s8.bf16 %v868
    %v1562 = vunpack.c.h.s8.bf16 %v869
    %v1563 = vunpack.c.h.s8.bf16 %v870
    %v1564 = vunpack.c.h.s8.bf16 %v871
    %v1565 = vunpack.c.h.s8.bf16 %v872
    %v1566 = vunpack.c.h.s8.bf16 %v873
    %v1567 = vunpack.c.h.s8.bf16 %v874
    %v1568 = vunpack.c.h.s8.bf16 %v875
    %v1569 = vunpack.c.l.s8.bf16 %v876
    %v1570 = vunpack.c.l.s8.bf16 %v877
    %v1571 = vunpack.c.l.s8.bf16 %v878
    %v1572 = vunpack.c.l.s8.bf16 %v879
    %v1573 = vunpack.c.l.s8.bf16 %v880
    %v1574 = vunpack.c.l.s8.bf16 %v881
    %v1575 = vunpack.c.l.s8.bf16 %v882
    %v1576 = vunpack.c.l.s8.bf16 %v883
    %v1577 = vunpack.c.l.s8.bf16 %v884
    %v1578 = vunpack.c.h.s8.bf16 %v876
    %v1579 = vunpack.c.h.s8.bf16 %v877
    %v1580 = vunpack.c.h.s8.bf16 %v878
    %v1581 = vunpack.c.h.s8.bf16 %v879
    %v1582 = vunpack.c.h.s8.bf16 %v880
    %v1583 = vunpack.c.h.s8.bf16 %v881
    %v1584 = vunpack.c.h.s8.bf16 %v882
    %v1585 = vunpack.c.h.s8.bf16 %v883
    %v1586 = vunpack.c.h.s8.bf16 %v884
    %v1587 = vunpack.c.l.s8.bf16 %v885
    %v1588 = vunpack.c.l.s8.bf16 %v886
    %v1589 = vunpack.c.l.s8.bf16 %v887
    %v1590 = vunpack.c.l.s8.bf16 %v888
    %v1591 = vunpack.c.l.s8.bf16 %v889
    %v1592 = vunpack.c.l.s8.bf16 %v890
    %v1593 = vunpack.c.l.s8.bf16 %v891
    %v1594 = vunpack.c.l.s8.bf16 %v892
    %v1595 = vunpack.c.l.s8.bf16 %v893
    %v1596 = vunpack.c.h.s8.bf16 %v885
    %v1597 = vunpack.c.h.s8.bf16 %v886
    %v1598 = vunpack.c.h.s8.bf16 %v887
    %v1599 = vunpack.c.h.s8.bf16 %v888
    %v1600 = vunpack.c.h.s8.bf16 %v889
    %v1601 = vunpack.c.h.s8.bf16 %v890
    %v1602 = vunpack.c.h.s8.bf16 %v891
    %v1603 = vunpack.c.h.s8.bf16 %v892
    %v1604 = vunpack.c.h.s8.bf16 %v893
    %v1605 = vunpack.c.l.s8.bf16 %v894
    %v1606 = vunpack.c.l.s8.bf16 %v895
    %v1607 = vunpack.c.l.s8.bf16 %v896
    %v1608 = vunpack.c.l.s8.bf16 %v897
    %v1609 = vunpack.c.l.s8.bf16 %v898
    %v1610 = vunpack.c.l.s8.bf16 %v899
    %v1611 = vunpack.c.l.s8.bf16 %v900
    %v1612 = vunpack.c.l.s8.bf16 %v901
    %v1613 = vunpack.c.l.s8.bf16 %v902
    %v1614 = vunpack.c.h.s8.bf16 %v894
    %v1615 = vunpack.c.h.s8.bf16 %v895
    %v1616 = vunpack.c.h.s8.bf16 %v896
    %v1617 = vunpack.c.h.s8.bf16 %v897
    %v1618 = vunpack.c.h.s8.bf16 %v898
    %v1619 = vunpack.c.h.s8.bf16 %v899
    %v1620 = vunpack.c.h.s8.bf16 %v900
    %v1621 = vunpack.c.h.s8.bf16 %v901
    %v1622 = vunpack.c.h.s8.bf16 %v902
    %v1623 = vunpack.c.l.s8.bf16 %v903
    %v1624 = vunpack.c.l.s8.bf16 %v904
    %v1625 = vunpack.c.l.s8.bf16 %v905
    %v1626 = vunpack.c.l.s8.bf16 %v906
    %v1627 = vunpack.c.l.s8.bf16 %v907
    %v1628 = vunpack.c.l.s8.bf16 %v908
    %v1629 = vunpack.c.l.s8.bf16 %v909
    %v1630 = vunpack.c.l.s8.bf16 %v910
    %v1631 = vunpack.c.l.s8.bf16 %v911
    %v1632 = vunpack.c.h.s8.bf16 %v903
    %v1633 = vunpack.c.h.s8.bf16 %v904
    %v1634 = vunpack.c.h.s8.bf16 %v905
    %v1635 = vunpack.c.h.s8.bf16 %v906
    %v1636 = vunpack.c.h.s8.bf16 %v907
    %v1637 = vunpack.c.h.s8.bf16 %v908
    %v1638 = vunpack.c.h.s8.bf16 %v909
    %v1639 = vunpack.c.h.s8.bf16 %v910
    %v1640 = vunpack.c.h.s8.bf16 %v911
    %v1641 = vunpack.c.l.s8.bf16 %v912
    %v1642 = vunpack.c.l.s8.bf16 %v913
    %v1643 = vunpack.c.l.s8.bf16 %v914
    %v1644 = vunpack.c.l.s8.bf16 %v915
    %v1645 = vunpack.c.l.s8.bf16 %v916
    %v1646 = vunpack.c.l.s8.bf16 %v917
    %v1647 = vunpack.c.l.s8.bf16 %v918
    %v1648 = vunpack.c.l.s8.bf16 %v919
    %v1649 = vunpack.c.l.s8.bf16 %v920
    %v1650 = vunpack.c.h.s8.bf16 %v912
    %v1651 = vunpack.c.h.s8.bf16 %v913
    %v1652 = vunpack.c.h.s8.bf16 %v914
    %v1653 = vunpack.c.h.s8.bf16 %v915
    %v1654 = vunpack.c.h.s8.bf16 %v916
    %v1655 = vunpack.c.h.s8.bf16 %v917
    %v1656 = vunpack.c.h.s8.bf16 %v918
    %v1657 = vunpack.c.h.s8.bf16 %v919
    %v1658 = vunpack.c.h.s8.bf16 %v920
    %v1659 = vunpack.c.l.s8.bf16 %v921
    %v1660 = vunpack.c.l.s8.bf16 %v922
    %v1661 = vunpack.c.l.s8.bf16 %v923
    %v1662 = vunpack.c.l.s8.bf16 %v924
    %v1663 = vunpack.c.l.s8.bf16 %v925
    %v1664 = vunpack.c.l.s8.bf16 %v926
    %v1665 = vunpack.c.l.s8.bf16 %v927
    %v1666 = vunpack.c.l.s8.bf16 %v928
    %v1667 = vunpack.c.l.s8.bf16 %v929
    %v1668 = vunpack.c.h.s8.bf16 %v921
    %v1669 = vunpack.c.h.s8.bf16 %v922
    %v1670 = vunpack.c.h.s8.bf16 %v923
    %v1671 = vunpack.c.h.s8.bf16 %v924
    %v1672 = vunpack.c.h.s8.bf16 %v925
    %v1673 = vunpack.c.h.s8.bf16 %v926
    %v1674 = vunpack.c.h.s8.bf16 %v927
    %v1675 = vunpack.c.h.s8.bf16 %v928
    %v1676 = vunpack.c.h.s8.bf16 %v929
    %v1677 = vunpack.c.l.s8.bf16 %v930
    %v1678 = vunpack.c.l.s8.bf16 %v931
    %v1679 = vunpack.c.l.s8.bf16 %v932
    %v1680 = vunpack.c.l.s8.bf16 %v933
    %v1681 = vunpack.c.l.s8.bf16 %v934
    %v1682 = vunpack.c.l.s8.bf16 %v935
    %v1683 = vunpack.c.l.s8.bf16 %v936
    %v1684 = vunpack.c.l.s8.bf16 %v937
    %v1685 = vunpack.c.l.s8.bf16 %v938
    %v1686 = vunpack.c.h.s8.bf16 %v930
    %v1687 = vunpack.c.h.s8.bf16 %v931
    %v1688 = vunpack.c.h.s8.bf16 %v932
    %v1689 = vunpack.c.h.s8.bf16 %v933
    %v1690 = vunpack.c.h.s8.bf16 %v934
    %v1691 = vunpack.c.h.s8.bf16 %v935
    %v1692 = vunpack.c.h.s8.bf16 %v936
    %v1693 = vunpack.c.h.s8.bf16 %v937
    %v1694 = vunpack.c.h.s8.bf16 %v938
    %v1695 = vunpack.c.l.s8.bf16 %v939
    %v1696 = vunpack.c.l.s8.bf16 %v940
    %v1697 = vunpack.c.l.s8.bf16 %v941
    %v1698 = vunpack.c.l.s8.bf16 %v942
    %v1699 = vunpack.c.l.s8.bf16 %v943
    %v1700 = vunpack.c.l.s8.bf16 %v944
    %v1701 = vunpack.c.l.s8.bf16 %v945
    %v1702 = vunpack.c.l.s8.bf16 %v946
    %v1703 = vunpack.c.l.s8.bf16 %v947
    %v1704 = vunpack.c.h.s8.bf16 %v939
    %v1705 = vunpack.c.h.s8.bf16 %v940
    %v1706 = vunpack.c.h.s8.bf16 %v941
    %v1707 = vunpack.c.h.s8.bf16 %v942
    %v1708 = vunpack.c.h.s8.bf16 %v943
    %v1709 = vunpack.c.h.s8.bf16 %v944
    %v1710 = vunpack.c.h.s8.bf16 %v945
    %v1711 = vunpack.c.h.s8.bf16 %v946
    %v1712 = vunpack.c.h.s8.bf16 %v947
    %v1713 = vunpack.c.l.s8.bf16 %v948
    %v1714 = vunpack.c.l.s8.bf16 %v949
    %v1715 = vunpack.c.l.s8.bf16 %v950
    %v1716 = vunpack.c.l.s8.bf16 %v951
    %v1717 = vunpack.c.l.s8.bf16 %v952
    %v1718 = vunpack.c.l.s8.bf16 %v953
    %v1719 = vunpack.c.l.s8.bf16 %v954
    %v1720 = vunpack.c.l.s8.bf16 %v955
    %v1721 = vunpack.c.l.s8.bf16 %v956
    %v1722 = vunpack.c.h.s8.bf16 %v948
    %v1723 = vunpack.c.h.s8.bf16 %v949
    %v1724 = vunpack.c.h.s8.bf16 %v950
    %v1725 = vunpack.c.h.s8.bf16 %v951
    %v1726 = vunpack.c.h.s8.bf16 %v952
    %v1727 = vunpack.c.h.s8.bf16 %v953
    %v1728 = vunpack.c.h.s8.bf16 %v954
    %v1729 = vunpack.c.h.s8.bf16 %v955
    %v1730 = vunpack.c.h.s8.bf16 %v956
    %v1731 = vunpack.c.l.s8.bf16 %v957
    %v1732 = vunpack.c.l.s8.bf16 %v958
    %v1733 = vunpack.c.l.s8.bf16 %v959
    %v1734 = vunpack.c.l.s8.bf16 %v960
    %v1735 = vunpack.c.l.s8.bf16 %v961
    %v1736 = vunpack.c.l.s8.bf16 %v962
    %v1737 = vunpack.c.l.s8.bf16 %v963
    %v1738 = vunpack.c.l.s8.bf16 %v964
    %v1739 = vunpack.c.l.s8.bf16 %v965
    %v1740 = vunpack.c.h.s8.bf16 %v957
    %v1741 = vunpack.c.h.s8.bf16 %v958
    %v1742 = vunpack.c.h.s8.bf16 %v959
    %v1743 = vunpack.c.h.s8.bf16 %v960
    %v1744 = vunpack.c.h.s8.bf16 %v961
    %v1745 = vunpack.c.h.s8.bf16 %v962
    %v1746 = vunpack.c.h.s8.bf16 %v963
    %v1747 = vunpack.c.h.s8.bf16 %v964
    %v1748 = vunpack.c.h.s8.bf16 %v965
    %v1749 = vunpack.c.l.s8.bf16 %v966
    %v1750 = vunpack.c.l.s8.bf16 %v967
    %v1751 = vunpack.c.l.s8.bf16 %v968
    %v1752 = vunpack.c.l.s8.bf16 %v969
    %v1753 = vunpack.c.l.s8.bf16 %v970
    %v1754 = vunpack.c.l.s8.bf16 %v971
    %v1755 = vunpack.c.l.s8.bf16 %v972
    %v1756 = vunpack.c.l.s8.bf16 %v973
    %v1757 = vunpack.c.l.s8.bf16 %v974
    %v1758 = vunpack.c.h.s8.bf16 %v966
    %v1759 = vunpack.c.h.s8.bf16 %v967
    %v1760 = vunpack.c.h.s8.bf16 %v968
    %v1761 = vunpack.c.h.s8.bf16 %v969
    %v1762 = vunpack.c.h.s8.bf16 %v970
    %v1763 = vunpack.c.h.s8.bf16 %v971
    %v1764 = vunpack.c.h.s8.bf16 %v972
    %v1765 = vunpack.c.h.s8.bf16 %v973
    %v1766 = vunpack.c.h.s8.bf16 %v974
    %v1767 = vunpack.c.l.s8.bf16 %v975
    %v1768 = vunpack.c.l.s8.bf16 %v976
    %v1769 = vunpack.c.l.s8.bf16 %v977
    %v1770 = vunpack.c.l.s8.bf16 %v978
    %v1771 = vunpack.c.l.s8.bf16 %v979
    %v1772 = vunpack.c.l.s8.bf16 %v980
    %v1773 = vunpack.c.l.s8.bf16 %v981
    %v1774 = vunpack.c.l.s8.bf16 %v982
    %v1775 = vunpack.c.l.s8.bf16 %v983
    %v1776 = vunpack.c.h.s8.bf16 %v975
    %v1777 = vunpack.c.h.s8.bf16 %v976
    %v1778 = vunpack.c.h.s8.bf16 %v977
    %v1779 = vunpack.c.h.s8.bf16 %v978
    %v1780 = vunpack.c.h.s8.bf16 %v979
    %v1781 = vunpack.c.h.s8.bf16 %v980
    %v1782 = vunpack.c.h.s8.bf16 %v981
    %v1783 = vunpack.c.h.s8.bf16 %v982
    %v1784 = vunpack.c.h.s8.bf16 %v983
    %v1785 = vunpack.c.l.s8.bf16 %v984
    %v1786 = vunpack.c.l.s8.bf16 %v985
    %v1787 = vunpack.c.l.s8.bf16 %v986
    %v1788 = vunpack.c.l.s8.bf16 %v987
    %v1789 = vunpack.c.l.s8.bf16 %v988
    %v1790 = vunpack.c.l.s8.bf16 %v989
    %v1791 = vunpack.c.l.s8.bf16 %v990
    %v1792 = vunpack.c.l.s8.bf16 %v991
    %v1793 = vunpack.c.l.s8.bf16 %v992
    %v1794 = vunpack.c.h.s8.bf16 %v984
    %v1795 = vunpack.c.h.s8.bf16 %v985
    %v1796 = vunpack.c.h.s8.bf16 %v986
    %v1797 = vunpack.c.h.s8.bf16 %v987
    %v1798 = vunpack.c.h.s8.bf16 %v988
    %v1799 = vunpack.c.h.s8.bf16 %v989
    %v1800 = vunpack.c.h.s8.bf16 %v990
    %v1801 = vunpack.c.h.s8.bf16 %v991
    %v1802 = vunpack.c.h.s8.bf16 %v992
    %v1803 = vunpack.c.l.s8.bf16 %v993
    %v1804 = vunpack.c.l.s8.bf16 %v994
    %v1805 = vunpack.c.l.s8.bf16 %v995
    %v1806 = vunpack.c.l.s8.bf16 %v996
    %v1807 = vunpack.c.l.s8.bf16 %v997
    %v1808 = vunpack.c.l.s8.bf16 %v998
    %v1809 = vunpack.c.l.s8.bf16 %v999
    %v1810 = vunpack.c.l.s8.bf16 %v1000
    %v1811 = vunpack.c.l.s8.bf16 %v1001
    %v1812 = vunpack.c.h.s8.bf16 %v993
    %v1813 = vunpack.c.h.s8.bf16 %v994
    %v1814 = vunpack.c.h.s8.bf16 %v995
    %v1815 = vunpack.c.h.s8.bf16 %v996
    %v1816 = vunpack.c.h.s8.bf16 %v997
    %v1817 = vunpack.c.h.s8.bf16 %v998
    %v1818 = vunpack.c.h.s8.bf16 %v999
    %v1819 = vunpack.c.h.s8.bf16 %v1000
    %v1820 = vunpack.c.h.s8.bf16 %v1001
    %v1821 = vunpack.c.l.s8.bf16 %v1002
    %v1822 = vunpack.c.l.s8.bf16 %v1003
    %v1823 = vunpack.c.l.s8.bf16 %v1004
    %v1824 = vunpack.c.l.s8.bf16 %v1005
    %v1825 = vunpack.c.l.s8.bf16 %v1006
    %v1826 = vunpack.c.l.s8.bf16 %v1007
    %v1827 = vunpack.c.l.s8.bf16 %v1008
    %v1828 = vunpack.c.l.s8.bf16 %v1009
    %v1829 = vunpack.c.l.s8.bf16 %v1010
    %v1830 = vunpack.c.h.s8.bf16 %v1002
    %v1831 = vunpack.c.h.s8.bf16 %v1003
    %v1832 = vunpack.c.h.s8.bf16 %v1004
    %v1833 = vunpack.c.h.s8.bf16 %v1005
    %v1834 = vunpack.c.h.s8.bf16 %v1006
    %v1835 = vunpack.c.h.s8.bf16 %v1007
    %v1836 = vunpack.c.h.s8.bf16 %v1008
    %v1837 = vunpack.c.h.s8.bf16 %v1009
    %v1838 = vunpack.c.h.s8.bf16 %v1010
    %v1839 = vunpack.c.l.s8.bf16 %v1011
    %v1840 = vunpack.c.l.s8.bf16 %v1012
    %v1841 = vunpack.c.l.s8.bf16 %v1013
    %v1842 = vunpack.c.l.s8.bf16 %v1014
    %v1843 = vunpack.c.l.s8.bf16 %v1015
    %v1844 = vunpack.c.l.s8.bf16 %v1016
    %v1845 = vunpack.c.l.s8.bf16 %v1017
    %v1846 = vunpack.c.l.s8.bf16 %v1018
    %v1847 = vunpack.c.l.s8.bf16 %v1019
    %v1848 = vunpack.c.h.s8.bf16 %v1011
    %v1849 = vunpack.c.h.s8.bf16 %v1012
    %v1850 = vunpack.c.h.s8.bf16 %v1013
    %v1851 = vunpack.c.h.s8.bf16 %v1014
    %v1852 = vunpack.c.h.s8.bf16 %v1015
    %v1853 = vunpack.c.h.s8.bf16 %v1016
    %v1854 = vunpack.c.h.s8.bf16 %v1017
    %v1855 = vunpack.c.h.s8.bf16 %v1018
    %v1856 = vunpack.c.h.s8.bf16 %v1019
    %v1857 = vunpack.c.l.s8.bf16 %v1020
    %v1858 = vunpack.c.l.s8.bf16 %v1021
    %v1859 = vunpack.c.l.s8.bf16 %v1022
    %v1860 = vunpack.c.l.s8.bf16 %v1023
    %v1861 = vunpack.c.l.s8.bf16 %v1024
    %v1862 = vunpack.c.l.s8.bf16 %v1025
    %v1863 = vunpack.c.l.s8.bf16 %v1026
    %v1864 = vunpack.c.l.s8.bf16 %v1027
    %v1865 = vunpack.c.l.s8.bf16 %v1028
    %v1866 = vunpack.c.h.s8.bf16 %v1020
    %v1867 = vunpack.c.h.s8.bf16 %v1021
    %v1868 = vunpack.c.h.s8.bf16 %v1022
    %v1869 = vunpack.c.h.s8.bf16 %v1023
    %v1870 = vunpack.c.h.s8.bf16 %v1024
    %v1871 = vunpack.c.h.s8.bf16 %v1025
    %v1872 = vunpack.c.h.s8.bf16 %v1026
    %v1873 = vunpack.c.h.s8.bf16 %v1027
    %v1874 = vunpack.c.h.s8.bf16 %v1028
    %v1875 = vunpack.c.l.s8.bf16 %v1029
    %v1876 = vunpack.c.l.s8.bf16 %v1030
    %v1877 = vunpack.c.l.s8.bf16 %v1031
    %v1878 = vunpack.c.l.s8.bf16 %v1032
    %v1879 = vunpack.c.l.s8.bf16 %v1033
    %v1880 = vunpack.c.l.s8.bf16 %v1034
    %v1881 = vunpack.c.l.s8.bf16 %v1035
    %v1882 = vunpack.c.l.s8.bf16 %v1036
    %v1883 = vunpack.c.l.s8.bf16 %v1037
    %v1884 = vunpack.c.h.s8.bf16 %v1029
    %v1885 = vunpack.c.h.s8.bf16 %v1030
    %v1886 = vunpack.c.h.s8.bf16 %v1031
    %v1887 = vunpack.c.h.s8.bf16 %v1032
    %v1888 = vunpack.c.h.s8.bf16 %v1033
    %v1889 = vunpack.c.h.s8.bf16 %v1034
    %v1890 = vunpack.c.h.s8.bf16 %v1035
    %v1891 = vunpack.c.h.s8.bf16 %v1036
    %v1892 = vunpack.c.h.s8.bf16 %v1037
    %v1893 = vunpack.c.l.s8.bf16 %v1038
    %v1894 = vunpack.c.l.s8.bf16 %v1039
    %v1895 = vunpack.c.l.s8.bf16 %v1040
    %v1896 = vunpack.c.l.s8.bf16 %v1041
    %v1897 = vunpack.c.l.s8.bf16 %v1042
    %v1898 = vunpack.c.l.s8.bf16 %v1043
    %v1899 = vunpack.c.l.s8.bf16 %v1044
    %v1900 = vunpack.c.l.s8.bf16 %v1045
    %v1901 = vunpack.c.l.s8.bf16 %v1046
    %v1902 = vunpack.c.h.s8.bf16 %v1038
    %v1903 = vunpack.c.h.s8.bf16 %v1039
    %v1904 = vunpack.c.h.s8.bf16 %v1040
    %v1905 = vunpack.c.h.s8.bf16 %v1041
    %v1906 = vunpack.c.h.s8.bf16 %v1042
    %v1907 = vunpack.c.h.s8.bf16 %v1043
    %v1908 = vunpack.c.h.s8.bf16 %v1044
    %v1909 = vunpack.c.h.s8.bf16 %v1045
    %v1910 = vunpack.c.h.s8.bf16 %v1046
    %v1911 = vunpack.c.l.s8.bf16 %v1047
    %v1912 = vunpack.c.l.s8.bf16 %v1048
    %v1913 = vunpack.c.l.s8.bf16 %v1049
    %v1914 = vunpack.c.l.s8.bf16 %v1050
    %v1915 = vunpack.c.l.s8.bf16 %v1051
    %v1916 = vunpack.c.l.s8.bf16 %v1052
    %v1917 = vunpack.c.l.s8.bf16 %v1053
    %v1918 = vunpack.c.l.s8.bf16 %v1054
    %v1919 = vunpack.c.l.s8.bf16 %v1055
    %v1920 = vunpack.c.h.s8.bf16 %v1047
    %v1921 = vunpack.c.h.s8.bf16 %v1048
    %v1922 = vunpack.c.h.s8.bf16 %v1049
    %v1923 = vunpack.c.h.s8.bf16 %v1050
    %v1924 = vunpack.c.h.s8.bf16 %v1051
    %v1925 = vunpack.c.h.s8.bf16 %v1052
    %v1926 = vunpack.c.h.s8.bf16 %v1053
    %v1927 = vunpack.c.h.s8.bf16 %v1054
    %v1928 = vunpack.c.h.s8.bf16 %v1055
    %v1929 = vunpack.c.l.s8.bf16 %v1056
    %v1930 = vunpack.c.l.s8.bf16 %v1057
    %v1931 = vunpack.c.l.s8.bf16 %v1058
    %v1932 = vunpack.c.l.s8.bf16 %v1059
    %v1933 = vunpack.c.l.s8.bf16 %v1060
    %v1934 = vunpack.c.l.s8.bf16 %v1061
    %v1935 = vunpack.c.l.s8.bf16 %v1062
    %v1936 = vunpack.c.l.s8.bf16 %v1063
    %v1937 = vunpack.c.l.s8.bf16 %v1064
    %v1938 = vunpack.c.h.s8.bf16 %v1056
    %v1939 = vunpack.c.h.s8.bf16 %v1057
    %v1940 = vunpack.c.h.s8.bf16 %v1058
    %v1941 = vunpack.c.h.s8.bf16 %v1059
    %v1942 = vunpack.c.h.s8.bf16 %v1060
    %v1943 = vunpack.c.h.s8.bf16 %v1061
    %v1944 = vunpack.c.h.s8.bf16 %v1062
    %v1945 = vunpack.c.h.s8.bf16 %v1063
    %v1946 = vunpack.c.h.s8.bf16 %v1064
    %v1947 = vunpack.c.l.s8.bf16 %v1065
    %v1948 = vunpack.c.l.s8.bf16 %v1066
    %v1949 = vunpack.c.l.s8.bf16 %v1067
    %v1950 = vunpack.c.l.s8.bf16 %v1068
    %v1951 = vunpack.c.l.s8.bf16 %v1069
    %v1952 = vunpack.c.l.s8.bf16 %v1070
    %v1953 = vunpack.c.l.s8.bf16 %v1071
    %v1954 = vunpack.c.l.s8.bf16 %v1072
    %v1955 = vunpack.c.l.s8.bf16 %v1073
    %v1956 = vunpack.c.h.s8.bf16 %v1065
    %v1957 = vunpack.c.h.s8.bf16 %v1066
    %v1958 = vunpack.c.h.s8.bf16 %v1067
    %v1959 = vunpack.c.h.s8.bf16 %v1068
    %v1960 = vunpack.c.h.s8.bf16 %v1069
    %v1961 = vunpack.c.h.s8.bf16 %v1070
    %v1962 = vunpack.c.h.s8.bf16 %v1071
    %v1963 = vunpack.c.h.s8.bf16 %v1072
    %v1964 = vunpack.c.h.s8.bf16 %v1073
    %v1965 = vunpack.c.l.s8.bf16 %v1074
    %v1966 = vunpack.c.l.s8.bf16 %v1075
    %v1967 = vunpack.c.l.s8.bf16 %v1076
    %v1968 = vunpack.c.l.s8.bf16 %v1077
    %v1969 = vunpack.c.l.s8.bf16 %v1078
    %v1970 = vunpack.c.l.s8.bf16 %v1079
    %v1971 = vunpack.c.l.s8.bf16 %v1080
    %v1972 = vunpack.c.l.s8.bf16 %v1081
    %v1973 = vunpack.c.l.s8.bf16 %v1082
    %v1974 = vunpack.c.h.s8.bf16 %v1074
    %v1975 = vunpack.c.h.s8.bf16 %v1075
    %v1976 = vunpack.c.h.s8.bf16 %v1076
    %v1977 = vunpack.c.h.s8.bf16 %v1077
    %v1978 = vunpack.c.h.s8.bf16 %v1078
    %v1979 = vunpack.c.h.s8.bf16 %v1079
    %v1980 = vunpack.c.h.s8.bf16 %v1080
    %v1981 = vunpack.c.h.s8.bf16 %v1081
    %v1982 = vunpack.c.h.s8.bf16 %v1082
    %v1983 = vunpack.c.l.s8.bf16 %v1083
    %v1984 = vunpack.c.l.s8.bf16 %v1084
    %v1985 = vunpack.c.l.s8.bf16 %v1085
    %v1986 = vunpack.c.l.s8.bf16 %v1086
    %v1987 = vunpack.c.l.s8.bf16 %v1087
    %v1988 = vunpack.c.l.s8.bf16 %v1088
    %v1989 = vunpack.c.l.s8.bf16 %v1089
    %v1990 = vunpack.c.l.s8.bf16 %v1090
    %v1991 = vunpack.c.l.s8.bf16 %v1091
    %v1992 = vunpack.c.h.s8.bf16 %v1083
    %v1993 = vunpack.c.h.s8.bf16 %v1084
    %v1994 = vunpack.c.h.s8.bf16 %v1085
    %v1995 = vunpack.c.h.s8.bf16 %v1086
    %v1996 = vunpack.c.h.s8.bf16 %v1087
    %v1997 = vunpack.c.h.s8.bf16 %v1088
    %v1998 = vunpack.c.h.s8.bf16 %v1089
    %v1999 = vunpack.c.h.s8.bf16 %v1090
    %v2000 = vunpack.c.h.s8.bf16 %v1091
    %v2001 = vunpack.c.l.s8.bf16 %v1092
    %v2002 = vunpack.c.l.s8.bf16 %v1093
    %v2003 = vunpack.c.l.s8.bf16 %v1094
    %v2004 = vunpack.c.l.s8.bf16 %v1095
    %v2005 = vunpack.c.l.s8.bf16 %v1096
    %v2006 = vunpack.c.l.s8.bf16 %v1097
    %v2007 = vunpack.c.l.s8.bf16 %v1098
    %v2008 = vunpack.c.l.s8.bf16 %v1099
    %v2009 = vunpack.c.l.s8.bf16 %v1100
    %v2010 = vunpack.c.h.s8.bf16 %v1092
    %v2011 = vunpack.c.h.s8.bf16 %v1093
    %v2012 = vunpack.c.h.s8.bf16 %v1094
    %v2013 = vunpack.c.h.s8.bf16 %v1095
    %v2014 = vunpack.c.h.s8.bf16 %v1096
    %v2015 = vunpack.c.h.s8.bf16 %v1097
    %v2016 = vunpack.c.h.s8.bf16 %v1098
    %v2017 = vunpack.c.h.s8.bf16 %v1099
    %v2018 = vunpack.c.h.s8.bf16 %v1100
    %v2019 = vunpack.c.l.s8.bf16 %v1101
    %v2020 = vunpack.c.l.s8.bf16 %v1102
    %v2021 = vunpack.c.l.s8.bf16 %v1103
    %v2022 = vunpack.c.l.s8.bf16 %v1104
    %v2023 = vunpack.c.l.s8.bf16 %v1105
    %v2024 = vunpack.c.l.s8.bf16 %v1106
    %v2025 = vunpack.c.l.s8.bf16 %v1107
    %v2026 = vunpack.c.l.s8.bf16 %v1108
    %v2027 = vunpack.c.l.s8.bf16 %v1109
    %v2028 = vunpack.c.h.s8.bf16 %v1101
    %v2029 = vunpack.c.h.s8.bf16 %v1102
    %v2030 = vunpack.c.h.s8.bf16 %v1103
    %v2031 = vunpack.c.h.s8.bf16 %v1104
    %v2032 = vunpack.c.h.s8.bf16 %v1105
    %v2033 = vunpack.c.h.s8.bf16 %v1106
    %v2034 = vunpack.c.h.s8.bf16 %v1107
    %v2035 = vunpack.c.h.s8.bf16 %v1108
    %v2036 = vunpack.c.h.s8.bf16 %v1109
    %v2037 = vunpack.c.l.s8.bf16 %v1110
    %v2038 = vunpack.c.l.s8.bf16 %v1111
    %v2039 = vunpack.c.l.s8.bf16 %v1112
    %v2040 = vunpack.c.l.s8.bf16 %v1113
    %v2041 = vunpack.c.l.s8.bf16 %v1114
    %v2042 = vunpack.c.l.s8.bf16 %v1115
    %v2043 = vunpack.c.l.s8.bf16 %v1116
    %v2044 = vunpack.c.l.s8.bf16 %v1117
    %v2045 = vunpack.c.l.s8.bf16 %v1118
    %v2046 = vunpack.c.h.s8.bf16 %v1110
    %v2047 = vunpack.c.h.s8.bf16 %v1111
    %v2048 = vunpack.c.h.s8.bf16 %v1112
    %v2049 = vunpack.c.h.s8.bf16 %v1113
    %v2050 = vunpack.c.h.s8.bf16 %v1114
    %v2051 = vunpack.c.h.s8.bf16 %v1115
    %v2052 = vunpack.c.h.s8.bf16 %v1116
    %v2053 = vunpack.c.h.s8.bf16 %v1117
    %v2054 = vunpack.c.h.s8.bf16 %v1118
    %v2055 = vunpack.c.l.s8.bf16 %v1119
    %v2056 = vunpack.c.l.s8.bf16 %v1120
    %v2057 = vunpack.c.l.s8.bf16 %v1121
    %v2058 = vunpack.c.l.s8.bf16 %v1122
    %v2059 = vunpack.c.l.s8.bf16 %v1123
    %v2060 = vunpack.c.l.s8.bf16 %v1124
    %v2061 = vunpack.c.l.s8.bf16 %v1125
    %v2062 = vunpack.c.l.s8.bf16 %v1126
    %v2063 = vunpack.c.l.s8.bf16 %v1127
    %v2064 = vunpack.c.h.s8.bf16 %v1119
    %v2065 = vunpack.c.h.s8.bf16 %v1120
    %v2066 = vunpack.c.h.s8.bf16 %v1121
    %v2067 = vunpack.c.h.s8.bf16 %v1122
    %v2068 = vunpack.c.h.s8.bf16 %v1123
    %v2069 = vunpack.c.h.s8.bf16 %v1124
    %v2070 = vunpack.c.h.s8.bf16 %v1125
    %v2071 = vunpack.c.h.s8.bf16 %v1126
    %v2072 = vunpack.c.h.s8.bf16 %v1127
    %v2073 = vunpack.c.l.s8.bf16 %v1128
    %v2074 = vunpack.c.l.s8.bf16 %v1129
    %v2075 = vunpack.c.l.s8.bf16 %v1130
    %v2076 = vunpack.c.l.s8.bf16 %v1131
    %v2077 = vunpack.c.l.s8.bf16 %v1132
    %v2078 = vunpack.c.l.s8.bf16 %v1133
    %v2079 = vunpack.c.l.s8.bf16 %v1134
    %v2080 = vunpack.c.l.s8.bf16 %v1135
    %v2081 = vunpack.c.l.s8.bf16 %v1136
    %v2082 = vunpack.c.h.s8.bf16 %v1128
    %v2083 = vunpack.c.h.s8.bf16 %v1129
    %v2084 = vunpack.c.h.s8.bf16 %v1130
    %v2085 = vunpack.c.h.s8.bf16 %v1131
    %v2086 = vunpack.c.h.s8.bf16 %v1132
    %v2087 = vunpack.c.h.s8.bf16 %v1133
    %v2088 = vunpack.c.h.s8.bf16 %v1134
    %v2089 = vunpack.c.h.s8.bf16 %v1135
    %v2090 = vunpack.c.h.s8.bf16 %v1136
    %v2091 = vunpack.c.l.s8.bf16 %v1137
    %v2092 = vunpack.c.l.s8.bf16 %v1138
    %v2093 = vunpack.c.l.s8.bf16 %v1139
    %v2094 = vunpack.c.l.s8.bf16 %v1140
    %v2095 = vunpack.c.l.s8.bf16 %v1141
    %v2096 = vunpack.c.l.s8.bf16 %v1142
    %v2097 = vunpack.c.l.s8.bf16 %v1143
    %v2098 = vunpack.c.l.s8.bf16 %v1144
    %v2099 = vunpack.c.l.s8.bf16 %v1145
    %v2100 = vunpack.c.h.s8.bf16 %v1137
    %v2101 = vunpack.c.h.s8.bf16 %v1138
    %v2102 = vunpack.c.h.s8.bf16 %v1139
    %v2103 = vunpack.c.h.s8.bf16 %v1140
    %v2104 = vunpack.c.h.s8.bf16 %v1141
    %v2105 = vunpack.c.h.s8.bf16 %v1142
    %v2106 = vunpack.c.h.s8.bf16 %v1143
    %v2107 = vunpack.c.h.s8.bf16 %v1144
    %v2108 = vunpack.c.h.s8.bf16 %v1145
    %v2109 = vunpack.c.l.s8.bf16 %v1146
    %v2110 = vunpack.c.l.s8.bf16 %v1147
    %v2111 = vunpack.c.l.s8.bf16 %v1148
    %v2112 = vunpack.c.l.s8.bf16 %v1149
    %v2113 = vunpack.c.l.s8.bf16 %v1150
    %v2114 = vunpack.c.l.s8.bf16 %v1151
    %v2115 = vunpack.c.l.s8.bf16 %v1152
    %v2116 = vunpack.c.l.s8.bf16 %v1153
    %v2117 = vunpack.c.l.s8.bf16 %v1154
    %v2118 = vunpack.c.h.s8.bf16 %v1146
    %v2119 = vunpack.c.h.s8.bf16 %v1147
    %v2120 = vunpack.c.h.s8.bf16 %v1148
    %v2121 = vunpack.c.h.s8.bf16 %v1149
    %v2122 = vunpack.c.h.s8.bf16 %v1150
    %v2123 = vunpack.c.h.s8.bf16 %v1151
    %v2124 = vunpack.c.h.s8.bf16 %v1152
    %v2125 = vunpack.c.h.s8.bf16 %v1153
    %v2126 = vunpack.c.h.s8.bf16 %v1154
    %v2127 = vunpack.c.l.s8.bf16 %v1155
    %v2128 = vunpack.c.l.s8.bf16 %v1156
    %v2129 = vunpack.c.l.s8.bf16 %v1157
    %v2130 = vunpack.c.l.s8.bf16 %v1158
    %v2131 = vunpack.c.l.s8.bf16 %v1159
    %v2132 = vunpack.c.l.s8.bf16 %v1160
    %v2133 = vunpack.c.l.s8.bf16 %v1161
    %v2134 = vunpack.c.l.s8.bf16 %v1162
    %v2135 = vunpack.c.l.s8.bf16 %v1163
    %v2136 = vunpack.c.h.s8.bf16 %v1155
    %v2137 = vunpack.c.h.s8.bf16 %v1156
    %v2138 = vunpack.c.h.s8.bf16 %v1157
    %v2139 = vunpack.c.h.s8.bf16 %v1158
    %v2140 = vunpack.c.h.s8.bf16 %v1159
    %v2141 = vunpack.c.h.s8.bf16 %v1160
    %v2142 = vunpack.c.h.s8.bf16 %v1161
    %v2143 = vunpack.c.h.s8.bf16 %v1162
    %v2144 = vunpack.c.h.s8.bf16 %v1163
    %v2145 = vunpack.c.l.s8.bf16 %v1164
    %v2146 = vunpack.c.l.s8.bf16 %v1165
    %v2147 = vunpack.c.l.s8.bf16 %v1166
    %v2148 = vunpack.c.l.s8.bf16 %v1167
    %v2149 = vunpack.c.l.s8.bf16 %v1168
    %v2150 = vunpack.c.l.s8.bf16 %v1169
    %v2151 = vunpack.c.l.s8.bf16 %v1170
    %v2152 = vunpack.c.l.s8.bf16 %v1171
    %v2153 = vunpack.c.l.s8.bf16 %v1172
    %v2154 = vunpack.c.h.s8.bf16 %v1164
    %v2155 = vunpack.c.h.s8.bf16 %v1165
    %v2156 = vunpack.c.h.s8.bf16 %v1166
    %v2157 = vunpack.c.h.s8.bf16 %v1167
    %v2158 = vunpack.c.h.s8.bf16 %v1168
    %v2159 = vunpack.c.h.s8.bf16 %v1169
    %v2160 = vunpack.c.h.s8.bf16 %v1170
    %v2161 = vunpack.c.h.s8.bf16 %v1171
    %v2162 = vunpack.c.h.s8.bf16 %v1172
    %v2163 = vunpack.c.l.s8.bf16 %v1173
    %v2164 = vunpack.c.l.s8.bf16 %v1174
    %v2165 = vunpack.c.l.s8.bf16 %v1175
    %v2166 = vunpack.c.l.s8.bf16 %v1176
    %v2167 = vunpack.c.l.s8.bf16 %v1177
    %v2168 = vunpack.c.l.s8.bf16 %v1178
    %v2169 = vunpack.c.l.s8.bf16 %v1179
    %v2170 = vunpack.c.l.s8.bf16 %v1180
    %v2171 = vunpack.c.l.s8.bf16 %v1181
    %v2172 = vunpack.c.h.s8.bf16 %v1173
    %v2173 = vunpack.c.h.s8.bf16 %v1174
    %v2174 = vunpack.c.h.s8.bf16 %v1175
    %v2175 = vunpack.c.h.s8.bf16 %v1176
    %v2176 = vunpack.c.h.s8.bf16 %v1177
    %v2177 = vunpack.c.h.s8.bf16 %v1178
    %v2178 = vunpack.c.h.s8.bf16 %v1179
    %v2179 = vunpack.c.h.s8.bf16 %v1180
    %v2180 = vunpack.c.h.s8.bf16 %v1181
    %v2181 = vunpack.c.l.s8.bf16 %v1182
    %v2182 = vunpack.c.l.s8.bf16 %v1183
    %v2183 = vunpack.c.l.s8.bf16 %v1184
    %v2184 = vunpack.c.l.s8.bf16 %v1185
    %v2185 = vunpack.c.l.s8.bf16 %v1186
    %v2186 = vunpack.c.l.s8.bf16 %v1187
    %v2187 = vunpack.c.l.s8.bf16 %v1188
    %v2188 = vunpack.c.l.s8.bf16 %v1189
    %v2189 = vunpack.c.l.s8.bf16 %v1190
    %v2190 = vunpack.c.h.s8.bf16 %v1182
    %v2191 = vunpack.c.h.s8.bf16 %v1183
    %v2192 = vunpack.c.h.s8.bf16 %v1184
    %v2193 = vunpack.c.h.s8.bf16 %v1185
    %v2194 = vunpack.c.h.s8.bf16 %v1186
    %v2195 = vunpack.c.h.s8.bf16 %v1187
    %v2196 = vunpack.c.h.s8.bf16 %v1188
    %v2197 = vunpack.c.h.s8.bf16 %v1189
    %v2198 = vunpack.c.h.s8.bf16 %v1190
    %v2199 = vunpack.c.l.s8.bf16 %v1191
    %v2200 = vunpack.c.l.s8.bf16 %v1192
    %v2201 = vunpack.c.l.s8.bf16 %v1193
    %v2202 = vunpack.c.l.s8.bf16 %v1194
    %v2203 = vunpack.c.l.s8.bf16 %v1195
    %v2204 = vunpack.c.l.s8.bf16 %v1196
    %v2205 = vunpack.c.l.s8.bf16 %v1197
    %v2206 = vunpack.c.l.s8.bf16 %v1198
    %v2207 = vunpack.c.l.s8.bf16 %v1199
    %v2208 = vunpack.c.h.s8.bf16 %v1191
    %v2209 = vunpack.c.h.s8.bf16 %v1192
    %v2210 = vunpack.c.h.s8.bf16 %v1193
    %v2211 = vunpack.c.h.s8.bf16 %v1194
    %v2212 = vunpack.c.h.s8.bf16 %v1195
    %v2213 = vunpack.c.h.s8.bf16 %v1196
    %v2214 = vunpack.c.h.s8.bf16 %v1197
    %v2215 = vunpack.c.h.s8.bf16 %v1198
    %v2216 = vunpack.c.h.s8.bf16 %v1199
    %v2217 = vunpack.c.l.s8.bf16 %v1200
    %v2218 = vunpack.c.l.s8.bf16 %v1201
    %v2219 = vunpack.c.l.s8.bf16 %v1202
    %v2220 = vunpack.c.l.s8.bf16 %v1203
    %v2221 = vunpack.c.l.s8.bf16 %v1204
    %v2222 = vunpack.c.l.s8.bf16 %v1205
    %v2223 = vunpack.c.l.s8.bf16 %v1206
    %v2224 = vunpack.c.l.s8.bf16 %v1207
    %v2225 = vunpack.c.l.s8.bf16 %v1208
    %v2226 = vunpack.c.h.s8.bf16 %v1200
    %v2227 = vunpack.c.h.s8.bf16 %v1201
    %v2228 = vunpack.c.h.s8.bf16 %v1202
    %v2229 = vunpack.c.h.s8.bf16 %v1203
    %v2230 = vunpack.c.h.s8.bf16 %v1204
    %v2231 = vunpack.c.h.s8.bf16 %v1205
    %v2232 = vunpack.c.h.s8.bf16 %v1206
    %v2233 = vunpack.c.h.s8.bf16 %v1207
    %v2234 = vunpack.c.h.s8.bf16 %v1208
    %v2235 = vunpack.c.l.s8.bf16 %v1209
    %v2236 = vunpack.c.l.s8.bf16 %v1210
    %v2237 = vunpack.c.l.s8.bf16 %v1211
    %v2238 = vunpack.c.l.s8.bf16 %v1212
    %v2239 = vunpack.c.l.s8.bf16 %v1213
    %v2240 = vunpack.c.l.s8.bf16 %v1214
    %v2241 = vunpack.c.l.s8.bf16 %v1215
    %v2242 = vunpack.c.l.s8.bf16 %v1216
    %v2243 = vunpack.c.l.s8.bf16 %v1217
    %v2244 = vunpack.c.h.s8.bf16 %v1209
    %v2245 = vunpack.c.h.s8.bf16 %v1210
    %v2246 = vunpack.c.h.s8.bf16 %v1211
    %v2247 = vunpack.c.h.s8.bf16 %v1212
    %v2248 = vunpack.c.h.s8.bf16 %v1213
    %v2249 = vunpack.c.h.s8.bf16 %v1214
    %v2250 = vunpack.c.h.s8.bf16 %v1215
    %v2251 = vunpack.c.h.s8.bf16 %v1216
    %v2252 = vunpack.c.h.s8.bf16 %v1217
    %v2253 = vunpack.c.l.s8.bf16 %v1218
    %v2254 = vunpack.c.l.s8.bf16 %v1219
    %v2255 = vunpack.c.l.s8.bf16 %v1220
    %v2256 = vunpack.c.l.s8.bf16 %v1221
    %v2257 = vunpack.c.l.s8.bf16 %v1222
    %v2258 = vunpack.c.l.s8.bf16 %v1223
    %v2259 = vunpack.c.l.s8.bf16 %v1224
    %v2260 = vunpack.c.l.s8.bf16 %v1225
    %v2261 = vunpack.c.l.s8.bf16 %v1226
    %v2262 = vunpack.c.h.s8.bf16 %v1218
    %v2263 = vunpack.c.h.s8.bf16 %v1219
    %v2264 = vunpack.c.h.s8.bf16 %v1220
    %v2265 = vunpack.c.h.s8.bf16 %v1221
    %v2266 = vunpack.c.h.s8.bf16 %v1222
    %v2267 = vunpack.c.h.s8.bf16 %v1223
    %v2268 = vunpack.c.h.s8.bf16 %v1224
    %v2269 = vunpack.c.h.s8.bf16 %v1225
    %v2270 = vunpack.c.h.s8.bf16 %v1226
    %v2271 = vunpack.c.l.s8.bf16 %v1227
    %v2272 = vunpack.c.l.s8.bf16 %v1228
    %v2273 = vunpack.c.l.s8.bf16 %v1229
    %v2274 = vunpack.c.l.s8.bf16 %v1230
    %v2275 = vunpack.c.l.s8.bf16 %v1231
    %v2276 = vunpack.c.l.s8.bf16 %v1232
    %v2277 = vunpack.c.l.s8.bf16 %v1233
    %v2278 = vunpack.c.l.s8.bf16 %v1234
    %v2279 = vunpack.c.l.s8.bf16 %v1235
    %v2280 = vunpack.c.h.s8.bf16 %v1227
    %v2281 = vunpack.c.h.s8.bf16 %v1228
    %v2282 = vunpack.c.h.s8.bf16 %v1229
    %v2283 = vunpack.c.h.s8.bf16 %v1230
    %v2284 = vunpack.c.h.s8.bf16 %v1231
    %v2285 = vunpack.c.h.s8.bf16 %v1232
    %v2286 = vunpack.c.h.s8.bf16 %v1233
    %v2287 = vunpack.c.h.s8.bf16 %v1234
    %v2288 = vunpack.c.h.s8.bf16 %v1235
    %v2289 = vunpack.c.l.s8.bf16 %v1236
    %v2290 = vunpack.c.l.s8.bf16 %v1237
    %v2291 = vunpack.c.l.s8.bf16 %v1238
    %v2292 = vunpack.c.l.s8.bf16 %v1239
    %v2293 = vunpack.c.l.s8.bf16 %v1240
    %v2294 = vunpack.c.l.s8.bf16 %v1241
    %v2295 = vunpack.c.l.s8.bf16 %v1242
    %v2296 = vunpack.c.l.s8.bf16 %v1243
    %v2297 = vunpack.c.l.s8.bf16 %v1244
    %v2298 = vunpack.c.h.s8.bf16 %v1236
    %v2299 = vunpack.c.h.s8.bf16 %v1237
    %v2300 = vunpack.c.h.s8.bf16 %v1238
    %v2301 = vunpack.c.h.s8.bf16 %v1239
    %v2302 = vunpack.c.h.s8.bf16 %v1240
    %v2303 = vunpack.c.h.s8.bf16 %v1241
    %v2304 = vunpack.c.h.s8.bf16 %v1242
    %v2305 = vunpack.c.h.s8.bf16 %v1243
    %v2306 = vunpack.c.h.s8.bf16 %v1244
    %v2307 = vunpack.c.l.s8.bf16 %v1245
    %v2308 = vunpack.c.l.s8.bf16 %v1246
    %v2309 = vunpack.c.l.s8.bf16 %v1247
    %v2310 = vunpack.c.l.s8.bf16 %v1248
    %v2311 = vunpack.c.l.s8.bf16 %v1249
    %v2312 = vunpack.c.l.s8.bf16 %v1250
    %v2313 = vunpack.c.l.s8.bf16 %v1251
    %v2314 = vunpack.c.l.s8.bf16 %v1252
    %v2315 = vunpack.c.l.s8.bf16 %v1253
    %v2316 = vunpack.c.h.s8.bf16 %v1245
    %v2317 = vunpack.c.h.s8.bf16 %v1246
    %v2318 = vunpack.c.h.s8.bf16 %v1247
    %v2319 = vunpack.c.h.s8.bf16 %v1248
    %v2320 = vunpack.c.h.s8.bf16 %v1249
    %v2321 = vunpack.c.h.s8.bf16 %v1250
    %v2322 = vunpack.c.h.s8.bf16 %v1251
    %v2323 = vunpack.c.h.s8.bf16 %v1252
    %v2324 = vunpack.c.h.s8.bf16 %v1253
    %v2325 = vunpack.c.l.s8.bf16 %v1254
    %v2326 = vunpack.c.l.s8.bf16 %v1255
    %v2327 = vunpack.c.l.s8.bf16 %v1256
    %v2328 = vunpack.c.l.s8.bf16 %v1257
    %v2329 = vunpack.c.l.s8.bf16 %v1258
    %v2330 = vunpack.c.l.s8.bf16 %v1259
    %v2331 = vunpack.c.l.s8.bf16 %v1260
    %v2332 = vunpack.c.l.s8.bf16 %v1261
    %v2333 = vunpack.c.l.s8.bf16 %v1262
    %v2334 = vunpack.c.h.s8.bf16 %v1254
    %v2335 = vunpack.c.h.s8.bf16 %v1255
    %v2336 = vunpack.c.h.s8.bf16 %v1256
    %v2337 = vunpack.c.h.s8.bf16 %v1257
    %v2338 = vunpack.c.h.s8.bf16 %v1258
    %v2339 = vunpack.c.h.s8.bf16 %v1259
    %v2340 = vunpack.c.h.s8.bf16 %v1260
    %v2341 = vunpack.c.h.s8.bf16 %v1261
    %v2342 = vunpack.c.h.s8.bf16 %v1262
    %v2343 = vunpack.c.l.s8.bf16 %v1263
    %v2344 = vunpack.c.l.s8.bf16 %v1264
    %v2345 = vunpack.c.l.s8.bf16 %v1265
    %v2346 = vunpack.c.l.s8.bf16 %v1266
    %v2347 = vunpack.c.l.s8.bf16 %v1267
    %v2348 = vunpack.c.l.s8.bf16 %v1268
    %v2349 = vunpack.c.l.s8.bf16 %v1269
    %v2350 = vunpack.c.l.s8.bf16 %v1270
    %v2351 = vunpack.c.l.s8.bf16 %v1271
    %v2352 = vunpack.c.h.s8.bf16 %v1263
    %v2353 = vunpack.c.h.s8.bf16 %v1264
    %v2354 = vunpack.c.h.s8.bf16 %v1265
    %v2355 = vunpack.c.h.s8.bf16 %v1266
    %v2356 = vunpack.c.h.s8.bf16 %v1267
    %v2357 = vunpack.c.h.s8.bf16 %v1268
    %v2358 = vunpack.c.h.s8.bf16 %v1269
    %v2359 = vunpack.c.h.s8.bf16 %v1270
    %v2360 = vunpack.c.h.s8.bf16 %v1271
    %v2361 = vunpack.c.l.s8.bf16 %v1272
    %v2362 = vunpack.c.l.s8.bf16 %v1273
    %v2363 = vunpack.c.l.s8.bf16 %v1274
    %v2364 = vunpack.c.l.s8.bf16 %v1275
    %v2365 = vunpack.c.l.s8.bf16 %v1276
    %v2366 = vunpack.c.l.s8.bf16 %v1277
    %v2367 = vunpack.c.l.s8.bf16 %v1278
    %v2368 = vunpack.c.l.s8.bf16 %v1279
    %v2369 = vunpack.c.l.s8.bf16 %v1280
    %v2370 = vunpack.c.h.s8.bf16 %v1272
    %v2371 = vunpack.c.h.s8.bf16 %v1273
    %v2372 = vunpack.c.h.s8.bf16 %v1274
    %v2373 = vunpack.c.h.s8.bf16 %v1275
    %v2374 = vunpack.c.h.s8.bf16 %v1276
    %v2375 = vunpack.c.h.s8.bf16 %v1277
    %v2376 = vunpack.c.h.s8.bf16 %v1278
    %v2377 = vunpack.c.h.s8.bf16 %v1279
    %v2378 = vunpack.c.h.s8.bf16 %v1280
    %v2379 = vunpack.c.l.s8.bf16 %v1281
    %v2380 = vunpack.c.l.s8.bf16 %v1282
    %v2381 = vunpack.c.l.s8.bf16 %v1283
    %v2382 = vunpack.c.l.s8.bf16 %v1284
    %v2383 = vunpack.c.l.s8.bf16 %v1285
    %v2384 = vunpack.c.l.s8.bf16 %v1286
    %v2385 = vunpack.c.l.s8.bf16 %v1287
    %v2386 = vunpack.c.l.s8.bf16 %v1288
    %v2387 = vunpack.c.l.s8.bf16 %v1289
    %v2388 = vunpack.c.h.s8.bf16 %v1281
    %v2389 = vunpack.c.h.s8.bf16 %v1282
    %v2390 = vunpack.c.h.s8.bf16 %v1283
    %v2391 = vunpack.c.h.s8.bf16 %v1284
    %v2392 = vunpack.c.h.s8.bf16 %v1285
    %v2393 = vunpack.c.h.s8.bf16 %v1286
    %v2394 = vunpack.c.h.s8.bf16 %v1287
    %v2395 = vunpack.c.h.s8.bf16 %v1288
    %v2396 = vunpack.c.h.s8.bf16 %v1289
    %v2397 = vunpack.c.l.s8.bf16 %v1290
    %v2398 = vunpack.c.l.s8.bf16 %v1291
    %v2399 = vunpack.c.l.s8.bf16 %v1292
    %v2400 = vunpack.c.l.s8.bf16 %v1293
    %v2401 = vunpack.c.l.s8.bf16 %v1294
    %v2402 = vunpack.c.l.s8.bf16 %v1295
    %v2403 = vunpack.c.l.s8.bf16 %v1296
    %v2404 = vunpack.c.l.s8.bf16 %v1297
    %v2405 = vunpack.c.l.s8.bf16 %v1298
    %v2406 = vunpack.c.h.s8.bf16 %v1290
    %v2407 = vunpack.c.h.s8.bf16 %v1291
    %v2408 = vunpack.c.h.s8.bf16 %v1292
    %v2409 = vunpack.c.h.s8.bf16 %v1293
    %v2410 = vunpack.c.h.s8.bf16 %v1294
    %v2411 = vunpack.c.h.s8.bf16 %v1295
    %v2412 = vunpack.c.h.s8.bf16 %v1296
    %v2413 = vunpack.c.h.s8.bf16 %v1297
    %v2414 = vunpack.c.h.s8.bf16 %v1298
    %v2415 = vunpack.c.l.s8.bf16 %v1299
    %v2416 = vunpack.c.l.s8.bf16 %v1300
    %v2417 = vunpack.c.l.s8.bf16 %v1301
    %v2418 = vunpack.c.l.s8.bf16 %v1302
    %v2419 = vunpack.c.l.s8.bf16 %v1303
    %v2420 = vunpack.c.l.s8.bf16 %v1304
    %v2421 = vunpack.c.l.s8.bf16 %v1305
    %v2422 = vunpack.c.l.s8.bf16 %v1306
    %v2423 = vunpack.c.l.s8.bf16 %v1307
    %v2424 = vunpack.c.h.s8.bf16 %v1299
    %v2425 = vunpack.c.h.s8.bf16 %v1300
    %v2426 = vunpack.c.h.s8.bf16 %v1301
    %v2427 = vunpack.c.h.s8.bf16 %v1302
    %v2428 = vunpack.c.h.s8.bf16 %v1303
    %v2429 = vunpack.c.h.s8.bf16 %v1304
    %v2430 = vunpack.c.h.s8.bf16 %v1305
    %v2431 = vunpack.c.h.s8.bf16 %v1306
    %v2432 = vunpack.c.h.s8.bf16 %v1307
    %v2433 = vunpack.c.l.s8.bf16 %v1308
    %v2434 = vunpack.c.l.s8.bf16 %v1309
    %v2435 = vunpack.c.l.s8.bf16 %v1310
    %v2436 = vunpack.c.l.s8.bf16 %v1311
    %v2437 = vunpack.c.l.s8.bf16 %v1312
    %v2438 = vunpack.c.l.s8.bf16 %v1313
    %v2439 = vunpack.c.l.s8.bf16 %v1314
    %v2440 = vunpack.c.l.s8.bf16 %v1315
    %v2441 = vunpack.c.l.s8.bf16 %v1316
    %v2442 = vunpack.c.h.s8.bf16 %v1308
    %v2443 = vunpack.c.h.s8.bf16 %v1309
    %v2444 = vunpack.c.h.s8.bf16 %v1310
    %v2445 = vunpack.c.h.s8.bf16 %v1311
    %v2446 = vunpack.c.h.s8.bf16 %v1312
    %v2447 = vunpack.c.h.s8.bf16 %v1313
    %v2448 = vunpack.c.h.s8.bf16 %v1314
    %v2449 = vunpack.c.h.s8.bf16 %v1315
    %v2450 = vunpack.c.h.s8.bf16 %v1316
    %v2451 = vunpack.c.l.s8.bf16 %v1317
    %v2452 = vunpack.c.l.s8.bf16 %v1318
    %v2453 = vunpack.c.l.s8.bf16 %v1319
    %v2454 = vunpack.c.l.s8.bf16 %v1320
    %v2455 = vunpack.c.l.s8.bf16 %v1321
    %v2456 = vunpack.c.l.s8.bf16 %v1322
    %v2457 = vunpack.c.l.s8.bf16 %v1323
    %v2458 = vunpack.c.l.s8.bf16 %v1324
    %v2459 = vunpack.c.l.s8.bf16 %v1325
    %v2460 = vunpack.c.h.s8.bf16 %v1317
    %v2461 = vunpack.c.h.s8.bf16 %v1318
    %v2462 = vunpack.c.h.s8.bf16 %v1319
    %v2463 = vunpack.c.h.s8.bf16 %v1320
    %v2464 = vunpack.c.h.s8.bf16 %v1321
    %v2465 = vunpack.c.h.s8.bf16 %v1322
    %v2466 = vunpack.c.h.s8.bf16 %v1323
    %v2467 = vunpack.c.h.s8.bf16 %v1324
    %v2468 = vunpack.c.h.s8.bf16 %v1325
    %v2469 = vunpack.c.l.s8.bf16 %v1326
    %v2470 = vunpack.c.l.s8.bf16 %v1327
    %v2471 = vunpack.c.l.s8.bf16 %v1328
    %v2472 = vunpack.c.l.s8.bf16 %v1329
    %v2473 = vunpack.c.l.s8.bf16 %v1330
    %v2474 = vunpack.c.l.s8.bf16 %v1331
    %v2475 = vunpack.c.l.s8.bf16 %v1332
    %v2476 = vunpack.c.l.s8.bf16 %v1333
    %v2477 = vunpack.c.l.s8.bf16 %v1334
    %v2478 = vunpack.c.h.s8.bf16 %v1326
    %v2479 = vunpack.c.h.s8.bf16 %v1327
    %v2480 = vunpack.c.h.s8.bf16 %v1328
    %v2481 = vunpack.c.h.s8.bf16 %v1329
    %v2482 = vunpack.c.h.s8.bf16 %v1330
    %v2483 = vunpack.c.h.s8.bf16 %v1331
    %v2484 = vunpack.c.h.s8.bf16 %v1332
    %v2485 = vunpack.c.h.s8.bf16 %v1333
    %v2486 = vunpack.c.h.s8.bf16 %v1334
    %2487 = vmatprep.subr.bf16.mxu0 %v1399
    %2488 = vmatpush1.bf16.msra.mxu0 %v1398
    %2489 = vmatprep.subr.bf16.mxu0 %v1390
    %2490 = vmatpush1.bf16.msra.mxu0 %v1389
    %2491 = vmatprep.subr.bf16.mxu0 %v1381
    %2492 = vmatpush1.bf16.msra.mxu0 %v1380
    %2493 = vmatprep.subr.bf16.mxu0 %v1372
    %2494 = vmatpush1.bf16.msra.mxu0 %v1371
    %2495 = vmatprep.subr.bf16.mxu0 %v1363
    %2496 = vmatpush1.bf16.msra.mxu0 %v1362
    %2497 = vmatprep.subr.bf16.mxu0 %v1354
    %2498 = vmatpush1.bf16.msra.mxu0 %v1353
    %2499 = vmatprep.subr.bf16.mxu0 %v1345
    %2500 = vmatpush1.bf16.msra.mxu0 %v1344
    %2501 = vmatprep.subr.bf16.mxu0 %v1336
    %2502 = vmatpush1.bf16.msra.mxu0 %v1335
    %2503 = vmatprep.subr.bf16.mxu0 %v1471
    %2504 = vmatpush2.bf16.msra.mxu0 %v1470
    %2505 = vmatprep.subr.bf16.mxu0 %v1462
    %2506 = vmatpush2.bf16.msra.mxu0 %v1461
    %2507 = vmatprep.subr.bf16.mxu0 %v1453
    %2508 = vmatpush2.bf16.msra.mxu0 %v1452
    %2509 = vmatprep.subr.bf16.mxu0 %v1444
    %2510 = vmatpush2.bf16.msra.mxu0 %v1443
    %2511 = vmatprep.subr.bf16.mxu0 %v1435
    %2512 = vmatpush2.bf16.msra.mxu0 %v1434
    %2513 = vmatprep.subr.bf16.mxu0 %v1426
    %2514 = vmatpush2.bf16.msra.mxu0 %v1425
    %2515 = vmatprep.subr.bf16.mxu0 %v1417
    %2516 = vmatpush2.bf16.msra.mxu0 %v1416
    %2517 = vmatprep.subr.bf16.mxu0 %v1408
    %2518 = vmatpush2.bf16.msra.mxu0 %v1407
    %2519 = vmatprep.mubr.bf16.mxu0 %v744
    %2520 = vmatmul.mubr.bf16.gmra.mxu0 %v743
    %v2521 = vpop.f32.mrf.mxu0
    %v2522 = vadd.f32 0.0, %v2521
    %v2523 = vpop.f32.mrf.mxu0
    %v2524 = vadd.f32 0.0, %v2523
    %v2525 = vpop.f32.mrf.mxu0
    %v2526 = vpop.f32.mrf.mxu0
    %2527 = vdwg.mxu0
    %2528 = vmatprep.subr.bf16.mxu0 %v1543
    %2529 = vmatpush1.bf16.msra.mxu0 %v1542
    %2530 = vmatprep.subr.bf16.mxu0 %v1534
    %2531 = vmatpush1.bf16.msra.mxu0 %v1533
    %2532 = vmatprep.subr.bf16.mxu0 %v1525
    %2533 = vmatpush1.bf16.msra.mxu0 %v1524
    %2534 = vmatprep.subr.bf16.mxu0 %v1516
    %2535 = vmatpush1.bf16.msra.mxu0 %v1515
    %2536 = vmatprep.subr.bf16.mxu0 %v1507
    %2537 = vmatpush1.bf16.msra.mxu0 %v1506
    %2538 = vmatprep.subr.bf16.mxu0 %v1498
    %2539 = vmatpush1.bf16.msra.mxu0 %v1497
    %2540 = vmatprep.subr.bf16.mxu0 %v1489
    %2541 = vmatpush1.bf16.msra.mxu0 %v1488
    %2542 = vmatprep.subr.bf16.mxu0 %v1480
    %2543 = vmatpush1.bf16.msra.mxu0 %v1479
    %2544 = vmatprep.subr.bf16.mxu0 %v1615
    %2545 = vmatpush2.bf16.msra.mxu0 %v1614
    %2546 = vmatprep.subr.bf16.mxu0 %v1606
    %2547 = vmatpush2.bf16.msra.mxu0 %v1605
    %2548 = vmatprep.subr.bf16.mxu0 %v1597
    %2549 = vmatpush2.bf16.msra.mxu0 %v1596
    %2550 = vmatprep.subr.bf16.mxu0 %v1588
    %2551 = vmatpush2.bf16.msra.mxu0 %v1587
    %2552 = vmatprep.subr.bf16.mxu0 %v1579
    %2553 = vmatpush2.bf16.msra.mxu0 %v1578
    %2554 = vmatprep.subr.bf16.mxu0 %v1570
    %2555 = vmatpush2.bf16.msra.mxu0 %v1569
    %2556 = vmatprep.subr.bf16.mxu0 %v1561
    %2557 = vmatpush2.bf16.msra.mxu0 %v1560
    %2558 = vmatprep.subr.bf16.mxu0 %v1552
    %2559 = vmatpush2.bf16.msra.mxu0 %v1551
    %2560 = vmatprep.mubr.bf16.mxu0 %v746
    %2561 = vmatmul.mubr.bf16.gmra.mxu0 %v745
    %v2562 = vpop.f32.mrf.mxu0
    %v2563 = vadd.f32 %v2522, %v2562
    %v2564 = vpop.f32.mrf.mxu0
    %v2565 = vadd.f32 %v2524, %v2564
    %v2566 = vpop.f32.mrf.mxu0
    %v2567 = vpop.f32.mrf.mxu0
    %2568 = vdwg.mxu0
    %2569 = vmatprep.subr.bf16.mxu0 %v1687
    %2570 = vmatpush1.bf16.msra.mxu0 %v1686
    %2571 = vmatprep.subr.bf16.mxu0 %v1678
    %2572 = vmatpush1.bf16.msra.mxu0 %v1677
    %2573 = vmatprep.subr.bf16.mxu0 %v1669
    %2574 = vmatpush1.bf16.msra.mxu0 %v1668
    %2575 = vmatprep.subr.bf16.mxu0 %v1660
    %2576 = vmatpush1.bf16.msra.mxu0 %v1659
    %2577 = vmatprep.subr.bf16.mxu0 %v1651
    %2578 = vmatpush1.bf16.msra.mxu0 %v1650
    %2579 = vmatprep.subr.bf16.mxu0 %v1642
    %2580 = vmatpush1.bf16.msra.mxu0 %v1641
    %2581 = vmatprep.subr.bf16.mxu0 %v1633
    %2582 = vmatpush1.bf16.msra.mxu0 %v1632
    %2583 = vmatprep.subr.bf16.mxu0 %v1624
    %2584 = vmatpush1.bf16.msra.mxu0 %v1623
    %2585 = vmatprep.subr.bf16.mxu0 %v1759
    %2586 = vmatpush2.bf16.msra.mxu0 %v1758
    %2587 = vmatprep.subr.bf16.mxu0 %v1750
    %2588 = vmatpush2.bf16.msra.mxu0 %v1749
    %2589 = vmatprep.subr.bf16.mxu0 %v1741
    %2590 = vmatpush2.bf16.msra.mxu0 %v1740
    %2591 = vmatprep.subr.bf16.mxu0 %v1732
    %2592 = vmatpush2.bf16.msra.mxu0 %v1731
    %2593 = vmatprep.subr.bf16.mxu0 %v1723
    %2594 = vmatpush2.bf16.msra.mxu0 %v1722
    %2595 = vmatprep.subr.bf16.mxu0 %v1714
    %2596 = vmatpush2.bf16.msra.mxu0 %v1713
    %2597 = vmatprep.subr.bf16.mxu0 %v1705
    %2598 = vmatpush2.bf16.msra.mxu0 %v1704
    %2599 = vmatprep.subr.bf16.mxu0 %v1696
    %2600 = vmatpush2.bf16.msra.mxu0 %v1695
    %2601 = vmatprep.mubr.bf16.mxu0 %v748
    %2602 = vmatmul.mubr.bf16.gmra.mxu0 %v747
    %v2603 = vpop.f32.mrf.mxu0
    %v2604 = vadd.f32 %v2563, %v2603
    %v2605 = vpop.f32.mrf.mxu0
    %v2606 = vadd.f32 %v2565, %v2605
    %v2607 = vpop.f32.mrf.mxu0
    %v2608 = vpop.f32.mrf.mxu0
    %2609 = vdwg.mxu0
    %2610 = vmatprep.subr.bf16.mxu0 %v1831
    %2611 = vmatpush1.bf16.msra.mxu0 %v1830
    %2612 = vmatprep.subr.bf16.mxu0 %v1822
    %2613 = vmatpush1.bf16.msra.mxu0 %v1821
    %2614 = vmatprep.subr.bf16.mxu0 %v1813
    %2615 = vmatpush1.bf16.msra.mxu0 %v1812
    %2616 = vmatprep.subr.bf16.mxu0 %v1804
    %2617 = vmatpush1.bf16.msra.mxu0 %v1803
    %2618 = vmatprep.subr.bf16.mxu0 %v1795
    %2619 = vmatpush1.bf16.msra.mxu0 %v1794
    %2620 = vmatprep.subr.bf16.mxu0 %v1786
    %2621 = vmatpush1.bf16.msra.mxu0 %v1785
    %2622 = vmatprep.subr.bf16.mxu0 %v1777
    %2623 = vmatpush1.bf16.msra.mxu0 %v1776
    %2624 = vmatprep.subr.bf16.mxu0 %v1768
    %2625 = vmatpush1.bf16.msra.mxu0 %v1767
    %2626 = vmatprep.subr.bf16.mxu0 %v1903
    %2627 = vmatpush2.bf16.msra.mxu0 %v1902
    %2628 = vmatprep.subr.bf16.mxu0 %v1894
    %2629 = vmatpush2.bf16.msra.mxu0 %v1893
    %2630 = vmatprep.subr.bf16.mxu0 %v1885
    %2631 = vmatpush2.bf16.msra.mxu0 %v1884
    %2632 = vmatprep.subr.bf16.mxu0 %v1876
    %2633 = vmatpush2.bf16.msra.mxu0 %v1875
    %2634 = vmatprep.subr.bf16.mxu0 %v1867
    %2635 = vmatpush2.bf16.msra.mxu0 %v1866
    %2636 = vmatprep.subr.bf16.mxu0 %v1858
    %2637 = vmatpush2.bf16.msra.mxu0 %v1857
    %2638 = vmatprep.subr.bf16.mxu0 %v1849
    %2639 = vmatpush2.bf16.msra.mxu0 %v1848
    %2640 = vmatprep.subr.bf16.mxu0 %v1840
    %2641 = vmatpush2.bf16.msra.mxu0 %v1839
    %2642 = vmatprep.mubr.bf16.mxu0 %v750
    %2643 = vmatmul.mubr.bf16.gmra.mxu0 %v749
    %v2644 = vpop.f32.mrf.mxu0
    %v2645 = vadd.f32 %v2604, %v2644
    %v2646 = vpop.f32.mrf.mxu0
    %v2647 = vadd.f32 %v2606, %v2646
    %v2648 = vpop.f32.mrf.mxu0
    %v2649 = vpop.f32.mrf.mxu0
    %2650 = vdwg.mxu0
    %2651 = vmatprep.subr.bf16.mxu0 %v1975
    %2652 = vmatpush1.bf16.msra.mxu0 %v1974
    %2653 = vmatprep.subr.bf16.mxu0 %v1966
    %2654 = vmatpush1.bf16.msra.mxu0 %v1965
    %2655 = vmatprep.subr.bf16.mxu0 %v1957
    %2656 = vmatpush1.bf16.msra.mxu0 %v1956
    %2657 = vmatprep.subr.bf16.mxu0 %v1948
    %2658 = vmatpush1.bf16.msra.mxu0 %v1947
    %2659 = vmatprep.subr.bf16.mxu0 %v1939
    %2660 = vmatpush1.bf16.msra.mxu0 %v1938
    %2661 = vmatprep.subr.bf16.mxu0 %v1930
    %2662 = vmatpush1.bf16.msra.mxu0 %v1929
    %2663 = vmatprep.subr.bf16.mxu0 %v1921
    %2664 = vmatpush1.bf16.msra.mxu0 %v1920
    %2665 = vmatprep.subr.bf16.mxu0 %v1912
    %2666 = vmatpush1.bf16.msra.mxu0 %v1911
    %2667 = vmatprep.subr.bf16.mxu0 %v2047
    %2668 = vmatpush2.bf16.msra.mxu0 %v2046
    %2669 = vmatprep.subr.bf16.mxu0 %v2038
    %2670 = vmatpush2.bf16.msra.mxu0 %v2037
    %2671 = vmatprep.subr.bf16.mxu0 %v2029
    %2672 = vmatpush2.bf16.msra.mxu0 %v2028
    %2673 = vmatprep.subr.bf16.mxu0 %v2020
    %2674 = vmatpush2.bf16.msra.mxu0 %v2019
    %2675 = vmatprep.subr.bf16.mxu0 %v2011
    %2676 = vmatpush2.bf16.msra.mxu0 %v2010
    %2677 = vmatprep.subr.bf16.mxu0 %v2002
    %2678 = vmatpush2.bf16.msra.mxu0 %v2001
    %2679 = vmatprep.subr.bf16.mxu0 %v1993
    %2680 = vmatpush2.bf16.msra.mxu0 %v1992
    %2681 = vmatprep.subr.bf16.mxu0 %v1984
    %2682 = vmatpush2.bf16.msra.mxu0 %v1983
    %2683 = vmatprep.mubr.bf16.mxu0 %v752
    %2684 = vmatmul.mubr.bf16.gmra.mxu0 %v751
    %v2685 = vpop.f32.mrf.mxu0
    %v2686 = vadd.f32 %v2645, %v2685
    %v2687 = vpop.f32.mrf.mxu0
    %v2688 = vadd.f32 %v2647, %v2687
    %v2689 = vpop.f32.mrf.mxu0
    %v2690 = vpop.f32.mrf.mxu0
    %2691 = vdwg.mxu0
    %2692 = vmatprep.subr.bf16.mxu0 %v2119
    %2693 = vmatpush1.bf16.msra.mxu0 %v2118
    %2694 = vmatprep.subr.bf16.mxu0 %v2110
    %2695 = vmatpush1.bf16.msra.mxu0 %v2109
    %2696 = vmatprep.subr.bf16.mxu0 %v2101
    %2697 = vmatpush1.bf16.msra.mxu0 %v2100
    %2698 = vmatprep.subr.bf16.mxu0 %v2092
    %2699 = vmatpush1.bf16.msra.mxu0 %v2091
    %2700 = vmatprep.subr.bf16.mxu0 %v2083
    %2701 = vmatpush1.bf16.msra.mxu0 %v2082
    %2702 = vmatprep.subr.bf16.mxu0 %v2074
    %2703 = vmatpush1.bf16.msra.mxu0 %v2073
    %2704 = vmatprep.subr.bf16.mxu0 %v2065
    %2705 = vmatpush1.bf16.msra.mxu0 %v2064
    %2706 = vmatprep.subr.bf16.mxu0 %v2056
    %2707 = vmatpush1.bf16.msra.mxu0 %v2055
    %2708 = vmatprep.subr.bf16.mxu0 %v2191
    %2709 = vmatpush2.bf16.msra.mxu0 %v2190
    %2710 = vmatprep.subr.bf16.mxu0 %v2182
    %2711 = vmatpush2.bf16.msra.mxu0 %v2181
    %2712 = vmatprep.subr.bf16.mxu0 %v2173
    %2713 = vmatpush2.bf16.msra.mxu0 %v2172
    %2714 = vmatprep.subr.bf16.mxu0 %v2164
    %2715 = vmatpush2.bf16.msra.mxu0 %v2163
    %2716 = vmatprep.subr.bf16.mxu0 %v2155
    %2717 = vmatpush2.bf16.msra.mxu0 %v2154
    %2718 = vmatprep.subr.bf16.mxu0 %v2146
    %2719 = vmatpush2.bf16.msra.mxu0 %v2145
    %2720 = vmatprep.subr.bf16.mxu0 %v2137
    %2721 = vmatpush2.bf16.msra.mxu0 %v2136
    %2722 = vmatprep.subr.bf16.mxu0 %v2128
    %2723 = vmatpush2.bf16.msra.mxu0 %v2127
    %2724 = vmatprep.mubr.bf16.mxu0 %v754
    %2725 = vmatmul.mubr.bf16.gmra.mxu0 %v753
    %v2726 = vpop.f32.mrf.mxu0
    %v2727 = vadd.f32 %v2686, %v2726
    %v2728 = vpop.f32.mrf.mxu0
    %v2729 = vadd.f32 %v2688, %v2728
    %v2730 = vpop.f32.mrf.mxu0
    %v2731 = vpop.f32.mrf.mxu0
    %2732 = vdwg.mxu0
    %2733 = vmatprep.subr.bf16.mxu0 %v2263
    %2734 = vmatpush1.bf16.msra.mxu0 %v2262
    %2735 = vmatprep.subr.bf16.mxu0 %v2254
    %2736 = vmatpush1.bf16.msra.mxu0 %v2253
    %2737 = vmatprep.subr.bf16.mxu0 %v2245
    %2738 = vmatpush1.bf16.msra.mxu0 %v2244
    %2739 = vmatprep.subr.bf16.mxu0 %v2236
    %2740 = vmatpush1.bf16.msra.mxu0 %v2235
    %2741 = vmatprep.subr.bf16.mxu0 %v2227
    %2742 = vmatpush1.bf16.msra.mxu0 %v2226
    %2743 = vmatprep.subr.bf16.mxu0 %v2218
    %2744 = vmatpush1.bf16.msra.mxu0 %v2217
    %2745 = vmatprep.subr.bf16.mxu0 %v2209
    %2746 = vmatpush1.bf16.msra.mxu0 %v2208
    %2747 = vmatprep.subr.bf16.mxu0 %v2200
    %2748 = vmatpush1.bf16.msra.mxu0 %v2199
    %2749 = vmatprep.subr.bf16.mxu0 %v2335
    %2750 = vmatpush2.bf16.msra.mxu0 %v2334
    %2751 = vmatprep.subr.bf16.mxu0 %v2326
    %2752 = vmatpush2.bf16.msra.mxu0 %v2325
    %2753 = vmatprep.subr.bf16.mxu0 %v2317
    %2754 = vmatpush2.bf16.msra.mxu0 %v2316
    %2755 = vmatprep.subr.bf16.mxu0 %v2308
    %2756 = vmatpush2.bf16.msra.mxu0 %v2307
    %2757 = vmatprep.subr.bf16.mxu0 %v2299
    %2758 = vmatpush2.bf16.msra.mxu0 %v2298
    %2759 = vmatprep.subr.bf16.mxu0 %v2290
    %2760 = vmatpush2.bf16.msra.mxu0 %v2289
    %2761 = vmatprep.subr.bf16.mxu0 %v2281
    %2762 = vmatpush2.bf16.msra.mxu0 %v2280
    %2763 = vmatprep.subr.bf16.mxu0 %v2272
    %2764 = vmatpush2.bf16.msra.mxu0 %v2271
    %2765 = vmatprep.mubr.bf16.mxu0 %v756
    %2766 = vmatmul.mubr.bf16.gmra.mxu0 %v755
    %v2767 = vpop.f32.mrf.mxu0
    %v2768 = vadd.f32 %v2727, %v2767
    %v2769 = vpop.f32.mrf.mxu0
    %v2770 = vadd.f32 %v2729, %v2769
    %v2771 = vpop.f32.mrf.mxu0
    %v2772 = vpop.f32.mrf.mxu0
    %2773 = vdwg.mxu0
    %2774 = vmatprep.subr.bf16.mxu0 %v2407
    %2775 = vmatpush1.bf16.msra.mxu0 %v2406
    %2776 = vmatprep.subr.bf16.mxu0 %v2398
    %2777 = vmatpush1.bf16.msra.mxu0 %v2397
    %2778 = vmatprep.subr.bf16.mxu0 %v2389
    %2779 = vmatpush1.bf16.msra.mxu0 %v2388
    %2780 = vmatprep.subr.bf16.mxu0 %v2380
    %2781 = vmatpush1.bf16.msra.mxu0 %v2379
    %2782 = vmatprep.subr.bf16.mxu0 %v2371
    %2783 = vmatpush1.bf16.msra.mxu0 %v2370
    %2784 = vmatprep.subr.bf16.mxu0 %v2362
    %2785 = vmatpush1.bf16.msra.mxu0 %v2361
    %2786 = vmatprep.subr.bf16.mxu0 %v2353
    %2787 = vmatpush1.bf16.msra.mxu0 %v2352
    %2788 = vmatprep.subr.bf16.mxu0 %v2344
    %2789 = vmatpush1.bf16.msra.mxu0 %v2343
    %2790 = vmatprep.subr.bf16.mxu0 %v2479
    %2791 = vmatpush2.bf16.msra.mxu0 %v2478
    %2792 = vmatprep.subr.bf16.mxu0 %v2470
    %2793 = vmatpush2.bf16.msra.mxu0 %v2469
    %2794 = vmatprep.subr.bf16.mxu0 %v2461
    %2795 = vmatpush2.bf16.msra.mxu0 %v2460
    %2796 = vmatprep.subr.bf16.mxu0 %v2452
    %2797 = vmatpush2.bf16.msra.mxu0 %v2451
    %2798 = vmatprep.subr.bf16.mxu0 %v2443
    %2799 = vmatpush2.bf16.msra.mxu0 %v2442
    %2800 = vmatprep.subr.bf16.mxu0 %v2434
    %2801 = vmatpush2.bf16.msra.mxu0 %v2433
    %2802 = vmatprep.subr.bf16.mxu0 %v2425
    %2803 = vmatpush2.bf16.msra.mxu0 %v2424
    %2804 = vmatprep.subr.bf16.mxu0 %v2416
    %2805 = vmatpush2.bf16.msra.mxu0 %v2415
    %2806 = vmatprep.mubr.bf16.mxu0 %v758
    %2807 = vmatmul.mubr.bf16.gmra.mxu0 %v757
    %v2808 = vpop.f32.mrf.mxu0
    %v2809 = vadd.f32 %v2768, %v2808
    %v2810 = vpop.f32.mrf.mxu0
    %v2811 = vadd.f32 %v2770, %v2810
    %v2812 = vpop.f32.mrf.mxu0
    %v2813 = vpop.f32.mrf.mxu0
    %2814 = vdwg.mxu0
    %2815 = vmatprep.subr.bf16.mxu0 %v1401
    %2816 = vmatpush1.bf16.msra.mxu0 %v1400
    %2817 = vmatprep.subr.bf16.mxu0 %v1392
    %2818 = vmatpush1.bf16.msra.mxu0 %v1391
    %2819 = vmatprep.subr.bf16.mxu0 %v1383
    %2820 = vmatpush1.bf16.msra.mxu0 %v1382
    %2821 = vmatprep.subr.bf16.mxu0 %v1374
    %2822 = vmatpush1.bf16.msra.mxu0 %v1373
    %2823 = vmatprep.subr.bf16.mxu0 %v1365
    %2824 = vmatpush1.bf16.msra.mxu0 %v1364
    %2825 = vmatprep.subr.bf16.mxu0 %v1356
    %2826 = vmatpush1.bf16.msra.mxu0 %v1355
    %2827 = vmatprep.subr.bf16.mxu0 %v1347
    %2828 = vmatpush1.bf16.msra.mxu0 %v1346
    %2829 = vmatprep.subr.bf16.mxu0 %v1338
    %2830 = vmatpush1.bf16.msra.mxu0 %v1337
    %2831 = vmatprep.subr.bf16.mxu0 %v1473
    %2832 = vmatpush2.bf16.msra.mxu0 %v1472
    %2833 = vmatprep.subr.bf16.mxu0 %v1464
    %2834 = vmatpush2.bf16.msra.mxu0 %v1463
    %2835 = vmatprep.subr.bf16.mxu0 %v1455
    %2836 = vmatpush2.bf16.msra.mxu0 %v1454
    %2837 = vmatprep.subr.bf16.mxu0 %v1446
    %2838 = vmatpush2.bf16.msra.mxu0 %v1445
    %2839 = vmatprep.subr.bf16.mxu0 %v1437
    %2840 = vmatpush2.bf16.msra.mxu0 %v1436
    %2841 = vmatprep.subr.bf16.mxu0 %v1428
    %2842 = vmatpush2.bf16.msra.mxu0 %v1427
    %2843 = vmatprep.subr.bf16.mxu0 %v1419
    %2844 = vmatpush2.bf16.msra.mxu0 %v1418
    %2845 = vmatprep.subr.bf16.mxu0 %v1410
    %2846 = vmatpush2.bf16.msra.mxu0 %v1409
    %2847 = vmatprep.mubr.bf16.mxu0 %v744
    %2848 = vmatmul.mubr.bf16.gmra.mxu0 %v743
    %v2849 = vpop.f32.mrf.mxu0
    %v2850 = vadd.f32 0.0, %v2849
    %v2851 = vpop.f32.mrf.mxu0
    %v2852 = vadd.f32 0.0, %v2851
    %v2853 = vpop.f32.mrf.mxu0
    %v2854 = vpop.f32.mrf.mxu0
    %2855 = vdwg.mxu0
    %2856 = vmatprep.subr.bf16.mxu0 %v1545
    %2857 = vmatpush1.bf16.msra.mxu0 %v1544
    %2858 = vmatprep.subr.bf16.mxu0 %v1536
    %2859 = vmatpush1.bf16.msra.mxu0 %v1535
    %2860 = vmatprep.subr.bf16.mxu0 %v1527
    %2861 = vmatpush1.bf16.msra.mxu0 %v1526
    %2862 = vmatprep.subr.bf16.mxu0 %v1518
    %2863 = vmatpush1.bf16.msra.mxu0 %v1517
    %2864 = vmatprep.subr.bf16.mxu0 %v1509
    %2865 = vmatpush1.bf16.msra.mxu0 %v1508
    %2866 = vmatprep.subr.bf16.mxu0 %v1500
    %2867 = vmatpush1.bf16.msra.mxu0 %v1499
    %2868 = vmatprep.subr.bf16.mxu0 %v1491
    %2869 = vmatpush1.bf16.msra.mxu0 %v1490
    %2870 = vmatprep.subr.bf16.mxu0 %v1482
    %2871 = vmatpush1.bf16.msra.mxu0 %v1481
    %2872 = vmatprep.subr.bf16.mxu0 %v1617
    %2873 = vmatpush2.bf16.msra.mxu0 %v1616
    %2874 = vmatprep.subr.bf16.mxu0 %v1608
    %2875 = vmatpush2.bf16.msra.mxu0 %v1607
    %2876 = vmatprep.subr.bf16.mxu0 %v1599
    %2877 = vmatpush2.bf16.msra.mxu0 %v1598
    %2878 = vmatprep.subr.bf16.mxu0 %v1590
    %2879 = vmatpush2.bf16.msra.mxu0 %v1589
    %2880 = vmatprep.subr.bf16.mxu0 %v1581
    %2881 = vmatpush2.bf16.msra.mxu0 %v1580
    %2882 = vmatprep.subr.bf16.mxu0 %v1572
    %2883 = vmatpush2.bf16.msra.mxu0 %v1571
    %2884 = vmatprep.subr.bf16.mxu0 %v1563
    %2885 = vmatpush2.bf16.msra.mxu0 %v1562
    %2886 = vmatprep.subr.bf16.mxu0 %v1554
    %2887 = vmatpush2.bf16.msra.mxu0 %v1553
    %2888 = vmatprep.mubr.bf16.mxu0 %v746
    %2889 = vmatmul.mubr.bf16.gmra.mxu0 %v745
    %v2890 = vpop.f32.mrf.mxu0
    %v2891 = vadd.f32 %v2850, %v2890
    %v2892 = vpop.f32.mrf.mxu0
    %v2893 = vadd.f32 %v2852, %v2892
    %v2894 = vpop.f32.mrf.mxu0
    %v2895 = vpop.f32.mrf.mxu0
    %2896 = vdwg.mxu0
    %2897 = vmatprep.subr.bf16.mxu0 %v1689
    %2898 = vmatpush1.bf16.msra.mxu0 %v1688
    %2899 = vmatprep.subr.bf16.mxu0 %v1680
    %2900 = vmatpush1.bf16.msra.mxu0 %v1679
    %2901 = vmatprep.subr.bf16.mxu0 %v1671
    %2902 = vmatpush1.bf16.msra.mxu0 %v1670
    %2903 = vmatprep.subr.bf16.mxu0 %v1662
    %2904 = vmatpush1.bf16.msra.mxu0 %v1661
    %2905 = vmatprep.subr.bf16.mxu0 %v1653
    %2906 = vmatpush1.bf16.msra.mxu0 %v1652
    %2907 = vmatprep.subr.bf16.mxu0 %v1644
    %2908 = vmatpush1.bf16.msra.mxu0 %v1643
    %2909 = vmatprep.subr.bf16.mxu0 %v1635
    %2910 = vmatpush1.bf16.msra.mxu0 %v1634
    %2911 = vmatprep.subr.bf16.mxu0 %v1626
    %2912 = vmatpush1.bf16.msra.mxu0 %v1625
    %2913 = vmatprep.subr.bf16.mxu0 %v1761
    %2914 = vmatpush2.bf16.msra.mxu0 %v1760
    %2915 = vmatprep.subr.bf16.mxu0 %v1752
    %2916 = vmatpush2.bf16.msra.mxu0 %v1751
    %2917 = vmatprep.subr.bf16.mxu0 %v1743
    %2918 = vmatpush2.bf16.msra.mxu0 %v1742
    %2919 = vmatprep.subr.bf16.mxu0 %v1734
    %2920 = vmatpush2.bf16.msra.mxu0 %v1733
    %2921 = vmatprep.subr.bf16.mxu0 %v1725
    %2922 = vmatpush2.bf16.msra.mxu0 %v1724
    %2923 = vmatprep.subr.bf16.mxu0 %v1716
    %2924 = vmatpush2.bf16.msra.mxu0 %v1715
    %2925 = vmatprep.subr.bf16.mxu0 %v1707
    %2926 = vmatpush2.bf16.msra.mxu0 %v1706
    %2927 = vmatprep.subr.bf16.mxu0 %v1698
    %2928 = vmatpush2.bf16.msra.mxu0 %v1697
    %2929 = vmatprep.mubr.bf16.mxu0 %v748
    %2930 = vmatmul.mubr.bf16.gmra.mxu0 %v747
    %v2931 = vpop.f32.mrf.mxu0
    %v2932 = vadd.f32 %v2891, %v2931
    %v2933 = vpop.f32.mrf.mxu0
    %v2934 = vadd.f32 %v2893, %v2933
    %v2935 = vpop.f32.mrf.mxu0
    %v2936 = vpop.f32.mrf.mxu0
    %2937 = vdwg.mxu0
    %2938 = vmatprep.subr.bf16.mxu0 %v1833
    %2939 = vmatpush1.bf16.msra.mxu0 %v1832
    %2940 = vmatprep.subr.bf16.mxu0 %v1824
    %2941 = vmatpush1.bf16.msra.mxu0 %v1823
    %2942 = vmatprep.subr.bf16.mxu0 %v1815
    %2943 = vmatpush1.bf16.msra.mxu0 %v1814
    %2944 = vmatprep.subr.bf16.mxu0 %v1806
    %2945 = vmatpush1.bf16.msra.mxu0 %v1805
    %2946 = vmatprep.subr.bf16.mxu0 %v1797
    %2947 = vmatpush1.bf16.msra.mxu0 %v1796
    %2948 = vmatprep.subr.bf16.mxu0 %v1788
    %2949 = vmatpush1.bf16.msra.mxu0 %v1787
    %2950 = vmatprep.subr.bf16.mxu0 %v1779
    %2951 = vmatpush1.bf16.msra.mxu0 %v1778
    %2952 = vmatprep.subr.bf16.mxu0 %v1770
    %2953 = vmatpush1.bf16.msra.mxu0 %v1769
    %2954 = vmatprep.subr.bf16.mxu0 %v1905
    %2955 = vmatpush2.bf16.msra.mxu0 %v1904
    %2956 = vmatprep.subr.bf16.mxu0 %v1896
    %2957 = vmatpush2.bf16.msra.mxu0 %v1895
    %2958 = vmatprep.subr.bf16.mxu0 %v1887
    %2959 = vmatpush2.bf16.msra.mxu0 %v1886
    %2960 = vmatprep.subr.bf16.mxu0 %v1878
    %2961 = vmatpush2.bf16.msra.mxu0 %v1877
    %2962 = vmatprep.subr.bf16.mxu0 %v1869
    %2963 = vmatpush2.bf16.msra.mxu0 %v1868
    %2964 = vmatprep.subr.bf16.mxu0 %v1860
    %2965 = vmatpush2.bf16.msra.mxu0 %v1859
    %2966 = vmatprep.subr.bf16.mxu0 %v1851
    %2967 = vmatpush2.bf16.msra.mxu0 %v1850
    %2968 = vmatprep.subr.bf16.mxu0 %v1842
    %2969 = vmatpush2.bf16.msra.mxu0 %v1841
    %2970 = vmatprep.mubr.bf16.mxu0 %v750
    %2971 = vmatmul.mubr.bf16.gmra.mxu0 %v749
    %v2972 = vpop.f32.mrf.mxu0
    %v2973 = vadd.f32 %v2932, %v2972
    %v2974 = vpop.f32.mrf.mxu0
    %v2975 = vadd.f32 %v2934, %v2974
    %v2976 = vpop.f32.mrf.mxu0
    %v2977 = vpop.f32.mrf.mxu0
    %2978 = vdwg.mxu0
    %2979 = vmatprep.subr.bf16.mxu0 %v1977
    %2980 = vmatpush1.bf16.msra.mxu0 %v1976
    %2981 = vmatprep.subr.bf16.mxu0 %v1968
    %2982 = vmatpush1.bf16.msra.mxu0 %v1967
    %2983 = vmatprep.subr.bf16.mxu0 %v1959
    %2984 = vmatpush1.bf16.msra.mxu0 %v1958
    %2985 = vmatprep.subr.bf16.mxu0 %v1950
    %2986 = vmatpush1.bf16.msra.mxu0 %v1949
    %2987 = vmatprep.subr.bf16.mxu0 %v1941
    %2988 = vmatpush1.bf16.msra.mxu0 %v1940
    %2989 = vmatprep.subr.bf16.mxu0 %v1932
    %2990 = vmatpush1.bf16.msra.mxu0 %v1931
    %2991 = vmatprep.subr.bf16.mxu0 %v1923
    %2992 = vmatpush1.bf16.msra.mxu0 %v1922
    %2993 = vmatprep.subr.bf16.mxu0 %v1914
    %2994 = vmatpush1.bf16.msra.mxu0 %v1913
    %2995 = vmatprep.subr.bf16.mxu0 %v2049
    %2996 = vmatpush2.bf16.msra.mxu0 %v2048
    %2997 = vmatprep.subr.bf16.mxu0 %v2040
    %2998 = vmatpush2.bf16.msra.mxu0 %v2039
    %2999 = vmatprep.subr.bf16.mxu0 %v2031
    %3000 = vmatpush2.bf16.msra.mxu0 %v2030
    %3001 = vmatprep.subr.bf16.mxu0 %v2022
    %3002 = vmatpush2.bf16.msra.mxu0 %v2021
    %3003 = vmatprep.subr.bf16.mxu0 %v2013
    %3004 = vmatpush2.bf16.msra.mxu0 %v2012
    %3005 = vmatprep.subr.bf16.mxu0 %v2004
    %3006 = vmatpush2.bf16.msra.mxu0 %v2003
    %3007 = vmatprep.subr.bf16.mxu0 %v1995
    %3008 = vmatpush2.bf16.msra.mxu0 %v1994
    %3009 = vmatprep.subr.bf16.mxu0 %v1986
    %3010 = vmatpush2.bf16.msra.mxu0 %v1985
    %3011 = vmatprep.mubr.bf16.mxu0 %v752
    %3012 = vmatmul.mubr.bf16.gmra.mxu0 %v751
    %v3013 = vpop.f32.mrf.mxu0
    %v3014 = vadd.f32 %v2973, %v3013
    %v3015 = vpop.f32.mrf.mxu0
    %v3016 = vadd.f32 %v2975, %v3015
    %v3017 = vpop.f32.mrf.mxu0
    %v3018 = vpop.f32.mrf.mxu0
    %3019 = vdwg.mxu0
    %3020 = vmatprep.subr.bf16.mxu0 %v2121
    %3021 = vmatpush1.bf16.msra.mxu0 %v2120
    %3022 = vmatprep.subr.bf16.mxu0 %v2112
    %3023 = vmatpush1.bf16.msra.mxu0 %v2111
    %3024 = vmatprep.subr.bf16.mxu0 %v2103
    %3025 = vmatpush1.bf16.msra.mxu0 %v2102
    %3026 = vmatprep.subr.bf16.mxu0 %v2094
    %3027 = vmatpush1.bf16.msra.mxu0 %v2093
    %3028 = vmatprep.subr.bf16.mxu0 %v2085
    %3029 = vmatpush1.bf16.msra.mxu0 %v2084
    %3030 = vmatprep.subr.bf16.mxu0 %v2076
    %3031 = vmatpush1.bf16.msra.mxu0 %v2075
    %3032 = vmatprep.subr.bf16.mxu0 %v2067
    %3033 = vmatpush1.bf16.msra.mxu0 %v2066
    %3034 = vmatprep.subr.bf16.mxu0 %v2058
    %3035 = vmatpush1.bf16.msra.mxu0 %v2057
    %3036 = vmatprep.subr.bf16.mxu0 %v2193
    %3037 = vmatpush2.bf16.msra.mxu0 %v2192
    %3038 = vmatprep.subr.bf16.mxu0 %v2184
    %3039 = vmatpush2.bf16.msra.mxu0 %v2183
    %3040 = vmatprep.subr.bf16.mxu0 %v2175
    %3041 = vmatpush2.bf16.msra.mxu0 %v2174
    %3042 = vmatprep.subr.bf16.mxu0 %v2166
    %3043 = vmatpush2.bf16.msra.mxu0 %v2165
    %3044 = vmatprep.subr.bf16.mxu0 %v2157
    %3045 = vmatpush2.bf16.msra.mxu0 %v2156
    %3046 = vmatprep.subr.bf16.mxu0 %v2148
    %3047 = vmatpush2.bf16.msra.mxu0 %v2147
    %3048 = vmatprep.subr.bf16.mxu0 %v2139
    %3049 = vmatpush2.bf16.msra.mxu0 %v2138
    %3050 = vmatprep.subr.bf16.mxu0 %v2130
    %3051 = vmatpush2.bf16.msra.mxu0 %v2129
    %3052 = vmatprep.mubr.bf16.mxu0 %v754
    %3053 = vmatmul.mubr.bf16.gmra.mxu0 %v753
    %v3054 = vpop.f32.mrf.mxu0
    %v3055 = vadd.f32 %v3014, %v3054
    %v3056 = vpop.f32.mrf.mxu0
    %v3057 = vadd.f32 %v3016, %v3056
    %v3058 = vpop.f32.mrf.mxu0
    %v3059 = vpop.f32.mrf.mxu0
    %3060 = vdwg.mxu0
    %3061 = vmatprep.subr.bf16.mxu0 %v2265
    %3062 = vmatpush1.bf16.msra.mxu0 %v2264
    %3063 = vmatprep.subr.bf16.mxu0 %v2256
    %3064 = vmatpush1.bf16.msra.mxu0 %v2255
    %3065 = vmatprep.subr.bf16.mxu0 %v2247
    %3066 = vmatpush1.bf16.msra.mxu0 %v2246
    %3067 = vmatprep.subr.bf16.mxu0 %v2238
    %3068 = vmatpush1.bf16.msra.mxu0 %v2237
    %3069 = vmatprep.subr.bf16.mxu0 %v2229
    %3070 = vmatpush1.bf16.msra.mxu0 %v2228
    %3071 = vmatprep.subr.bf16.mxu0 %v2220
    %3072 = vmatpush1.bf16.msra.mxu0 %v2219
    %3073 = vmatprep.subr.bf16.mxu0 %v2211
    %3074 = vmatpush1.bf16.msra.mxu0 %v2210
    %3075 = vmatprep.subr.bf16.mxu0 %v2202
    %3076 = vmatpush1.bf16.msra.mxu0 %v2201
    %3077 = vmatprep.subr.bf16.mxu0 %v2337
    %3078 = vmatpush2.bf16.msra.mxu0 %v2336
    %3079 = vmatprep.subr.bf16.mxu0 %v2328
    %3080 = vmatpush2.bf16.msra.mxu0 %v2327
    %3081 = vmatprep.subr.bf16.mxu0 %v2319
    %3082 = vmatpush2.bf16.msra.mxu0 %v2318
    %3083 = vmatprep.subr.bf16.mxu0 %v2310
    %3084 = vmatpush2.bf16.msra.mxu0 %v2309
    %3085 = vmatprep.subr.bf16.mxu0 %v2301
    %3086 = vmatpush2.bf16.msra.mxu0 %v2300
    %3087 = vmatprep.subr.bf16.mxu0 %v2292
    %3088 = vmatpush2.bf16.msra.mxu0 %v2291
    %3089 = vmatprep.subr.bf16.mxu0 %v2283
    %3090 = vmatpush2.bf16.msra.mxu0 %v2282
    %3091 = vmatprep.subr.bf16.mxu0 %v2274
    %3092 = vmatpush2.bf16.msra.mxu0 %v2273
    %3093 = vmatprep.mubr.bf16.mxu0 %v756
    %3094 = vmatmul.mubr.bf16.gmra.mxu0 %v755
    %v3095 = vpop.f32.mrf.mxu0
    %v3096 = vadd.f32 %v3055, %v3095
    %v3097 = vpop.f32.mrf.mxu0
    %v3098 = vadd.f32 %v3057, %v3097
    %v3099 = vpop.f32.mrf.mxu0
    %v3100 = vpop.f32.mrf.mxu0
    %3101 = vdwg.mxu0
    %3102 = vmatprep.subr.bf16.mxu0 %v2409
    %3103 = vmatpush1.bf16.msra.mxu0 %v2408
    %3104 = vmatprep.subr.bf16.mxu0 %v2400
    %3105 = vmatpush1.bf16.msra.mxu0 %v2399
    %3106 = vmatprep.subr.bf16.mxu0 %v2391
    %3107 = vmatpush1.bf16.msra.mxu0 %v2390
    %3108 = vmatprep.subr.bf16.mxu0 %v2382
    %3109 = vmatpush1.bf16.msra.mxu0 %v2381
    %3110 = vmatprep.subr.bf16.mxu0 %v2373
    %3111 = vmatpush1.bf16.msra.mxu0 %v2372
    %3112 = vmatprep.subr.bf16.mxu0 %v2364
    %3113 = vmatpush1.bf16.msra.mxu0 %v2363
    %3114 = vmatprep.subr.bf16.mxu0 %v2355
    %3115 = vmatpush1.bf16.msra.mxu0 %v2354
    %3116 = vmatprep.subr.bf16.mxu0 %v2346
    %3117 = vmatpush1.bf16.msra.mxu0 %v2345
    %3118 = vmatprep.subr.bf16.mxu0 %v2481
    %3119 = vmatpush2.bf16.msra.mxu0 %v2480
    %3120 = vmatprep.subr.bf16.mxu0 %v2472
    %3121 = vmatpush2.bf16.msra.mxu0 %v2471
    %3122 = vmatprep.subr.bf16.mxu0 %v2463
    %3123 = vmatpush2.bf16.msra.mxu0 %v2462
    %3124 = vmatprep.subr.bf16.mxu0 %v2454
    %3125 = vmatpush2.bf16.msra.mxu0 %v2453
    %3126 = vmatprep.subr.bf16.mxu0 %v2445
    %3127 = vmatpush2.bf16.msra.mxu0 %v2444
    %3128 = vmatprep.subr.bf16.mxu0 %v2436
    %3129 = vmatpush2.bf16.msra.mxu0 %v2435
    %3130 = vmatprep.subr.bf16.mxu0 %v2427
    %3131 = vmatpush2.bf16.msra.mxu0 %v2426
    %3132 = vmatprep.subr.bf16.mxu0 %v2418
    %3133 = vmatpush2.bf16.msra.mxu0 %v2417
    %3134 = vmatprep.mubr.bf16.mxu0 %v758
    %3135 = vmatmul.mubr.bf16.gmra.mxu0 %v757
    %v3136 = vpop.f32.mrf.mxu0
    %v3137 = vadd.f32 %v3096, %v3136
    %v3138 = vpop.f32.mrf.mxu0
    %v3139 = vadd.f32 %v3098, %v3138
    %v3140 = vpop.f32.mrf.mxu0
    %v3141 = vpop.f32.mrf.mxu0
    %3142 = vdwg.mxu0
    %3143 = vmatprep.subr.bf16.mxu0 %v1403
    %3144 = vmatpush1.bf16.msra.mxu0 %v1402
    %3145 = vmatprep.subr.bf16.mxu0 %v1394
    %3146 = vmatpush1.bf16.msra.mxu0 %v1393
    %3147 = vmatprep.subr.bf16.mxu0 %v1385
    %3148 = vmatpush1.bf16.msra.mxu0 %v1384
    %3149 = vmatprep.subr.bf16.mxu0 %v1376
    %3150 = vmatpush1.bf16.msra.mxu0 %v1375
    %3151 = vmatprep.subr.bf16.mxu0 %v1367
    %3152 = vmatpush1.bf16.msra.mxu0 %v1366
    %3153 = vmatprep.subr.bf16.mxu0 %v1358
    %3154 = vmatpush1.bf16.msra.mxu0 %v1357
    %3155 = vmatprep.subr.bf16.mxu0 %v1349
    %3156 = vmatpush1.bf16.msra.mxu0 %v1348
    %3157 = vmatprep.subr.bf16.mxu0 %v1340
    %3158 = vmatpush1.bf16.msra.mxu0 %v1339
    %3159 = vmatprep.subr.bf16.mxu0 %v1475
    %3160 = vmatpush2.bf16.msra.mxu0 %v1474
    %3161 = vmatprep.subr.bf16.mxu0 %v1466
    %3162 = vmatpush2.bf16.msra.mxu0 %v1465
    %3163 = vmatprep.subr.bf16.mxu0 %v1457
    %3164 = vmatpush2.bf16.msra.mxu0 %v1456
    %3165 = vmatprep.subr.bf16.mxu0 %v1448
    %3166 = vmatpush2.bf16.msra.mxu0 %v1447
    %3167 = vmatprep.subr.bf16.mxu0 %v1439
    %3168 = vmatpush2.bf16.msra.mxu0 %v1438
    %3169 = vmatprep.subr.bf16.mxu0 %v1430
    %3170 = vmatpush2.bf16.msra.mxu0 %v1429
    %3171 = vmatprep.subr.bf16.mxu0 %v1421
    %3172 = vmatpush2.bf16.msra.mxu0 %v1420
    %3173 = vmatprep.subr.bf16.mxu0 %v1412
    %3174 = vmatpush2.bf16.msra.mxu0 %v1411
    %3175 = vmatprep.mubr.bf16.mxu0 %v744
    %3176 = vmatmul.mubr.bf16.gmra.mxu0 %v743
    %v3177 = vpop.f32.mrf.mxu0
    %v3178 = vadd.f32 0.0, %v3177
    %v3179 = vpop.f32.mrf.mxu0
    %v3180 = vadd.f32 0.0, %v3179
    %v3181 = vpop.f32.mrf.mxu0
    %v3182 = vpop.f32.mrf.mxu0
    %3183 = vdwg.mxu0
    %3184 = vmatprep.subr.bf16.mxu0 %v1547
    %3185 = vmatpush1.bf16.msra.mxu0 %v1546
    %3186 = vmatprep.subr.bf16.mxu0 %v1538
    %3187 = vmatpush1.bf16.msra.mxu0 %v1537
    %3188 = vmatprep.subr.bf16.mxu0 %v1529
    %3189 = vmatpush1.bf16.msra.mxu0 %v1528
    %3190 = vmatprep.subr.bf16.mxu0 %v1520
    %3191 = vmatpush1.bf16.msra.mxu0 %v1519
    %3192 = vmatprep.subr.bf16.mxu0 %v1511
    %3193 = vmatpush1.bf16.msra.mxu0 %v1510
    %3194 = vmatprep.subr.bf16.mxu0 %v1502
    %3195 = vmatpush1.bf16.msra.mxu0 %v1501
    %3196 = vmatprep.subr.bf16.mxu0 %v1493
    %3197 = vmatpush1.bf16.msra.mxu0 %v1492
    %3198 = vmatprep.subr.bf16.mxu0 %v1484
    %3199 = vmatpush1.bf16.msra.mxu0 %v1483
    %3200 = vmatprep.subr.bf16.mxu0 %v1619
    %3201 = vmatpush2.bf16.msra.mxu0 %v1618
    %3202 = vmatprep.subr.bf16.mxu0 %v1610
    %3203 = vmatpush2.bf16.msra.mxu0 %v1609
    %3204 = vmatprep.subr.bf16.mxu0 %v1601
    %3205 = vmatpush2.bf16.msra.mxu0 %v1600
    %3206 = vmatprep.subr.bf16.mxu0 %v1592
    %3207 = vmatpush2.bf16.msra.mxu0 %v1591
    %3208 = vmatprep.subr.bf16.mxu0 %v1583
    %3209 = vmatpush2.bf16.msra.mxu0 %v1582
    %3210 = vmatprep.subr.bf16.mxu0 %v1574
    %3211 = vmatpush2.bf16.msra.mxu0 %v1573
    %3212 = vmatprep.subr.bf16.mxu0 %v1565
    %3213 = vmatpush2.bf16.msra.mxu0 %v1564
    %3214 = vmatprep.subr.bf16.mxu0 %v1556
    %3215 = vmatpush2.bf16.msra.mxu0 %v1555
    %3216 = vmatprep.mubr.bf16.mxu0 %v746
    %3217 = vmatmul.mubr.bf16.gmra.mxu0 %v745
    %v3218 = vpop.f32.mrf.mxu0
    %v3219 = vadd.f32 %v3178, %v3218
    %v3220 = vpop.f32.mrf.mxu0
    %v3221 = vadd.f32 %v3180, %v3220
    %v3222 = vpop.f32.mrf.mxu0
    %v3223 = vpop.f32.mrf.mxu0
    %3224 = vdwg.mxu0
    %3225 = vmatprep.subr.bf16.mxu0 %v1691
    %3226 = vmatpush1.bf16.msra.mxu0 %v1690
    %3227 = vmatprep.subr.bf16.mxu0 %v1682
    %3228 = vmatpush1.bf16.msra.mxu0 %v1681
    %3229 = vmatprep.subr.bf16.mxu0 %v1673
    %3230 = vmatpush1.bf16.msra.mxu0 %v1672
    %3231 = vmatprep.subr.bf16.mxu0 %v1664
    %3232 = vmatpush1.bf16.msra.mxu0 %v1663
    %3233 = vmatprep.subr.bf16.mxu0 %v1655
    %3234 = vmatpush1.bf16.msra.mxu0 %v1654
    %3235 = vmatprep.subr.bf16.mxu0 %v1646
    %3236 = vmatpush1.bf16.msra.mxu0 %v1645
    %3237 = vmatprep.subr.bf16.mxu0 %v1637
    %3238 = vmatpush1.bf16.msra.mxu0 %v1636
    %3239 = vmatprep.subr.bf16.mxu0 %v1628
    %3240 = vmatpush1.bf16.msra.mxu0 %v1627
    %3241 = vmatprep.subr.bf16.mxu0 %v1763
    %3242 = vmatpush2.bf16.msra.mxu0 %v1762
    %3243 = vmatprep.subr.bf16.mxu0 %v1754
    %3244 = vmatpush2.bf16.msra.mxu0 %v1753
    %3245 = vmatprep.subr.bf16.mxu0 %v1745
    %3246 = vmatpush2.bf16.msra.mxu0 %v1744
    %3247 = vmatprep.subr.bf16.mxu0 %v1736
    %3248 = vmatpush2.bf16.msra.mxu0 %v1735
    %3249 = vmatprep.subr.bf16.mxu0 %v1727
    %3250 = vmatpush2.bf16.msra.mxu0 %v1726
    %3251 = vmatprep.subr.bf16.mxu0 %v1718
    %3252 = vmatpush2.bf16.msra.mxu0 %v1717
    %3253 = vmatprep.subr.bf16.mxu0 %v1709
    %3254 = vmatpush2.bf16.msra.mxu0 %v1708
    %3255 = vmatprep.subr.bf16.mxu0 %v1700
    %3256 = vmatpush2.bf16.msra.mxu0 %v1699
    %3257 = vmatprep.mubr.bf16.mxu0 %v748
    %3258 = vmatmul.mubr.bf16.gmra.mxu0 %v747
    %v3259 = vpop.f32.mrf.mxu0
    %v3260 = vadd.f32 %v3219, %v3259
    %v3261 = vpop.f32.mrf.mxu0
    %v3262 = vadd.f32 %v3221, %v3261
    %v3263 = vpop.f32.mrf.mxu0
    %v3264 = vpop.f32.mrf.mxu0
    %3265 = vdwg.mxu0
    %3266 = vmatprep.subr.bf16.mxu0 %v1835
    %3267 = vmatpush1.bf16.msra.mxu0 %v1834
    %3268 = vmatprep.subr.bf16.mxu0 %v1826
    %3269 = vmatpush1.bf16.msra.mxu0 %v1825
    %3270 = vmatprep.subr.bf16.mxu0 %v1817
    %3271 = vmatpush1.bf16.msra.mxu0 %v1816
    %3272 = vmatprep.subr.bf16.mxu0 %v1808
    %3273 = vmatpush1.bf16.msra.mxu0 %v1807
    %3274 = vmatprep.subr.bf16.mxu0 %v1799
    %3275 = vmatpush1.bf16.msra.mxu0 %v1798
    %3276 = vmatprep.subr.bf16.mxu0 %v1790
    %3277 = vmatpush1.bf16.msra.mxu0 %v1789
    %3278 = vmatprep.subr.bf16.mxu0 %v1781
    %3279 = vmatpush1.bf16.msra.mxu0 %v1780
    %3280 = vmatprep.subr.bf16.mxu0 %v1772
    %3281 = vmatpush1.bf16.msra.mxu0 %v1771
    %3282 = vmatprep.subr.bf16.mxu0 %v1907
    %3283 = vmatpush2.bf16.msra.mxu0 %v1906
    %3284 = vmatprep.subr.bf16.mxu0 %v1898
    %3285 = vmatpush2.bf16.msra.mxu0 %v1897
    %3286 = vmatprep.subr.bf16.mxu0 %v1889
    %3287 = vmatpush2.bf16.msra.mxu0 %v1888
    %3288 = vmatprep.subr.bf16.mxu0 %v1880
    %3289 = vmatpush2.bf16.msra.mxu0 %v1879
    %3290 = vmatprep.subr.bf16.mxu0 %v1871
    %3291 = vmatpush2.bf16.msra.mxu0 %v1870
    %3292 = vmatprep.subr.bf16.mxu0 %v1862
    %3293 = vmatpush2.bf16.msra.mxu0 %v1861
    %3294 = vmatprep.subr.bf16.mxu0 %v1853
    %3295 = vmatpush2.bf16.msra.mxu0 %v1852
    %3296 = vmatprep.subr.bf16.mxu0 %v1844
    %3297 = vmatpush2.bf16.msra.mxu0 %v1843
    %3298 = vmatprep.mubr.bf16.mxu0 %v750
    %3299 = vmatmul.mubr.bf16.gmra.mxu0 %v749
    %v3300 = vpop.f32.mrf.mxu0
    %v3301 = vadd.f32 %v3260, %v3300
    %v3302 = vpop.f32.mrf.mxu0
    %v3303 = vadd.f32 %v3262, %v3302
    %v3304 = vpop.f32.mrf.mxu0
    %v3305 = vpop.f32.mrf.mxu0
    %3306 = vdwg.mxu0
    %3307 = vmatprep.subr.bf16.mxu0 %v1979
    %3308 = vmatpush1.bf16.msra.mxu0 %v1978
    %3309 = vmatprep.subr.bf16.mxu0 %v1970
    %3310 = vmatpush1.bf16.msra.mxu0 %v1969
    %3311 = vmatprep.subr.bf16.mxu0 %v1961
    %3312 = vmatpush1.bf16.msra.mxu0 %v1960
    %3313 = vmatprep.subr.bf16.mxu0 %v1952
    %3314 = vmatpush1.bf16.msra.mxu0 %v1951
    %3315 = vmatprep.subr.bf16.mxu0 %v1943
    %3316 = vmatpush1.bf16.msra.mxu0 %v1942
    %3317 = vmatprep.subr.bf16.mxu0 %v1934
    %3318 = vmatpush1.bf16.msra.mxu0 %v1933
    %3319 = vmatprep.subr.bf16.mxu0 %v1925
    %3320 = vmatpush1.bf16.msra.mxu0 %v1924
    %3321 = vmatprep.subr.bf16.mxu0 %v1916
    %3322 = vmatpush1.bf16.msra.mxu0 %v1915
    %3323 = vmatprep.subr.bf16.mxu0 %v2051
    %3324 = vmatpush2.bf16.msra.mxu0 %v2050
    %3325 = vmatprep.subr.bf16.mxu0 %v2042
    %3326 = vmatpush2.bf16.msra.mxu0 %v2041
    %3327 = vmatprep.subr.bf16.mxu0 %v2033
    %3328 = vmatpush2.bf16.msra.mxu0 %v2032
    %3329 = vmatprep.subr.bf16.mxu0 %v2024
    %3330 = vmatpush2.bf16.msra.mxu0 %v2023
    %3331 = vmatprep.subr.bf16.mxu0 %v2015
    %3332 = vmatpush2.bf16.msra.mxu0 %v2014
    %3333 = vmatprep.subr.bf16.mxu0 %v2006
    %3334 = vmatpush2.bf16.msra.mxu0 %v2005
    %3335 = vmatprep.subr.bf16.mxu0 %v1997
    %3336 = vmatpush2.bf16.msra.mxu0 %v1996
    %3337 = vmatprep.subr.bf16.mxu0 %v1988
    %3338 = vmatpush2.bf16.msra.mxu0 %v1987
    %3339 = vmatprep.mubr.bf16.mxu0 %v752
    %3340 = vmatmul.mubr.bf16.gmra.mxu0 %v751
    %v3341 = vpop.f32.mrf.mxu0
    %v3342 = vadd.f32 %v3301, %v3341
    %v3343 = vpop.f32.mrf.mxu0
    %v3344 = vadd.f32 %v3303, %v3343
    %v3345 = vpop.f32.mrf.mxu0
    %v3346 = vpop.f32.mrf.mxu0
    %3347 = vdwg.mxu0
    %3348 = vmatprep.subr.bf16.mxu0 %v2123
    %3349 = vmatpush1.bf16.msra.mxu0 %v2122
    %3350 = vmatprep.subr.bf16.mxu0 %v2114
    %3351 = vmatpush1.bf16.msra.mxu0 %v2113
    %3352 = vmatprep.subr.bf16.mxu0 %v2105
    %3353 = vmatpush1.bf16.msra.mxu0 %v2104
    %3354 = vmatprep.subr.bf16.mxu0 %v2096
    %3355 = vmatpush1.bf16.msra.mxu0 %v2095
    %3356 = vmatprep.subr.bf16.mxu0 %v2087
    %3357 = vmatpush1.bf16.msra.mxu0 %v2086
    %3358 = vmatprep.subr.bf16.mxu0 %v2078
    %3359 = vmatpush1.bf16.msra.mxu0 %v2077
    %3360 = vmatprep.subr.bf16.mxu0 %v2069
    %3361 = vmatpush1.bf16.msra.mxu0 %v2068
    %3362 = vmatprep.subr.bf16.mxu0 %v2060
    %3363 = vmatpush1.bf16.msra.mxu0 %v2059
    %3364 = vmatprep.subr.bf16.mxu0 %v2195
    %3365 = vmatpush2.bf16.msra.mxu0 %v2194
    %3366 = vmatprep.subr.bf16.mxu0 %v2186
    %3367 = vmatpush2.bf16.msra.mxu0 %v2185
    %3368 = vmatprep.subr.bf16.mxu0 %v2177
    %3369 = vmatpush2.bf16.msra.mxu0 %v2176
    %3370 = vmatprep.subr.bf16.mxu0 %v2168
    %3371 = vmatpush2.bf16.msra.mxu0 %v2167
    %3372 = vmatprep.subr.bf16.mxu0 %v2159
    %3373 = vmatpush2.bf16.msra.mxu0 %v2158
    %3374 = vmatprep.subr.bf16.mxu0 %v2150
    %3375 = vmatpush2.bf16.msra.mxu0 %v2149
    %3376 = vmatprep.subr.bf16.mxu0 %v2141
    %3377 = vmatpush2.bf16.msra.mxu0 %v2140
    %3378 = vmatprep.subr.bf16.mxu0 %v2132
    %3379 = vmatpush2.bf16.msra.mxu0 %v2131
    %3380 = vmatprep.mubr.bf16.mxu0 %v754
    %3381 = vmatmul.mubr.bf16.gmra.mxu0 %v753
    %v3382 = vpop.f32.mrf.mxu0
    %v3383 = vadd.f32 %v3342, %v3382
    %v3384 = vpop.f32.mrf.mxu0
    %v3385 = vadd.f32 %v3344, %v3384
    %v3386 = vpop.f32.mrf.mxu0
    %v3387 = vpop.f32.mrf.mxu0
    %3388 = vdwg.mxu0
    %3389 = vmatprep.subr.bf16.mxu0 %v2267
    %3390 = vmatpush1.bf16.msra.mxu0 %v2266
    %3391 = vmatprep.subr.bf16.mxu0 %v2258
    %3392 = vmatpush1.bf16.msra.mxu0 %v2257
    %3393 = vmatprep.subr.bf16.mxu0 %v2249
    %3394 = vmatpush1.bf16.msra.mxu0 %v2248
    %3395 = vmatprep.subr.bf16.mxu0 %v2240
    %3396 = vmatpush1.bf16.msra.mxu0 %v2239
    %3397 = vmatprep.subr.bf16.mxu0 %v2231
    %3398 = vmatpush1.bf16.msra.mxu0 %v2230
    %3399 = vmatprep.subr.bf16.mxu0 %v2222
    %3400 = vmatpush1.bf16.msra.mxu0 %v2221
    %3401 = vmatprep.subr.bf16.mxu0 %v2213
    %3402 = vmatpush1.bf16.msra.mxu0 %v2212
    %3403 = vmatprep.subr.bf16.mxu0 %v2204
    %3404 = vmatpush1.bf16.msra.mxu0 %v2203
    %3405 = vmatprep.subr.bf16.mxu0 %v2339
    %3406 = vmatpush2.bf16.msra.mxu0 %v2338
    %3407 = vmatprep.subr.bf16.mxu0 %v2330
    %3408 = vmatpush2.bf16.msra.mxu0 %v2329
    %3409 = vmatprep.subr.bf16.mxu0 %v2321
    %3410 = vmatpush2.bf16.msra.mxu0 %v2320
    %3411 = vmatprep.subr.bf16.mxu0 %v2312
    %3412 = vmatpush2.bf16.msra.mxu0 %v2311
    %3413 = vmatprep.subr.bf16.mxu0 %v2303
    %3414 = vmatpush2.bf16.msra.mxu0 %v2302
    %3415 = vmatprep.subr.bf16.mxu0 %v2294
    %3416 = vmatpush2.bf16.msra.mxu0 %v2293
    %3417 = vmatprep.subr.bf16.mxu0 %v2285
    %3418 = vmatpush2.bf16.msra.mxu0 %v2284
    %3419 = vmatprep.subr.bf16.mxu0 %v2276
    %3420 = vmatpush2.bf16.msra.mxu0 %v2275
    %3421 = vmatprep.mubr.bf16.mxu0 %v756
    %3422 = vmatmul.mubr.bf16.gmra.mxu0 %v755
    %v3423 = vpop.f32.mrf.mxu0
    %v3424 = vadd.f32 %v3383, %v3423
    %v3425 = vpop.f32.mrf.mxu0
    %v3426 = vadd.f32 %v3385, %v3425
    %v3427 = vpop.f32.mrf.mxu0
    %v3428 = vpop.f32.mrf.mxu0
    %3429 = vdwg.mxu0
    %3430 = vmatprep.subr.bf16.mxu0 %v2411
    %3431 = vmatpush1.bf16.msra.mxu0 %v2410
    %3432 = vmatprep.subr.bf16.mxu0 %v2402
    %3433 = vmatpush1.bf16.msra.mxu0 %v2401
    %3434 = vmatprep.subr.bf16.mxu0 %v2393
    %3435 = vmatpush1.bf16.msra.mxu0 %v2392
    %3436 = vmatprep.subr.bf16.mxu0 %v2384
    %3437 = vmatpush1.bf16.msra.mxu0 %v2383
    %3438 = vmatprep.subr.bf16.mxu0 %v2375
    %3439 = vmatpush1.bf16.msra.mxu0 %v2374
    %3440 = vmatprep.subr.bf16.mxu0 %v2366
    %3441 = vmatpush1.bf16.msra.mxu0 %v2365
    %3442 = vmatprep.subr.bf16.mxu0 %v2357
    %3443 = vmatpush1.bf16.msra.mxu0 %v2356
    %3444 = vmatprep.subr.bf16.mxu0 %v2348
    %3445 = vmatpush1.bf16.msra.mxu0 %v2347
    %3446 = vmatprep.subr.bf16.mxu0 %v2483
    %3447 = vmatpush2.bf16.msra.mxu0 %v2482
    %3448 = vmatprep.subr.bf16.mxu0 %v2474
    %3449 = vmatpush2.bf16.msra.mxu0 %v2473
    %3450 = vmatprep.subr.bf16.mxu0 %v2465
    %3451 = vmatpush2.bf16.msra.mxu0 %v2464
    %3452 = vmatprep.subr.bf16.mxu0 %v2456
    %3453 = vmatpush2.bf16.msra.mxu0 %v2455
    %3454 = vmatprep.subr.bf16.mxu0 %v2447
    %3455 = vmatpush2.bf16.msra.mxu0 %v2446
    %3456 = vmatprep.subr.bf16.mxu0 %v2438
    %3457 = vmatpush2.bf16.msra.mxu0 %v2437
    %3458 = vmatprep.subr.bf16.mxu0 %v2429
    %3459 = vmatpush2.bf16.msra.mxu0 %v2428
    %3460 = vmatprep.subr.bf16.mxu0 %v2420
    %3461 = vmatpush2.bf16.msra.mxu0 %v2419
    %3462 = vmatprep.mubr.bf16.mxu0 %v758
    %3463 = vmatmul.mubr.bf16.gmra.mxu0 %v757
    %v3464 = vpop.f32.mrf.mxu0
    %v3465 = vadd.f32 %v3424, %v3464
    %v3466 = vpop.f32.mrf.mxu0
    %v3467 = vadd.f32 %v3426, %v3466
    %v3468 = vpop.f32.mrf.mxu0
    %v3469 = vpop.f32.mrf.mxu0
    %3470 = vdwg.mxu0
    %3471 = vmatprep.subr.bf16.mxu0 %v1405
    %3472 = vmatpush1.bf16.msra.mxu0 %v1404
    %3473 = vmatprep.subr.bf16.mxu0 %v1396
    %3474 = vmatpush1.bf16.msra.mxu0 %v1395
    %3475 = vmatprep.subr.bf16.mxu0 %v1387
    %3476 = vmatpush1.bf16.msra.mxu0 %v1386
    %3477 = vmatprep.subr.bf16.mxu0 %v1378
    %3478 = vmatpush1.bf16.msra.mxu0 %v1377
    %3479 = vmatprep.subr.bf16.mxu0 %v1369
    %3480 = vmatpush1.bf16.msra.mxu0 %v1368
    %3481 = vmatprep.subr.bf16.mxu0 %v1360
    %3482 = vmatpush1.bf16.msra.mxu0 %v1359
    %3483 = vmatprep.subr.bf16.mxu0 %v1351
    %3484 = vmatpush1.bf16.msra.mxu0 %v1350
    %3485 = vmatprep.subr.bf16.mxu0 %v1342
    %3486 = vmatpush1.bf16.msra.mxu0 %v1341
    %3487 = vmatprep.subr.bf16.mxu0 %v1477
    %3488 = vmatpush2.bf16.msra.mxu0 %v1476
    %3489 = vmatprep.subr.bf16.mxu0 %v1468
    %3490 = vmatpush2.bf16.msra.mxu0 %v1467
    %3491 = vmatprep.subr.bf16.mxu0 %v1459
    %3492 = vmatpush2.bf16.msra.mxu0 %v1458
    %3493 = vmatprep.subr.bf16.mxu0 %v1450
    %3494 = vmatpush2.bf16.msra.mxu0 %v1449
    %3495 = vmatprep.subr.bf16.mxu0 %v1441
    %3496 = vmatpush2.bf16.msra.mxu0 %v1440
    %3497 = vmatprep.subr.bf16.mxu0 %v1432
    %3498 = vmatpush2.bf16.msra.mxu0 %v1431
    %3499 = vmatprep.subr.bf16.mxu0 %v1423
    %3500 = vmatpush2.bf16.msra.mxu0 %v1422
    %3501 = vmatprep.subr.bf16.mxu0 %v1414
    %3502 = vmatpush2.bf16.msra.mxu0 %v1413
    %3503 = vmatprep.mubr.bf16.mxu0 %v744
    %3504 = vmatmul.mubr.bf16.gmra.mxu0 %v743
    %v3505 = vpop.f32.mrf.mxu0
    %v3506 = vadd.f32 0.0, %v3505
    %v3507 = vpop.f32.mrf.mxu0
    %v3508 = vadd.f32 0.0, %v3507
    %v3509 = vpop.f32.mrf.mxu0
    %v3510 = vpop.f32.mrf.mxu0
    %3511 = vdwg.mxu0
    %3512 = vmatprep.subr.bf16.mxu0 %v1549
    %3513 = vmatpush1.bf16.msra.mxu0 %v1548
    %3514 = vmatprep.subr.bf16.mxu0 %v1540
    %3515 = vmatpush1.bf16.msra.mxu0 %v1539
    %3516 = vmatprep.subr.bf16.mxu0 %v1531
    %3517 = vmatpush1.bf16.msra.mxu0 %v1530
    %3518 = vmatprep.subr.bf16.mxu0 %v1522
    %3519 = vmatpush1.bf16.msra.mxu0 %v1521
    %3520 = vmatprep.subr.bf16.mxu0 %v1513
    %3521 = vmatpush1.bf16.msra.mxu0 %v1512
    %3522 = vmatprep.subr.bf16.mxu0 %v1504
    %3523 = vmatpush1.bf16.msra.mxu0 %v1503
    %3524 = vmatprep.subr.bf16.mxu0 %v1495
    %3525 = vmatpush1.bf16.msra.mxu0 %v1494
    %3526 = vmatprep.subr.bf16.mxu0 %v1486
    %3527 = vmatpush1.bf16.msra.mxu0 %v1485
    %3528 = vmatprep.subr.bf16.mxu0 %v1621
    %3529 = vmatpush2.bf16.msra.mxu0 %v1620
    %3530 = vmatprep.subr.bf16.mxu0 %v1612
    %3531 = vmatpush2.bf16.msra.mxu0 %v1611
    %3532 = vmatprep.subr.bf16.mxu0 %v1603
    %3533 = vmatpush2.bf16.msra.mxu0 %v1602
    %3534 = vmatprep.subr.bf16.mxu0 %v1594
    %3535 = vmatpush2.bf16.msra.mxu0 %v1593
    %3536 = vmatprep.subr.bf16.mxu0 %v1585
    %3537 = vmatpush2.bf16.msra.mxu0 %v1584
    %3538 = vmatprep.subr.bf16.mxu0 %v1576
    %3539 = vmatpush2.bf16.msra.mxu0 %v1575
    %3540 = vmatprep.subr.bf16.mxu0 %v1567
    %3541 = vmatpush2.bf16.msra.mxu0 %v1566
    %3542 = vmatprep.subr.bf16.mxu0 %v1558
    %3543 = vmatpush2.bf16.msra.mxu0 %v1557
    %3544 = vmatprep.mubr.bf16.mxu0 %v746
    %3545 = vmatmul.mubr.bf16.gmra.mxu0 %v745
    %v3546 = vpop.f32.mrf.mxu0
    %v3547 = vadd.f32 %v3506, %v3546
    %v3548 = vpop.f32.mrf.mxu0
    %v3549 = vadd.f32 %v3508, %v3548
    %v3550 = vpop.f32.mrf.mxu0
    %v3551 = vpop.f32.mrf.mxu0
    %3552 = vdwg.mxu0
    %3553 = vmatprep.subr.bf16.mxu0 %v1693
    %3554 = vmatpush1.bf16.msra.mxu0 %v1692
    %3555 = vmatprep.subr.bf16.mxu0 %v1684
    %3556 = vmatpush1.bf16.msra.mxu0 %v1683
    %3557 = vmatprep.subr.bf16.mxu0 %v1675
    %3558 = vmatpush1.bf16.msra.mxu0 %v1674
    %3559 = vmatprep.subr.bf16.mxu0 %v1666
    %3560 = vmatpush1.bf16.msra.mxu0 %v1665
    %3561 = vmatprep.subr.bf16.mxu0 %v1657
    %3562 = vmatpush1.bf16.msra.mxu0 %v1656
    %3563 = vmatprep.subr.bf16.mxu0 %v1648
    %3564 = vmatpush1.bf16.msra.mxu0 %v1647
    %3565 = vmatprep.subr.bf16.mxu0 %v1639
    %3566 = vmatpush1.bf16.msra.mxu0 %v1638
    %3567 = vmatprep.subr.bf16.mxu0 %v1630
    %3568 = vmatpush1.bf16.msra.mxu0 %v1629
    %3569 = vmatprep.subr.bf16.mxu0 %v1765
    %3570 = vmatpush2.bf16.msra.mxu0 %v1764
    %3571 = vmatprep.subr.bf16.mxu0 %v1756
    %3572 = vmatpush2.bf16.msra.mxu0 %v1755
    %3573 = vmatprep.subr.bf16.mxu0 %v1747
    %3574 = vmatpush2.bf16.msra.mxu0 %v1746
    %3575 = vmatprep.subr.bf16.mxu0 %v1738
    %3576 = vmatpush2.bf16.msra.mxu0 %v1737
    %3577 = vmatprep.subr.bf16.mxu0 %v1729
    %3578 = vmatpush2.bf16.msra.mxu0 %v1728
    %3579 = vmatprep.subr.bf16.mxu0 %v1720
    %3580 = vmatpush2.bf16.msra.mxu0 %v1719
    %3581 = vmatprep.subr.bf16.mxu0 %v1711
    %3582 = vmatpush2.bf16.msra.mxu0 %v1710
    %3583 = vmatprep.subr.bf16.mxu0 %v1702
    %3584 = vmatpush2.bf16.msra.mxu0 %v1701
    %3585 = vmatprep.mubr.bf16.mxu0 %v748
    %3586 = vmatmul.mubr.bf16.gmra.mxu0 %v747
    %v3587 = vpop.f32.mrf.mxu0
    %v3588 = vadd.f32 %v3547, %v3587
    %v3589 = vpop.f32.mrf.mxu0
    %v3590 = vadd.f32 %v3549, %v3589
    %v3591 = vpop.f32.mrf.mxu0
    %v3592 = vpop.f32.mrf.mxu0
    %3593 = vdwg.mxu0
    %3594 = vmatprep.subr.bf16.mxu0 %v1837
    %3595 = vmatpush1.bf16.msra.mxu0 %v1836
    %3596 = vmatprep.subr.bf16.mxu0 %v1828
    %3597 = vmatpush1.bf16.msra.mxu0 %v1827
    %3598 = vmatprep.subr.bf16.mxu0 %v1819
    %3599 = vmatpush1.bf16.msra.mxu0 %v1818
    %3600 = vmatprep.subr.bf16.mxu0 %v1810
    %3601 = vmatpush1.bf16.msra.mxu0 %v1809
    %3602 = vmatprep.subr.bf16.mxu0 %v1801
    %3603 = vmatpush1.bf16.msra.mxu0 %v1800
    %3604 = vmatprep.subr.bf16.mxu0 %v1792
    %3605 = vmatpush1.bf16.msra.mxu0 %v1791
    %3606 = vmatprep.subr.bf16.mxu0 %v1783
    %3607 = vmatpush1.bf16.msra.mxu0 %v1782
    %3608 = vmatprep.subr.bf16.mxu0 %v1774
    %3609 = vmatpush1.bf16.msra.mxu0 %v1773
    %3610 = vmatprep.subr.bf16.mxu0 %v1909
    %3611 = vmatpush2.bf16.msra.mxu0 %v1908
    %3612 = vmatprep.subr.bf16.mxu0 %v1900
    %3613 = vmatpush2.bf16.msra.mxu0 %v1899
    %3614 = vmatprep.subr.bf16.mxu0 %v1891
    %3615 = vmatpush2.bf16.msra.mxu0 %v1890
    %3616 = vmatprep.subr.bf16.mxu0 %v1882
    %3617 = vmatpush2.bf16.msra.mxu0 %v1881
    %3618 = vmatprep.subr.bf16.mxu0 %v1873
    %3619 = vmatpush2.bf16.msra.mxu0 %v1872
    %3620 = vmatprep.subr.bf16.mxu0 %v1864
    %3621 = vmatpush2.bf16.msra.mxu0 %v1863
    %3622 = vmatprep.subr.bf16.mxu0 %v1855
    %3623 = vmatpush2.bf16.msra.mxu0 %v1854
    %3624 = vmatprep.subr.bf16.mxu0 %v1846
    %3625 = vmatpush2.bf16.msra.mxu0 %v1845
    %3626 = vmatprep.mubr.bf16.mxu0 %v750
    %3627 = vmatmul.mubr.bf16.gmra.mxu0 %v749
    %v3628 = vpop.f32.mrf.mxu0
    %v3629 = vadd.f32 %v3588, %v3628
    %v3630 = vpop.f32.mrf.mxu0
    %v3631 = vadd.f32 %v3590, %v3630
    %v3632 = vpop.f32.mrf.mxu0
    %v3633 = vpop.f32.mrf.mxu0
    %3634 = vdwg.mxu0
    %3635 = vmatprep.subr.bf16.mxu0 %v1981
    %3636 = vmatpush1.bf16.msra.mxu0 %v1980
    %3637 = vmatprep.subr.bf16.mxu0 %v1972
    %3638 = vmatpush1.bf16.msra.mxu0 %v1971
    %3639 = vmatprep.subr.bf16.mxu0 %v1963
    %3640 = vmatpush1.bf16.msra.mxu0 %v1962
    %3641 = vmatprep.subr.bf16.mxu0 %v1954
    %3642 = vmatpush1.bf16.msra.mxu0 %v1953
    %3643 = vmatprep.subr.bf16.mxu0 %v1945
    %3644 = vmatpush1.bf16.msra.mxu0 %v1944
    %3645 = vmatprep.subr.bf16.mxu0 %v1936
    %3646 = vmatpush1.bf16.msra.mxu0 %v1935
    %3647 = vmatprep.subr.bf16.mxu0 %v1927
    %3648 = vmatpush1.bf16.msra.mxu0 %v1926
    %3649 = vmatprep.subr.bf16.mxu0 %v1918
    %3650 = vmatpush1.bf16.msra.mxu0 %v1917
    %3651 = vmatprep.subr.bf16.mxu0 %v2053
    %3652 = vmatpush2.bf16.msra.mxu0 %v2052
    %3653 = vmatprep.subr.bf16.mxu0 %v2044
    %3654 = vmatpush2.bf16.msra.mxu0 %v2043
    %3655 = vmatprep.subr.bf16.mxu0 %v2035
    %3656 = vmatpush2.bf16.msra.mxu0 %v2034
    %3657 = vmatprep.subr.bf16.mxu0 %v2026
    %3658 = vmatpush2.bf16.msra.mxu0 %v2025
    %3659 = vmatprep.subr.bf16.mxu0 %v2017
    %3660 = vmatpush2.bf16.msra.mxu0 %v2016
    %3661 = vmatprep.subr.bf16.mxu0 %v2008
    %3662 = vmatpush2.bf16.msra.mxu0 %v2007
    %3663 = vmatprep.subr.bf16.mxu0 %v1999
    %3664 = vmatpush2.bf16.msra.mxu0 %v1998
    %3665 = vmatprep.subr.bf16.mxu0 %v1990
    %3666 = vmatpush2.bf16.msra.mxu0 %v1989
    %3667 = vmatprep.mubr.bf16.mxu0 %v752
    %3668 = vmatmul.mubr.bf16.gmra.mxu0 %v751
    %v3669 = vpop.f32.mrf.mxu0
    %v3670 = vadd.f32 %v3629, %v3669
    %v3671 = vpop.f32.mrf.mxu0
    %v3672 = vadd.f32 %v3631, %v3671
    %v3673 = vpop.f32.mrf.mxu0
    %v3674 = vpop.f32.mrf.mxu0
    %3675 = vdwg.mxu0
    %3676 = vmatprep.subr.bf16.mxu0 %v2125
    %3677 = vmatpush1.bf16.msra.mxu0 %v2124
    %3678 = vmatprep.subr.bf16.mxu0 %v2116
    %3679 = vmatpush1.bf16.msra.mxu0 %v2115
    %3680 = vmatprep.subr.bf16.mxu0 %v2107
    %3681 = vmatpush1.bf16.msra.mxu0 %v2106
    %3682 = vmatprep.subr.bf16.mxu0 %v2098
    %3683 = vmatpush1.bf16.msra.mxu0 %v2097
    %3684 = vmatprep.subr.bf16.mxu0 %v2089
    %3685 = vmatpush1.bf16.msra.mxu0 %v2088
    %3686 = vmatprep.subr.bf16.mxu0 %v2080
    %3687 = vmatpush1.bf16.msra.mxu0 %v2079
    %3688 = vmatprep.subr.bf16.mxu0 %v2071
    %3689 = vmatpush1.bf16.msra.mxu0 %v2070
    %3690 = vmatprep.subr.bf16.mxu0 %v2062
    %3691 = vmatpush1.bf16.msra.mxu0 %v2061
    %3692 = vmatprep.subr.bf16.mxu0 %v2197
    %3693 = vmatpush2.bf16.msra.mxu0 %v2196
    %3694 = vmatprep.subr.bf16.mxu0 %v2188
    %3695 = vmatpush2.bf16.msra.mxu0 %v2187
    %3696 = vmatprep.subr.bf16.mxu0 %v2179
    %3697 = vmatpush2.bf16.msra.mxu0 %v2178
    %3698 = vmatprep.subr.bf16.mxu0 %v2170
    %3699 = vmatpush2.bf16.msra.mxu0 %v2169
    %3700 = vmatprep.subr.bf16.mxu0 %v2161
    %3701 = vmatpush2.bf16.msra.mxu0 %v2160
    %3702 = vmatprep.subr.bf16.mxu0 %v2152
    %3703 = vmatpush2.bf16.msra.mxu0 %v2151
    %3704 = vmatprep.subr.bf16.mxu0 %v2143
    %3705 = vmatpush2.bf16.msra.mxu0 %v2142
    %3706 = vmatprep.subr.bf16.mxu0 %v2134
    %3707 = vmatpush2.bf16.msra.mxu0 %v2133
    %3708 = vmatprep.mubr.bf16.mxu0 %v754
    %3709 = vmatmul.mubr.bf16.gmra.mxu0 %v753
    %v3710 = vpop.f32.mrf.mxu0
    %v3711 = vadd.f32 %v3670, %v3710
    %v3712 = vpop.f32.mrf.mxu0
    %v3713 = vadd.f32 %v3672, %v3712
    %v3714 = vpop.f32.mrf.mxu0
    %v3715 = vpop.f32.mrf.mxu0
    %3716 = vdwg.mxu0
    %3717 = vmatprep.subr.bf16.mxu0 %v2269
    %3718 = vmatpush1.bf16.msra.mxu0 %v2268
    %3719 = vmatprep.subr.bf16.mxu0 %v2260
    %3720 = vmatpush1.bf16.msra.mxu0 %v2259
    %3721 = vmatprep.subr.bf16.mxu0 %v2251
    %3722 = vmatpush1.bf16.msra.mxu0 %v2250
    %3723 = vmatprep.subr.bf16.mxu0 %v2242
    %3724 = vmatpush1.bf16.msra.mxu0 %v2241
    %3725 = vmatprep.subr.bf16.mxu0 %v2233
    %3726 = vmatpush1.bf16.msra.mxu0 %v2232
    %3727 = vmatprep.subr.bf16.mxu0 %v2224
    %3728 = vmatpush1.bf16.msra.mxu0 %v2223
    %3729 = vmatprep.subr.bf16.mxu0 %v2215
    %3730 = vmatpush1.bf16.msra.mxu0 %v2214
    %3731 = vmatprep.subr.bf16.mxu0 %v2206
    %3732 = vmatpush1.bf16.msra.mxu0 %v2205
    %3733 = vmatprep.subr.bf16.mxu0 %v2341
    %3734 = vmatpush2.bf16.msra.mxu0 %v2340
    %3735 = vmatprep.subr.bf16.mxu0 %v2332
    %3736 = vmatpush2.bf16.msra.mxu0 %v2331
    %3737 = vmatprep.subr.bf16.mxu0 %v2323
    %3738 = vmatpush2.bf16.msra.mxu0 %v2322
    %3739 = vmatprep.subr.bf16.mxu0 %v2314
    %3740 = vmatpush2.bf16.msra.mxu0 %v2313
    %3741 = vmatprep.subr.bf16.mxu0 %v2305
    %3742 = vmatpush2.bf16.msra.mxu0 %v2304
    %3743 = vmatprep.subr.bf16.mxu0 %v2296
    %3744 = vmatpush2.bf16.msra.mxu0 %v2295
    %3745 = vmatprep.subr.bf16.mxu0 %v2287
    %3746 = vmatpush2.bf16.msra.mxu0 %v2286
    %3747 = vmatprep.subr.bf16.mxu0 %v2278
    %3748 = vmatpush2.bf16.msra.mxu0 %v2277
    %3749 = vmatprep.mubr.bf16.mxu0 %v756
    %3750 = vmatmul.mubr.bf16.gmra.mxu0 %v755
    %v3751 = vpop.f32.mrf.mxu0
    %v3752 = vadd.f32 %v3711, %v3751
    %v3753 = vpop.f32.mrf.mxu0
    %v3754 = vadd.f32 %v3713, %v3753
    %v3755 = vpop.f32.mrf.mxu0
    %v3756 = vpop.f32.mrf.mxu0
    %3757 = vdwg.mxu0
    %3758 = vmatprep.subr.bf16.mxu0 %v2413
    %3759 = vmatpush1.bf16.msra.mxu0 %v2412
    %3760 = vmatprep.subr.bf16.mxu0 %v2404
    %3761 = vmatpush1.bf16.msra.mxu0 %v2403
    %3762 = vmatprep.subr.bf16.mxu0 %v2395
    %3763 = vmatpush1.bf16.msra.mxu0 %v2394
    %3764 = vmatprep.subr.bf16.mxu0 %v2386
    %3765 = vmatpush1.bf16.msra.mxu0 %v2385
    %3766 = vmatprep.subr.bf16.mxu0 %v2377
    %3767 = vmatpush1.bf16.msra.mxu0 %v2376
    %3768 = vmatprep.subr.bf16.mxu0 %v2368
    %3769 = vmatpush1.bf16.msra.mxu0 %v2367
    %3770 = vmatprep.subr.bf16.mxu0 %v2359
    %3771 = vmatpush1.bf16.msra.mxu0 %v2358
    %3772 = vmatprep.subr.bf16.mxu0 %v2350
    %3773 = vmatpush1.bf16.msra.mxu0 %v2349
    %3774 = vmatprep.subr.bf16.mxu0 %v2485
    %3775 = vmatpush2.bf16.msra.mxu0 %v2484
    %3776 = vmatprep.subr.bf16.mxu0 %v2476
    %3777 = vmatpush2.bf16.msra.mxu0 %v2475
    %3778 = vmatprep.subr.bf16.mxu0 %v2467
    %3779 = vmatpush2.bf16.msra.mxu0 %v2466
    %3780 = vmatprep.subr.bf16.mxu0 %v2458
    %3781 = vmatpush2.bf16.msra.mxu0 %v2457
    %3782 = vmatprep.subr.bf16.mxu0 %v2449
    %3783 = vmatpush2.bf16.msra.mxu0 %v2448
    %3784 = vmatprep.subr.bf16.mxu0 %v2440
    %3785 = vmatpush2.bf16.msra.mxu0 %v2439
    %3786 = vmatprep.subr.bf16.mxu0 %v2431
    %3787 = vmatpush2.bf16.msra.mxu0 %v2430
    %3788 = vmatprep.subr.bf16.mxu0 %v2422
    %3789 = vmatpush2.bf16.msra.mxu0 %v2421
    %3790 = vmatprep.mubr.bf16.mxu0 %v758
    %3791 = vmatmul.mubr.bf16.gmra.mxu0 %v757
    %v3792 = vpop.f32.mrf.mxu0
    %v3793 = vadd.f32 %v3752, %v3792
    %v3794 = vpop.f32.mrf.mxu0
    %v3795 = vadd.f32 %v3754, %v3794
    %v3796 = vpop.f32.mrf.mxu0
    %v3797 = vpop.f32.mrf.mxu0
    %3798 = vdwg.mxu0
    %3799 = vmatprep.subr.bf16.mxu0 0
    %3800 = vmatpush1.bf16.msra.mxu0 %v1406
    %3801 = vmatprep.subr.bf16.mxu0 0
    %3802 = vmatpush1.bf16.msra.mxu0 %v1397
    %3803 = vmatprep.subr.bf16.mxu0 0
    %3804 = vmatpush1.bf16.msra.mxu0 %v1388
    %3805 = vmatprep.subr.bf16.mxu0 0
    %3806 = vmatpush1.bf16.msra.mxu0 %v1379
    %3807 = vmatprep.subr.bf16.mxu0 0
    %3808 = vmatpush1.bf16.msra.mxu0 %v1370
    %3809 = vmatprep.subr.bf16.mxu0 0
    %3810 = vmatpush1.bf16.msra.mxu0 %v1361
    %3811 = vmatprep.subr.bf16.mxu0 0
    %3812 = vmatpush1.bf16.msra.mxu0 %v1352
    %3813 = vmatprep.subr.bf16.mxu0 0
    %3814 = vmatpush1.bf16.msra.mxu0 %v1343
    %3815 = vmatprep.subr.bf16.mxu0 0
    %3816 = vmatpush2.bf16.msra.mxu0 %v1478
    %3817 = vmatprep.subr.bf16.mxu0 0
    %3818 = vmatpush2.bf16.msra.mxu0 %v1469
    %3819 = vmatprep.subr.bf16.mxu0 0
    %3820 = vmatpush2.bf16.msra.mxu0 %v1460
    %3821 = vmatprep.subr.bf16.mxu0 0
    %3822 = vmatpush2.bf16.msra.mxu0 %v1451
    %3823 = vmatprep.subr.bf16.mxu0 0
    %3824 = vmatpush2.bf16.msra.mxu0 %v1442
    %3825 = vmatprep.subr.bf16.mxu0 0
    %3826 = vmatpush2.bf16.msra.mxu0 %v1433
    %3827 = vmatprep.subr.bf16.mxu0 0
    %3828 = vmatpush2.bf16.msra.mxu0 %v1424
    %3829 = vmatprep.subr.bf16.mxu0 0
    %3830 = vmatpush2.bf16.msra.mxu0 %v1415
    %3831 = vmatprep.mubr.bf16.mxu0 %v744
    %3832 = vmatmul.mubr.bf16.gmra.mxu0 %v743
    %v3833 = vpop.f32.mrf.mxu0
    %v3834 = vadd.f32 0.0, %v3833
    %v3835 = vpop.f32.mrf.mxu0
    %v3836 = vpop.f32.mrf.mxu0
    %v3837 = vpop.f32.mrf.mxu0
    %3838 = vdwg.mxu0
    %3839 = vmatprep.subr.bf16.mxu0 0
    %3840 = vmatpush1.bf16.msra.mxu0 %v1550
    %3841 = vmatprep.subr.bf16.mxu0 0
    %3842 = vmatpush1.bf16.msra.mxu0 %v1541
    %3843 = vmatprep.subr.bf16.mxu0 0
    %3844 = vmatpush1.bf16.msra.mxu0 %v1532
    %3845 = vmatprep.subr.bf16.mxu0 0
    %3846 = vmatpush1.bf16.msra.mxu0 %v1523
    %3847 = vmatprep.subr.bf16.mxu0 0
    %3848 = vmatpush1.bf16.msra.mxu0 %v1514
    %3849 = vmatprep.subr.bf16.mxu0 0
    %3850 = vmatpush1.bf16.msra.mxu0 %v1505
    %3851 = vmatprep.subr.bf16.mxu0 0
    %3852 = vmatpush1.bf16.msra.mxu0 %v1496
    %3853 = vmatprep.subr.bf16.mxu0 0
    %3854 = vmatpush1.bf16.msra.mxu0 %v1487
    %3855 = vmatprep.subr.bf16.mxu0 0
    %3856 = vmatpush2.bf16.msra.mxu0 %v1622
    %3857 = vmatprep.subr.bf16.mxu0 0
    %3858 = vmatpush2.bf16.msra.mxu0 %v1613
    %3859 = vmatprep.subr.bf16.mxu0 0
    %3860 = vmatpush2.bf16.msra.mxu0 %v1604
    %3861 = vmatprep.subr.bf16.mxu0 0
    %3862 = vmatpush2.bf16.msra.mxu0 %v1595
    %3863 = vmatprep.subr.bf16.mxu0 0
    %3864 = vmatpush2.bf16.msra.mxu0 %v1586
    %3865 = vmatprep.subr.bf16.mxu0 0
    %3866 = vmatpush2.bf16.msra.mxu0 %v1577
    %3867 = vmatprep.subr.bf16.mxu0 0
    %3868 = vmatpush2.bf16.msra.mxu0 %v1568
    %3869 = vmatprep.subr.bf16.mxu0 0
    %3870 = vmatpush2.bf16.msra.mxu0 %v1559
    %3871 = vmatprep.mubr.bf16.mxu0 %v746
    %3872 = vmatmul.mubr.bf16.gmra.mxu0 %v745
    %v3873 = vpop.f32.mrf.mxu0
    %v3874 = vadd.f32 %v3834, %v3873
    %v3875 = vpop.f32.mrf.mxu0
    %v3876 = vpop.f32.mrf.mxu0
    %v3877 = vpop.f32.mrf.mxu0
    %3878 = vdwg.mxu0
    %3879 = vmatprep.subr.bf16.mxu0 0
    %3880 = vmatpush1.bf16.msra.mxu0 %v1694
    %3881 = vmatprep.subr.bf16.mxu0 0
    %3882 = vmatpush1.bf16.msra.mxu0 %v1685
    %3883 = vmatprep.subr.bf16.mxu0 0
    %3884 = vmatpush1.bf16.msra.mxu0 %v1676
    %3885 = vmatprep.subr.bf16.mxu0 0
    %3886 = vmatpush1.bf16.msra.mxu0 %v1667
    %3887 = vmatprep.subr.bf16.mxu0 0
    %3888 = vmatpush1.bf16.msra.mxu0 %v1658
    %3889 = vmatprep.subr.bf16.mxu0 0
    %3890 = vmatpush1.bf16.msra.mxu0 %v1649
    %3891 = vmatprep.subr.bf16.mxu0 0
    %3892 = vmatpush1.bf16.msra.mxu0 %v1640
    %3893 = vmatprep.subr.bf16.mxu0 0
    %3894 = vmatpush1.bf16.msra.mxu0 %v1631
    %3895 = vmatprep.subr.bf16.mxu0 0
    %3896 = vmatpush2.bf16.msra.mxu0 %v1766
    %3897 = vmatprep.subr.bf16.mxu0 0
    %3898 = vmatpush2.bf16.msra.mxu0 %v1757
    %3899 = vmatprep.subr.bf16.mxu0 0
    %3900 = vmatpush2.bf16.msra.mxu0 %v1748
    %3901 = vmatprep.subr.bf16.mxu0 0
    %3902 = vmatpush2.bf16.msra.mxu0 %v1739
    %3903 = vmatprep.subr.bf16.mxu0 0
    %3904 = vmatpush2.bf16.msra.mxu0 %v1730
    %3905 = vmatprep.subr.bf16.mxu0 0
    %3906 = vmatpush2.bf16.msra.mxu0 %v1721
    %3907 = vmatprep.subr.bf16.mxu0 0
    %3908 = vmatpush2.bf16.msra.mxu0 %v1712
    %3909 = vmatprep.subr.bf16.mxu0 0
    %3910 = vmatpush2.bf16.msra.mxu0 %v1703
    %3911 = vmatprep.mubr.bf16.mxu0 %v748
    %3912 = vmatmul.mubr.bf16.gmra.mxu0 %v747
    %v3913 = vpop.f32.mrf.mxu0
    %v3914 = vadd.f32 %v3874, %v3913
    %v3915 = vpop.f32.mrf.mxu0
    %v3916 = vpop.f32.mrf.mxu0
    %v3917 = vpop.f32.mrf.mxu0
    %3918 = vdwg.mxu0
    %3919 = vmatprep.subr.bf16.mxu0 0
    %3920 = vmatpush1.bf16.msra.mxu0 %v1838
    %3921 = vmatprep.subr.bf16.mxu0 0
    %3922 = vmatpush1.bf16.msra.mxu0 %v1829
    %3923 = vmatprep.subr.bf16.mxu0 0
    %3924 = vmatpush1.bf16.msra.mxu0 %v1820
    %3925 = vmatprep.subr.bf16.mxu0 0
    %3926 = vmatpush1.bf16.msra.mxu0 %v1811
    %3927 = vmatprep.subr.bf16.mxu0 0
    %3928 = vmatpush1.bf16.msra.mxu0 %v1802
    %3929 = vmatprep.subr.bf16.mxu0 0
    %3930 = vmatpush1.bf16.msra.mxu0 %v1793
    %3931 = vmatprep.subr.bf16.mxu0 0
    %3932 = vmatpush1.bf16.msra.mxu0 %v1784
    %3933 = vmatprep.subr.bf16.mxu0 0
    %3934 = vmatpush1.bf16.msra.mxu0 %v1775
    %3935 = vmatprep.subr.bf16.mxu0 0
    %3936 = vmatpush2.bf16.msra.mxu0 %v1910
    %3937 = vmatprep.subr.bf16.mxu0 0
    %3938 = vmatpush2.bf16.msra.mxu0 %v1901
    %3939 = vmatprep.subr.bf16.mxu0 0
    %3940 = vmatpush2.bf16.msra.mxu0 %v1892
    %3941 = vmatprep.subr.bf16.mxu0 0
    %3942 = vmatpush2.bf16.msra.mxu0 %v1883
    %3943 = vmatprep.subr.bf16.mxu0 0
    %3944 = vmatpush2.bf16.msra.mxu0 %v1874
    %3945 = vmatprep.subr.bf16.mxu0 0
    %3946 = vmatpush2.bf16.msra.mxu0 %v1865
    %3947 = vmatprep.subr.bf16.mxu0 0
    %3948 = vmatpush2.bf16.msra.mxu0 %v1856
    %3949 = vmatprep.subr.bf16.mxu0 0
    %3950 = vmatpush2.bf16.msra.mxu0 %v1847
    %3951 = vmatprep.mubr.bf16.mxu0 %v750
    %3952 = vmatmul.mubr.bf16.gmra.mxu0 %v749
    %v3953 = vpop.f32.mrf.mxu0
    %v3954 = vadd.f32 %v3914, %v3953
    %v3955 = vpop.f32.mrf.mxu0
    %v3956 = vpop.f32.mrf.mxu0
    %v3957 = vpop.f32.mrf.mxu0
    %3958 = vdwg.mxu0
    %3959 = vmatprep.subr.bf16.mxu0 0
    %3960 = vmatpush1.bf16.msra.mxu0 %v1982
    %3961 = vmatprep.subr.bf16.mxu0 0
    %3962 = vmatpush1.bf16.msra.mxu0 %v1973
    %3963 = vmatprep.subr.bf16.mxu0 0
    %3964 = vmatpush1.bf16.msra.mxu0 %v1964
    %3965 = vmatprep.subr.bf16.mxu0 0
    %3966 = vmatpush1.bf16.msra.mxu0 %v1955
    %3967 = vmatprep.subr.bf16.mxu0 0
    %3968 = vmatpush1.bf16.msra.mxu0 %v1946
    %3969 = vmatprep.subr.bf16.mxu0 0
    %3970 = vmatpush1.bf16.msra.mxu0 %v1937
    %3971 = vmatprep.subr.bf16.mxu0 0
    %3972 = vmatpush1.bf16.msra.mxu0 %v1928
    %3973 = vmatprep.subr.bf16.mxu0 0
    %3974 = vmatpush1.bf16.msra.mxu0 %v1919
    %3975 = vmatprep.subr.bf16.mxu0 0
    %3976 = vmatpush2.bf16.msra.mxu0 %v2054
    %3977 = vmatprep.subr.bf16.mxu0 0
    %3978 = vmatpush2.bf16.msra.mxu0 %v2045
    %3979 = vmatprep.subr.bf16.mxu0 0
    %3980 = vmatpush2.bf16.msra.mxu0 %v2036
    %3981 = vmatprep.subr.bf16.mxu0 0
    %3982 = vmatpush2.bf16.msra.mxu0 %v2027
    %3983 = vmatprep.subr.bf16.mxu0 0
    %3984 = vmatpush2.bf16.msra.mxu0 %v2018
    %3985 = vmatprep.subr.bf16.mxu0 0
    %3986 = vmatpush2.bf16.msra.mxu0 %v2009
    %3987 = vmatprep.subr.bf16.mxu0 0
    %3988 = vmatpush2.bf16.msra.mxu0 %v2000
    %3989 = vmatprep.subr.bf16.mxu0 0
    %3990 = vmatpush2.bf16.msra.mxu0 %v1991
    %3991 = vmatprep.mubr.bf16.mxu0 %v752
    %3992 = vmatmul.mubr.bf16.gmra.mxu0 %v751
    %v3993 = vpop.f32.mrf.mxu0
    %v3994 = vadd.f32 %v3954, %v3993
    %v3995 = vpop.f32.mrf.mxu0
    %v3996 = vpop.f32.mrf.mxu0
    %v3997 = vpop.f32.mrf.mxu0
    %3998 = vdwg.mxu0
    %3999 = vmatprep.subr.bf16.mxu0 0
    %4000 = vmatpush1.bf16.msra.mxu0 %v2126
    %4001 = vmatprep.subr.bf16.mxu0 0
    %4002 = vmatpush1.bf16.msra.mxu0 %v2117
    %4003 = vmatprep.subr.bf16.mxu0 0
    %4004 = vmatpush1.bf16.msra.mxu0 %v2108
    %4005 = vmatprep.subr.bf16.mxu0 0
    %4006 = vmatpush1.bf16.msra.mxu0 %v2099
    %4007 = vmatprep.subr.bf16.mxu0 0
    %4008 = vmatpush1.bf16.msra.mxu0 %v2090
    %4009 = vmatprep.subr.bf16.mxu0 0
    %4010 = vmatpush1.bf16.msra.mxu0 %v2081
    %4011 = vmatprep.subr.bf16.mxu0 0
    %4012 = vmatpush1.bf16.msra.mxu0 %v2072
    %4013 = vmatprep.subr.bf16.mxu0 0
    %4014 = vmatpush1.bf16.msra.mxu0 %v2063
    %4015 = vmatprep.subr.bf16.mxu0 0
    %4016 = vmatpush2.bf16.msra.mxu0 %v2198
    %4017 = vmatprep.subr.bf16.mxu0 0
    %4018 = vmatpush2.bf16.msra.mxu0 %v2189
    %4019 = vmatprep.subr.bf16.mxu0 0
    %4020 = vmatpush2.bf16.msra.mxu0 %v2180
    %4021 = vmatprep.subr.bf16.mxu0 0
    %4022 = vmatpush2.bf16.msra.mxu0 %v2171
    %4023 = vmatprep.subr.bf16.mxu0 0
    %4024 = vmatpush2.bf16.msra.mxu0 %v2162
    %4025 = vmatprep.subr.bf16.mxu0 0
    %4026 = vmatpush2.bf16.msra.mxu0 %v2153
    %4027 = vmatprep.subr.bf16.mxu0 0
    %4028 = vmatpush2.bf16.msra.mxu0 %v2144
    %4029 = vmatprep.subr.bf16.mxu0 0
    %4030 = vmatpush2.bf16.msra.mxu0 %v2135
    %4031 = vmatprep.mubr.bf16.mxu0 %v754
    %4032 = vmatmul.mubr.bf16.gmra.mxu0 %v753
    %v4033 = vpop.f32.mrf.mxu0
    %v4034 = vadd.f32 %v3994, %v4033
    %v4035 = vpop.f32.mrf.mxu0
    %v4036 = vpop.f32.mrf.mxu0
    %v4037 = vpop.f32.mrf.mxu0
    %4038 = vdwg.mxu0
    %4039 = vmatprep.subr.bf16.mxu0 0
    %4040 = vmatpush1.bf16.msra.mxu0 %v2270
    %4041 = vmatprep.subr.bf16.mxu0 0
    %4042 = vmatpush1.bf16.msra.mxu0 %v2261
    %4043 = vmatprep.subr.bf16.mxu0 0
    %4044 = vmatpush1.bf16.msra.mxu0 %v2252
    %4045 = vmatprep.subr.bf16.mxu0 0
    %4046 = vmatpush1.bf16.msra.mxu0 %v2243
    %4047 = vmatprep.subr.bf16.mxu0 0
    %4048 = vmatpush1.bf16.msra.mxu0 %v2234
    %4049 = vmatprep.subr.bf16.mxu0 0
    %4050 = vmatpush1.bf16.msra.mxu0 %v2225
    %4051 = vmatprep.subr.bf16.mxu0 0
    %4052 = vmatpush1.bf16.msra.mxu0 %v2216
    %4053 = vmatprep.subr.bf16.mxu0 0
    %4054 = vmatpush1.bf16.msra.mxu0 %v2207
    %4055 = vmatprep.subr.bf16.mxu0 0
    %4056 = vmatpush2.bf16.msra.mxu0 %v2342
    %4057 = vmatprep.subr.bf16.mxu0 0
    %4058 = vmatpush2.bf16.msra.mxu0 %v2333
    %4059 = vmatprep.subr.bf16.mxu0 0
    %4060 = vmatpush2.bf16.msra.mxu0 %v2324
    %4061 = vmatprep.subr.bf16.mxu0 0
    %4062 = vmatpush2.bf16.msra.mxu0 %v2315
    %4063 = vmatprep.subr.bf16.mxu0 0
    %4064 = vmatpush2.bf16.msra.mxu0 %v2306
    %4065 = vmatprep.subr.bf16.mxu0 0
    %4066 = vmatpush2.bf16.msra.mxu0 %v2297
    %4067 = vmatprep.subr.bf16.mxu0 0
    %4068 = vmatpush2.bf16.msra.mxu0 %v2288
    %4069 = vmatprep.subr.bf16.mxu0 0
    %4070 = vmatpush2.bf16.msra.mxu0 %v2279
    %4071 = vmatprep.mubr.bf16.mxu0 %v756
    %4072 = vmatmul.mubr.bf16.gmra.mxu0 %v755
    %v4073 = vpop.f32.mrf.mxu0
    %v4074 = vadd.f32 %v4034, %v4073
    %v4075 = vpop.f32.mrf.mxu0
    %v4076 = vpop.f32.mrf.mxu0
    %v4077 = vpop.f32.mrf.mxu0
    %4078 = vdwg.mxu0
    %4079 = vmatprep.subr.bf16.mxu0 0
    %4080 = vmatpush1.bf16.msra.mxu0 %v2414
    %4081 = vmatprep.subr.bf16.mxu0 0
    %4082 = vmatpush1.bf16.msra.mxu0 %v2405
    %4083 = vmatprep.subr.bf16.mxu0 0
    %4084 = vmatpush1.bf16.msra.mxu0 %v2396
    %4085 = vmatprep.subr.bf16.mxu0 0
    %4086 = vmatpush1.bf16.msra.mxu0 %v2387
    %4087 = vmatprep.subr.bf16.mxu0 0
    %4088 = vmatpush1.bf16.msra.mxu0 %v2378
    %4089 = vmatprep.subr.bf16.mxu0 0
    %4090 = vmatpush1.bf16.msra.mxu0 %v2369
    %4091 = vmatprep.subr.bf16.mxu0 0
    %4092 = vmatpush1.bf16.msra.mxu0 %v2360
    %4093 = vmatprep.subr.bf16.mxu0 0
    %4094 = vmatpush1.bf16.msra.mxu0 %v2351
    %4095 = vmatprep.subr.bf16.mxu0 0
    %4096 = vmatpush2.bf16.msra.mxu0 %v2486
    %4097 = vmatprep.subr.bf16.mxu0 0
    %4098 = vmatpush2.bf16.msra.mxu0 %v2477
    %4099 = vmatprep.subr.bf16.mxu0 0
    %4100 = vmatpush2.bf16.msra.mxu0 %v2468
    %4101 = vmatprep.subr.bf16.mxu0 0
    %4102 = vmatpush2.bf16.msra.mxu0 %v2459
    %4103 = vmatprep.subr.bf16.mxu0 0
    %4104 = vmatpush2.bf16.msra.mxu0 %v2450
    %4105 = vmatprep.subr.bf16.mxu0 0
    %4106 = vmatpush2.bf16.msra.mxu0 %v2441
    %4107 = vmatprep.subr.bf16.mxu0 0
    %4108 = vmatpush2.bf16.msra.mxu0 %v2432
    %4109 = vmatprep.subr.bf16.mxu0 0
    %4110 = vmatpush2.bf16.msra.mxu0 %v2423
    %4111 = vmatprep.mubr.bf16.mxu0 %v758
    %4112 = vmatmul.mubr.bf16.gmra.mxu0 %v757
    %v4113 = vpop.f32.mrf.mxu0
    %v4114 = vadd.f32 %v4074, %v4113
    %v4115 = vpop.f32.mrf.mxu0
    %v4116 = vpop.f32.mrf.mxu0
    %v4117 = vpop.f32.mrf.mxu0
    %4118 = vdwg.mxu0
    %v4119 = vld [vmem:[#allocation5 + $0x11] sm:$0xff]
    %v4120 = vld [vmem:[#allocation5 + $0x19] sm:$0x1]
    %v4123 = vlaneseq
    %v4124 = vshrl.u32 %v4123, 7
    %v4125 = vsub.s32 0, %v4124
    %v4126 = vrot.slane %v4119, %v4125
    %v4127 = vlaneseq
    %v4128 = vshrl.u32 %v4127, 7
    %v4129 = vsub.s32 1, %v4128
    %v4130 = vrot.slane %v4119, %v4129
    %v4131 = vlaneseq
    %v4132 = vshrl.u32 %v4131, 7
    %v4133 = vsub.s32 2, %v4132
    %v4134 = vrot.slane %v4119, %v4133
    %v4135 = vlaneseq
    %v4136 = vshrl.u32 %v4135, 7
    %v4137 = vsub.s32 3, %v4136
    %v4138 = vrot.slane %v4119, %v4137
    %v4139 = vlaneseq
    %v4140 = vshrl.u32 %v4139, 7
    %v4141 = vsub.s32 4, %v4140
    %v4142 = vrot.slane %v4119, %v4141
    %v4143 = vlaneseq
    %v4144 = vshrl.u32 %v4143, 7
    %v4145 = vsub.s32 5, %v4144
    %v4146 = vrot.slane %v4119, %v4145
    %v4147 = vlaneseq
    %v4148 = vshrl.u32 %v4147, 7
    %v4149 = vsub.s32 6, %v4148
    %v4150 = vrot.slane %v4119, %v4149
    %v4151 = vlaneseq
    %v4152 = vshrl.u32 %v4151, 7
    %v4153 = vsub.s32 7, %v4152
    %v4154 = vrot.slane %v4119, %v4153
    %v4155 = vlaneseq
    %v4156 = vshrl.u32 %v4155, 7
    %v4157 = vsub.s32 0, %v4156
    %v4158 = vrot.slane %v4120, %v4157
    %v4168 = vmul.f32 %v2809, %v4126
    %v4169 = vmul.f32 %v2811, %v4130
    %v4170 = vmul.f32 %v3137, %v4134
    %v4171 = vmul.f32 %v3139, %v4138
    %v4172 = vmul.f32 %v3465, %v4142
    %v4173 = vmul.f32 %v3467, %v4146
    %v4174 = vmul.f32 %v3793, %v4150
    %v4175 = vmul.f32 %v3795, %v4154
    %v4176 = vmul.f32 %v4114, %v4158
    %v4177 = vpack.c.bf16 %v742, %v742
    %v4178 = vld [vmem:[#allocation10] sm:$0xff]
    %v4179 = vld [vmem:[#allocation10 + $0x8] sm:$0xff]
    %v4180 = vld [vmem:[#allocation10 + $0x10] sm:$0xff]
    %v4181 = vld [vmem:[#allocation10 + $0x18] sm:$0xff]
    %v4182 = vld [vmem:[#allocation10 + $0x20] sm:$0xff]
    %v4183 = vld [vmem:[#allocation10 + $0x28] sm:$0xff]
    %v4184 = vld [vmem:[#allocation10 + $0x30] sm:$0xff]
    %v4185 = vld [vmem:[#allocation10 + $0x38] sm:$0xff]
    %v4186 = vld [vmem:[#allocation10 + $0x40] sm:$0xff]
    %v4187 = vld [vmem:[#allocation10 + $0x48] sm:$0xff]
    %v4188 = vld [vmem:[#allocation10 + $0x50] sm:$0xff]
    %v4189 = vld [vmem:[#allocation10 + $0x58] sm:$0xff]
    %v4190 = vld [vmem:[#allocation10 + $0x60] sm:$0xff]
    %v4191 = vld [vmem:[#allocation10 + $0x68] sm:$0xff]
    %v4192 = vld [vmem:[#allocation10 + $0x70] sm:$0xff]
    %v4193 = vld [vmem:[#allocation10 + $0x78] sm:$0xff]
    %v4194 = vld [vmem:[#allocation10 + $0x80] sm:$0xff]
    %v4195 = vld [vmem:[#allocation10 + $0x88] sm:$0xff]
    %v4196 = vld [vmem:[#allocation10 + $0x90] sm:$0xff]
    %v4197 = vld [vmem:[#allocation10 + $0x98] sm:$0xff]
    %v4198 = vld [vmem:[#allocation10 + $0xa0] sm:$0xff]
    %v4199 = vld [vmem:[#allocation10 + $0xa8] sm:$0xff]
    %v4200 = vld [vmem:[#allocation10 + $0xb0] sm:$0xff]
    %v4201 = vld [vmem:[#allocation10 + $0xb8] sm:$0xff]
    %v4202 = vld [vmem:[#allocation10 + $0xc0] sm:$0xff]
    %v4203 = vld [vmem:[#allocation10 + $0xc8] sm:$0xff]
    %v4204 = vld [vmem:[#allocation10 + $0xd0] sm:$0xff]
    %v4205 = vld [vmem:[#allocation10 + $0xd8] sm:$0xff]
    %v4206 = vld [vmem:[#allocation10 + $0xe0] sm:$0xff]
    %v4207 = vld [vmem:[#allocation10 + $0xe8] sm:$0xff]
    %v4208 = vld [vmem:[#allocation10 + $0xf0] sm:$0xff]
    %v4209 = vld [vmem:[#allocation10 + $0xf8] sm:$0xff]
    %v4210 = vunpack.c.l.s8.bf16 %v4178
    %v4211 = vunpack.c.l.s8.bf16 %v4179
    %v4212 = vunpack.c.l.s8.bf16 %v4180
    %v4213 = vunpack.c.l.s8.bf16 %v4181
    %v4214 = vunpack.c.l.s8.bf16 %v4182
    %v4215 = vunpack.c.l.s8.bf16 %v4183
    %v4216 = vunpack.c.l.s8.bf16 %v4184
    %v4217 = vunpack.c.l.s8.bf16 %v4185
    %v4218 = vunpack.c.h.s8.bf16 %v4178
    %v4219 = vunpack.c.h.s8.bf16 %v4179
    %v4220 = vunpack.c.h.s8.bf16 %v4180
    %v4221 = vunpack.c.h.s8.bf16 %v4181
    %v4222 = vunpack.c.h.s8.bf16 %v4182
    %v4223 = vunpack.c.h.s8.bf16 %v4183
    %v4224 = vunpack.c.h.s8.bf16 %v4184
    %v4225 = vunpack.c.h.s8.bf16 %v4185
    %v4226 = vunpack.c.l.s8.bf16 %v4186
    %v4227 = vunpack.c.l.s8.bf16 %v4187
    %v4228 = vunpack.c.l.s8.bf16 %v4188
    %v4229 = vunpack.c.l.s8.bf16 %v4189
    %v4230 = vunpack.c.l.s8.bf16 %v4190
    %v4231 = vunpack.c.l.s8.bf16 %v4191
    %v4232 = vunpack.c.l.s8.bf16 %v4192
    %v4233 = vunpack.c.l.s8.bf16 %v4193
    %v4234 = vunpack.c.h.s8.bf16 %v4186
    %v4235 = vunpack.c.h.s8.bf16 %v4187
    %v4236 = vunpack.c.h.s8.bf16 %v4188
    %v4237 = vunpack.c.h.s8.bf16 %v4189
    %v4238 = vunpack.c.h.s8.bf16 %v4190
    %v4239 = vunpack.c.h.s8.bf16 %v4191
    %v4240 = vunpack.c.h.s8.bf16 %v4192
    %v4241 = vunpack.c.h.s8.bf16 %v4193
    %v4242 = vunpack.c.l.s8.bf16 %v4194
    %v4243 = vunpack.c.l.s8.bf16 %v4195
    %v4244 = vunpack.c.l.s8.bf16 %v4196
    %v4245 = vunpack.c.l.s8.bf16 %v4197
    %v4246 = vunpack.c.l.s8.bf16 %v4198
    %v4247 = vunpack.c.l.s8.bf16 %v4199
    %v4248 = vunpack.c.l.s8.bf16 %v4200
    %v4249 = vunpack.c.l.s8.bf16 %v4201
    %v4250 = vunpack.c.h.s8.bf16 %v4194
    %v4251 = vunpack.c.h.s8.bf16 %v4195
    %v4252 = vunpack.c.h.s8.bf16 %v4196
    %v4253 = vunpack.c.h.s8.bf16 %v4197
    %v4254 = vunpack.c.h.s8.bf16 %v4198
    %v4255 = vunpack.c.h.s8.bf16 %v4199
    %v4256 = vunpack.c.h.s8.bf16 %v4200
    %v4257 = vunpack.c.h.s8.bf16 %v4201
    %v4258 = vunpack.c.l.s8.bf16 %v4202
    %v4259 = vunpack.c.l.s8.bf16 %v4203
    %v4260 = vunpack.c.l.s8.bf16 %v4204
    %v4261 = vunpack.c.l.s8.bf16 %v4205
    %v4262 = vunpack.c.l.s8.bf16 %v4206
    %v4263 = vunpack.c.l.s8.bf16 %v4207
    %v4264 = vunpack.c.l.s8.bf16 %v4208
    %v4265 = vunpack.c.l.s8.bf16 %v4209
    %v4266 = vunpack.c.h.s8.bf16 %v4202
    %v4267 = vunpack.c.h.s8.bf16 %v4203
    %v4268 = vunpack.c.h.s8.bf16 %v4204
    %v4269 = vunpack.c.h.s8.bf16 %v4205
    %v4270 = vunpack.c.h.s8.bf16 %v4206
    %v4271 = vunpack.c.h.s8.bf16 %v4207
    %v4272 = vunpack.c.h.s8.bf16 %v4208
    %v4273 = vunpack.c.h.s8.bf16 %v4209
    %4274 = vmatprep.subr.bf16.mxu0 %v4267
    %4275 = vmatpush1.bf16.msra.mxu0 %v4266
    %4276 = vmatprep.subr.bf16.mxu0 %v4259
    %4277 = vmatpush1.bf16.msra.mxu0 %v4258
    %4278 = vmatprep.subr.bf16.mxu0 %v4251
    %4279 = vmatpush1.bf16.msra.mxu0 %v4250
    %4280 = vmatprep.subr.bf16.mxu0 %v4243
    %4281 = vmatpush1.bf16.msra.mxu0 %v4242
    %4282 = vmatprep.subr.bf16.mxu0 %v4235
    %4283 = vmatpush1.bf16.msra.mxu0 %v4234
    %4284 = vmatprep.subr.bf16.mxu0 %v4227
    %4285 = vmatpush1.bf16.msra.mxu0 %v4226
    %4286 = vmatprep.subr.bf16.mxu0 %v4219
    %4287 = vmatpush1.bf16.msra.mxu0 %v4218
    %4288 = vmatprep.subr.bf16.mxu0 %v4211
    %4289 = vmatpush1.bf16.msra.mxu0 %v4210
    %4290 = vmatprep.subr.bf16.mxu0 0
    %4291 = vmatpush2.bf16.msra.mxu0 0
    %4292 = vmatprep.subr.bf16.mxu0 0
    %4293 = vmatpush2.bf16.msra.mxu0 0
    %4294 = vmatprep.subr.bf16.mxu0 0
    %4295 = vmatpush2.bf16.msra.mxu0 0
    %4296 = vmatprep.subr.bf16.mxu0 0
    %4297 = vmatpush2.bf16.msra.mxu0 0
    %4298 = vmatprep.subr.bf16.mxu0 0
    %4299 = vmatpush2.bf16.msra.mxu0 0
    %4300 = vmatprep.subr.bf16.mxu0 0
    %4301 = vmatpush2.bf16.msra.mxu0 0
    %4302 = vmatprep.subr.bf16.mxu0 0
    %4303 = vmatpush2.bf16.msra.mxu0 0
    %4304 = vmatprep.subr.bf16.mxu0 0
    %4305 = vmatpush2.bf16.msra.mxu0 0
    %4306 = vmatprep.mubr.bf16.mxu0 0
    %4307 = vmatmul.mubr.bf16.gmra.mxu0 %v4177
    %v4308 = vpop.f32.mrf.mxu0
    %v4309 = vadd.f32 0.0, %v4308
    %v4310 = vpop.f32.mrf.mxu0
    %v4311 = vadd.f32 0.0, %v4310
    %v4312 = vpop.f32.mrf.mxu0
    %v4313 = vpop.f32.mrf.mxu0
    %4314 = vdwg.mxu0
    %4315 = vmatprep.subr.bf16.mxu0 %v4269
    %4316 = vmatpush1.bf16.msra.mxu0 %v4268
    %4317 = vmatprep.subr.bf16.mxu0 %v4261
    %4318 = vmatpush1.bf16.msra.mxu0 %v4260
    %4319 = vmatprep.subr.bf16.mxu0 %v4253
    %4320 = vmatpush1.bf16.msra.mxu0 %v4252
    %4321 = vmatprep.subr.bf16.mxu0 %v4245
    %4322 = vmatpush1.bf16.msra.mxu0 %v4244
    %4323 = vmatprep.subr.bf16.mxu0 %v4237
    %4324 = vmatpush1.bf16.msra.mxu0 %v4236
    %4325 = vmatprep.subr.bf16.mxu0 %v4229
    %4326 = vmatpush1.bf16.msra.mxu0 %v4228
    %4327 = vmatprep.subr.bf16.mxu0 %v4221
    %4328 = vmatpush1.bf16.msra.mxu0 %v4220
    %4329 = vmatprep.subr.bf16.mxu0 %v4213
    %4330 = vmatpush1.bf16.msra.mxu0 %v4212
    %4331 = vmatprep.subr.bf16.mxu0 0
    %4332 = vmatpush2.bf16.msra.mxu0 0
    %4333 = vmatprep.subr.bf16.mxu0 0
    %4334 = vmatpush2.bf16.msra.mxu0 0
    %4335 = vmatprep.subr.bf16.mxu0 0
    %4336 = vmatpush2.bf16.msra.mxu0 0
    %4337 = vmatprep.subr.bf16.mxu0 0
    %4338 = vmatpush2.bf16.msra.mxu0 0
    %4339 = vmatprep.subr.bf16.mxu0 0
    %4340 = vmatpush2.bf16.msra.mxu0 0
    %4341 = vmatprep.subr.bf16.mxu0 0
    %4342 = vmatpush2.bf16.msra.mxu0 0
    %4343 = vmatprep.subr.bf16.mxu0 0
    %4344 = vmatpush2.bf16.msra.mxu0 0
    %4345 = vmatprep.subr.bf16.mxu0 0
    %4346 = vmatpush2.bf16.msra.mxu0 0
    %4347 = vmatprep.mubr.bf16.mxu0 0
    %4348 = vmatmul.mubr.bf16.gmra.mxu0 %v4177
    %v4349 = vpop.f32.mrf.mxu0
    %v4350 = vadd.f32 0.0, %v4349
    %v4351 = vpop.f32.mrf.mxu0
    %v4352 = vadd.f32 0.0, %v4351
    %v4353 = vpop.f32.mrf.mxu0
    %v4354 = vpop.f32.mrf.mxu0
    %4355 = vdwg.mxu0
    %4356 = vmatprep.subr.bf16.mxu0 %v4271
    %4357 = vmatpush1.bf16.msra.mxu0 %v4270
    %4358 = vmatprep.subr.bf16.mxu0 %v4263
    %4359 = vmatpush1.bf16.msra.mxu0 %v4262
    %4360 = vmatprep.subr.bf16.mxu0 %v4255
    %4361 = vmatpush1.bf16.msra.mxu0 %v4254
    %4362 = vmatprep.subr.bf16.mxu0 %v4247
    %4363 = vmatpush1.bf16.msra.mxu0 %v4246
    %4364 = vmatprep.subr.bf16.mxu0 %v4239
    %4365 = vmatpush1.bf16.msra.mxu0 %v4238
    %4366 = vmatprep.subr.bf16.mxu0 %v4231
    %4367 = vmatpush1.bf16.msra.mxu0 %v4230
    %4368 = vmatprep.subr.bf16.mxu0 %v4223
    %4369 = vmatpush1.bf16.msra.mxu0 %v4222
    %4370 = vmatprep.subr.bf16.mxu0 %v4215
    %4371 = vmatpush1.bf16.msra.mxu0 %v4214
    %4372 = vmatprep.subr.bf16.mxu0 0
    %4373 = vmatpush2.bf16.msra.mxu0 0
    %4374 = vmatprep.subr.bf16.mxu0 0
    %4375 = vmatpush2.bf16.msra.mxu0 0
    %4376 = vmatprep.subr.bf16.mxu0 0
    %4377 = vmatpush2.bf16.msra.mxu0 0
    %4378 = vmatprep.subr.bf16.mxu0 0
    %4379 = vmatpush2.bf16.msra.mxu0 0
    %4380 = vmatprep.subr.bf16.mxu0 0
    %4381 = vmatpush2.bf16.msra.mxu0 0
    %4382 = vmatprep.subr.bf16.mxu0 0
    %4383 = vmatpush2.bf16.msra.mxu0 0
    %4384 = vmatprep.subr.bf16.mxu0 0
    %4385 = vmatpush2.bf16.msra.mxu0 0
    %4386 = vmatprep.subr.bf16.mxu0 0
    %4387 = vmatpush2.bf16.msra.mxu0 0
    %4388 = vmatprep.mubr.bf16.mxu0 0
    %4389 = vmatmul.mubr.bf16.gmra.mxu0 %v4177
    %v4390 = vpop.f32.mrf.mxu0
    %v4391 = vadd.f32 0.0, %v4390
    %v4392 = vpop.f32.mrf.mxu0
    %v4393 = vadd.f32 0.0, %v4392
    %v4394 = vpop.f32.mrf.mxu0
    %v4395 = vpop.f32.mrf.mxu0
    %4396 = vdwg.mxu0
    %4397 = vmatprep.subr.bf16.mxu0 %v4273
    %4398 = vmatpush1.bf16.msra.mxu0 %v4272
    %4399 = vmatprep.subr.bf16.mxu0 %v4265
    %4400 = vmatpush1.bf16.msra.mxu0 %v4264
    %4401 = vmatprep.subr.bf16.mxu0 %v4257
    %4402 = vmatpush1.bf16.msra.mxu0 %v4256
    %4403 = vmatprep.subr.bf16.mxu0 %v4249
    %4404 = vmatpush1.bf16.msra.mxu0 %v4248
    %4405 = vmatprep.subr.bf16.mxu0 %v4241
    %4406 = vmatpush1.bf16.msra.mxu0 %v4240
    %4407 = vmatprep.subr.bf16.mxu0 %v4233
    %4408 = vmatpush1.bf16.msra.mxu0 %v4232
    %4409 = vmatprep.subr.bf16.mxu0 %v4225
    %4410 = vmatpush1.bf16.msra.mxu0 %v4224
    %4411 = vmatprep.subr.bf16.mxu0 %v4217
    %4412 = vmatpush1.bf16.msra.mxu0 %v4216
    %4413 = vmatprep.subr.bf16.mxu0 0
    %4414 = vmatpush2.bf16.msra.mxu0 0
    %4415 = vmatprep.subr.bf16.mxu0 0
    %4416 = vmatpush2.bf16.msra.mxu0 0
    %4417 = vmatprep.subr.bf16.mxu0 0
    %4418 = vmatpush2.bf16.msra.mxu0 0
    %4419 = vmatprep.subr.bf16.mxu0 0
    %4420 = vmatpush2.bf16.msra.mxu0 0
    %4421 = vmatprep.subr.bf16.mxu0 0
    %4422 = vmatpush2.bf16.msra.mxu0 0
    %4423 = vmatprep.subr.bf16.mxu0 0
    %4424 = vmatpush2.bf16.msra.mxu0 0
    %4425 = vmatprep.subr.bf16.mxu0 0
    %4426 = vmatpush2.bf16.msra.mxu0 0
    %4427 = vmatprep.subr.bf16.mxu0 0
    %4428 = vmatpush2.bf16.msra.mxu0 0
    %4429 = vmatprep.mubr.bf16.mxu0 0
    %4430 = vmatmul.mubr.bf16.gmra.mxu0 %v4177
    %v4431 = vpop.f32.mrf.mxu0
    %v4432 = vadd.f32 0.0, %v4431
    %v4433 = vpop.f32.mrf.mxu0
    %v4434 = vadd.f32 0.0, %v4433
    %v4435 = vpop.f32.mrf.mxu0
    %v4436 = vpop.f32.mrf.mxu0
    %4437 = vdwg.mxu0
    %v4438 = vld [vmem:[#allocation5 + $0x1a] sm:$0xff]
    %v4440 = vlaneseq
    %v4441 = vshrl.u32 %v4440, 7
    %v4442 = vsub.s32 0, %v4441
    %v4443 = vrot.slane %v4438, %v4442
    %v4444 = vlaneseq
    %v4445 = vshrl.u32 %v4444, 7
    %v4446 = vsub.s32 1, %v4445
    %v4447 = vrot.slane %v4438, %v4446
    %v4448 = vlaneseq
    %v4449 = vshrl.u32 %v4448, 7
    %v4450 = vsub.s32 2, %v4449
    %v4451 = vrot.slane %v4438, %v4450
    %v4452 = vlaneseq
    %v4453 = vshrl.u32 %v4452, 7
    %v4454 = vsub.s32 3, %v4453
    %v4455 = vrot.slane %v4438, %v4454
    %v4456 = vlaneseq
    %v4457 = vshrl.u32 %v4456, 7
    %v4458 = vsub.s32 4, %v4457
    %v4459 = vrot.slane %v4438, %v4458
    %v4460 = vlaneseq
    %v4461 = vshrl.u32 %v4460, 7
    %v4462 = vsub.s32 5, %v4461
    %v4463 = vrot.slane %v4438, %v4462
    %v4464 = vlaneseq
    %v4465 = vshrl.u32 %v4464, 7
    %v4466 = vsub.s32 6, %v4465
    %v4467 = vrot.slane %v4438, %v4466
    %v4468 = vlaneseq
    %v4469 = vshrl.u32 %v4468, 7
    %v4470 = vsub.s32 7, %v4469
    %v4471 = vrot.slane %v4438, %v4470
    %v4480 = vmul.f32 %v4309, %v4443
    %v4481 = vmul.f32 %v4311, %v4447
    %v4482 = vmul.f32 %v4350, %v4451
    %v4483 = vmul.f32 %v4352, %v4455
    %v4484 = vmul.f32 %v4391, %v4459
    %v4485 = vmul.f32 %v4393, %v4463
    %v4486 = vmul.f32 %v4432, %v4467
    %v4487 = vmul.f32 %v4434, %v4471
    %v4488 = vadd.f32 %v4168, %v4480
    %v4489 = vadd.f32 %v4169, %v4481
    %v4490 = vadd.f32 %v4170, %v4482
    %v4491 = vadd.f32 %v4171, %v4483
    %v4492 = vadd.f32 %v4172, %v4484
    %v4493 = vadd.f32 %v4173, %v4485
    %v4494 = vadd.f32 %v4174, %v4486
    %v4495 = vadd.f32 %v4175, %v4487
    %v4496 = vld [vmem:[#allocation5 + $0x28] sm:$0xff]
    %v4498 = vlaneseq
    %v4499 = vshrl.u32 %v4498, 7
    %v4500 = vsub.s32 0, %v4499
    %v4501 = vrot.slane %v4496, %v4500
    %v4502 = vlaneseq
    %v4503 = vshrl.u32 %v4502, 7
    %v4504 = vsub.s32 1, %v4503
    %v4505 = vrot.slane %v4496, %v4504
    %v4506 = vlaneseq
    %v4507 = vshrl.u32 %v4506, 7
    %v4508 = vsub.s32 2, %v4507
    %v4509 = vrot.slane %v4496, %v4508
    %v4510 = vlaneseq
    %v4511 = vshrl.u32 %v4510, 7
    %v4512 = vsub.s32 3, %v4511
    %v4513 = vrot.slane %v4496, %v4512
    %v4514 = vlaneseq
    %v4515 = vshrl.u32 %v4514, 7
    %v4516 = vsub.s32 4, %v4515
    %v4517 = vrot.slane %v4496, %v4516
    %v4518 = vlaneseq
    %v4519 = vshrl.u32 %v4518, 7
    %v4520 = vsub.s32 5, %v4519
    %v4521 = vrot.slane %v4496, %v4520
    %v4522 = vlaneseq
    %v4523 = vshrl.u32 %v4522, 7
    %v4524 = vsub.s32 6, %v4523
    %v4525 = vrot.slane %v4496, %v4524
    %v4526 = vlaneseq
    %v4527 = vshrl.u32 %v4526, 7
    %v4528 = vsub.s32 7, %v4527
    %v4529 = vrot.slane %v4496, %v4528
    %v4538 = vadd.f32 %v4488, %v4501
    %v4539 = vadd.f32 %v4489, %v4505
    %v4540 = vadd.f32 %v4490, %v4509
    %v4541 = vadd.f32 %v4491, %v4513
    %v4542 = vadd.f32 %v4492, %v4517
    %v4543 = vadd.f32 %v4493, %v4521
    %v4544 = vadd.f32 %v4494, %v4525
    %v4545 = vadd.f32 %v4495, %v4529
    %v4546 = vld [vmem:[#allocation5 + $0x30] sm:$0xff]
    %v4547 = vld [vmem:[#allocation5 + $0x38] sm:$0xff]
    %v4548 = vsel %vm278, %v4538, 0.0
    %v4549 = vsel %vm278, %v4539, 0.0
    %v4550 = vadd.f32 %v4548, %v4549
    %v4551 = vsel %vm278, %v4540, 0.0
    %v4552 = vadd.f32 %v4550, %v4551
    %v4553 = vsel %vm278, %v4541, 0.0
    %v4554 = vadd.f32 %v4552, %v4553
    %v4555 = vsel %vm278, %v4542, 0.0
    %v4556 = vadd.f32 %v4554, %v4555
    %v4557 = vsel %vm278, %v4543, 0.0
    %v4558 = vadd.f32 %v4556, %v4557
    %v4559 = vsel %vm278, %v4544, 0.0
    %v4560 = vadd.f32 %v4558, %v4559
    %v4561 = vsel %vm278, %v4545, 0.0
    %v4562 = vadd.f32 %v4560, %v4561
    %4563 = vadd.xlane.f32.xlu0 %v4562
    %v4564 = vpop.xlane.xlu0 %4563
    %v4565 = vrcp.pop 1024.0
    %v4566 = vmul.f32 %v4564, %v4565
    %v4567 = vsub.f32 %v4538, %v4566
    %v4568 = vsub.f32 %v4539, %v4566
    %v4569 = vsub.f32 %v4540, %v4566
    %v4570 = vsub.f32 %v4541, %v4566
    %v4571 = vsub.f32 %v4542, %v4566
    %v4572 = vsub.f32 %v4543, %v4566
    %v4573 = vsub.f32 %v4544, %v4566
    %v4574 = vsub.f32 %v4545, %v4566
    %v4575 = vmul.f32 %v4567, %v4567
    %v4576 = vmul.f32 %v4568, %v4568
    %v4577 = vmul.f32 %v4569, %v4569
    %v4578 = vmul.f32 %v4570, %v4570
    %v4579 = vmul.f32 %v4571, %v4571
    %v4580 = vmul.f32 %v4572, %v4572
    %v4581 = vmul.f32 %v4573, %v4573
    %v4582 = vmul.f32 %v4574, %v4574
    %v4583 = vsel %vm278, %v4575, 0.0
    %v4584 = vsel %vm278, %v4576, 0.0
    %v4585 = vadd.f32 %v4583, %v4584
    %v4586 = vsel %vm278, %v4577, 0.0
    %v4587 = vadd.f32 %v4585, %v4586
    %v4588 = vsel %vm278, %v4578, 0.0
    %v4589 = vadd.f32 %v4587, %v4588
    %v4590 = vsel %vm278, %v4579, 0.0
    %v4591 = vadd.f32 %v4589, %v4590
    %v4592 = vsel %vm278, %v4580, 0.0
    %v4593 = vadd.f32 %v4591, %v4592
    %v4594 = vsel %vm278, %v4581, 0.0
    %v4595 = vadd.f32 %v4593, %v4594
    %v4596 = vsel %vm278, %v4582, 0.0
    %v4597 = vadd.f32 %v4595, %v4596
    %4598 = vadd.xlane.f32.xlu0 %v4597
    %v4599 = vpop.xlane.xlu0 %4598
    %v4600 = vmul.f32 %v4599, %v4565
    %v4601 = vadd.f32 %v4600, 1e-05
    %v4602 = vrsqrt.pop %v4601
    %v4603 = vmul.f32 %v4567, %v4602
    %v4604 = vmul.f32 %v4568, %v4602
    %v4605 = vmul.f32 %v4569, %v4602
    %v4606 = vmul.f32 %v4570, %v4602
    %v4607 = vmul.f32 %v4571, %v4602
    %v4608 = vmul.f32 %v4572, %v4602
    %v4609 = vmul.f32 %v4573, %v4602
    %v4610 = vmul.f32 %v4574, %v4602
    %v4612 = vlaneseq
    %v4613 = vshrl.u32 %v4612, 7
    %v4614 = vsub.s32 0, %v4613
    %v4615 = vrot.slane %v4546, %v4614
    %v4616 = vlaneseq
    %v4617 = vshrl.u32 %v4616, 7
    %v4618 = vsub.s32 1, %v4617
    %v4619 = vrot.slane %v4546, %v4618
    %v4620 = vlaneseq
    %v4621 = vshrl.u32 %v4620, 7
    %v4622 = vsub.s32 2, %v4621
    %v4623 = vrot.slane %v4546, %v4622
    %v4624 = vlaneseq
    %v4625 = vshrl.u32 %v4624, 7
    %v4626 = vsub.s32 3, %v4625
    %v4627 = vrot.slane %v4546, %v4626
    %v4628 = vlaneseq
    %v4629 = vshrl.u32 %v4628, 7
    %v4630 = vsub.s32 4, %v4629
    %v4631 = vrot.slane %v4546, %v4630
    %v4632 = vlaneseq
    %v4633 = vshrl.u32 %v4632, 7
    %v4634 = vsub.s32 5, %v4633
    %v4635 = vrot.slane %v4546, %v4634
    %v4636 = vlaneseq
    %v4637 = vshrl.u32 %v4636, 7
    %v4638 = vsub.s32 6, %v4637
    %v4639 = vrot.slane %v4546, %v4638
    %v4640 = vlaneseq
    %v4641 = vshrl.u32 %v4640, 7
    %v4642 = vsub.s32 7, %v4641
    %v4643 = vrot.slane %v4546, %v4642
    %v4652 = vmul.f32 %v4603, %v4615
    %v4653 = vmul.f32 %v4604, %v4619
    %v4654 = vmul.f32 %v4605, %v4623
    %v4655 = vmul.f32 %v4606, %v4627
    %v4656 = vmul.f32 %v4607, %v4631
    %v4657 = vmul.f32 %v4608, %v4635
    %v4658 = vmul.f32 %v4609, %v4639
    %v4659 = vmul.f32 %v4610, %v4643
    %v4661 = vlaneseq
    %v4662 = vshrl.u32 %v4661, 7
    %v4663 = vsub.s32 0, %v4662
    %v4664 = vrot.slane %v4547, %v4663
    %v4665 = vlaneseq
    %v4666 = vshrl.u32 %v4665, 7
    %v4667 = vsub.s32 1, %v4666
    %v4668 = vrot.slane %v4547, %v4667
    %v4669 = vlaneseq
    %v4670 = vshrl.u32 %v4669, 7
    %v4671 = vsub.s32 2, %v4670
    %v4672 = vrot.slane %v4547, %v4671
    %v4673 = vlaneseq
    %v4674 = vshrl.u32 %v4673, 7
    %v4675 = vsub.s32 3, %v4674
    %v4676 = vrot.slane %v4547, %v4675
    %v4677 = vlaneseq
    %v4678 = vshrl.u32 %v4677, 7
    %v4679 = vsub.s32 4, %v4678
    %v4680 = vrot.slane %v4547, %v4679
    %v4681 = vlaneseq
    %v4682 = vshrl.u32 %v4681, 7
    %v4683 = vsub.s32 5, %v4682
    %v4684 = vrot.slane %v4547, %v4683
    %v4685 = vlaneseq
    %v4686 = vshrl.u32 %v4685, 7
    %v4687 = vsub.s32 6, %v4686
    %v4688 = vrot.slane %v4547, %v4687
    %v4689 = vlaneseq
    %v4690 = vshrl.u32 %v4689, 7
    %v4691 = vsub.s32 7, %v4690
    %v4692 = vrot.slane %v4547, %v4691
    %v4701 = vadd.f32 %v4652, %v4664
    %v4702 = vadd.f32 %v4653, %v4668
    %v4703 = vadd.f32 %v4654, %v4672
    %v4704 = vadd.f32 %v4655, %v4676
    %v4705 = vadd.f32 %v4656, %v4680
    %v4706 = vadd.f32 %v4657, %v4684
    %v4707 = vadd.f32 %v4658, %v4688
    %v4708 = vadd.f32 %v4659, %v4692
    %v4709 = vmax.f32 %v4701, 0.0
    %v4710 = vmax.f32 %v4702, 0.0
    %v4711 = vmax.f32 %v4703, 0.0
    %v4712 = vmax.f32 %v4704, 0.0
    %v4713 = vmax.f32 %v4705, 0.0
    %v4714 = vmax.f32 %v4706, 0.0
    %v4715 = vmax.f32 %v4707, 0.0
    %v4716 = vmax.f32 %v4708, 0.0
    %v4717 = vpack.c.bf16 %v4709, %v4709
    %v4718 = vpack.c.bf16 %v4710, %v4710
    %v4719 = vpack.c.bf16 %v4711, %v4711
    %v4720 = vpack.c.bf16 %v4712, %v4712
    %v4721 = vpack.c.bf16 %v4713, %v4713
    %v4722 = vpack.c.bf16 %v4714, %v4714
    %v4723 = vpack.c.bf16 %v4715, %v4715
    %v4724 = vpack.c.bf16 %v4716, %v4716
    %v4725 = vld [vmem:[#allocation11] sm:$0xff]
    %v4726 = vld [vmem:[#allocation11 + $0x8] sm:$0xff]
    %v4727 = vld [vmem:[#allocation11 + $0x10] sm:$0xff]
    %v4728 = vld [vmem:[#allocation11 + $0x18] sm:$0xff]
    %v4729 = vld [vmem:[#allocation11 + $0x20] sm:$0xff]
    %v4730 = vld [vmem:[#allocation11 + $0x28] sm:$0xff]
    %v4731 = vld [vmem:[#allocation11 + $0x30] sm:$0xff]
    %v4732 = vld [vmem:[#allocation11 + $0x38] sm:$0xff]
    %v4733 = vld [vmem:[#allocation11 + $0x40] sm:$0xff]
    %v4734 = vld [vmem:[#allocation11 + $0x48] sm:$0xff]
    %v4735 = vld [vmem:[#allocation11 + $0x50] sm:$0xff]
    %v4736 = vld [vmem:[#allocation11 + $0x58] sm:$0xff]
    %v4737 = vld [vmem:[#allocation11 + $0x60] sm:$0xff]
    %v4738 = vld [vmem:[#allocation11 + $0x68] sm:$0xff]
    %v4739 = vld [vmem:[#allocation11 + $0x70] sm:$0xff]
    %v4740 = vld [vmem:[#allocation11 + $0x78] sm:$0xff]
    %v4741 = vld [vmem:[#allocation11 + $0x80] sm:$0xff]
    %v4742 = vld [vmem:[#allocation11 + $0x88] sm:$0xff]
    %v4743 = vld [vmem:[#allocation11 + $0x90] sm:$0xff]
    %v4744 = vld [vmem:[#allocation11 + $0x98] sm:$0xff]
    %v4745 = vld [vmem:[#allocation11 + $0xa0] sm:$0xff]
    %v4746 = vld [vmem:[#allocation11 + $0xa8] sm:$0xff]
    %v4747 = vld [vmem:[#allocation11 + $0xb0] sm:$0xff]
    %v4748 = vld [vmem:[#allocation11 + $0xb8] sm:$0xff]
    %v4749 = vld [vmem:[#allocation11 + $0xc0] sm:$0xff]
    %v4750 = vld [vmem:[#allocation11 + $0xc8] sm:$0xff]
    %v4751 = vld [vmem:[#allocation11 + $0xd0] sm:$0xff]
    %v4752 = vld [vmem:[#allocation11 + $0xd8] sm:$0xff]
    %v4753 = vld [vmem:[#allocation11 + $0xe0] sm:$0xff]
    %v4754 = vld [vmem:[#allocation11 + $0xe8] sm:$0xff]
    %v4755 = vld [vmem:[#allocation11 + $0xf0] sm:$0xff]
    %v4756 = vld [vmem:[#allocation11 + $0xf8] sm:$0xff]
    %v4757 = vld [vmem:[#allocation11 + $0x100] sm:$0xff]
    %v4758 = vld [vmem:[#allocation11 + $0x108] sm:$0xff]
    %v4759 = vld [vmem:[#allocation11 + $0x110] sm:$0xff]
    %v4760 = vld [vmem:[#allocation11 + $0x118] sm:$0xff]
    %v4761 = vld [vmem:[#allocation11 + $0x120] sm:$0xff]
    %v4762 = vld [vmem:[#allocation11 + $0x128] sm:$0xff]
    %v4763 = vld [vmem:[#allocation11 + $0x130] sm:$0xff]
    %v4764 = vld [vmem:[#allocation11 + $0x138] sm:$0xff]
    %v4765 = vld [vmem:[#allocation11 + $0x140] sm:$0xff]
    %v4766 = vld [vmem:[#allocation11 + $0x148] sm:$0xff]
    %v4767 = vld [vmem:[#allocation11 + $0x150] sm:$0xff]
    %v4768 = vld [vmem:[#allocation11 + $0x158] sm:$0xff]
    %v4769 = vld [vmem:[#allocation11 + $0x160] sm:$0xff]
    %v4770 = vld [vmem:[#allocation11 + $0x168] sm:$0xff]
    %v4771 = vld [vmem:[#allocation11 + $0x170] sm:$0xff]
    %v4772 = vld [vmem:[#allocation11 + $0x178] sm:$0xff]
    %v4773 = vld [vmem:[#allocation11 + $0x180] sm:$0xff]
    %v4774 = vld [vmem:[#allocation11 + $0x188] sm:$0xff]
    %v4775 = vld [vmem:[#allocation11 + $0x190] sm:$0xff]
    %v4776 = vld [vmem:[#allocation11 + $0x198] sm:$0xff]
    %v4777 = vld [vmem:[#allocation11 + $0x1a0] sm:$0xff]
    %v4778 = vld [vmem:[#allocation11 + $0x1a8] sm:$0xff]
    %v4779 = vld [vmem:[#allocation11 + $0x1b0] sm:$0xff]
    %v4780 = vld [vmem:[#allocation11 + $0x1b8] sm:$0xff]
    %v4781 = vld [vmem:[#allocation11 + $0x1c0] sm:$0xff]
    %v4782 = vld [vmem:[#allocation11 + $0x1c8] sm:$0xff]
    %v4783 = vld [vmem:[#allocation11 + $0x1d0] sm:$0xff]
    %v4784 = vld [vmem:[#allocation11 + $0x1d8] sm:$0xff]
    %v4785 = vld [vmem:[#allocation11 + $0x1e0] sm:$0xff]
    %v4786 = vld [vmem:[#allocation11 + $0x1e8] sm:$0xff]
    %v4787 = vld [vmem:[#allocation11 + $0x1f0] sm:$0xff]
    %v4788 = vld [vmem:[#allocation11 + $0x1f8] sm:$0xff]
    %v4789 = vld [vmem:[#allocation11 + $0x200] sm:$0xff]
    %v4790 = vld [vmem:[#allocation11 + $0x208] sm:$0xff]
    %v4791 = vld [vmem:[#allocation11 + $0x210] sm:$0xff]
    %v4792 = vld [vmem:[#allocation11 + $0x218] sm:$0xff]
    %v4793 = vld [vmem:[#allocation11 + $0x220] sm:$0xff]
    %v4794 = vld [vmem:[#allocation11 + $0x228] sm:$0xff]
    %v4795 = vld [vmem:[#allocation11 + $0x230] sm:$0xff]
    %v4796 = vld [vmem:[#allocation11 + $0x238] sm:$0xff]
    %v4797 = vld [vmem:[#allocation11 + $0x240] sm:$0xff]
    %v4798 = vld [vmem:[#allocation11 + $0x248] sm:$0xff]
    %v4799 = vld [vmem:[#allocation11 + $0x250] sm:$0xff]
    %v4800 = vld [vmem:[#allocation11 + $0x258] sm:$0xff]
    %v4801 = vld [vmem:[#allocation11 + $0x260] sm:$0xff]
    %v4802 = vld [vmem:[#allocation11 + $0x268] sm:$0xff]
    %v4803 = vld [vmem:[#allocation11 + $0x270] sm:$0xff]
    %v4804 = vld [vmem:[#allocation11 + $0x278] sm:$0xff]
    %v4805 = vld [vmem:[#allocation11 + $0x280] sm:$0xff]
    %v4806 = vld [vmem:[#allocation11 + $0x288] sm:$0xff]
    %v4807 = vld [vmem:[#allocation11 + $0x290] sm:$0xff]
    %v4808 = vld [vmem:[#allocation11 + $0x298] sm:$0xff]
    %v4809 = vld [vmem:[#allocation11 + $0x2a0] sm:$0xff]
    %v4810 = vld [vmem:[#allocation11 + $0x2a8] sm:$0xff]
    %v4811 = vld [vmem:[#allocation11 + $0x2b0] sm:$0xff]
    %v4812 = vld [vmem:[#allocation11 + $0x2b8] sm:$0xff]
    %v4813 = vld [vmem:[#allocation11 + $0x2c0] sm:$0xff]
    %v4814 = vld [vmem:[#allocation11 + $0x2c8] sm:$0xff]
    %v4815 = vld [vmem:[#allocation11 + $0x2d0] sm:$0xff]
    %v4816 = vld [vmem:[#allocation11 + $0x2d8] sm:$0xff]
    %v4817 = vld [vmem:[#allocation11 + $0x2e0] sm:$0xff]
    %v4818 = vld [vmem:[#allocation11 + $0x2e8] sm:$0xff]
    %v4819 = vld [vmem:[#allocation11 + $0x2f0] sm:$0xff]
    %v4820 = vld [vmem:[#allocation11 + $0x2f8] sm:$0xff]
    %v4821 = vld [vmem:[#allocation11 + $0x300] sm:$0xff]
    %v4822 = vld [vmem:[#allocation11 + $0x308] sm:$0xff]
    %v4823 = vld [vmem:[#allocation11 + $0x310] sm:$0xff]
    %v4824 = vld [vmem:[#allocation11 + $0x318] sm:$0xff]
    %v4825 = vld [vmem:[#allocation11 + $0x320] sm:$0xff]
    %v4826 = vld [vmem:[#allocation11 + $0x328] sm:$0xff]
    %v4827 = vld [vmem:[#allocation11 + $0x330] sm:$0xff]
    %v4828 = vld [vmem:[#allocation11 + $0x338] sm:$0xff]
    %v4829 = vld [vmem:[#allocation11 + $0x340] sm:$0xff]
    %v4830 = vld [vmem:[#allocation11 + $0x348] sm:$0xff]
    %v4831 = vld [vmem:[#allocation11 + $0x350] sm:$0xff]
    %v4832 = vld [vmem:[#allocation11 + $0x358] sm:$0xff]
    %v4833 = vld [vmem:[#allocation11 + $0x360] sm:$0xff]
    %v4834 = vld [vmem:[#allocation11 + $0x368] sm:$0xff]
    %v4835 = vld [vmem:[#allocation11 + $0x370] sm:$0xff]
    %v4836 = vld [vmem:[#allocation11 + $0x378] sm:$0xff]
    %v4837 = vld [vmem:[#allocation11 + $0x380] sm:$0xff]
    %v4838 = vld [vmem:[#allocation11 + $0x388] sm:$0xff]
    %v4839 = vld [vmem:[#allocation11 + $0x390] sm:$0xff]
    %v4840 = vld [vmem:[#allocation11 + $0x398] sm:$0xff]
    %v4841 = vld [vmem:[#allocation11 + $0x3a0] sm:$0xff]
    %v4842 = vld [vmem:[#allocation11 + $0x3a8] sm:$0xff]
    %v4843 = vld [vmem:[#allocation11 + $0x3b0] sm:$0xff]
    %v4844 = vld [vmem:[#allocation11 + $0x3b8] sm:$0xff]
    %v4845 = vld [vmem:[#allocation11 + $0x3c0] sm:$0xff]
    %v4846 = vld [vmem:[#allocation11 + $0x3c8] sm:$0xff]
    %v4847 = vld [vmem:[#allocation11 + $0x3d0] sm:$0xff]
    %v4848 = vld [vmem:[#allocation11 + $0x3d8] sm:$0xff]
    %v4849 = vld [vmem:[#allocation11 + $0x3e0] sm:$0xff]
    %v4850 = vld [vmem:[#allocation11 + $0x3e8] sm:$0xff]
    %v4851 = vld [vmem:[#allocation11 + $0x3f0] sm:$0xff]
    %v4852 = vld [vmem:[#allocation11 + $0x3f8] sm:$0xff]
    %v4853 = vunpack.c.l.s8.bf16 %v4725
    %v4854 = vunpack.c.l.s8.bf16 %v4726
    %v4855 = vunpack.c.l.s8.bf16 %v4727
    %v4856 = vunpack.c.l.s8.bf16 %v4728
    %v4857 = vunpack.c.h.s8.bf16 %v4725
    %v4858 = vunpack.c.h.s8.bf16 %v4726
    %v4859 = vunpack.c.h.s8.bf16 %v4727
    %v4860 = vunpack.c.h.s8.bf16 %v4728
    %v4861 = vunpack.c.l.s8.bf16 %v4729
    %v4862 = vunpack.c.l.s8.bf16 %v4730
    %v4863 = vunpack.c.l.s8.bf16 %v4731
    %v4864 = vunpack.c.l.s8.bf16 %v4732
    %v4865 = vunpack.c.h.s8.bf16 %v4729
    %v4866 = vunpack.c.h.s8.bf16 %v4730
    %v4867 = vunpack.c.h.s8.bf16 %v4731
    %v4868 = vunpack.c.h.s8.bf16 %v4732
    %v4869 = vunpack.c.l.s8.bf16 %v4733
    %v4870 = vunpack.c.l.s8.bf16 %v4734
    %v4871 = vunpack.c.l.s8.bf16 %v4735
    %v4872 = vunpack.c.l.s8.bf16 %v4736
    %v4873 = vunpack.c.h.s8.bf16 %v4733
    %v4874 = vunpack.c.h.s8.bf16 %v4734
    %v4875 = vunpack.c.h.s8.bf16 %v4735
    %v4876 = vunpack.c.h.s8.bf16 %v4736
    %v4877 = vunpack.c.l.s8.bf16 %v4737
    %v4878 = vunpack.c.l.s8.bf16 %v4738
    %v4879 = vunpack.c.l.s8.bf16 %v4739
    %v4880 = vunpack.c.l.s8.bf16 %v4740
    %v4881 = vunpack.c.h.s8.bf16 %v4737
    %v4882 = vunpack.c.h.s8.bf16 %v4738
    %v4883 = vunpack.c.h.s8.bf16 %v4739
    %v4884 = vunpack.c.h.s8.bf16 %v4740
    %v4885 = vunpack.c.l.s8.bf16 %v4741
    %v4886 = vunpack.c.l.s8.bf16 %v4742
    %v4887 = vunpack.c.l.s8.bf16 %v4743
    %v4888 = vunpack.c.l.s8.bf16 %v4744
    %v4889 = vunpack.c.h.s8.bf16 %v4741
    %v4890 = vunpack.c.h.s8.bf16 %v4742
    %v4891 = vunpack.c.h.s8.bf16 %v4743
    %v4892 = vunpack.c.h.s8.bf16 %v4744
    %v4893 = vunpack.c.l.s8.bf16 %v4745
    %v4894 = vunpack.c.l.s8.bf16 %v4746
    %v4895 = vunpack.c.l.s8.bf16 %v4747
    %v4896 = vunpack.c.l.s8.bf16 %v4748
    %v4897 = vunpack.c.h.s8.bf16 %v4745
    %v4898 = vunpack.c.h.s8.bf16 %v4746
    %v4899 = vunpack.c.h.s8.bf16 %v4747
    %v4900 = vunpack.c.h.s8.bf16 %v4748
    %v4901 = vunpack.c.l.s8.bf16 %v4749
    %v4902 = vunpack.c.l.s8.bf16 %v4750
    %v4903 = vunpack.c.l.s8.bf16 %v4751
    %v4904 = vunpack.c.l.s8.bf16 %v4752
    %v4905 = vunpack.c.h.s8.bf16 %v4749
    %v4906 = vunpack.c.h.s8.bf16 %v4750
    %v4907 = vunpack.c.h.s8.bf16 %v4751
    %v4908 = vunpack.c.h.s8.bf16 %v4752
    %v4909 = vunpack.c.l.s8.bf16 %v4753
    %v4910 = vunpack.c.l.s8.bf16 %v4754
    %v4911 = vunpack.c.l.s8.bf16 %v4755
    %v4912 = vunpack.c.l.s8.bf16 %v4756
    %v4913 = vunpack.c.h.s8.bf16 %v4753
    %v4914 = vunpack.c.h.s8.bf16 %v4754
    %v4915 = vunpack.c.h.s8.bf16 %v4755
    %v4916 = vunpack.c.h.s8.bf16 %v4756
    %v4917 = vunpack.c.l.s8.bf16 %v4757
    %v4918 = vunpack.c.l.s8.bf16 %v4758
    %v4919 = vunpack.c.l.s8.bf16 %v4759
    %v4920 = vunpack.c.l.s8.bf16 %v4760
    %v4921 = vunpack.c.h.s8.bf16 %v4757
    %v4922 = vunpack.c.h.s8.bf16 %v4758
    %v4923 = vunpack.c.h.s8.bf16 %v4759
    %v4924 = vunpack.c.h.s8.bf16 %v4760
    %v4925 = vunpack.c.l.s8.bf16 %v4761
    %v4926 = vunpack.c.l.s8.bf16 %v4762
    %v4927 = vunpack.c.l.s8.bf16 %v4763
    %v4928 = vunpack.c.l.s8.bf16 %v4764
    %v4929 = vunpack.c.h.s8.bf16 %v4761
    %v4930 = vunpack.c.h.s8.bf16 %v4762
    %v4931 = vunpack.c.h.s8.bf16 %v4763
    %v4932 = vunpack.c.h.s8.bf16 %v4764
    %v4933 = vunpack.c.l.s8.bf16 %v4765
    %v4934 = vunpack.c.l.s8.bf16 %v4766
    %v4935 = vunpack.c.l.s8.bf16 %v4767
    %v4936 = vunpack.c.l.s8.bf16 %v4768
    %v4937 = vunpack.c.h.s8.bf16 %v4765
    %v4938 = vunpack.c.h.s8.bf16 %v4766
    %v4939 = vunpack.c.h.s8.bf16 %v4767
    %v4940 = vunpack.c.h.s8.bf16 %v4768
    %v4941 = vunpack.c.l.s8.bf16 %v4769
    %v4942 = vunpack.c.l.s8.bf16 %v4770
    %v4943 = vunpack.c.l.s8.bf16 %v4771
    %v4944 = vunpack.c.l.s8.bf16 %v4772
    %v4945 = vunpack.c.h.s8.bf16 %v4769
    %v4946 = vunpack.c.h.s8.bf16 %v4770
    %v4947 = vunpack.c.h.s8.bf16 %v4771
    %v4948 = vunpack.c.h.s8.bf16 %v4772
    %v4949 = vunpack.c.l.s8.bf16 %v4773
    %v4950 = vunpack.c.l.s8.bf16 %v4774
    %v4951 = vunpack.c.l.s8.bf16 %v4775
    %v4952 = vunpack.c.l.s8.bf16 %v4776
    %v4953 = vunpack.c.h.s8.bf16 %v4773
    %v4954 = vunpack.c.h.s8.bf16 %v4774
    %v4955 = vunpack.c.h.s8.bf16 %v4775
    %v4956 = vunpack.c.h.s8.bf16 %v4776
    %v4957 = vunpack.c.l.s8.bf16 %v4777
    %v4958 = vunpack.c.l.s8.bf16 %v4778
    %v4959 = vunpack.c.l.s8.bf16 %v4779
    %v4960 = vunpack.c.l.s8.bf16 %v4780
    %v4961 = vunpack.c.h.s8.bf16 %v4777
    %v4962 = vunpack.c.h.s8.bf16 %v4778
    %v4963 = vunpack.c.h.s8.bf16 %v4779
    %v4964 = vunpack.c.h.s8.bf16 %v4780
    %v4965 = vunpack.c.l.s8.bf16 %v4781
    %v4966 = vunpack.c.l.s8.bf16 %v4782
    %v4967 = vunpack.c.l.s8.bf16 %v4783
    %v4968 = vunpack.c.l.s8.bf16 %v4784
    %v4969 = vunpack.c.h.s8.bf16 %v4781
    %v4970 = vunpack.c.h.s8.bf16 %v4782
    %v4971 = vunpack.c.h.s8.bf16 %v4783
    %v4972 = vunpack.c.h.s8.bf16 %v4784
    %v4973 = vunpack.c.l.s8.bf16 %v4785
    %v4974 = vunpack.c.l.s8.bf16 %v4786
    %v4975 = vunpack.c.l.s8.bf16 %v4787
    %v4976 = vunpack.c.l.s8.bf16 %v4788
    %v4977 = vunpack.c.h.s8.bf16 %v4785
    %v4978 = vunpack.c.h.s8.bf16 %v4786
    %v4979 = vunpack.c.h.s8.bf16 %v4787
    %v4980 = vunpack.c.h.s8.bf16 %v4788
    %v4981 = vunpack.c.l.s8.bf16 %v4789
    %v4982 = vunpack.c.l.s8.bf16 %v4790
    %v4983 = vunpack.c.l.s8.bf16 %v4791
    %v4984 = vunpack.c.l.s8.bf16 %v4792
    %v4985 = vunpack.c.h.s8.bf16 %v4789
    %v4986 = vunpack.c.h.s8.bf16 %v4790
    %v4987 = vunpack.c.h.s8.bf16 %v4791
    %v4988 = vunpack.c.h.s8.bf16 %v4792
    %v4989 = vunpack.c.l.s8.bf16 %v4793
    %v4990 = vunpack.c.l.s8.bf16 %v4794
    %v4991 = vunpack.c.l.s8.bf16 %v4795
    %v4992 = vunpack.c.l.s8.bf16 %v4796
    %v4993 = vunpack.c.h.s8.bf16 %v4793
    %v4994 = vunpack.c.h.s8.bf16 %v4794
    %v4995 = vunpack.c.h.s8.bf16 %v4795
    %v4996 = vunpack.c.h.s8.bf16 %v4796
    %v4997 = vunpack.c.l.s8.bf16 %v4797
    %v4998 = vunpack.c.l.s8.bf16 %v4798
    %v4999 = vunpack.c.l.s8.bf16 %v4799
    %v5000 = vunpack.c.l.s8.bf16 %v4800
    %v5001 = vunpack.c.h.s8.bf16 %v4797
    %v5002 = vunpack.c.h.s8.bf16 %v4798
    %v5003 = vunpack.c.h.s8.bf16 %v4799
    %v5004 = vunpack.c.h.s8.bf16 %v4800
    %v5005 = vunpack.c.l.s8.bf16 %v4801
    %v5006 = vunpack.c.l.s8.bf16 %v4802
    %v5007 = vunpack.c.l.s8.bf16 %v4803
    %v5008 = vunpack.c.l.s8.bf16 %v4804
    %v5009 = vunpack.c.h.s8.bf16 %v4801
    %v5010 = vunpack.c.h.s8.bf16 %v4802
    %v5011 = vunpack.c.h.s8.bf16 %v4803
    %v5012 = vunpack.c.h.s8.bf16 %v4804
    %v5013 = vunpack.c.l.s8.bf16 %v4805
    %v5014 = vunpack.c.l.s8.bf16 %v4806
    %v5015 = vunpack.c.l.s8.bf16 %v4807
    %v5016 = vunpack.c.l.s8.bf16 %v4808
    %v5017 = vunpack.c.h.s8.bf16 %v4805
    %v5018 = vunpack.c.h.s8.bf16 %v4806
    %v5019 = vunpack.c.h.s8.bf16 %v4807
    %v5020 = vunpack.c.h.s8.bf16 %v4808
    %v5021 = vunpack.c.l.s8.bf16 %v4809
    %v5022 = vunpack.c.l.s8.bf16 %v4810
    %v5023 = vunpack.c.l.s8.bf16 %v4811
    %v5024 = vunpack.c.l.s8.bf16 %v4812
    %v5025 = vunpack.c.h.s8.bf16 %v4809
    %v5026 = vunpack.c.h.s8.bf16 %v4810
    %v5027 = vunpack.c.h.s8.bf16 %v4811
    %v5028 = vunpack.c.h.s8.bf16 %v4812
    %v5029 = vunpack.c.l.s8.bf16 %v4813
    %v5030 = vunpack.c.l.s8.bf16 %v4814
    %v5031 = vunpack.c.l.s8.bf16 %v4815
    %v5032 = vunpack.c.l.s8.bf16 %v4816
    %v5033 = vunpack.c.h.s8.bf16 %v4813
    %v5034 = vunpack.c.h.s8.bf16 %v4814
    %v5035 = vunpack.c.h.s8.bf16 %v4815
    %v5036 = vunpack.c.h.s8.bf16 %v4816
    %v5037 = vunpack.c.l.s8.bf16 %v4817
    %v5038 = vunpack.c.l.s8.bf16 %v4818
    %v5039 = vunpack.c.l.s8.bf16 %v4819
    %v5040 = vunpack.c.l.s8.bf16 %v4820
    %v5041 = vunpack.c.h.s8.bf16 %v4817
    %v5042 = vunpack.c.h.s8.bf16 %v4818
    %v5043 = vunpack.c.h.s8.bf16 %v4819
    %v5044 = vunpack.c.h.s8.bf16 %v4820
    %v5045 = vunpack.c.l.s8.bf16 %v4821
    %v5046 = vunpack.c.l.s8.bf16 %v4822
    %v5047 = vunpack.c.l.s8.bf16 %v4823
    %v5048 = vunpack.c.l.s8.bf16 %v4824
    %v5049 = vunpack.c.h.s8.bf16 %v4821
    %v5050 = vunpack.c.h.s8.bf16 %v4822
    %v5051 = vunpack.c.h.s8.bf16 %v4823
    %v5052 = vunpack.c.h.s8.bf16 %v4824
    %v5053 = vunpack.c.l.s8.bf16 %v4825
    %v5054 = vunpack.c.l.s8.bf16 %v4826
    %v5055 = vunpack.c.l.s8.bf16 %v4827
    %v5056 = vunpack.c.l.s8.bf16 %v4828
    %v5057 = vunpack.c.h.s8.bf16 %v4825
    %v5058 = vunpack.c.h.s8.bf16 %v4826
    %v5059 = vunpack.c.h.s8.bf16 %v4827
    %v5060 = vunpack.c.h.s8.bf16 %v4828
    %v5061 = vunpack.c.l.s8.bf16 %v4829
    %v5062 = vunpack.c.l.s8.bf16 %v4830
    %v5063 = vunpack.c.l.s8.bf16 %v4831
    %v5064 = vunpack.c.l.s8.bf16 %v4832
    %v5065 = vunpack.c.h.s8.bf16 %v4829
    %v5066 = vunpack.c.h.s8.bf16 %v4830
    %v5067 = vunpack.c.h.s8.bf16 %v4831
    %v5068 = vunpack.c.h.s8.bf16 %v4832
    %v5069 = vunpack.c.l.s8.bf16 %v4833
    %v5070 = vunpack.c.l.s8.bf16 %v4834
    %v5071 = vunpack.c.l.s8.bf16 %v4835
    %v5072 = vunpack.c.l.s8.bf16 %v4836
    %v5073 = vunpack.c.h.s8.bf16 %v4833
    %v5074 = vunpack.c.h.s8.bf16 %v4834
    %v5075 = vunpack.c.h.s8.bf16 %v4835
    %v5076 = vunpack.c.h.s8.bf16 %v4836
    %v5077 = vunpack.c.l.s8.bf16 %v4837
    %v5078 = vunpack.c.l.s8.bf16 %v4838
    %v5079 = vunpack.c.l.s8.bf16 %v4839
    %v5080 = vunpack.c.l.s8.bf16 %v4840
    %v5081 = vunpack.c.h.s8.bf16 %v4837
    %v5082 = vunpack.c.h.s8.bf16 %v4838
    %v5083 = vunpack.c.h.s8.bf16 %v4839
    %v5084 = vunpack.c.h.s8.bf16 %v4840
    %v5085 = vunpack.c.l.s8.bf16 %v4841
    %v5086 = vunpack.c.l.s8.bf16 %v4842
    %v5087 = vunpack.c.l.s8.bf16 %v4843
    %v5088 = vunpack.c.l.s8.bf16 %v4844
    %v5089 = vunpack.c.h.s8.bf16 %v4841
    %v5090 = vunpack.c.h.s8.bf16 %v4842
    %v5091 = vunpack.c.h.s8.bf16 %v4843
    %v5092 = vunpack.c.h.s8.bf16 %v4844
    %v5093 = vunpack.c.l.s8.bf16 %v4845
    %v5094 = vunpack.c.l.s8.bf16 %v4846
    %v5095 = vunpack.c.l.s8.bf16 %v4847
    %v5096 = vunpack.c.l.s8.bf16 %v4848
    %v5097 = vunpack.c.h.s8.bf16 %v4845
    %v5098 = vunpack.c.h.s8.bf16 %v4846
    %v5099 = vunpack.c.h.s8.bf16 %v4847
    %v5100 = vunpack.c.h.s8.bf16 %v4848
    %v5101 = vunpack.c.l.s8.bf16 %v4849
    %v5102 = vunpack.c.l.s8.bf16 %v4850
    %v5103 = vunpack.c.l.s8.bf16 %v4851
    %v5104 = vunpack.c.l.s8.bf16 %v4852
    %v5105 = vunpack.c.h.s8.bf16 %v4849
    %v5106 = vunpack.c.h.s8.bf16 %v4850
    %v5107 = vunpack.c.h.s8.bf16 %v4851
    %v5108 = vunpack.c.h.s8.bf16 %v4852
    %5109 = vmatprep.subr.bf16.mxu0 %v4882
    %5110 = vmatpush1.bf16.msra.mxu0 %v4881
    %5111 = vmatprep.subr.bf16.mxu0 %v4878
    %5112 = vmatpush1.bf16.msra.mxu0 %v4877
    %5113 = vmatprep.subr.bf16.mxu0 %v4874
    %5114 = vmatpush1.bf16.msra.mxu0 %v4873
    %5115 = vmatprep.subr.bf16.mxu0 %v4870
    %5116 = vmatpush1.bf16.msra.mxu0 %v4869
    %5117 = vmatprep.subr.bf16.mxu0 %v4866
    %5118 = vmatpush1.bf16.msra.mxu0 %v4865
    %5119 = vmatprep.subr.bf16.mxu0 %v4862
    %5120 = vmatpush1.bf16.msra.mxu0 %v4861
    %5121 = vmatprep.subr.bf16.mxu0 %v4858
    %5122 = vmatpush1.bf16.msra.mxu0 %v4857
    %5123 = vmatprep.subr.bf16.mxu0 %v4854
    %5124 = vmatpush1.bf16.msra.mxu0 %v4853
    %5125 = vmatprep.subr.bf16.mxu0 %v4914
    %5126 = vmatpush2.bf16.msra.mxu0 %v4913
    %5127 = vmatprep.subr.bf16.mxu0 %v4910
    %5128 = vmatpush2.bf16.msra.mxu0 %v4909
    %5129 = vmatprep.subr.bf16.mxu0 %v4906
    %5130 = vmatpush2.bf16.msra.mxu0 %v4905
    %5131 = vmatprep.subr.bf16.mxu0 %v4902
    %5132 = vmatpush2.bf16.msra.mxu0 %v4901
    %5133 = vmatprep.subr.bf16.mxu0 %v4898
    %5134 = vmatpush2.bf16.msra.mxu0 %v4897
    %5135 = vmatprep.subr.bf16.mxu0 %v4894
    %5136 = vmatpush2.bf16.msra.mxu0 %v4893
    %5137 = vmatprep.subr.bf16.mxu0 %v4890
    %5138 = vmatpush2.bf16.msra.mxu0 %v4889
    %5139 = vmatprep.subr.bf16.mxu0 %v4886
    %5140 = vmatpush2.bf16.msra.mxu0 %v4885
    %5141 = vmatprep.mubr.bf16.mxu0 %v4718
    %5142 = vmatmul.mubr.bf16.gmra.mxu0 %v4717
    %v5143 = vpop.f32.mrf.mxu0
    %v5144 = vadd.f32 0.0, %v5143
    %v5145 = vpop.f32.mrf.mxu0
    %v5146 = vadd.f32 0.0, %v5145
    %v5147 = vpop.f32.mrf.mxu0
    %v5148 = vpop.f32.mrf.mxu0
    %5149 = vdwg.mxu0
    %5150 = vmatprep.subr.bf16.mxu0 %v4946
    %5151 = vmatpush1.bf16.msra.mxu0 %v4945
    %5152 = vmatprep.subr.bf16.mxu0 %v4942
    %5153 = vmatpush1.bf16.msra.mxu0 %v4941
    %5154 = vmatprep.subr.bf16.mxu0 %v4938
    %5155 = vmatpush1.bf16.msra.mxu0 %v4937
    %5156 = vmatprep.subr.bf16.mxu0 %v4934
    %5157 = vmatpush1.bf16.msra.mxu0 %v4933
    %5158 = vmatprep.subr.bf16.mxu0 %v4930
    %5159 = vmatpush1.bf16.msra.mxu0 %v4929
    %5160 = vmatprep.subr.bf16.mxu0 %v4926
    %5161 = vmatpush1.bf16.msra.mxu0 %v4925
    %5162 = vmatprep.subr.bf16.mxu0 %v4922
    %5163 = vmatpush1.bf16.msra.mxu0 %v4921
    %5164 = vmatprep.subr.bf16.mxu0 %v4918
    %5165 = vmatpush1.bf16.msra.mxu0 %v4917
    %5166 = vmatprep.subr.bf16.mxu0 %v4978
    %5167 = vmatpush2.bf16.msra.mxu0 %v4977
    %5168 = vmatprep.subr.bf16.mxu0 %v4974
    %5169 = vmatpush2.bf16.msra.mxu0 %v4973
    %5170 = vmatprep.subr.bf16.mxu0 %v4970
    %5171 = vmatpush2.bf16.msra.mxu0 %v4969
    %5172 = vmatprep.subr.bf16.mxu0 %v4966
    %5173 = vmatpush2.bf16.msra.mxu0 %v4965
    %5174 = vmatprep.subr.bf16.mxu0 %v4962
    %5175 = vmatpush2.bf16.msra.mxu0 %v4961
    %5176 = vmatprep.subr.bf16.mxu0 %v4958
    %5177 = vmatpush2.bf16.msra.mxu0 %v4957
    %5178 = vmatprep.subr.bf16.mxu0 %v4954
    %5179 = vmatpush2.bf16.msra.mxu0 %v4953
    %5180 = vmatprep.subr.bf16.mxu0 %v4950
    %5181 = vmatpush2.bf16.msra.mxu0 %v4949
    %5182 = vmatprep.mubr.bf16.mxu0 %v4720
    %5183 = vmatmul.mubr.bf16.gmra.mxu0 %v4719
    %v5184 = vpop.f32.mrf.mxu0
    %v5185 = vadd.f32 %v5144, %v5184
    %v5186 = vpop.f32.mrf.mxu0
    %v5187 = vadd.f32 %v5146, %v5186
    %v5188 = vpop.f32.mrf.mxu0
    %v5189 = vpop.f32.mrf.mxu0
    %5190 = vdwg.mxu0
    %5191 = vmatprep.subr.bf16.mxu0 %v5010
    %5192 = vmatpush1.bf16.msra.mxu0 %v5009
    %5193 = vmatprep.subr.bf16.mxu0 %v5006
    %5194 = vmatpush1.bf16.msra.mxu0 %v5005
    %5195 = vmatprep.subr.bf16.mxu0 %v5002
    %5196 = vmatpush1.bf16.msra.mxu0 %v5001
    %5197 = vmatprep.subr.bf16.mxu0 %v4998
    %5198 = vmatpush1.bf16.msra.mxu0 %v4997
    %5199 = vmatprep.subr.bf16.mxu0 %v4994
    %5200 = vmatpush1.bf16.msra.mxu0 %v4993
    %5201 = vmatprep.subr.bf16.mxu0 %v4990
    %5202 = vmatpush1.bf16.msra.mxu0 %v4989
    %5203 = vmatprep.subr.bf16.mxu0 %v4986
    %5204 = vmatpush1.bf16.msra.mxu0 %v4985
    %5205 = vmatprep.subr.bf16.mxu0 %v4982
    %5206 = vmatpush1.bf16.msra.mxu0 %v4981
    %5207 = vmatprep.subr.bf16.mxu0 %v5042
    %5208 = vmatpush2.bf16.msra.mxu0 %v5041
    %5209 = vmatprep.subr.bf16.mxu0 %v5038
    %5210 = vmatpush2.bf16.msra.mxu0 %v5037
    %5211 = vmatprep.subr.bf16.mxu0 %v5034
    %5212 = vmatpush2.bf16.msra.mxu0 %v5033
    %5213 = vmatprep.subr.bf16.mxu0 %v5030
    %5214 = vmatpush2.bf16.msra.mxu0 %v5029
    %5215 = vmatprep.subr.bf16.mxu0 %v5026
    %5216 = vmatpush2.bf16.msra.mxu0 %v5025
    %5217 = vmatprep.subr.bf16.mxu0 %v5022
    %5218 = vmatpush2.bf16.msra.mxu0 %v5021
    %5219 = vmatprep.subr.bf16.mxu0 %v5018
    %5220 = vmatpush2.bf16.msra.mxu0 %v5017
    %5221 = vmatprep.subr.bf16.mxu0 %v5014
    %5222 = vmatpush2.bf16.msra.mxu0 %v5013
    %5223 = vmatprep.mubr.bf16.mxu0 %v4722
    %5224 = vmatmul.mubr.bf16.gmra.mxu0 %v4721
    %v5225 = vpop.f32.mrf.mxu0
    %v5226 = vadd.f32 %v5185, %v5225
    %v5227 = vpop.f32.mrf.mxu0
    %v5228 = vadd.f32 %v5187, %v5227
    %v5229 = vpop.f32.mrf.mxu0
    %v5230 = vpop.f32.mrf.mxu0
    %5231 = vdwg.mxu0
    %5232 = vmatprep.subr.bf16.mxu0 %v5074
    %5233 = vmatpush1.bf16.msra.mxu0 %v5073
    %5234 = vmatprep.subr.bf16.mxu0 %v5070
    %5235 = vmatpush1.bf16.msra.mxu0 %v5069
    %5236 = vmatprep.subr.bf16.mxu0 %v5066
    %5237 = vmatpush1.bf16.msra.mxu0 %v5065
    %5238 = vmatprep.subr.bf16.mxu0 %v5062
    %5239 = vmatpush1.bf16.msra.mxu0 %v5061
    %5240 = vmatprep.subr.bf16.mxu0 %v5058
    %5241 = vmatpush1.bf16.msra.mxu0 %v5057
    %5242 = vmatprep.subr.bf16.mxu0 %v5054
    %5243 = vmatpush1.bf16.msra.mxu0 %v5053
    %5244 = vmatprep.subr.bf16.mxu0 %v5050
    %5245 = vmatpush1.bf16.msra.mxu0 %v5049
    %5246 = vmatprep.subr.bf16.mxu0 %v5046
    %5247 = vmatpush1.bf16.msra.mxu0 %v5045
    %5248 = vmatprep.subr.bf16.mxu0 %v5106
    %5249 = vmatpush2.bf16.msra.mxu0 %v5105
    %5250 = vmatprep.subr.bf16.mxu0 %v5102
    %5251 = vmatpush2.bf16.msra.mxu0 %v5101
    %5252 = vmatprep.subr.bf16.mxu0 %v5098
    %5253 = vmatpush2.bf16.msra.mxu0 %v5097
    %5254 = vmatprep.subr.bf16.mxu0 %v5094
    %5255 = vmatpush2.bf16.msra.mxu0 %v5093
    %5256 = vmatprep.subr.bf16.mxu0 %v5090
    %5257 = vmatpush2.bf16.msra.mxu0 %v5089
    %5258 = vmatprep.subr.bf16.mxu0 %v5086
    %5259 = vmatpush2.bf16.msra.mxu0 %v5085
    %5260 = vmatprep.subr.bf16.mxu0 %v5082
    %5261 = vmatpush2.bf16.msra.mxu0 %v5081
    %5262 = vmatprep.subr.bf16.mxu0 %v5078
    %5263 = vmatpush2.bf16.msra.mxu0 %v5077
    %5264 = vmatprep.mubr.bf16.mxu0 %v4724
    %5265 = vmatmul.mubr.bf16.gmra.mxu0 %v4723
    %v5266 = vpop.f32.mrf.mxu0
    %v5267 = vadd.f32 %v5226, %v5266
    %v5268 = vpop.f32.mrf.mxu0
    %v5269 = vadd.f32 %v5228, %v5268
    %v5270 = vpop.f32.mrf.mxu0
    %v5271 = vpop.f32.mrf.mxu0
    %5272 = vdwg.mxu0
    %5273 = vmatprep.subr.bf16.mxu0 %v4884
    %5274 = vmatpush1.bf16.msra.mxu0 %v4883
    %5275 = vmatprep.subr.bf16.mxu0 %v4880
    %5276 = vmatpush1.bf16.msra.mxu0 %v4879
    %5277 = vmatprep.subr.bf16.mxu0 %v4876
    %5278 = vmatpush1.bf16.msra.mxu0 %v4875
    %5279 = vmatprep.subr.bf16.mxu0 %v4872
    %5280 = vmatpush1.bf16.msra.mxu0 %v4871
    %5281 = vmatprep.subr.bf16.mxu0 %v4868
    %5282 = vmatpush1.bf16.msra.mxu0 %v4867
    %5283 = vmatprep.subr.bf16.mxu0 %v4864
    %5284 = vmatpush1.bf16.msra.mxu0 %v4863
    %5285 = vmatprep.subr.bf16.mxu0 %v4860
    %5286 = vmatpush1.bf16.msra.mxu0 %v4859
    %5287 = vmatprep.subr.bf16.mxu0 %v4856
    %5288 = vmatpush1.bf16.msra.mxu0 %v4855
    %5289 = vmatprep.subr.bf16.mxu0 %v4916
    %5290 = vmatpush2.bf16.msra.mxu0 %v4915
    %5291 = vmatprep.subr.bf16.mxu0 %v4912
    %5292 = vmatpush2.bf16.msra.mxu0 %v4911
    %5293 = vmatprep.subr.bf16.mxu0 %v4908
    %5294 = vmatpush2.bf16.msra.mxu0 %v4907
    %5295 = vmatprep.subr.bf16.mxu0 %v4904
    %5296 = vmatpush2.bf16.msra.mxu0 %v4903
    %5297 = vmatprep.subr.bf16.mxu0 %v4900
    %5298 = vmatpush2.bf16.msra.mxu0 %v4899
    %5299 = vmatprep.subr.bf16.mxu0 %v4896
    %5300 = vmatpush2.bf16.msra.mxu0 %v4895
    %5301 = vmatprep.subr.bf16.mxu0 %v4892
    %5302 = vmatpush2.bf16.msra.mxu0 %v4891
    %5303 = vmatprep.subr.bf16.mxu0 %v4888
    %5304 = vmatpush2.bf16.msra.mxu0 %v4887
    %5305 = vmatprep.mubr.bf16.mxu0 %v4718
    %5306 = vmatmul.mubr.bf16.gmra.mxu0 %v4717
    %v5307 = vpop.f32.mrf.mxu0
    %v5308 = vadd.f32 0.0, %v5307
    %v5309 = vpop.f32.mrf.mxu0
    %v5310 = vadd.f32 0.0, %v5309
    %v5311 = vpop.f32.mrf.mxu0
    %v5312 = vpop.f32.mrf.mxu0
    %5313 = vdwg.mxu0
    %5314 = vmatprep.subr.bf16.mxu0 %v4948
    %5315 = vmatpush1.bf16.msra.mxu0 %v4947
    %5316 = vmatprep.subr.bf16.mxu0 %v4944
    %5317 = vmatpush1.bf16.msra.mxu0 %v4943
    %5318 = vmatprep.subr.bf16.mxu0 %v4940
    %5319 = vmatpush1.bf16.msra.mxu0 %v4939
    %5320 = vmatprep.subr.bf16.mxu0 %v4936
    %5321 = vmatpush1.bf16.msra.mxu0 %v4935
    %5322 = vmatprep.subr.bf16.mxu0 %v4932
    %5323 = vmatpush1.bf16.msra.mxu0 %v4931
    %5324 = vmatprep.subr.bf16.mxu0 %v4928
    %5325 = vmatpush1.bf16.msra.mxu0 %v4927
    %5326 = vmatprep.subr.bf16.mxu0 %v4924
    %5327 = vmatpush1.bf16.msra.mxu0 %v4923
    %5328 = vmatprep.subr.bf16.mxu0 %v4920
    %5329 = vmatpush1.bf16.msra.mxu0 %v4919
    %5330 = vmatprep.subr.bf16.mxu0 %v4980
    %5331 = vmatpush2.bf16.msra.mxu0 %v4979
    %5332 = vmatprep.subr.bf16.mxu0 %v4976
    %5333 = vmatpush2.bf16.msra.mxu0 %v4975
    %5334 = vmatprep.subr.bf16.mxu0 %v4972
    %5335 = vmatpush2.bf16.msra.mxu0 %v4971
    %5336 = vmatprep.subr.bf16.mxu0 %v4968
    %5337 = vmatpush2.bf16.msra.mxu0 %v4967
    %5338 = vmatprep.subr.bf16.mxu0 %v4964
    %5339 = vmatpush2.bf16.msra.mxu0 %v4963
    %5340 = vmatprep.subr.bf16.mxu0 %v4960
    %5341 = vmatpush2.bf16.msra.mxu0 %v4959
    %5342 = vmatprep.subr.bf16.mxu0 %v4956
    %5343 = vmatpush2.bf16.msra.mxu0 %v4955
    %5344 = vmatprep.subr.bf16.mxu0 %v4952
    %5345 = vmatpush2.bf16.msra.mxu0 %v4951
    %5346 = vmatprep.mubr.bf16.mxu0 %v4720
    %5347 = vmatmul.mubr.bf16.gmra.mxu0 %v4719
    %v5348 = vpop.f32.mrf.mxu0
    %v5349 = vadd.f32 %v5308, %v5348
    %v5350 = vpop.f32.mrf.mxu0
    %v5351 = vadd.f32 %v5310, %v5350
    %v5352 = vpop.f32.mrf.mxu0
    %v5353 = vpop.f32.mrf.mxu0
    %5354 = vdwg.mxu0
    %5355 = vmatprep.subr.bf16.mxu0 %v5012
    %5356 = vmatpush1.bf16.msra.mxu0 %v5011
    %5357 = vmatprep.subr.bf16.mxu0 %v5008
    %5358 = vmatpush1.bf16.msra.mxu0 %v5007
    %5359 = vmatprep.subr.bf16.mxu0 %v5004
    %5360 = vmatpush1.bf16.msra.mxu0 %v5003
    %5361 = vmatprep.subr.bf16.mxu0 %v5000
    %5362 = vmatpush1.bf16.msra.mxu0 %v4999
    %5363 = vmatprep.subr.bf16.mxu0 %v4996
    %5364 = vmatpush1.bf16.msra.mxu0 %v4995
    %5365 = vmatprep.subr.bf16.mxu0 %v4992
    %5366 = vmatpush1.bf16.msra.mxu0 %v4991
    %5367 = vmatprep.subr.bf16.mxu0 %v4988
    %5368 = vmatpush1.bf16.msra.mxu0 %v4987
    %5369 = vmatprep.subr.bf16.mxu0 %v4984
    %5370 = vmatpush1.bf16.msra.mxu0 %v4983
    %5371 = vmatprep.subr.bf16.mxu0 %v5044
    %5372 = vmatpush2.bf16.msra.mxu0 %v5043
    %5373 = vmatprep.subr.bf16.mxu0 %v5040
    %5374 = vmatpush2.bf16.msra.mxu0 %v5039
    %5375 = vmatprep.subr.bf16.mxu0 %v5036
    %5376 = vmatpush2.bf16.msra.mxu0 %v5035
    %5377 = vmatprep.subr.bf16.mxu0 %v5032
    %5378 = vmatpush2.bf16.msra.mxu0 %v5031
    %5379 = vmatprep.subr.bf16.mxu0 %v5028
    %5380 = vmatpush2.bf16.msra.mxu0 %v5027
    %5381 = vmatprep.subr.bf16.mxu0 %v5024
    %5382 = vmatpush2.bf16.msra.mxu0 %v5023
    %5383 = vmatprep.subr.bf16.mxu0 %v5020
    %5384 = vmatpush2.bf16.msra.mxu0 %v5019
    %5385 = vmatprep.subr.bf16.mxu0 %v5016
    %5386 = vmatpush2.bf16.msra.mxu0 %v5015
    %5387 = vmatprep.mubr.bf16.mxu0 %v4722
    %5388 = vmatmul.mubr.bf16.gmra.mxu0 %v4721
    %v5389 = vpop.f32.mrf.mxu0
    %v5390 = vadd.f32 %v5349, %v5389
    %v5391 = vpop.f32.mrf.mxu0
    %v5392 = vadd.f32 %v5351, %v5391
    %v5393 = vpop.f32.mrf.mxu0
    %v5394 = vpop.f32.mrf.mxu0
    %5395 = vdwg.mxu0
    %5396 = vmatprep.subr.bf16.mxu0 %v5076
    %5397 = vmatpush1.bf16.msra.mxu0 %v5075
    %5398 = vmatprep.subr.bf16.mxu0 %v5072
    %5399 = vmatpush1.bf16.msra.mxu0 %v5071
    %5400 = vmatprep.subr.bf16.mxu0 %v5068
    %5401 = vmatpush1.bf16.msra.mxu0 %v5067
    %5402 = vmatprep.subr.bf16.mxu0 %v5064
    %5403 = vmatpush1.bf16.msra.mxu0 %v5063
    %5404 = vmatprep.subr.bf16.mxu0 %v5060
    %5405 = vmatpush1.bf16.msra.mxu0 %v5059
    %5406 = vmatprep.subr.bf16.mxu0 %v5056
    %5407 = vmatpush1.bf16.msra.mxu0 %v5055
    %5408 = vmatprep.subr.bf16.mxu0 %v5052
    %5409 = vmatpush1.bf16.msra.mxu0 %v5051
    %5410 = vmatprep.subr.bf16.mxu0 %v5048
    %5411 = vmatpush1.bf16.msra.mxu0 %v5047
    %5412 = vmatprep.subr.bf16.mxu0 %v5108
    %5413 = vmatpush2.bf16.msra.mxu0 %v5107
    %5414 = vmatprep.subr.bf16.mxu0 %v5104
    %5415 = vmatpush2.bf16.msra.mxu0 %v5103
    %5416 = vmatprep.subr.bf16.mxu0 %v5100
    %5417 = vmatpush2.bf16.msra.mxu0 %v5099
    %5418 = vmatprep.subr.bf16.mxu0 %v5096
    %5419 = vmatpush2.bf16.msra.mxu0 %v5095
    %5420 = vmatprep.subr.bf16.mxu0 %v5092
    %5421 = vmatpush2.bf16.msra.mxu0 %v5091
    %5422 = vmatprep.subr.bf16.mxu0 %v5088
    %5423 = vmatpush2.bf16.msra.mxu0 %v5087
    %5424 = vmatprep.subr.bf16.mxu0 %v5084
    %5425 = vmatpush2.bf16.msra.mxu0 %v5083
    %5426 = vmatprep.subr.bf16.mxu0 %v5080
    %5427 = vmatpush2.bf16.msra.mxu0 %v5079
    %5428 = vmatprep.mubr.bf16.mxu0 %v4724
    %5429 = vmatmul.mubr.bf16.gmra.mxu0 %v4723
    %v5430 = vpop.f32.mrf.mxu0
    %v5431 = vadd.f32 %v5390, %v5430
    %v5432 = vpop.f32.mrf.mxu0
    %v5433 = vadd.f32 %v5392, %v5432
    %v5434 = vpop.f32.mrf.mxu0
    %v5435 = vpop.f32.mrf.mxu0
    %5436 = vdwg.mxu0
    %v5437 = vld [vmem:[#allocation5 + $0x22] sm:$0xf]
    %v5439 = vlaneseq
    %v5440 = vshrl.u32 %v5439, 7
    %v5441 = vsub.s32 0, %v5440
    %v5442 = vrot.slane %v5437, %v5441
    %v5443 = vlaneseq
    %v5444 = vshrl.u32 %v5443, 7
    %v5445 = vsub.s32 1, %v5444
    %v5446 = vrot.slane %v5437, %v5445
    %v5447 = vlaneseq
    %v5448 = vshrl.u32 %v5447, 7
    %v5449 = vsub.s32 2, %v5448
    %v5450 = vrot.slane %v5437, %v5449
    %v5451 = vlaneseq
    %v5452 = vshrl.u32 %v5451, 7
    %v5453 = vsub.s32 3, %v5452
    %v5454 = vrot.slane %v5437, %v5453
    %v5459 = vmul.f32 %v5267, %v5442
    %v5460 = vmul.f32 %v5269, %v5446
    %v5461 = vmul.f32 %v5431, %v5450
    %v5462 = vmul.f32 %v5433, %v5454
    %v5463 = vld [vmem:[#allocation5 + $0x40] sm:$0xf]
    %v5465 = vlaneseq
    %v5466 = vshrl.u32 %v5465, 7
    %v5467 = vsub.s32 0, %v5466
    %v5468 = vrot.slane %v5463, %v5467
    %v5469 = vlaneseq
    %v5470 = vshrl.u32 %v5469, 7
    %v5471 = vsub.s32 1, %v5470
    %v5472 = vrot.slane %v5463, %v5471
    %v5473 = vlaneseq
    %v5474 = vshrl.u32 %v5473, 7
    %v5475 = vsub.s32 2, %v5474
    %v5476 = vrot.slane %v5463, %v5475
    %v5477 = vlaneseq
    %v5478 = vshrl.u32 %v5477, 7
    %v5479 = vsub.s32 3, %v5478
    %v5480 = vrot.slane %v5463, %v5479
    %v5485 = vadd.f32 %v5459, %v5468
    %v5486 = vadd.f32 %v5460, %v5472
    %v5487 = vadd.f32 %v5461, %v5476
    %v5488 = vadd.f32 %v5462, %v5480
    %v5489 = vld [vmem:[#allocation5 + $0x44] sm:$0xf]
    %v5490 = vld [vmem:[#allocation5 + $0x48] sm:$0xf]
    %v5491 = vsel %vm278, %v5485, 0.0
    %v5492 = vsel %vm278, %v5486, 0.0
    %v5493 = vadd.f32 %v5491, %v5492
    %v5494 = vsel %vm278, %v5487, 0.0
    %v5495 = vadd.f32 %v5493, %v5494
    %v5496 = vsel %vm278, %v5488, 0.0
    %v5497 = vadd.f32 %v5495, %v5496
    %5498 = vadd.xlane.f32.xlu0 %v5497
    %v5499 = vpop.xlane.xlu0 %5498
    %v5500 = vrcp.pop 512.0
    %v5501 = vmul.f32 %v5499, %v5500
    %v5502 = vsub.f32 %v5485, %v5501
    %v5503 = vsub.f32 %v5486, %v5501
    %v5504 = vsub.f32 %v5487, %v5501
    %v5505 = vsub.f32 %v5488, %v5501
    %v5506 = vmul.f32 %v5502, %v5502
    %v5507 = vmul.f32 %v5503, %v5503
    %v5508 = vmul.f32 %v5504, %v5504
    %v5509 = vmul.f32 %v5505, %v5505
    %v5510 = vsel %vm278, %v5506, 0.0
    %v5511 = vsel %vm278, %v5507, 0.0
    %v5512 = vadd.f32 %v5510, %v5511
    %v5513 = vsel %vm278, %v5508, 0.0
    %v5514 = vadd.f32 %v5512, %v5513
    %v5515 = vsel %vm278, %v5509, 0.0
    %v5516 = vadd.f32 %v5514, %v5515
    %5517 = vadd.xlane.f32.xlu0 %v5516
    %v5518 = vpop.xlane.xlu0 %5517
    %v5519 = vmul.f32 %v5518, %v5500
    %v5520 = vadd.f32 %v5519, 1e-05
    %v5521 = vrsqrt.pop %v5520
    %v5522 = vmul.f32 %v5502, %v5521
    %v5523 = vmul.f32 %v5503, %v5521
    %v5524 = vmul.f32 %v5504, %v5521
    %v5525 = vmul.f32 %v5505, %v5521
    %v5527 = vlaneseq
    %v5528 = vshrl.u32 %v5527, 7
    %v5529 = vsub.s32 0, %v5528
    %v5530 = vrot.slane %v5489, %v5529
    %v5531 = vlaneseq
    %v5532 = vshrl.u32 %v5531, 7
    %v5533 = vsub.s32 1, %v5532
    %v5534 = vrot.slane %v5489, %v5533
    %v5535 = vlaneseq
    %v5536 = vshrl.u32 %v5535, 7
    %v5537 = vsub.s32 2, %v5536
    %v5538 = vrot.slane %v5489, %v5537
    %v5539 = vlaneseq
    %v5540 = vshrl.u32 %v5539, 7
    %v5541 = vsub.s32 3, %v5540
    %v5542 = vrot.slane %v5489, %v5541
    %v5547 = vmul.f32 %v5522, %v5530
    %v5548 = vmul.f32 %v5523, %v5534
    %v5549 = vmul.f32 %v5524, %v5538
    %v5550 = vmul.f32 %v5525, %v5542
    %v5552 = vlaneseq
    %v5553 = vshrl.u32 %v5552, 7
    %v5554 = vsub.s32 0, %v5553
    %v5555 = vrot.slane %v5490, %v5554
    %v5556 = vlaneseq
    %v5557 = vshrl.u32 %v5556, 7
    %v5558 = vsub.s32 1, %v5557
    %v5559 = vrot.slane %v5490, %v5558
    %v5560 = vlaneseq
    %v5561 = vshrl.u32 %v5560, 7
    %v5562 = vsub.s32 2, %v5561
    %v5563 = vrot.slane %v5490, %v5562
    %v5564 = vlaneseq
    %v5565 = vshrl.u32 %v5564, 7
    %v5566 = vsub.s32 3, %v5565
    %v5567 = vrot.slane %v5490, %v5566
    %v5572 = vadd.f32 %v5547, %v5555
    %v5573 = vadd.f32 %v5548, %v5559
    %v5574 = vadd.f32 %v5549, %v5563
    %v5575 = vadd.f32 %v5550, %v5567
    %v5576 = vmax.f32 %v5572, 0.0
    %v5577 = vmax.f32 %v5573, 0.0
    %v5578 = vmax.f32 %v5574, 0.0
    %v5579 = vmax.f32 %v5575, 0.0
    %v5580 = vpack.c.bf16 %v5576, %v5576
    %v5581 = vpack.c.bf16 %v5577, %v5577
    %v5582 = vpack.c.bf16 %v5578, %v5578
    %v5583 = vpack.c.bf16 %v5579, %v5579
    %v5584 = vld [vmem:[#allocation13] sm:$0xff]
    %v5585 = vld [vmem:[#allocation13 + $0x8] sm:$0xff]
    %v5586 = vld [vmem:[#allocation13 + $0x10] sm:$0xff]
    %v5587 = vld [vmem:[#allocation13 + $0x18] sm:$0xff]
    %v5588 = vld [vmem:[#allocation13 + $0x20] sm:$0xff]
    %v5589 = vld [vmem:[#allocation13 + $0x28] sm:$0xff]
    %v5590 = vld [vmem:[#allocation13 + $0x30] sm:$0xff]
    %v5591 = vld [vmem:[#allocation13 + $0x38] sm:$0xff]
    %v5592 = vld [vmem:[#allocation13 + $0x40] sm:$0xff]
    %v5593 = vld [vmem:[#allocation13 + $0x48] sm:$0xff]
    %v5594 = vld [vmem:[#allocation13 + $0x50] sm:$0xff]
    %v5595 = vld [vmem:[#allocation13 + $0x58] sm:$0xff]
    %v5596 = vld [vmem:[#allocation13 + $0x60] sm:$0xff]
    %v5597 = vld [vmem:[#allocation13 + $0x68] sm:$0xff]
    %v5598 = vld [vmem:[#allocation13 + $0x70] sm:$0xff]
    %v5599 = vld [vmem:[#allocation13 + $0x78] sm:$0xff]
    %v5600 = vld [vmem:[#allocation13 + $0x80] sm:$0xff]
    %v5601 = vld [vmem:[#allocation13 + $0x88] sm:$0xff]
    %v5602 = vld [vmem:[#allocation13 + $0x90] sm:$0xff]
    %v5603 = vld [vmem:[#allocation13 + $0x98] sm:$0xff]
    %v5604 = vld [vmem:[#allocation13 + $0xa0] sm:$0xff]
    %v5605 = vld [vmem:[#allocation13 + $0xa8] sm:$0xff]
    %v5606 = vld [vmem:[#allocation13 + $0xb0] sm:$0xff]
    %v5607 = vld [vmem:[#allocation13 + $0xb8] sm:$0xff]
    %v5608 = vld [vmem:[#allocation13 + $0xc0] sm:$0xff]
    %v5609 = vld [vmem:[#allocation13 + $0xc8] sm:$0xff]
    %v5610 = vld [vmem:[#allocation13 + $0xd0] sm:$0xff]
    %v5611 = vld [vmem:[#allocation13 + $0xd8] sm:$0xff]
    %v5612 = vld [vmem:[#allocation13 + $0xe0] sm:$0xff]
    %v5613 = vld [vmem:[#allocation13 + $0xe8] sm:$0xff]
    %v5614 = vld [vmem:[#allocation13 + $0xf0] sm:$0xff]
    %v5615 = vld [vmem:[#allocation13 + $0xf8] sm:$0xff]
    %v5616 = vunpack.c.l.s8.bf16 %v5584
    %v5617 = vunpack.c.l.s8.bf16 %v5585
    %v5618 = vunpack.c.h.s8.bf16 %v5584
    %v5619 = vunpack.c.h.s8.bf16 %v5585
    %v5620 = vunpack.c.l.s8.bf16 %v5586
    %v5621 = vunpack.c.l.s8.bf16 %v5587
    %v5622 = vunpack.c.h.s8.bf16 %v5586
    %v5623 = vunpack.c.h.s8.bf16 %v5587
    %v5624 = vunpack.c.l.s8.bf16 %v5588
    %v5625 = vunpack.c.l.s8.bf16 %v5589
    %v5626 = vunpack.c.h.s8.bf16 %v5588
    %v5627 = vunpack.c.h.s8.bf16 %v5589
    %v5628 = vunpack.c.l.s8.bf16 %v5590
    %v5629 = vunpack.c.l.s8.bf16 %v5591
    %v5630 = vunpack.c.h.s8.bf16 %v5590
    %v5631 = vunpack.c.h.s8.bf16 %v5591
    %v5632 = vunpack.c.l.s8.bf16 %v5592
    %v5633 = vunpack.c.l.s8.bf16 %v5593
    %v5634 = vunpack.c.h.s8.bf16 %v5592
    %v5635 = vunpack.c.h.s8.bf16 %v5593
    %v5636 = vunpack.c.l.s8.bf16 %v5594
    %v5637 = vunpack.c.l.s8.bf16 %v5595
    %v5638 = vunpack.c.h.s8.bf16 %v5594
    %v5639 = vunpack.c.h.s8.bf16 %v5595
    %v5640 = vunpack.c.l.s8.bf16 %v5596
    %v5641 = vunpack.c.l.s8.bf16 %v5597
    %v5642 = vunpack.c.h.s8.bf16 %v5596
    %v5643 = vunpack.c.h.s8.bf16 %v5597
    %v5644 = vunpack.c.l.s8.bf16 %v5598
    %v5645 = vunpack.c.l.s8.bf16 %v5599
    %v5646 = vunpack.c.h.s8.bf16 %v5598
    %v5647 = vunpack.c.h.s8.bf16 %v5599
    %v5648 = vunpack.c.l.s8.bf16 %v5600
    %v5649 = vunpack.c.l.s8.bf16 %v5601
    %v5650 = vunpack.c.h.s8.bf16 %v5600
    %v5651 = vunpack.c.h.s8.bf16 %v5601
    %v5652 = vunpack.c.l.s8.bf16 %v5602
    %v5653 = vunpack.c.l.s8.bf16 %v5603
    %v5654 = vunpack.c.h.s8.bf16 %v5602
    %v5655 = vunpack.c.h.s8.bf16 %v5603
    %v5656 = vunpack.c.l.s8.bf16 %v5604
    %v5657 = vunpack.c.l.s8.bf16 %v5605
    %v5658 = vunpack.c.h.s8.bf16 %v5604
    %v5659 = vunpack.c.h.s8.bf16 %v5605
    %v5660 = vunpack.c.l.s8.bf16 %v5606
    %v5661 = vunpack.c.l.s8.bf16 %v5607
    %v5662 = vunpack.c.h.s8.bf16 %v5606
    %v5663 = vunpack.c.h.s8.bf16 %v5607
    %v5664 = vunpack.c.l.s8.bf16 %v5608
    %v5665 = vunpack.c.l.s8.bf16 %v5609
    %v5666 = vunpack.c.h.s8.bf16 %v5608
    %v5667 = vunpack.c.h.s8.bf16 %v5609
    %v5668 = vunpack.c.l.s8.bf16 %v5610
    %v5669 = vunpack.c.l.s8.bf16 %v5611
    %v5670 = vunpack.c.h.s8.bf16 %v5610
    %v5671 = vunpack.c.h.s8.bf16 %v5611
    %v5672 = vunpack.c.l.s8.bf16 %v5612
    %v5673 = vunpack.c.l.s8.bf16 %v5613
    %v5674 = vunpack.c.h.s8.bf16 %v5612
    %v5675 = vunpack.c.h.s8.bf16 %v5613
    %v5676 = vunpack.c.l.s8.bf16 %v5614
    %v5677 = vunpack.c.l.s8.bf16 %v5615
    %v5678 = vunpack.c.h.s8.bf16 %v5614
    %v5679 = vunpack.c.h.s8.bf16 %v5615
    %5680 = vmatprep.subr.bf16.mxu0 %v5631
    %5681 = vmatpush1.bf16.msra.mxu0 %v5630
    %5682 = vmatprep.subr.bf16.mxu0 %v5629
    %5683 = vmatpush1.bf16.msra.mxu0 %v5628
    %5684 = vmatprep.subr.bf16.mxu0 %v5627
    %5685 = vmatpush1.bf16.msra.mxu0 %v5626
    %5686 = vmatprep.subr.bf16.mxu0 %v5625
    %5687 = vmatpush1.bf16.msra.mxu0 %v5624
    %5688 = vmatprep.subr.bf16.mxu0 %v5623
    %5689 = vmatpush1.bf16.msra.mxu0 %v5622
    %5690 = vmatprep.subr.bf16.mxu0 %v5621
    %5691 = vmatpush1.bf16.msra.mxu0 %v5620
    %5692 = vmatprep.subr.bf16.mxu0 %v5619
    %5693 = vmatpush1.bf16.msra.mxu0 %v5618
    %5694 = vmatprep.subr.bf16.mxu0 %v5617
    %5695 = vmatpush1.bf16.msra.mxu0 %v5616
    %5696 = vmatprep.subr.bf16.mxu0 %v5647
    %5697 = vmatpush2.bf16.msra.mxu0 %v5646
    %5698 = vmatprep.subr.bf16.mxu0 %v5645
    %5699 = vmatpush2.bf16.msra.mxu0 %v5644
    %5700 = vmatprep.subr.bf16.mxu0 %v5643
    %5701 = vmatpush2.bf16.msra.mxu0 %v5642
    %5702 = vmatprep.subr.bf16.mxu0 %v5641
    %5703 = vmatpush2.bf16.msra.mxu0 %v5640
    %5704 = vmatprep.subr.bf16.mxu0 %v5639
    %5705 = vmatpush2.bf16.msra.mxu0 %v5638
    %5706 = vmatprep.subr.bf16.mxu0 %v5637
    %5707 = vmatpush2.bf16.msra.mxu0 %v5636
    %5708 = vmatprep.subr.bf16.mxu0 %v5635
    %5709 = vmatpush2.bf16.msra.mxu0 %v5634
    %5710 = vmatprep.subr.bf16.mxu0 %v5633
    %5711 = vmatpush2.bf16.msra.mxu0 %v5632
    %5712 = vmatprep.mubr.bf16.mxu0 %v5581
    %5713 = vmatmul.mubr.bf16.gmra.mxu0 %v5580
    %v5714 = vpop.f32.mrf.mxu0
    %v5715 = vadd.f32 0.0, %v5714
    %v5716 = vpop.f32.mrf.mxu0
    %v5717 = vadd.f32 0.0, %v5716
    %v5718 = vpop.f32.mrf.mxu0
    %v5719 = vpop.f32.mrf.mxu0
    %5720 = vdwg.mxu0
    %5721 = vmatprep.subr.bf16.mxu0 %v5663
    %5722 = vmatpush1.bf16.msra.mxu0 %v5662
    %5723 = vmatprep.subr.bf16.mxu0 %v5661
    %5724 = vmatpush1.bf16.msra.mxu0 %v5660
    %5725 = vmatprep.subr.bf16.mxu0 %v5659
    %5726 = vmatpush1.bf16.msra.mxu0 %v5658
    %5727 = vmatprep.subr.bf16.mxu0 %v5657
    %5728 = vmatpush1.bf16.msra.mxu0 %v5656
    %5729 = vmatprep.subr.bf16.mxu0 %v5655
    %5730 = vmatpush1.bf16.msra.mxu0 %v5654
    %5731 = vmatprep.subr.bf16.mxu0 %v5653
    %5732 = vmatpush1.bf16.msra.mxu0 %v5652
    %5733 = vmatprep.subr.bf16.mxu0 %v5651
    %5734 = vmatpush1.bf16.msra.mxu0 %v5650
    %5735 = vmatprep.subr.bf16.mxu0 %v5649
    %5736 = vmatpush1.bf16.msra.mxu0 %v5648
    %5737 = vmatprep.subr.bf16.mxu0 %v5679
    %5738 = vmatpush2.bf16.msra.mxu0 %v5678
    %5739 = vmatprep.subr.bf16.mxu0 %v5677
    %5740 = vmatpush2.bf16.msra.mxu0 %v5676
    %5741 = vmatprep.subr.bf16.mxu0 %v5675
    %5742 = vmatpush2.bf16.msra.mxu0 %v5674
    %5743 = vmatprep.subr.bf16.mxu0 %v5673
    %5744 = vmatpush2.bf16.msra.mxu0 %v5672
    %5745 = vmatprep.subr.bf16.mxu0 %v5671
    %5746 = vmatpush2.bf16.msra.mxu0 %v5670
    %5747 = vmatprep.subr.bf16.mxu0 %v5669
    %5748 = vmatpush2.bf16.msra.mxu0 %v5668
    %5749 = vmatprep.subr.bf16.mxu0 %v5667
    %5750 = vmatpush2.bf16.msra.mxu0 %v5666
    %5751 = vmatprep.subr.bf16.mxu0 %v5665
    %5752 = vmatpush2.bf16.msra.mxu0 %v5664
    %5753 = vmatprep.mubr.bf16.mxu0 %v5583
    %5754 = vmatmul.mubr.bf16.gmra.mxu0 %v5582
    %v5755 = vpop.f32.mrf.mxu0
    %v5756 = vadd.f32 %v5715, %v5755
    %v5757 = vpop.f32.mrf.mxu0
    %v5758 = vadd.f32 %v5717, %v5757
    %v5759 = vpop.f32.mrf.mxu0
    %v5760 = vpop.f32.mrf.mxu0
    %5761 = vdwg.mxu0
    %v5762 = vld [vmem:[#allocation5 + $0x26] sm:$0x3]
    %v5764 = vlaneseq
    %v5765 = vshrl.u32 %v5764, 7
    %v5766 = vsub.s32 0, %v5765
    %v5767 = vrot.slane %v5762, %v5766
    %v5768 = vlaneseq
    %v5769 = vshrl.u32 %v5768, 7
    %v5770 = vsub.s32 1, %v5769
    %v5771 = vrot.slane %v5762, %v5770
    %v5774 = vmul.f32 %v5756, %v5767
    %v5775 = vmul.f32 %v5758, %v5771
    %v5776 = vld [vmem:[#allocation5 + $0x4c] sm:$0x3]
    %v5778 = vlaneseq
    %v5779 = vshrl.u32 %v5778, 7
    %v5780 = vsub.s32 0, %v5779
    %v5781 = vrot.slane %v5776, %v5780
    %v5782 = vlaneseq
    %v5783 = vshrl.u32 %v5782, 7
    %v5784 = vsub.s32 1, %v5783
    %v5785 = vrot.slane %v5776, %v5784
    %v5788 = vadd.f32 %v5774, %v5781
    %v5789 = vadd.f32 %v5775, %v5785
    %v5790 = vld [vmem:[#allocation5 + $0x4e] sm:$0x3]
    %v5791 = vld [vmem:[#allocation5 + $0x50] sm:$0x3]
    %v5792 = vsel %vm278, %v5788, 0.0
    %v5793 = vsel %vm278, %v5789, 0.0
    %v5794 = vadd.f32 %v5792, %v5793
    %5795 = vadd.xlane.f32.xlu0 %v5794
    %v5796 = vpop.xlane.xlu0 %5795
    %v5797 = vrcp.pop 256.0
    %v5798 = vmul.f32 %v5796, %v5797
    %v5799 = vsub.f32 %v5788, %v5798
    %v5800 = vsub.f32 %v5789, %v5798
    %v5801 = vmul.f32 %v5799, %v5799
    %v5802 = vmul.f32 %v5800, %v5800
    %v5803 = vsel %vm278, %v5801, 0.0
    %v5804 = vsel %vm278, %v5802, 0.0
    %v5805 = vadd.f32 %v5803, %v5804
    %5806 = vadd.xlane.f32.xlu0 %v5805
    %v5807 = vpop.xlane.xlu0 %5806
    %v5808 = vmul.f32 %v5807, %v5797
    %v5809 = vadd.f32 %v5808, 1e-05
    %v5810 = vrsqrt.pop %v5809
    %v5811 = vmul.f32 %v5799, %v5810
    %v5812 = vmul.f32 %v5800, %v5810
    %v5814 = vlaneseq
    %v5815 = vshrl.u32 %v5814, 7
    %v5816 = vsub.s32 0, %v5815
    %v5817 = vrot.slane %v5790, %v5816
    %v5818 = vlaneseq
    %v5819 = vshrl.u32 %v5818, 7
    %v5820 = vsub.s32 1, %v5819
    %v5821 = vrot.slane %v5790, %v5820
    %v5824 = vmul.f32 %v5811, %v5817
    %v5825 = vmul.f32 %v5812, %v5821
    %v5827 = vlaneseq
    %v5828 = vshrl.u32 %v5827, 7
    %v5829 = vsub.s32 0, %v5828
    %v5830 = vrot.slane %v5791, %v5829
    %v5831 = vlaneseq
    %v5832 = vshrl.u32 %v5831, 7
    %v5833 = vsub.s32 1, %v5832
    %v5834 = vrot.slane %v5791, %v5833
    %v5837 = vadd.f32 %v5824, %v5830
    %v5838 = vadd.f32 %v5825, %v5834
    %v5839 = vmax.f32 %v5837, 0.0
    %v5840 = vmax.f32 %v5838, 0.0
    %v5841 = vld [vmem:[#allocation14 + $0xb8] sm:$0xff]
    %v5842 = vld [vmem:[#allocation14 + $0xc0] sm:$0xff]
    %v5843 = vld [vmem:[#allocation14 + $0xc8] sm:$0xff]
    %v5844 = vld [vmem:[#allocation14 + $0xd0] sm:$0xff]
    %v5845 = vld [vmem:[#allocation14 + $0xd8] sm:$0xff]
    %v5846 = vld [vmem:[#allocation14 + $0xe0] sm:$0xff]
    %v5847 = vld [vmem:[#allocation14 + $0xe8] sm:$0xff]
    %v5848 = vld [vmem:[#allocation14 + $0xf0] sm:$0xff]
    %v5849 = vld [vmem:[#allocation14 + $0xf8] sm:$0xff]
    %v5850 = vld [vmem:[#allocation14 + $0x100] sm:$0xff]
    %v5851 = vld [vmem:[#allocation14 + $0x108] sm:$0xff]
    %v5852 = vld [vmem:[#allocation14 + $0x110] sm:$0xff]
    %v5853 = vld [vmem:[#allocation14 + $0x118] sm:$0xff]
    %v5854 = vld [vmem:[#allocation14 + $0x120] sm:$0xff]
    %v5855 = vld [vmem:[#allocation14 + $0x128] sm:$0xff]
    %v5856 = vld [vmem:[#allocation14 + $0x130] sm:$0xff]
    %v5857 = vld [vmem:[#allocation14 + $0x138] sm:$0xff]
    %v5858 = vld [vmem:[#allocation14 + $0x140] sm:$0xff]
    %v5859 = vld [vmem:[#allocation14 + $0x148] sm:$0xff]
    %v5860 = vld [vmem:[#allocation14 + $0x150] sm:$0xff]
    %v5861 = vld [vmem:[#allocation14 + $0x158] sm:$0xff]
    %v5862 = vld [vmem:[#allocation14 + $0x160] sm:$0xff]
    %v5863 = vld [vmem:[#allocation14 + $0x168] sm:$0xff]
    %v5864 = vld [vmem:[#allocation14 + $0x170] sm:$0xff]
    %v5865 = vld [vmem:[#allocation14 + $0x178] sm:$0xff]
    %v5866 = vld [vmem:[#allocation14 + $0x180] sm:$0xff]
    %v5867 = vld [vmem:[#allocation14 + $0x188] sm:$0xff]
    %v5868 = vld [vmem:[#allocation14 + $0x190] sm:$0xff]
    %v5869 = vld [vmem:[#allocation14 + $0x198] sm:$0xff]
    %v5870 = vld [vmem:[#allocation14 + $0x1a0] sm:$0xff]
    %v5871 = vld [vmem:[#allocation14 + $0x1a8] sm:$0xff]
    %v5872 = vld [vmem:[#allocation14 + $0x1b0] sm:$0xff]
    %v5873 = vpack.c.bf16 %v5839, %v5839
    %v5874 = vpack.c.bf16 %v5840, %v5840
    %v5875 = vpack.c.bf16 %v5842, %v5841
    %v5876 = vpack.c.bf16 %v5844, %v5843
    %v5877 = vpack.c.bf16 %v5846, %v5845
    %v5878 = vpack.c.bf16 %v5848, %v5847
    %v5879 = vpack.c.bf16 %v5850, %v5849
    %v5880 = vpack.c.bf16 %v5852, %v5851
    %v5881 = vpack.c.bf16 %v5854, %v5853
    %v5882 = vpack.c.bf16 %v5856, %v5855
    %v5883 = vpack.c.bf16 %v5858, %v5857
    %v5884 = vpack.c.bf16 %v5860, %v5859
    %v5885 = vpack.c.bf16 %v5862, %v5861
    %v5886 = vpack.c.bf16 %v5864, %v5863
    %v5887 = vpack.c.bf16 %v5866, %v5865
    %v5888 = vpack.c.bf16 %v5868, %v5867
    %v5889 = vpack.c.bf16 %v5870, %v5869
    %v5890 = vpack.c.bf16 %v5872, %v5871
    %5891 = vmatprep.subr.bf16.mxu0 0
    %5892 = vmatpush1.bf16.msra.mxu0 %v5882
    %5893 = vmatprep.subr.bf16.mxu0 0
    %5894 = vmatpush1.bf16.msra.mxu0 %v5881
    %5895 = vmatprep.subr.bf16.mxu0 0
    %5896 = vmatpush1.bf16.msra.mxu0 %v5880
    %5897 = vmatprep.subr.bf16.mxu0 0
    %5898 = vmatpush1.bf16.msra.mxu0 %v5879
    %5899 = vmatprep.subr.bf16.mxu0 0
    %5900 = vmatpush1.bf16.msra.mxu0 %v5878
    %5901 = vmatprep.subr.bf16.mxu0 0
    %5902 = vmatpush1.bf16.msra.mxu0 %v5877
    %5903 = vmatprep.subr.bf16.mxu0 0
    %5904 = vmatpush1.bf16.msra.mxu0 %v5876
    %5905 = vmatprep.subr.bf16.mxu0 0
    %5906 = vmatpush1.bf16.msra.mxu0 %v5875
    %5907 = vmatprep.subr.bf16.mxu0 0
    %5908 = vmatpush2.bf16.msra.mxu0 %v5890
    %5909 = vmatprep.subr.bf16.mxu0 0
    %5910 = vmatpush2.bf16.msra.mxu0 %v5889
    %5911 = vmatprep.subr.bf16.mxu0 0
    %5912 = vmatpush2.bf16.msra.mxu0 %v5888
    %5913 = vmatprep.subr.bf16.mxu0 0
    %5914 = vmatpush2.bf16.msra.mxu0 %v5887
    %5915 = vmatprep.subr.bf16.mxu0 0
    %5916 = vmatpush2.bf16.msra.mxu0 %v5886
    %5917 = vmatprep.subr.bf16.mxu0 0
    %5918 = vmatpush2.bf16.msra.mxu0 %v5885
    %5919 = vmatprep.subr.bf16.mxu0 0
    %5920 = vmatpush2.bf16.msra.mxu0 %v5884
    %5921 = vmatprep.subr.bf16.mxu0 0
    %5922 = vmatpush2.bf16.msra.mxu0 %v5883
    %5923 = vmatprep.mubr.bf16.mxu0 %v5874
    %5924 = vmatmul.mubr.bf16.gmra.mxu0 %v5873
    %v5925 = vpop.f32.mrf.mxu0
    %v5926 = vadd.f32 0.0, %v5925
    %v5927 = vpop.f32.mrf.mxu0
    %v5928 = vpop.f32.mrf.mxu0
    %v5929 = vpop.f32.mrf.mxu0
    %5930 = vdwg.mxu0
    %v5931 = vld [vmem:[#allocation5 + $0x52] sm:$0x1]
    %v5933 = vlaneseq
    %v5934 = vshrl.u32 %v5933, 7
    %v5935 = vsub.s32 0, %v5934
    %v5936 = vrot.slane %v5931, %v5935
    %v5938 = vadd.f32 %v5926, %v5936
    %v5939 = vld [vmem:[#allocation5 + $0x53] sm:$0x1]
    %v5941 = vlaneseq
    %v5942 = vshrl.u32 %v5941, 7
    %v5943 = vsub.s32 0, %v5942
    %v5944 = vrot.slane %v5939, %v5943
    %v5946 = vadd.f32 %v4176, %v5944
    %v5947 = vld [vmem:[#allocation5 + $0x54] sm:$0x1]
    %v5948 = vld [vmem:[#allocation5 + $0x55] sm:$0x1]
    %v5949 = vsel %vm278, %v5946, 0.0
    %5950 = vadd.xlane.f32.xlu0 %v5949
    %v5951 = vpop.xlane.xlu0 %5950
    %v5952 = vrcp.pop 128.0
    %v5953 = vmul.f32 %v5951, %v5952
    %v5954 = vsub.f32 %v5946, %v5953
    %v5955 = vmul.f32 %v5954, %v5954
    %v5956 = vsel %vm278, %v5955, 0.0
    %5957 = vadd.xlane.f32.xlu0 %v5956
    %v5958 = vpop.xlane.xlu0 %5957
    %v5959 = vmul.f32 %v5958, %v5952
    %v5960 = vadd.f32 %v5959, 1e-05
    %v5961 = vrsqrt.pop %v5960
    %v5962 = vmul.f32 %v5954, %v5961
    %v5964 = vlaneseq
    %v5965 = vshrl.u32 %v5964, 7
    %v5966 = vsub.s32 0, %v5965
    %v5967 = vrot.slane %v5947, %v5966
    %v5969 = vmul.f32 %v5962, %v5967
    %v5971 = vlaneseq
    %v5972 = vshrl.u32 %v5971, 7
    %v5973 = vsub.s32 0, %v5972
    %v5974 = vrot.slane %v5948, %v5973
    %v5976 = vadd.f32 %v5969, %v5974
    %v5977 = vmax.f32 %v5976, 0.0
    %v5978 = vld [vmem:[#allocation14 + $0x38] sm:$0xff]
    %v5979 = vld [vmem:[#allocation14 + $0x40] sm:$0xff]
    %v5980 = vld [vmem:[#allocation14 + $0x48] sm:$0xff]
    %v5981 = vld [vmem:[#allocation14 + $0x50] sm:$0xff]
    %v5982 = vld [vmem:[#allocation14 + $0x58] sm:$0xff]
    %v5983 = vld [vmem:[#allocation14 + $0x60] sm:$0xff]
    %v5984 = vld [vmem:[#allocation14 + $0x68] sm:$0xff]
    %v5985 = vld [vmem:[#allocation14 + $0x70] sm:$0xff]
    %v5986 = vld [vmem:[#allocation14 + $0x78] sm:$0xff]
    %v5987 = vld [vmem:[#allocation14 + $0x80] sm:$0xff]
    %v5988 = vld [vmem:[#allocation14 + $0x88] sm:$0xff]
    %v5989 = vld [vmem:[#allocation14 + $0x90] sm:$0xff]
    %v5990 = vld [vmem:[#allocation14 + $0x98] sm:$0xff]
    %v5991 = vld [vmem:[#allocation14 + $0xa0] sm:$0xff]
    %v5992 = vld [vmem:[#allocation14 + $0xa8] sm:$0xff]
    %v5993 = vld [vmem:[#allocation14 + $0xb0] sm:$0xff]
    %v5994 = vpack.c.bf16 %v5977, %v5977
    %v5995 = vpack.c.bf16 %v5979, %v5978
    %v5996 = vpack.c.bf16 %v5981, %v5980
    %v5997 = vpack.c.bf16 %v5983, %v5982
    %v5998 = vpack.c.bf16 %v5985, %v5984
    %v5999 = vpack.c.bf16 %v5987, %v5986
    %v6000 = vpack.c.bf16 %v5989, %v5988
    %v6001 = vpack.c.bf16 %v5991, %v5990
    %v6002 = vpack.c.bf16 %v5993, %v5992
    %v6003 = vld [vmem:[#allocation5 + $0x56] sm:$0x1]
    %v6005 = vlaneseq
    %v6006 = vshrl.u32 %v6005, 7
    %v6007 = vsub.s32 0, %v6006
    %v6008 = vrot.slane %v6003, %v6007
    %6010 = vmatprep.subr.bf16.mxu0 0
    %6011 = vmatpush1.bf16.msra.mxu0 %v6002
    %6012 = vmatprep.subr.bf16.mxu0 0
    %6013 = vmatpush1.bf16.msra.mxu0 %v6001
    %6014 = vmatprep.subr.bf16.mxu0 0
    %6015 = vmatpush1.bf16.msra.mxu0 %v6000
    %6016 = vmatprep.subr.bf16.mxu0 0
    %6017 = vmatpush1.bf16.msra.mxu0 %v5999
    %6018 = vmatprep.subr.bf16.mxu0 0
    %6019 = vmatpush1.bf16.msra.mxu0 %v5998
    %6020 = vmatprep.subr.bf16.mxu0 0
    %6021 = vmatpush1.bf16.msra.mxu0 %v5997
    %6022 = vmatprep.subr.bf16.mxu0 0
    %6023 = vmatpush1.bf16.msra.mxu0 %v5996
    %6024 = vmatprep.subr.bf16.mxu0 0
    %6025 = vmatpush1.bf16.msra.mxu0 %v5995
    %6026 = vmatprep.subr.bf16.mxu0 0
    %6027 = vmatpush2.bf16.msra.mxu0 0
    %6028 = vmatprep.subr.bf16.mxu0 0
    %6029 = vmatpush2.bf16.msra.mxu0 0
    %6030 = vmatprep.subr.bf16.mxu0 0
    %6031 = vmatpush2.bf16.msra.mxu0 0
    %6032 = vmatprep.subr.bf16.mxu0 0
    %6033 = vmatpush2.bf16.msra.mxu0 0
    %6034 = vmatprep.subr.bf16.mxu0 0
    %6035 = vmatpush2.bf16.msra.mxu0 0
    %6036 = vmatprep.subr.bf16.mxu0 0
    %6037 = vmatpush2.bf16.msra.mxu0 0
    %6038 = vmatprep.subr.bf16.mxu0 0
    %6039 = vmatpush2.bf16.msra.mxu0 0
    %6040 = vmatprep.subr.bf16.mxu0 0
    %6041 = vmatpush2.bf16.msra.mxu0 0
    %6042 = vmatprep.mubr.bf16.mxu0 0
    %6043 = vmatmul.mubr.bf16.gmra.mxu0 %v5994
    %v6044 = vpop.f32.mrf.mxu0
    %v6045 = vadd.f32 %v6008, %v6044
    %v6046 = vpop.f32.mrf.mxu0
    %v6047 = vpop.f32.mrf.mxu0
    %v6048 = vpop.f32.mrf.mxu0
    %6049 = vdwg.mxu0
    %v6050 = vld [vmem:[#allocation5 + $0x57] sm:$0x1]
    %v6051 = vld [vmem:[#allocation5 + $0x58] sm:$0x1]
    %v6052 = vsel %vm278, %v6045, 0.0
    %6053 = vadd.xlane.f32.xlu0 %v6052
    %v6054 = vpop.xlane.xlu0 %6053
    %v6055 = vmul.f32 %v6054, %v5952
    %v6056 = vsub.f32 %v6045, %v6055
    %v6057 = vmul.f32 %v6056, %v6056
    %v6058 = vsel %vm278, %v6057, 0.0
    %6059 = vadd.xlane.f32.xlu0 %v6058
    %v6060 = vpop.xlane.xlu0 %6059
    %v6061 = vmul.f32 %v6060, %v5952
    %v6062 = vadd.f32 %v6061, 1e-05
    %v6063 = vrsqrt.pop %v6062
    %v6064 = vmul.f32 %v6056, %v6063
    %v6066 = vlaneseq
    %v6067 = vshrl.u32 %v6066, 7
    %v6068 = vsub.s32 0, %v6067
    %v6069 = vrot.slane %v6050, %v6068
    %v6071 = vmul.f32 %v6064, %v6069
    %v6073 = vlaneseq
    %v6074 = vshrl.u32 %v6073, 7
    %v6075 = vsub.s32 0, %v6074
    %v6076 = vrot.slane %v6051, %v6075
    %v6078 = vadd.f32 %v6071, %v6076
    %v6079 = vmax.f32 %v6078, 0.0
    %v6080 = vld [vmem:[%s8 + $0x80] sm:$0xff]
    %v6081 = vld [vmem:[%s8 + $0x88] sm:$0xff]
    %v6082 = vld [vmem:[%s8 + $0x90] sm:$0xff]
    %v6083 = vld [vmem:[%s8 + $0x98] sm:$0xff]
    %v6084 = vld [vmem:[%s8 + $0xa0] sm:$0xff]
    %v6085 = vld [vmem:[%s8 + $0xa8] sm:$0xff]
    %v6086 = vld [vmem:[%s8 + $0xb0] sm:$0xff]
    %v6087 = vld [vmem:[%s8 + $0xb8] sm:$0xff]
    %v6088 = vld [vmem:[%s8 + $0xc0] sm:$0xff]
    %v6089 = vld [vmem:[%s8 + $0xc8] sm:$0xff]
    %v6090 = vld [vmem:[%s8 + $0xd0] sm:$0xff]
    %v6091 = vld [vmem:[%s8 + $0xd8] sm:$0xff]
    %v6092 = vld [vmem:[%s8 + $0xe0] sm:$0xff]
    %v6093 = vld [vmem:[%s8 + $0xe8] sm:$0xff]
    %v6094 = vld [vmem:[%s8 + $0xf0] sm:$0xff]
    %v6095 = vld [vmem:[%s8 + $0xf8] sm:$0xff]
    %v6096 = vpack.c.bf16 %v6079, %v6079
    %v6097 = vpack.c.bf16 %v6081, %v6080
    %v6098 = vpack.c.bf16 %v6083, %v6082
    %v6099 = vpack.c.bf16 %v6085, %v6084
    %v6100 = vpack.c.bf16 %v6087, %v6086
    %v6101 = vpack.c.bf16 %v6089, %v6088
    %v6102 = vpack.c.bf16 %v6091, %v6090
    %v6103 = vpack.c.bf16 %v6093, %v6092
    %v6104 = vpack.c.bf16 %v6095, %v6094
    %6105 = vmatprep.subr.bf16.mxu0 0
    %6106 = vmatpush1.bf16.msra.mxu0 %v6104
    %6107 = vmatprep.subr.bf16.mxu0 0
    %6108 = vmatpush1.bf16.msra.mxu0 %v6103
    %6109 = vmatprep.subr.bf16.mxu0 0
    %6110 = vmatpush1.bf16.msra.mxu0 %v6102
    %6111 = vmatprep.subr.bf16.mxu0 0
    %6112 = vmatpush1.bf16.msra.mxu0 %v6101
    %6113 = vmatprep.subr.bf16.mxu0 0
    %6114 = vmatpush1.bf16.msra.mxu0 %v6100
    %6115 = vmatprep.subr.bf16.mxu0 0
    %6116 = vmatpush1.bf16.msra.mxu0 %v6099
    %6117 = vmatprep.subr.bf16.mxu0 0
    %6118 = vmatpush1.bf16.msra.mxu0 %v6098
    %6119 = vmatprep.subr.bf16.mxu0 0
    %6120 = vmatpush1.bf16.msra.mxu0 %v6097
    %6121 = vmatprep.subr.bf16.mxu0 0
    %6122 = vmatpush2.bf16.msra.mxu0 0
    %6123 = vmatprep.subr.bf16.mxu0 0
    %6124 = vmatpush2.bf16.msra.mxu0 0
    %6125 = vmatprep.subr.bf16.mxu0 0
    %6126 = vmatpush2.bf16.msra.mxu0 0
    %6127 = vmatprep.subr.bf16.mxu0 0
    %6128 = vmatpush2.bf16.msra.mxu0 0
    %6129 = vmatprep.subr.bf16.mxu0 0
    %6130 = vmatpush2.bf16.msra.mxu0 0
    %6131 = vmatprep.subr.bf16.mxu0 0
    %6132 = vmatpush2.bf16.msra.mxu0 0
    %6133 = vmatprep.subr.bf16.mxu0 0
    %6134 = vmatpush2.bf16.msra.mxu0 0
    %6135 = vmatprep.subr.bf16.mxu0 0
    %6136 = vmatpush2.bf16.msra.mxu0 0
    %6137 = vmatprep.mubr.bf16.mxu0 0
    %6138 = vmatmul.mubr.bf16.gmra.mxu0 %v6096
    %v6139 = vpop.f32.mrf.mxu0
    %v6140 = vadd.f32 0.0, %v6139
    %v6141 = vpop.f32.mrf.mxu0
    %v6142 = vpop.f32.mrf.mxu0
    %v6143 = vpop.f32.mrf.mxu0
    %6144 = vdwg.mxu0
    %v6145 = vld [vmem:[%s8] sm:$0x7]
    %v6146 = vpack.c.bf16 %v6140, %v6140
    %v6147 = vpack.c.bf16 %v6145, %v6145
    %v6148 = vld [vmem:[%s8 + $0x8] sm:$0xff]
    %v6149 = vld [vmem:[%s8 + $0x10] sm:$0xff]
    %v6150 = vld [vmem:[%s8 + $0x18] sm:$0x3]
    %v6151 = vpack.c.bf16 %v139, %v139
    %v6152 = vpack.c.bf16 %v6149, %v6148
    %v6153 = vpack.c.bf16 %v6150, %v6150
    %vm6154 = vcmask 146432
    %v6156 = vsel %vm6154, %v6151, 0
    %v6159 = vsel %vm277, %v6153, 0
    %6161 = vmatprep.subr.bf16.mxu0 0
    %6162 = vmatpush1.bf16.msra.mxu0 0
    %6163 = vmatprep.subr.bf16.mxu0 0
    %6164 = vmatpush1.bf16.msra.mxu0 0
    %6165 = vmatprep.subr.bf16.mxu0 0
    %6166 = vmatpush1.bf16.msra.mxu0 0
    %6167 = vmatprep.subr.bf16.mxu0 0
    %6168 = vmatpush1.bf16.msra.mxu0 0
    %6169 = vmatprep.subr.bf16.mxu0 0
    %6170 = vmatpush1.bf16.msra.mxu0 0
    %6171 = vmatprep.subr.bf16.mxu0 0
    %6172 = vmatpush1.bf16.msra.mxu0 0
    %6173 = vmatprep.subr.bf16.mxu0 0
    %6174 = vmatpush1.bf16.msra.mxu0 %v6159
    %6175 = vmatprep.subr.bf16.mxu0 0
    %6176 = vmatpush1.bf16.msra.mxu0 %v6152
    %6177 = vmatprep.subr.bf16.mxu0 0
    %6178 = vmatpush2.bf16.msra.mxu0 0
    %6179 = vmatprep.subr.bf16.mxu0 0
    %6180 = vmatpush2.bf16.msra.mxu0 0
    %6181 = vmatprep.subr.bf16.mxu0 0
    %6182 = vmatpush2.bf16.msra.mxu0 0
    %6183 = vmatprep.subr.bf16.mxu0 0
    %6184 = vmatpush2.bf16.msra.mxu0 0
    %6185 = vmatprep.subr.bf16.mxu0 0
    %6186 = vmatpush2.bf16.msra.mxu0 0
    %6187 = vmatprep.subr.bf16.mxu0 0
    %6188 = vmatpush2.bf16.msra.mxu0 0
    %6189 = vmatprep.subr.bf16.mxu0 0
    %6190 = vmatpush2.bf16.msra.mxu0 0
    %6191 = vmatprep.subr.bf16.mxu0 0
    %6192 = vmatpush2.bf16.msra.mxu0 0
    %6193 = vmatprep.mubr.bf16.mxu0 0
    %6194 = vmatmul.mubr.bf16.gmra.mxu0 %v6156
    %v6195 = vpop.f32.mrf.mxu0
    %v6196 = vadd.f32 0.0, %v6195
    %v6197 = vpop.f32.mrf.mxu0
    %v6198 = vpop.f32.mrf.mxu0
    %v6199 = vpop.f32.mrf.mxu0
    %6200 = vdwg.mxu0
    %v6202 = vsel %vm273, %v6146, 0
    %v6205 = vand.u32 %v6147, %v280
    %6207 = vmatprep.subr.bf16.mxu0 0
    %6208 = vmatpush1.bf16.msra.mxu0 0
    %6209 = vmatprep.subr.bf16.mxu0 0
    %6210 = vmatpush1.bf16.msra.mxu0 0
    %6211 = vmatprep.subr.bf16.mxu0 0
    %6212 = vmatpush1.bf16.msra.mxu0 0
    %6213 = vmatprep.subr.bf16.mxu0 0
    %6214 = vmatpush1.bf16.msra.mxu0 0
    %6215 = vmatprep.subr.bf16.mxu0 0
    %6216 = vmatpush1.bf16.msra.mxu0 0
    %6217 = vmatprep.subr.bf16.mxu0 0
    %6218 = vmatpush1.bf16.msra.mxu0 0
    %6219 = vmatprep.subr.bf16.mxu0 0
    %6220 = vmatpush1.bf16.msra.mxu0 0
    %6221 = vmatprep.subr.bf16.mxu0 0
    %6222 = vmatpush1.bf16.msra.mxu0 %v6205
    %6223 = vmatprep.subr.bf16.mxu0 0
    %6224 = vmatpush2.bf16.msra.mxu0 0
    %6225 = vmatprep.subr.bf16.mxu0 0
    %6226 = vmatpush2.bf16.msra.mxu0 0
    %6227 = vmatprep.subr.bf16.mxu0 0
    %6228 = vmatpush2.bf16.msra.mxu0 0
    %6229 = vmatprep.subr.bf16.mxu0 0
    %6230 = vmatpush2.bf16.msra.mxu0 0
    %6231 = vmatprep.subr.bf16.mxu0 0
    %6232 = vmatpush2.bf16.msra.mxu0 0
    %6233 = vmatprep.subr.bf16.mxu0 0
    %6234 = vmatpush2.bf16.msra.mxu0 0
    %6235 = vmatprep.subr.bf16.mxu0 0
    %6236 = vmatpush2.bf16.msra.mxu0 0
    %6237 = vmatprep.subr.bf16.mxu0 0
    %6238 = vmatpush2.bf16.msra.mxu0 0
    %6239 = vmatprep.mubr.bf16.mxu0 0
    %6240 = vmatmul.mubr.bf16.gmra.mxu0 %v6202
    %v6241 = vpop.f32.mrf.mxu0
    %v6242 = vadd.f32 %v6196, %v6241
    %v6243 = vpop.f32.mrf.mxu0
    %v6244 = vpop.f32.mrf.mxu0
    %v6245 = vpop.f32.mrf.mxu0
    %6246 = vdwg.mxu0
    %v6247 = vld [vmem:[#allocation5 + $0x59] sm:$0x1]
    %v6249 = vlaneseq
    %v6250 = vshrl.u32 %v6249, 7
    %v6251 = vsub.s32 0, %v6250
    %v6252 = vrot.slane %v6247, %v6251
    %v6254 = vadd.f32 %v6242, %v6252
    %v6255 = vld [vmem:[#allocation5 + $0x5a] sm:$0x1]
    %v6256 = vld [vmem:[#allocation5 + $0x5b] sm:$0x1]
    %vm6257 = vcmask 254976
    %v6258 = vsel %vm6257, %v6254, 0.0
    %6259 = vadd.xlane.f32.xlu0 %v6258
    %v6260 = vpop.xlane.xlu0 %6259
    %v6261 = vrcp.pop 32.0
    %v6262 = vmul.f32 %v6260, %v6261
    %v6263 = vsub.f32 %v6254, %v6262
    %v6264 = vmul.f32 %v6263, %v6263
    %v6265 = vsel %vm6257, %v6264, 0.0
    %6266 = vadd.xlane.f32.xlu0 %v6265
    %v6267 = vpop.xlane.xlu0 %6266
    %v6268 = vmul.f32 %v6267, %v6261
    %v6269 = vadd.f32 %v6268, 1e-05
    %v6270 = vrsqrt.pop %v6269
    %v6271 = vmul.f32 %v6263, %v6270
    %v6273 = vlaneseq
    %v6274 = vshrl.u32 %v6273, 7
    %v6275 = vsub.s32 0, %v6274
    %v6276 = vrot.slane %v6255, %v6275
    %v6278 = vmul.f32 %v6271, %v6276
    %v6280 = vlaneseq
    %v6281 = vshrl.u32 %v6280, 7
    %v6282 = vsub.s32 0, %v6281
    %v6283 = vrot.slane %v6256, %v6282
    %v6285 = vadd.f32 %v6278, %v6283
    %v6286 = vmax.f32 %v6285, 0.0
    %v6287 = vld [vmem:[%s8 + $0x20] sm:$0xff]
    %v6288 = vld [vmem:[%s8 + $0x28] sm:$0xff]
    %v6289 = vld [vmem:[%s8 + $0x30] sm:$0xff]
    %v6290 = vld [vmem:[%s8 + $0x38] sm:$0xff]
    %v6291 = vpack.c.bf16 %v6286, %v6286
    %v6292 = vpack.c.bf16 %v6288, %v6287
    %v6293 = vpack.c.bf16 %v6290, %v6289
    %v6294 = vld [vmem:[#allocation5 + $0x5c] sm:$0x1]
    %v6296 = vlaneseq
    %v6297 = vshrl.u32 %v6296, 7
    %v6298 = vsub.s32 0, %v6297
    %v6299 = vrot.slane %v6294, %v6298
    %vm6301 = vcmask 261120
    %v6303 = vsel %vm6301, %v6291, 0
    %6305 = vmatprep.subr.bf16.mxu0 0
    %6306 = vmatpush1.bf16.msra.mxu0 0
    %6307 = vmatprep.subr.bf16.mxu0 0
    %6308 = vmatpush1.bf16.msra.mxu0 0
    %6309 = vmatprep.subr.bf16.mxu0 0
    %6310 = vmatpush1.bf16.msra.mxu0 0
    %6311 = vmatprep.subr.bf16.mxu0 0
    %6312 = vmatpush1.bf16.msra.mxu0 0
    %6313 = vmatprep.subr.bf16.mxu0 0
    %6314 = vmatpush1.bf16.msra.mxu0 0
    %6315 = vmatprep.subr.bf16.mxu0 0
    %6316 = vmatpush1.bf16.msra.mxu0 0
    %6317 = vmatprep.subr.bf16.mxu0 0
    %6318 = vmatpush1.bf16.msra.mxu0 %v6293
    %6319 = vmatprep.subr.bf16.mxu0 0
    %6320 = vmatpush1.bf16.msra.mxu0 %v6292
    %6321 = vmatprep.subr.bf16.mxu0 0
    %6322 = vmatpush2.bf16.msra.mxu0 0
    %6323 = vmatprep.subr.bf16.mxu0 0
    %6324 = vmatpush2.bf16.msra.mxu0 0
    %6325 = vmatprep.subr.bf16.mxu0 0
    %6326 = vmatpush2.bf16.msra.mxu0 0
    %6327 = vmatprep.subr.bf16.mxu0 0
    %6328 = vmatpush2.bf16.msra.mxu0 0
    %6329 = vmatprep.subr.bf16.mxu0 0
    %6330 = vmatpush2.bf16.msra.mxu0 0
    %6331 = vmatprep.subr.bf16.mxu0 0
    %6332 = vmatpush2.bf16.msra.mxu0 0
    %6333 = vmatprep.subr.bf16.mxu0 0
    %6334 = vmatpush2.bf16.msra.mxu0 0
    %6335 = vmatprep.subr.bf16.mxu0 0
    %6336 = vmatpush2.bf16.msra.mxu0 0
    %6337 = vmatprep.mubr.bf16.mxu0 0
    %6338 = vmatmul.mubr.bf16.gmra.mxu0 %v6303
    %v6339 = vpop.f32.mrf.mxu0
    %v6340 = vadd.f32 %v6299, %v6339
    %v6341 = vpop.f32.mrf.mxu0
    %v6342 = vpop.f32.mrf.mxu0
    %v6343 = vpop.f32.mrf.mxu0
    %6344 = vdwg.mxu0
    %v6345 = vld [vmem:[#allocation5 + $0x5d] sm:$0x1]
    %v6346 = vld [vmem:[#allocation5 + $0x5e] sm:$0x1]
    %v6347 = vsel %vm6257, %v6340, 0.0
    %6348 = vadd.xlane.f32.xlu0 %v6347
    %v6349 = vpop.xlane.xlu0 %6348
    %v6350 = vmul.f32 %v6349, %v6261
    %v6351 = vsub.f32 %v6340, %v6350
    %v6352 = vmul.f32 %v6351, %v6351
    %v6353 = vsel %vm6257, %v6352, 0.0
    %6354 = vadd.xlane.f32.xlu0 %v6353
    %v6355 = vpop.xlane.xlu0 %6354
    %v6356 = vmul.f32 %v6355, %v6261
    %v6357 = vadd.f32 %v6356, 1e-05
    %v6358 = vrsqrt.pop %v6357
    %v6359 = vmul.f32 %v6351, %v6358
    %v6361 = vlaneseq
    %v6362 = vshrl.u32 %v6361, 7
    %v6363 = vsub.s32 0, %v6362
    %v6364 = vrot.slane %v6345, %v6363
    %v6366 = vmul.f32 %v6359, %v6364
    %v6368 = vlaneseq
    %v6369 = vshrl.u32 %v6368, 7
    %v6370 = vsub.s32 0, %v6369
    %v6371 = vrot.slane %v6346, %v6370
    %v6373 = vadd.f32 %v6366, %v6371
    %v6374 = vmax.f32 %v6373, 0.0
    %v6375 = vld [vmem:[%s8 + $0x40] sm:$0xff]
    %v6376 = vld [vmem:[%s8 + $0x48] sm:$0xff]
    %v6377 = vld [vmem:[%s8 + $0x50] sm:$0xff]
    %v6378 = vld [vmem:[%s8 + $0x58] sm:$0xff]
    %v6379 = vpack.c.bf16 %v6374, %v6374
    %v6380 = vpack.c.bf16 %v6376, %v6375
    %v6381 = vpack.c.bf16 %v6378, %v6377
    %v6382 = vld [vmem:[#allocation5 + $0x5f] sm:$0x1]
    %v6384 = vlaneseq
    %v6385 = vshrl.u32 %v6384, 7
    %v6386 = vsub.s32 0, %v6385
    %v6387 = vrot.slane %v6382, %v6386
    %v6390 = vsel %vm6301, %v6379, 0
    %6392 = vmatprep.subr.bf16.mxu0 0
    %6393 = vmatpush1.bf16.msra.mxu0 0
    %6394 = vmatprep.subr.bf16.mxu0 0
    %6395 = vmatpush1.bf16.msra.mxu0 0
    %6396 = vmatprep.subr.bf16.mxu0 0
    %6397 = vmatpush1.bf16.msra.mxu0 0
    %6398 = vmatprep.subr.bf16.mxu0 0
    %6399 = vmatpush1.bf16.msra.mxu0 0
    %6400 = vmatprep.subr.bf16.mxu0 0
    %6401 = vmatpush1.bf16.msra.mxu0 0
    %6402 = vmatprep.subr.bf16.mxu0 0
    %6403 = vmatpush1.bf16.msra.mxu0 0
    %6404 = vmatprep.subr.bf16.mxu0 0
    %6405 = vmatpush1.bf16.msra.mxu0 %v6381
    %6406 = vmatprep.subr.bf16.mxu0 0
    %6407 = vmatpush1.bf16.msra.mxu0 %v6380
    %6408 = vmatprep.subr.bf16.mxu0 0
    %6409 = vmatpush2.bf16.msra.mxu0 0
    %6410 = vmatprep.subr.bf16.mxu0 0
    %6411 = vmatpush2.bf16.msra.mxu0 0
    %6412 = vmatprep.subr.bf16.mxu0 0
    %6413 = vmatpush2.bf16.msra.mxu0 0
    %6414 = vmatprep.subr.bf16.mxu0 0
    %6415 = vmatpush2.bf16.msra.mxu0 0
    %6416 = vmatprep.subr.bf16.mxu0 0
    %6417 = vmatpush2.bf16.msra.mxu0 0
    %6418 = vmatprep.subr.bf16.mxu0 0
    %6419 = vmatpush2.bf16.msra.mxu0 0
    %6420 = vmatprep.subr.bf16.mxu0 0
    %6421 = vmatpush2.bf16.msra.mxu0 0
    %6422 = vmatprep.subr.bf16.mxu0 0
    %6423 = vmatpush2.bf16.msra.mxu0 0
    %6424 = vmatprep.mubr.bf16.mxu0 0
    %6425 = vmatmul.mubr.bf16.gmra.mxu0 %v6390
    %v6426 = vpop.f32.mrf.mxu0
    %v6427 = vadd.f32 %v6387, %v6426
    %v6428 = vpop.f32.mrf.mxu0
    %v6429 = vpop.f32.mrf.mxu0
    %v6430 = vpop.f32.mrf.mxu0
    %6431 = vdwg.mxu0
    %v6432 = vld [vmem:[#allocation5 + $0x60] sm:$0x1]
    %v6433 = vld [vmem:[#allocation5 + $0x61] sm:$0x1]
    %v6434 = vsel %vm6257, %v6427, 0.0
    %6435 = vadd.xlane.f32.xlu0 %v6434
    %v6436 = vpop.xlane.xlu0 %6435
    %v6437 = vmul.f32 %v6436, %v6261
    %v6438 = vsub.f32 %v6427, %v6437
    %v6439 = vmul.f32 %v6438, %v6438
    %v6440 = vsel %vm6257, %v6439, 0.0
    %6441 = vadd.xlane.f32.xlu0 %v6440
    %v6442 = vpop.xlane.xlu0 %6441
    %v6443 = vmul.f32 %v6442, %v6261
    %v6444 = vadd.f32 %v6443, 1e-05
    %v6445 = vrsqrt.pop %v6444
    %v6446 = vmul.f32 %v6438, %v6445
    %v6448 = vlaneseq
    %v6449 = vshrl.u32 %v6448, 7
    %v6450 = vsub.s32 0, %v6449
    %v6451 = vrot.slane %v6432, %v6450
    %v6453 = vmul.f32 %v6446, %v6451
    %v6455 = vlaneseq
    %v6456 = vshrl.u32 %v6455, 7
    %v6457 = vsub.s32 0, %v6456
    %v6458 = vrot.slane %v6433, %v6457
    %v6460 = vadd.f32 %v6453, %v6458
    %v6461 = vmax.f32 %v6460, 0.0
    %v6462 = vld [vmem:[%s8 + $0x60] sm:$0xff]
    %v6463 = vld [vmem:[%s8 + $0x68] sm:$0xff]
    %v6464 = vld [vmem:[%s8 + $0x70] sm:$0xff]
    %v6465 = vld [vmem:[%s8 + $0x78] sm:$0xff]
    %v6466 = vpack.c.bf16 %v6461, %v6461
    %v6467 = vpack.c.bf16 %v6463, %v6462
    %v6468 = vpack.c.bf16 %v6465, %v6464
    %v6470 = vsel %vm6301, %v6466, 0
    %6472 = vmatprep.subr.bf16.mxu0 0
    %6473 = vmatpush1.bf16.msra.mxu0 0
    %6474 = vmatprep.subr.bf16.mxu0 0
    %6475 = vmatpush1.bf16.msra.mxu0 0
    %6476 = vmatprep.subr.bf16.mxu0 0
    %6477 = vmatpush1.bf16.msra.mxu0 0
    %6478 = vmatprep.subr.bf16.mxu0 0
    %6479 = vmatpush1.bf16.msra.mxu0 0
    %6480 = vmatprep.subr.bf16.mxu0 0
    %6481 = vmatpush1.bf16.msra.mxu0 0
    %6482 = vmatprep.subr.bf16.mxu0 0
    %6483 = vmatpush1.bf16.msra.mxu0 0
    %6484 = vmatprep.subr.bf16.mxu0 0
    %6485 = vmatpush1.bf16.msra.mxu0 %v6468
    %6486 = vmatprep.subr.bf16.mxu0 0
    %6487 = vmatpush1.bf16.msra.mxu0 %v6467
    %6488 = vmatprep.subr.bf16.mxu0 0
    %6489 = vmatpush2.bf16.msra.mxu0 0
    %6490 = vmatprep.subr.bf16.mxu0 0
    %6491 = vmatpush2.bf16.msra.mxu0 0
    %6492 = vmatprep.subr.bf16.mxu0 0
    %6493 = vmatpush2.bf16.msra.mxu0 0
    %6494 = vmatprep.subr.bf16.mxu0 0
    %6495 = vmatpush2.bf16.msra.mxu0 0
    %6496 = vmatprep.subr.bf16.mxu0 0
    %6497 = vmatpush2.bf16.msra.mxu0 0
    %6498 = vmatprep.subr.bf16.mxu0 0
    %6499 = vmatpush2.bf16.msra.mxu0 0
    %6500 = vmatprep.subr.bf16.mxu0 0
    %6501 = vmatpush2.bf16.msra.mxu0 0
    %6502 = vmatprep.subr.bf16.mxu0 0
    %6503 = vmatpush2.bf16.msra.mxu0 0
    %6504 = vmatprep.mubr.bf16.mxu0 0
    %6505 = vmatmul.mubr.bf16.gmra.mxu0 %v6470
    %v6506 = vpop.f32.mrf.mxu0
    %v6507 = vadd.f32 0.0, %v6506
    %v6508 = vpop.f32.mrf.mxu0
    %v6509 = vpop.f32.mrf.mxu0
    %v6510 = vpop.f32.mrf.mxu0
    %6511 = vdwg.mxu0
    %v6512 = vld [vmem:[#allocation5 + $0x62] sm:$0x1]
    %v6514 = vlaneseq
    %v6515 = vshrl.u32 %v6514, 7
    %v6516 = vsub.s32 0, %v6515
    %v6517 = vrot.slane %v6512, %v6516
    %v6519 = vadd.f32 %v6507, %v6517
    %v6520 = vmul.f32 %v5938, 1.442695
    %v6521 = vpow.pop %v6520
    %vm6522 = vcmp.le.f32.partialorder %v138, 0.0
    %v6523 = vmax.f32 %v138, 1e-30
    %v6524 = vlog2.pop %v6523
    %v6525 = vmul.f32 %v6524, 0.6931472
    %v6526 = vmul.f32 %v6521, %v6525
    %v6527 = vmul.f32 %v6526, 1.442695
    %v6528 = vpow.pop %v6527
    %v6529 = vsel %vm6522, 0.0, %v6528
    %6531 = vrot.lane.b32.xlu0 %v6140, 53
    %v6532 = vpop.permute.xlu0 %6531
    %6535 = vrot.lane.b32.xlu0 %v6519, 56
    %v6536 = vpop.permute.xlu0 %6535
    %6539 = vrot.lane.b32.xlu0 %v5938, 62
    %v6540 = vpop.permute.xlu0 %6539
    %v6542 = vsel %vm692, %v6529, %v6532
    %vm6543 = vcmask 457728
    %v6544 = vsel %vm6543, %v6542, %v6536
    %vm6545 = vcmask 506880
    %v6546 = vsel %vm6545, %v6544, %v6540
    %vm6547 = vcmask 941056
    %v6548 = vsel %vm6547, %v6546, 0.0
    %6549 = vst [vmem:[#allocation16] sm:$0x3] %v6548
    // Predicated region
    $region70: #{tpu_custom_call.1} parent=1 // pred_check
      _
    $region71: #{tpu_custom_call.1} parent=1 // pred_check_branch
      %6551 = sbr.rel (0) target = $region73
    $region72: #{tpu_custom_call.1} parent=1 // pred_region
      %s6553 = ssub.s32 32, 32
      %6554 = vsyncadd [#allocation4], %s6553
      %s6556 = sshll.u32 [#allocation16], 4
      %s6557 = int_to_ptr.vmem [resolvable:$true] %s6556
      %6559 = dma.vmem_to_hbm [thread:$0]  %s6557, 32, %s9, [#allocation4]
    $region73: #{tpu_custom_call.1} parent=1 // pred_fallthru
      _
    // Predicated region
    $region74: #{tpu_custom_call.1} parent=1 // pred_check
      _
    $region75: #{tpu_custom_call.1} parent=1 // pred_check_branch
      %6561 = sbr.rel (0) target = $region77
    $region76: #{tpu_custom_call.1} parent=1 // pred_region
      %6562 = dma.done [#allocation4], 32
    $region77: #{tpu_custom_call.1} parent=1 // pred_fallthru
      _
    %6563 = vsyncpa [#allocation3], 1
    %6564 = vsyncpa [#allocation6], 1
    %6565 = vsyncpa [#allocation9], 1
    %6566 = vsyncpa [#allocation12], 1
    %6567 = vsyncpa [#allocation15], 1
    %6568 = vsyncpa [#allocation4], 1

</llo_original>
